<compile_context>
chip_gen: v6e
topology: v6e:2x2x1
jax: 0.10.0
libtpu: 0.0.40
codegen_flags: <defaults>
</compile_context>

<pallas_src>
import functools

import jax
import jax.numpy as jnp
from jax.experimental import pallas as pl
from jax.experimental.pallas import tpu as pltpu

MEL_FREQ = 80
EMB_DIM = 256
EPS = 1e-5


def _mel_spk_kernel(
    x_ref, alpha_ref,
    c0_w_ref, c0_b_ref,
    r1_w1_ref, r1_w2_ref, r1_g1_ref, r1_b1_ref, r1_g2_ref, r1_b2_ref,
    r2_w1_ref, r2_w2_ref, r2_wd_ref, r2_g1_ref, r2_b1_ref, r2_g2_ref, r2_b2_ref,
    r3_w1_ref, r3_w2_ref, r3_g1_ref, r3_b1_ref, r3_g2_ref, r3_b2_ref,
    cf_w_ref, cf_b_ref,
    out_ref,
    *, n_batch, t_final,
):
  x = x_ref[...]  # (R, 80) f32, rows permuted base-3 digit-major (see wrapper)

  # ---- ChannelWiseLayerNorm over channels (affine folded into c0 in the wrapper) ----
  mu = jnp.mean(x, axis=-1, keepdims=True)
  var = jnp.mean((x - mu) ** 2, axis=-1, keepdims=True)
  x = ((x - mu) * jax.lax.rsqrt(var + EPS)).astype(jnp.bfloat16)

  def mm(a_bf16, w_ref):
    # MXU matmul: bf16 operands (weights pre-cast in the wrapper), f32 accumulation.
    return jnp.dot(a_bf16, w_ref[...], preferred_element_type=jnp.float32)

  def batchnorm(h, g_ref, b_ref):
    # training-mode BatchNorm1d, single pass: biased per-channel stats over all
    # (compacted) rows, applied as one fused h*scale + shift.
    mean = jnp.mean(h, axis=0, keepdims=True)
    var = jnp.maximum(jnp.mean(h * h, axis=0, keepdims=True) - mean * mean, 0.0)
    scale = jax.lax.rsqrt(var + EPS) * g_ref[...]          # (1, C)
    shift = b_ref[...] - mean * scale                      # (1, C)
    return h * scale + shift

  def prelu(h, a):
    return jnp.where(h >= 0, h, a * h)

  def maxpool3(h):
    # MaxPool1d(3) + 3x row compaction: rows are base-3 digit-major so the three
    # pooling phases are contiguous row blocks (pure VPU max, no XLU gathers).
    r3 = h.shape[0] // 3
    return jnp.maximum(jnp.maximum(h[:r3], h[r3:2 * r3]), h[2 * r3:])

  def resblock(h_bf, w1_ref, w2_ref, g1_ref, b1_ref, g2_ref, b2_ref, a1, a2,
               wd_ref=None):
    # h_bf is already bf16: one cast feeds both the conv1 and the downsample matmul.
    res = h_bf if wd_ref is None else mm(h_bf, wd_ref)
    y = mm(h_bf, w1_ref)
    y = prelu(batchnorm(y, g1_ref, b1_ref), a1).astype(jnp.bfloat16)
    y = mm(y, w2_ref)
    y = prelu(batchnorm(y, g2_ref, b2_ref) + res, a2)
    return maxpool3(y).astype(jnp.bfloat16)

  # ---- Conv1D(80 -> 256, k=1, bias) ----
  h = (mm(x, c0_w_ref) + c0_b_ref[...]).astype(jnp.bfloat16)

  h = resblock(h, r1_w1_ref, r1_w2_ref, r1_g1_ref, r1_b1_ref, r1_g2_ref, r1_b2_ref,
               alpha_ref[0], alpha_ref[1])
  h = resblock(h, r2_w1_ref, r2_w2_ref, r2_g1_ref, r2_b1_ref, r2_g2_ref, r2_b2_ref,
               alpha_ref[2], alpha_ref[3], wd_ref=r2_wd_ref)
  h = resblock(h, r3_w1_ref, r3_w2_ref, r3_g1_ref, r3_b1_ref, r3_g2_ref, r3_b2_ref,
               alpha_ref[4], alpha_ref[5])

  # ---- final Conv1D(512 -> 256, k=1, bias) ----
  y = mm(h, cf_w_ref) + cf_b_ref[...]                      # (N * t_final, 256) f32

  # ---- torch.sum(x, -1): rows are batch-major (n, w) after the third pool ----
  out_ref[...] = jnp.sum(y.reshape(n_batch, t_final, y.shape[-1]), axis=1)


def init_params(key, mel_freq=MEL_FREQ, out_dim=EMB_DIM):
  ks = iter(jax.random.split(key, 40))

  def nrm(shape, scale=0.05):
    return (scale * jax.random.normal(next(ks), shape)).astype(jnp.float32)

  def resblock_params(cin, cout, downsample):
    p = {
        "w1": nrm((cin, cout)), "w2": nrm((cout, cout)),
        "g1": 1.0 + nrm((1, cout), 0.1), "b1": nrm((1, cout), 0.1),
        "g2": 1.0 + nrm((1, cout), 0.1), "b2": nrm((1, cout), 0.1),
    }
    if downsample:
      p["wd"] = nrm((cin, cout))
    return p

  return {
      "ln_w": 1.0 + nrm((1, mel_freq), 0.1), "ln_b": nrm((1, mel_freq), 0.1),
      "c0_w": nrm((mel_freq, 256)), "c0_b": nrm((1, 256)),
      "r1": resblock_params(256, 256, False),
      "r2": resblock_params(256, 512, True),
      "r3": resblock_params(512, 512, False),
      "cf_w": nrm((512, out_dim)), "cf_b": nrm((1, out_dim)),
      # 6 PReLU slopes (nn.PReLU default init = 0.25), read from SMEM as scalars
      "alphas": jnp.full((6,), 0.25, dtype=jnp.float32),
  }


def mel_speaker_encoder(mel, params):
  """mel: (N, 80, T) float32 (PyTorch NCT layout). Returns (N, 256)."""
  n, c, t = mel.shape
  assert c == MEL_FREQ
  assert t % 27 == 0, "T must be divisible by 27 (three MaxPool1d(3) stages)"
  t_f = t // 27
  rows = n * t

  # Base-3 digit-major row permutation (t = 27*w + 9*p3 + 3*p2 + p1):
  #   row = p1*(R/3) + p2*(R/9) + p3*(R/27) + n*t_f + w
  # so each MaxPool1d(3) in the kernel is a max of three contiguous row blocks and the
  # fully-compacted rows end up batch-major for the final per-batch time sum.
  # (For best layout keep N*T a multiple of 216 so each block stays 8-sublane aligned.)
  x = jnp.transpose(mel, (0, 2, 1)).reshape(n, t_f, 3, 3, 3, c)
  x2d = jnp.transpose(x, (4, 3, 2, 0, 1, 5)).reshape(rows, c).astype(jnp.float32)

  # Fold ChannelWiseLayerNorm affine (ln_w, ln_b) into the first conv:
  #   (x_norm * w + b) @ W + c == x_norm @ (diag(w) W) + (b W + c)
  ln_w = params["ln_w"].reshape(MEL_FREQ, 1)
  ln_b = params["ln_b"].reshape(1, MEL_FREQ)
  c0_w = ln_w * params["c0_w"]
  c0_b = params["c0_b"] + ln_b @ params["c0_w"]

  def bf16(w):
    return w.astype(jnp.bfloat16)

  flat_inputs = [
      x2d, params["alphas"],
      bf16(c0_w), c0_b,
      bf16(params["r1"]["w1"]), bf16(params["r1"]["w2"]),
      params["r1"]["g1"], params["r1"]["b1"], params["r1"]["g2"], params["r1"]["b2"],
      bf16(params["r2"]["w1"]), bf16(params["r2"]["w2"]), bf16(params["r2"]["wd"]),
      params["r2"]["g1"], params["r2"]["b1"], params["r2"]["g2"], params["r2"]["b2"],
      bf16(params["r3"]["w1"]), bf16(params["r3"]["w2"]),
      params["r3"]["g1"], params["r3"]["b1"], params["r3"]["g2"], params["r3"]["b2"],
      bf16(params["cf_w"]), params["cf_b"],
  ]

  vmem = pl.BlockSpec(memory_space=pltpu.MemorySpace.VMEM)
  smem = pl.BlockSpec(memory_space=pltpu.MemorySpace.SMEM)
  in_specs = [vmem, smem] + [vmem] * (len(flat_inputs) - 2)

  # Generation-aware VMEM budget: physical capacity minus headroom (128 MiB on v5e/v6e,
  # 64 MiB per TensorCore on v7x); never below the common 32 MiB scoped default.
  try:
    vmem_cap = pltpu.get_tpu_info().vmem_capacity_bytes
  except Exception:  # conservative fallback if the query is unavailable
    vmem_cap = 64 * 1024 * 1024
  vmem_bytes = int(max(32 * 1024 * 1024, vmem_cap - 16 * 1024 * 1024))

  # Advisory cost estimate so XLA schedules the surrounding transpose/reshape sensibly.
  flops = (2 * rows * MEL_FREQ * 256                                  # conv0
           + 2 * rows * 2 * 256 * 256                                 # resblock 1
           + 2 * (rows // 3) * (256 * 512 + 512 * 512 + 256 * 512)    # resblock 2 (+down)
           + 2 * (rows // 9) * 2 * 512 * 512                          # resblock 3
           + 2 * (rows // 27) * 512 * EMB_DIM)                        # final conv
  bytes_accessed = rows * MEL_FREQ * 4 + n * EMB_DIM * 4 + 2 * 1024 * 1024  # + weights

  kernel = functools.partial(_mel_spk_kernel, n_batch=n, t_final=t_f)
  return pl.pallas_call(
      kernel,
      out_shape=jax.ShapeDtypeStruct((n, EMB_DIM), jnp.float32),
      in_specs=in_specs,
      out_specs=vmem,
      compiler_params=pltpu.CompilerParams(vmem_limit_bytes=vmem_bytes),
      cost_estimate=pl.CostEstimate(flops=int(flops), transcendentals=0,
                                    bytes_accessed=int(bytes_accessed)),
  )(*flat_inputs)


if __name__ == "__main__":
  key = jax.random.PRNGKey(0)
  k_param, k_x = jax.random.split(key)
  params = init_params(k_param)

  # T divisible by 27; N*T = 216 keeps every pool block 8-sublane aligned.
  N, T = 2, 108
  mel = jax.random.normal(k_x, (N, MEL_FREQ, T), dtype=jnp.float32)

  out = mel_speaker_encoder(mel, params)
  out = jax.block_until_ready(out)
  assert out.shape == (N, EMB_DIM) and out.dtype == jnp.float32
  assert bool(jnp.all(jnp.isfinite(out)))
  print("KERNEL_OK")
</pallas_src>

<mosaic_0001>
module attributes {stable_mosaic.version = 11 : i64} {
  func.func @_mel_spk_kernel(%arg0: memref<216x80xf32, #tpu.memory_space<vmem>>, %arg1: memref<6xf32, #tpu.memory_space<smem>>, %arg2: memref<80x256xbf16, #tpu.memory_space<vmem>>, %arg3: memref<1x256xf32, #tpu.memory_space<vmem>>, %arg4: memref<256x256xbf16, #tpu.memory_space<vmem>>, %arg5: memref<256x256xbf16, #tpu.memory_space<vmem>>, %arg6: memref<1x256xf32, #tpu.memory_space<vmem>>, %arg7: memref<1x256xf32, #tpu.memory_space<vmem>>, %arg8: memref<1x256xf32, #tpu.memory_space<vmem>>, %arg9: memref<1x256xf32, #tpu.memory_space<vmem>>, %arg10: memref<256x512xbf16, #tpu.memory_space<vmem>>, %arg11: memref<512x512xbf16, #tpu.memory_space<vmem>>, %arg12: memref<256x512xbf16, #tpu.memory_space<vmem>>, %arg13: memref<1x512xf32, #tpu.memory_space<vmem>>, %arg14: memref<1x512xf32, #tpu.memory_space<vmem>>, %arg15: memref<1x512xf32, #tpu.memory_space<vmem>>, %arg16: memref<1x512xf32, #tpu.memory_space<vmem>>, %arg17: memref<512x512xbf16, #tpu.memory_space<vmem>>, %arg18: memref<512x512xbf16, #tpu.memory_space<vmem>>, %arg19: memref<1x512xf32, #tpu.memory_space<vmem>>, %arg20: memref<1x512xf32, #tpu.memory_space<vmem>>, %arg21: memref<1x512xf32, #tpu.memory_space<vmem>>, %arg22: memref<1x512xf32, #tpu.memory_space<vmem>>, %arg23: memref<512x256xbf16, #tpu.memory_space<vmem>>, %arg24: memref<1x256xf32, #tpu.memory_space<vmem>>, %arg25: memref<2x256xf32, #tpu.memory_space<vmem>>) attributes {dimension_semantics = [], scalar_prefetch = 0 : i64, scratch_operands = 0 : i64, tpu.core_type = #tpu.core_type<tc>} {
    %c0 = arith.constant 0 : index
    %c0_0 = arith.constant 0 : index
    %0 = vector.load %arg0[%c0, %c0_0] : memref<216x80xf32, #tpu.memory_space<vmem>>, vector<216x80xf32>
    %cst = arith.constant dense<0.000000e+00> : vector<216xf32>
    %1 = vector.multi_reduction <add>, %0, %cst [1] : vector<216x80xf32> to vector<216xf32>
    %2 = vector.shape_cast %1 : vector<216xf32> to vector<216x1xf32>
    %cst_1 = arith.constant 8.000000e+01 : f32
    %3 = vector.broadcast %cst_1 : f32 to vector<216x1xf32>
    %4 = arith.divf %2, %3 : vector<216x1xf32>
    %5 = vector.broadcast %4 : vector<216x1xf32> to vector<216x80xf32>
    %6 = arith.subf %0, %5 : vector<216x80xf32>
    %7 = arith.mulf %6, %6 : vector<216x80xf32>
    %cst_2 = arith.constant dense<0.000000e+00> : vector<216xf32>
    %8 = vector.multi_reduction <add>, %7, %cst_2 [1] : vector<216x80xf32> to vector<216xf32>
    %9 = vector.shape_cast %8 : vector<216xf32> to vector<216x1xf32>
    %cst_3 = arith.constant 8.000000e+01 : f32
    %10 = vector.broadcast %cst_3 : f32 to vector<216x1xf32>
    %11 = arith.divf %9, %10 : vector<216x1xf32>
    %12 = vector.broadcast %4 : vector<216x1xf32> to vector<216x80xf32>
    %13 = arith.subf %0, %12 : vector<216x80xf32>
    %cst_4 = arith.constant 9.99999974E-6 : f32
    %14 = vector.broadcast %cst_4 : f32 to vector<216x1xf32>
    %15 = arith.addf %11, %14 : vector<216x1xf32>
    %16 = math.rsqrt %15 : vector<216x1xf32>
    %17 = vector.broadcast %16 : vector<216x1xf32> to vector<216x80xf32>
    %18 = arith.mulf %13, %17 : vector<216x80xf32>
    %19 = arith.truncf %18 : vector<216x80xf32> to vector<216x80xbf16>
    %c0_5 = arith.constant 0 : index
    %c0_6 = arith.constant 0 : index
    %20 = vector.load %arg2[%c0_5, %c0_6] : memref<80x256xbf16, #tpu.memory_space<vmem>>, vector<80x256xbf16>
    %cst_7 = arith.constant dense<0.000000e+00> : vector<216x256xf32>
    %21 = tpu.matmul %19, %20, %cst_7 {dimension_numbers = #tpu.dot_dimension_numbers<[1], [0], [0], [1], [0, 0, 1, 1], [], []>} : vector<216x80xbf16>, vector<80x256xbf16>, vector<216x256xf32> -> vector<216x256xf32>
    %c0_8 = arith.constant 0 : index
    %c0_9 = arith.constant 0 : index
    %22 = vector.load %arg3[%c0_8, %c0_9] : memref<1x256xf32, #tpu.memory_space<vmem>>, vector<1x256xf32>
    %23 = vector.broadcast %22 : vector<1x256xf32> to vector<216x256xf32>
    %24 = arith.addf %21, %23 : vector<216x256xf32>
    %25 = arith.truncf %24 : vector<216x256xf32> to vector<216x256xbf16>
    %c0_10 = arith.constant 0 : index
    %26 = memref.load %arg1[%c0_10] : memref<6xf32, #tpu.memory_space<smem>>
    %c1 = arith.constant 1 : index
    %27 = memref.load %arg1[%c1] : memref<6xf32, #tpu.memory_space<smem>>
    %c0_11 = arith.constant 0 : index
    %c0_12 = arith.constant 0 : index
    %28 = vector.load %arg4[%c0_11, %c0_12] : memref<256x256xbf16, #tpu.memory_space<vmem>>, vector<256x256xbf16>
    %cst_13 = arith.constant dense<0.000000e+00> : vector<216x256xf32>
    %29 = tpu.matmul %25, %28, %cst_13 {dimension_numbers = #tpu.dot_dimension_numbers<[1], [0], [0], [1], [0, 0, 1, 1], [], []>} : vector<216x256xbf16>, vector<256x256xbf16>, vector<216x256xf32> -> vector<216x256xf32>
    %cst_14 = arith.constant dense<0.000000e+00> : vector<256xf32>
    %30 = vector.multi_reduction <add>, %29, %cst_14 [0] : vector<216x256xf32> to vector<256xf32>
    %31 = vector.shape_cast %30 : vector<256xf32> to vector<1x256xf32>
    %cst_15 = arith.constant 2.160000e+02 : f32
    %32 = vector.broadcast %cst_15 : f32 to vector<1x256xf32>
    %33 = arith.divf %31, %32 : vector<1x256xf32>
    %34 = arith.mulf %29, %29 : vector<216x256xf32>
    %cst_16 = arith.constant dense<0.000000e+00> : vector<256xf32>
    %35 = vector.multi_reduction <add>, %34, %cst_16 [0] : vector<216x256xf32> to vector<256xf32>
    %36 = vector.shape_cast %35 : vector<256xf32> to vector<1x256xf32>
    %cst_17 = arith.constant 2.160000e+02 : f32
    %37 = vector.broadcast %cst_17 : f32 to vector<1x256xf32>
    %38 = arith.divf %36, %37 : vector<1x256xf32>
    %39 = arith.mulf %33, %33 : vector<1x256xf32>
    %40 = arith.subf %38, %39 : vector<1x256xf32>
    %cst_18 = arith.constant 0.000000e+00 : f32
    %41 = vector.broadcast %cst_18 : f32 to vector<1x256xf32>
    %42 = arith.maximumf %40, %41 : vector<1x256xf32>
    %cst_19 = arith.constant 9.99999974E-6 : f32
    %43 = vector.broadcast %cst_19 : f32 to vector<1x256xf32>
    %44 = arith.addf %42, %43 : vector<1x256xf32>
    %45 = math.rsqrt %44 : vector<1x256xf32>
    %c0_20 = arith.constant 0 : index
    %c0_21 = arith.constant 0 : index
    %46 = vector.load %arg6[%c0_20, %c0_21] : memref<1x256xf32, #tpu.memory_space<vmem>>, vector<1x256xf32>
    %47 = arith.mulf %45, %46 : vector<1x256xf32>
    %c0_22 = arith.constant 0 : index
    %c0_23 = arith.constant 0 : index
    %48 = vector.load %arg7[%c0_22, %c0_23] : memref<1x256xf32, #tpu.memory_space<vmem>>, vector<1x256xf32>
    %49 = arith.mulf %33, %47 : vector<1x256xf32>
    %50 = arith.subf %48, %49 : vector<1x256xf32>
    %51 = vector.broadcast %47 : vector<1x256xf32> to vector<216x256xf32>
    %52 = arith.mulf %29, %51 : vector<216x256xf32>
    %53 = vector.broadcast %50 : vector<1x256xf32> to vector<216x256xf32>
    %54 = arith.addf %52, %53 : vector<216x256xf32>
    %cst_24 = arith.constant 0.000000e+00 : f32
    %55 = vector.broadcast %cst_24 : f32 to vector<216x256xf32>
    %56 = arith.cmpf oge, %54, %55 : vector<216x256xf32>
    %57 = vector.broadcast %26 : f32 to vector<216x256xf32>
    %58 = arith.mulf %57, %54 : vector<216x256xf32>
    %59 = arith.select %56, %54, %58 : vector<216x256xi1>, vector<216x256xf32>
    %60 = arith.truncf %59 : vector<216x256xf32> to vector<216x256xbf16>
    %c0_25 = arith.constant 0 : index
    %c0_26 = arith.constant 0 : index
    %61 = vector.load %arg5[%c0_25, %c0_26] : memref<256x256xbf16, #tpu.memory_space<vmem>>, vector<256x256xbf16>
    %cst_27 = arith.constant dense<0.000000e+00> : vector<216x256xf32>
    %62 = tpu.matmul %60, %61, %cst_27 {dimension_numbers = #tpu.dot_dimension_numbers<[1], [0], [0], [1], [0, 0, 1, 1], [], []>} : vector<216x256xbf16>, vector<256x256xbf16>, vector<216x256xf32> -> vector<216x256xf32>
    %cst_28 = arith.constant dense<0.000000e+00> : vector<256xf32>
    %63 = vector.multi_reduction <add>, %62, %cst_28 [0] : vector<216x256xf32> to vector<256xf32>
    %64 = vector.shape_cast %63 : vector<256xf32> to vector<1x256xf32>
    %cst_29 = arith.constant 2.160000e+02 : f32
    %65 = vector.broadcast %cst_29 : f32 to vector<1x256xf32>
    %66 = arith.divf %64, %65 : vector<1x256xf32>
    %67 = arith.mulf %62, %62 : vector<216x256xf32>
    %cst_30 = arith.constant dense<0.000000e+00> : vector<256xf32>
    %68 = vector.multi_reduction <add>, %67, %cst_30 [0] : vector<216x256xf32> to vector<256xf32>
    %69 = vector.shape_cast %68 : vector<256xf32> to vector<1x256xf32>
    %cst_31 = arith.constant 2.160000e+02 : f32
    %70 = vector.broadcast %cst_31 : f32 to vector<1x256xf32>
    %71 = arith.divf %69, %70 : vector<1x256xf32>
    %72 = arith.mulf %66, %66 : vector<1x256xf32>
    %73 = arith.subf %71, %72 : vector<1x256xf32>
    %cst_32 = arith.constant 0.000000e+00 : f32
    %74 = vector.broadcast %cst_32 : f32 to vector<1x256xf32>
    %75 = arith.maximumf %73, %74 : vector<1x256xf32>
    %cst_33 = arith.constant 9.99999974E-6 : f32
    %76 = vector.broadcast %cst_33 : f32 to vector<1x256xf32>
    %77 = arith.addf %75, %76 : vector<1x256xf32>
    %78 = math.rsqrt %77 : vector<1x256xf32>
    %c0_34 = arith.constant 0 : index
    %c0_35 = arith.constant 0 : index
    %79 = vector.load %arg8[%c0_34, %c0_35] : memref<1x256xf32, #tpu.memory_space<vmem>>, vector<1x256xf32>
    %80 = arith.mulf %78, %79 : vector<1x256xf32>
    %c0_36 = arith.constant 0 : index
    %c0_37 = arith.constant 0 : index
    %81 = vector.load %arg9[%c0_36, %c0_37] : memref<1x256xf32, #tpu.memory_space<vmem>>, vector<1x256xf32>
    %82 = arith.mulf %66, %80 : vector<1x256xf32>
    %83 = arith.subf %81, %82 : vector<1x256xf32>
    %84 = vector.broadcast %80 : vector<1x256xf32> to vector<216x256xf32>
    %85 = arith.mulf %62, %84 : vector<216x256xf32>
    %86 = vector.broadcast %83 : vector<1x256xf32> to vector<216x256xf32>
    %87 = arith.addf %85, %86 : vector<216x256xf32>
    %88 = arith.extf %25 : vector<216x256xbf16> to vector<216x256xf32>
    %89 = arith.addf %87, %88 : vector<216x256xf32>
    %cst_38 = arith.constant 0.000000e+00 : f32
    %90 = vector.broadcast %cst_38 : f32 to vector<216x256xf32>
    %91 = arith.cmpf oge, %89, %90 : vector<216x256xf32>
    %92 = vector.broadcast %27 : f32 to vector<216x256xf32>
    %93 = arith.mulf %92, %89 : vector<216x256xf32>
    %94 = arith.select %91, %89, %93 : vector<216x256xi1>, vector<216x256xf32>
    %95 = vector.extract_strided_slice %94 {offsets = [0, 0], sizes = [72, 256], strides = [1, 1]} : vector<216x256xf32> to vector<72x256xf32>
    %96 = vector.extract_strided_slice %94 {offsets = [72, 0], sizes = [72, 256], strides = [1, 1]} : vector<216x256xf32> to vector<72x256xf32>
    %97 = arith.maximumf %95, %96 : vector<72x256xf32>
    %98 = vector.extract_strided_slice %94 {offsets = [144, 0], sizes = [72, 256], strides = [1, 1]} : vector<216x256xf32> to vector<72x256xf32>
    %99 = arith.maximumf %97, %98 : vector<72x256xf32>
    %100 = arith.truncf %99 : vector<72x256xf32> to vector<72x256xbf16>
    %c2 = arith.constant 2 : index
    %101 = memref.load %arg1[%c2] : memref<6xf32, #tpu.memory_space<smem>>
    %c3 = arith.constant 3 : index
    %102 = memref.load %arg1[%c3] : memref<6xf32, #tpu.memory_space<smem>>
    %c0_39 = arith.constant 0 : index
    %c0_40 = arith.constant 0 : index
    %103 = vector.load %arg12[%c0_39, %c0_40] : memref<256x512xbf16, #tpu.memory_space<vmem>>, vector<256x512xbf16>
    %cst_41 = arith.constant dense<0.000000e+00> : vector<72x512xf32>
    %104 = tpu.matmul %100, %103, %cst_41 {dimension_numbers = #tpu.dot_dimension_numbers<[1], [0], [0], [1], [0, 0, 1, 1], [], []>} : vector<72x256xbf16>, vector<256x512xbf16>, vector<72x512xf32> -> vector<72x512xf32>
    %c0_42 = arith.constant 0 : index
    %c0_43 = arith.constant 0 : index
    %105 = vector.load %arg10[%c0_42, %c0_43] : memref<256x512xbf16, #tpu.memory_space<vmem>>, vector<256x512xbf16>
    %cst_44 = arith.constant dense<0.000000e+00> : vector<72x512xf32>
    %106 = tpu.matmul %100, %105, %cst_44 {dimension_numbers = #tpu.dot_dimension_numbers<[1], [0], [0], [1], [0, 0, 1, 1], [], []>} : vector<72x256xbf16>, vector<256x512xbf16>, vector<72x512xf32> -> vector<72x512xf32>
    %cst_45 = arith.constant dense<0.000000e+00> : vector<512xf32>
    %107 = vector.multi_reduction <add>, %106, %cst_45 [0] : vector<72x512xf32> to vector<512xf32>
    %108 = vector.shape_cast %107 : vector<512xf32> to vector<1x512xf32>
    %cst_46 = arith.constant 7.200000e+01 : f32
    %109 = vector.broadcast %cst_46 : f32 to vector<1x512xf32>
    %110 = arith.divf %108, %109 : vector<1x512xf32>
    %111 = arith.mulf %106, %106 : vector<72x512xf32>
    %cst_47 = arith.constant dense<0.000000e+00> : vector<512xf32>
    %112 = vector.multi_reduction <add>, %111, %cst_47 [0] : vector<72x512xf32> to vector<512xf32>
    %113 = vector.shape_cast %112 : vector<512xf32> to vector<1x512xf32>
    %cst_48 = arith.constant 7.200000e+01 : f32
    %114 = vector.broadcast %cst_48 : f32 to vector<1x512xf32>
    %115 = arith.divf %113, %114 : vector<1x512xf32>
    %116 = arith.mulf %110, %110 : vector<1x512xf32>
    %117 = arith.subf %115, %116 : vector<1x512xf32>
    %cst_49 = arith.constant 0.000000e+00 : f32
    %118 = vector.broadcast %cst_49 : f32 to vector<1x512xf32>
    %119 = arith.maximumf %117, %118 : vector<1x512xf32>
    %cst_50 = arith.constant 9.99999974E-6 : f32
    %120 = vector.broadcast %cst_50 : f32 to vector<1x512xf32>
    %121 = arith.addf %119, %120 : vector<1x512xf32>
    %122 = math.rsqrt %121 : vector<1x512xf32>
    %c0_51 = arith.constant 0 : index
    %c0_52 = arith.constant 0 : index
    %123 = vector.load %arg13[%c0_51, %c0_52] : memref<1x512xf32, #tpu.memory_space<vmem>>, vector<1x512xf32>
    %124 = arith.mulf %122, %123 : vector<1x512xf32>
    %c0_53 = arith.constant 0 : index
    %c0_54 = arith.constant 0 : index
    %125 = vector.load %arg14[%c0_53, %c0_54] : memref<1x512xf32, #tpu.memory_space<vmem>>, vector<1x512xf32>
    %126 = arith.mulf %110, %124 : vector<1x512xf32>
    %127 = arith.subf %125, %126 : vector<1x512xf32>
    %128 = vector.broadcast %124 : vector<1x512xf32> to vector<72x512xf32>
    %129 = arith.mulf %106, %128 : vector<72x512xf32>
    %130 = vector.broadcast %127 : vector<1x512xf32> to vector<72x512xf32>
    %131 = arith.addf %129, %130 : vector<72x512xf32>
    %cst_55 = arith.constant 0.000000e+00 : f32
    %132 = vector.broadcast %cst_55 : f32 to vector<72x512xf32>
    %133 = arith.cmpf oge, %131, %132 : vector<72x512xf32>
    %134 = vector.broadcast %101 : f32 to vector<72x512xf32>
    %135 = arith.mulf %134, %131 : vector<72x512xf32>
    %136 = arith.select %133, %131, %135 : vector<72x512xi1>, vector<72x512xf32>
    %137 = arith.truncf %136 : vector<72x512xf32> to vector<72x512xbf16>
    %c0_56 = arith.constant 0 : index
    %c0_57 = arith.constant 0 : index
    %138 = vector.load %arg11[%c0_56, %c0_57] : memref<512x512xbf16, #tpu.memory_space<vmem>>, vector<512x512xbf16>
    %cst_58 = arith.constant dense<0.000000e+00> : vector<72x512xf32>
    %139 = tpu.matmul %137, %138, %cst_58 {dimension_numbers = #tpu.dot_dimension_numbers<[1], [0], [0], [1], [0, 0, 1, 1], [], []>} : vector<72x512xbf16>, vector<512x512xbf16>, vector<72x512xf32> -> vector<72x512xf32>
    %cst_59 = arith.constant dense<0.000000e+00> : vector<512xf32>
    %140 = vector.multi_reduction <add>, %139, %cst_59 [0] : vector<72x512xf32> to vector<512xf32>
    %141 = vector.shape_cast %140 : vector<512xf32> to vector<1x512xf32>
    %cst_60 = arith.constant 7.200000e+01 : f32
    %142 = vector.broadcast %cst_60 : f32 to vector<1x512xf32>
    %143 = arith.divf %141, %142 : vector<1x512xf32>
    %144 = arith.mulf %139, %139 : vector<72x512xf32>
    %cst_61 = arith.constant dense<0.000000e+00> : vector<512xf32>
    %145 = vector.multi_reduction <add>, %144, %cst_61 [0] : vector<72x512xf32> to vector<512xf32>
    %146 = vector.shape_cast %145 : vector<512xf32> to vector<1x512xf32>
    %cst_62 = arith.constant 7.200000e+01 : f32
    %147 = vector.broadcast %cst_62 : f32 to vector<1x512xf32>
    %148 = arith.divf %146, %147 : vector<1x512xf32>
    %149 = arith.mulf %143, %143 : vector<1x512xf32>
    %150 = arith.subf %148, %149 : vector<1x512xf32>
    %cst_63 = arith.constant 0.000000e+00 : f32
    %151 = vector.broadcast %cst_63 : f32 to vector<1x512xf32>
    %152 = arith.maximumf %150, %151 : vector<1x512xf32>
    %cst_64 = arith.constant 9.99999974E-6 : f32
    %153 = vector.broadcast %cst_64 : f32 to vector<1x512xf32>
    %154 = arith.addf %152, %153 : vector<1x512xf32>
    %155 = math.rsqrt %154 : vector<1x512xf32>
    %c0_65 = arith.constant 0 : index
    %c0_66 = arith.constant 0 : index
    %156 = vector.load %arg15[%c0_65, %c0_66] : memref<1x512xf32, #tpu.memory_space<vmem>>, vector<1x512xf32>
    %157 = arith.mulf %155, %156 : vector<1x512xf32>
    %c0_67 = arith.constant 0 : index
    %c0_68 = arith.constant 0 : index
    %158 = vector.load %arg16[%c0_67, %c0_68] : memref<1x512xf32, #tpu.memory_space<vmem>>, vector<1x512xf32>
    %159 = arith.mulf %143, %157 : vector<1x512xf32>
    %160 = arith.subf %158, %159 : vector<1x512xf32>
    %161 = vector.broadcast %157 : vector<1x512xf32> to vector<72x512xf32>
    %162 = arith.mulf %139, %161 : vector<72x512xf32>
    %163 = vector.broadcast %160 : vector<1x512xf32> to vector<72x512xf32>
    %164 = arith.addf %162, %163 : vector<72x512xf32>
    %165 = arith.addf %164, %104 : vector<72x512xf32>
    %cst_69 = arith.constant 0.000000e+00 : f32
    %166 = vector.broadcast %cst_69 : f32 to vector<72x512xf32>
    %167 = arith.cmpf oge, %165, %166 : vector<72x512xf32>
    %168 = vector.broadcast %102 : f32 to vector<72x512xf32>
    %169 = arith.mulf %168, %165 : vector<72x512xf32>
    %170 = arith.select %167, %165, %169 : vector<72x512xi1>, vector<72x512xf32>
    %171 = vector.extract_strided_slice %170 {offsets = [0, 0], sizes = [24, 512], strides = [1, 1]} : vector<72x512xf32> to vector<24x512xf32>
    %172 = vector.extract_strided_slice %170 {offsets = [24, 0], sizes = [24, 512], strides = [1, 1]} : vector<72x512xf32> to vector<24x512xf32>
    %173 = arith.maximumf %171, %172 : vector<24x512xf32>
    %174 = vector.extract_strided_slice %170 {offsets = [48, 0], sizes = [24, 512], strides = [1, 1]} : vector<72x512xf32> to vector<24x512xf32>
    %175 = arith.maximumf %173, %174 : vector<24x512xf32>
    %176 = arith.truncf %175 : vector<24x512xf32> to vector<24x512xbf16>
    %c4 = arith.constant 4 : index
    %177 = memref.load %arg1[%c4] : memref<6xf32, #tpu.memory_space<smem>>
    %c5 = arith.constant 5 : index
    %178 = memref.load %arg1[%c5] : memref<6xf32, #tpu.memory_space<smem>>
    %c0_70 = arith.constant 0 : index
    %c0_71 = arith.constant 0 : index
    %179 = vector.load %arg17[%c0_70, %c0_71] : memref<512x512xbf16, #tpu.memory_space<vmem>>, vector<512x512xbf16>
    %cst_72 = arith.constant dense<0.000000e+00> : vector<24x512xf32>
    %180 = tpu.matmul %176, %179, %cst_72 {dimension_numbers = #tpu.dot_dimension_numbers<[1], [0], [0], [1], [0, 0, 1, 1], [], []>} : vector<24x512xbf16>, vector<512x512xbf16>, vector<24x512xf32> -> vector<24x512xf32>
    %cst_73 = arith.constant dense<0.000000e+00> : vector<512xf32>
    %181 = vector.multi_reduction <add>, %180, %cst_73 [0] : vector<24x512xf32> to vector<512xf32>
    %182 = vector.shape_cast %181 : vector<512xf32> to vector<1x512xf32>
    %cst_74 = arith.constant 2.400000e+01 : f32
    %183 = vector.broadcast %cst_74 : f32 to vector<1x512xf32>
    %184 = arith.divf %182, %183 : vector<1x512xf32>
    %185 = arith.mulf %180, %180 : vector<24x512xf32>
    %cst_75 = arith.constant dense<0.000000e+00> : vector<512xf32>
    %186 = vector.multi_reduction <add>, %185, %cst_75 [0] : vector<24x512xf32> to vector<512xf32>
    %187 = vector.shape_cast %186 : vector<512xf32> to vector<1x512xf32>
    %cst_76 = arith.constant 2.400000e+01 : f32
    %188 = vector.broadcast %cst_76 : f32 to vector<1x512xf32>
    %189 = arith.divf %187, %188 : vector<1x512xf32>
    %190 = arith.mulf %184, %184 : vector<1x512xf32>
    %191 = arith.subf %189, %190 : vector<1x512xf32>
    %cst_77 = arith.constant 0.000000e+00 : f32
    %192 = vector.broadcast %cst_77 : f32 to vector<1x512xf32>
    %193 = arith.maximumf %191, %192 : vector<1x512xf32>
    %cst_78 = arith.constant 9.99999974E-6 : f32
    %194 = vector.broadcast %cst_78 : f32 to vector<1x512xf32>
    %195 = arith.addf %193, %194 : vector<1x512xf32>
    %196 = math.rsqrt %195 : vector<1x512xf32>
    %c0_79 = arith.constant 0 : index
    %c0_80 = arith.constant 0 : index
    %197 = vector.load %arg19[%c0_79, %c0_80] : memref<1x512xf32, #tpu.memory_space<vmem>>, vector<1x512xf32>
    %198 = arith.mulf %196, %197 : vector<1x512xf32>
    %c0_81 = arith.constant 0 : index
    %c0_82 = arith.constant 0 : index
    %199 = vector.load %arg20[%c0_81, %c0_82] : memref<1x512xf32, #tpu.memory_space<vmem>>, vector<1x512xf32>
    %200 = arith.mulf %184, %198 : vector<1x512xf32>
    %201 = arith.subf %199, %200 : vector<1x512xf32>
    %202 = vector.broadcast %198 : vector<1x512xf32> to vector<24x512xf32>
    %203 = arith.mulf %180, %202 : vector<24x512xf32>
    %204 = vector.broadcast %201 : vector<1x512xf32> to vector<24x512xf32>
    %205 = arith.addf %203, %204 : vector<24x512xf32>
    %cst_83 = arith.constant 0.000000e+00 : f32
    %206 = vector.broadcast %cst_83 : f32 to vector<24x512xf32>
    %207 = arith.cmpf oge, %205, %206 : vector<24x512xf32>
    %208 = vector.broadcast %177 : f32 to vector<24x512xf32>
    %209 = arith.mulf %208, %205 : vector<24x512xf32>
    %210 = arith.select %207, %205, %209 : vector<24x512xi1>, vector<24x512xf32>
    %211 = arith.truncf %210 : vector<24x512xf32> to vector<24x512xbf16>
    %c0_84 = arith.constant 0 : index
    %c0_85 = arith.constant 0 : index
    %212 = vector.load %arg18[%c0_84, %c0_85] : memref<512x512xbf16, #tpu.memory_space<vmem>>, vector<512x512xbf16>
    %cst_86 = arith.constant dense<0.000000e+00> : vector<24x512xf32>
    %213 = tpu.matmul %211, %212, %cst_86 {dimension_numbers = #tpu.dot_dimension_numbers<[1], [0], [0], [1], [0, 0, 1, 1], [], []>} : vector<24x512xbf16>, vector<512x512xbf16>, vector<24x512xf32> -> vector<24x512xf32>
    %cst_87 = arith.constant dense<0.000000e+00> : vector<512xf32>
    %214 = vector.multi_reduction <add>, %213, %cst_87 [0] : vector<24x512xf32> to vector<512xf32>
    %215 = vector.shape_cast %214 : vector<512xf32> to vector<1x512xf32>
    %cst_88 = arith.constant 2.400000e+01 : f32
    %216 = vector.broadcast %cst_88 : f32 to vector<1x512xf32>
    %217 = arith.divf %215, %216 : vector<1x512xf32>
    %218 = arith.mulf %213, %213 : vector<24x512xf32>
    %cst_89 = arith.constant dense<0.000000e+00> : vector<512xf32>
    %219 = vector.multi_reduction <add>, %218, %cst_89 [0] : vector<24x512xf32> to vector<512xf32>
    %220 = vector.shape_cast %219 : vector<512xf32> to vector<1x512xf32>
    %cst_90 = arith.constant 2.400000e+01 : f32
    %221 = vector.broadcast %cst_90 : f32 to vector<1x512xf32>
    %222 = arith.divf %220, %221 : vector<1x512xf32>
    %223 = arith.mulf %217, %217 : vector<1x512xf32>
    %224 = arith.subf %222, %223 : vector<1x512xf32>
    %cst_91 = arith.constant 0.000000e+00 : f32
    %225 = vector.broadcast %cst_91 : f32 to vector<1x512xf32>
    %226 = arith.maximumf %224, %225 : vector<1x512xf32>
    %cst_92 = arith.constant 9.99999974E-6 : f32
    %227 = vector.broadcast %cst_92 : f32 to vector<1x512xf32>
    %228 = arith.addf %226, %227 : vector<1x512xf32>
    %229 = math.rsqrt %228 : vector<1x512xf32>
    %c0_93 = arith.constant 0 : index
    %c0_94 = arith.constant 0 : index
    %230 = vector.load %arg21[%c0_93, %c0_94] : memref<1x512xf32, #tpu.memory_space<vmem>>, vector<1x512xf32>
    %231 = arith.mulf %229, %230 : vector<1x512xf32>
    %c0_95 = arith.constant 0 : index
    %c0_96 = arith.constant 0 : index
    %232 = vector.load %arg22[%c0_95, %c0_96] : memref<1x512xf32, #tpu.memory_space<vmem>>, vector<1x512xf32>
    %233 = arith.mulf %217, %231 : vector<1x512xf32>
    %234 = arith.subf %232, %233 : vector<1x512xf32>
    %235 = vector.broadcast %231 : vector<1x512xf32> to vector<24x512xf32>
    %236 = arith.mulf %213, %235 : vector<24x512xf32>
    %237 = vector.broadcast %234 : vector<1x512xf32> to vector<24x512xf32>
    %238 = arith.addf %236, %237 : vector<24x512xf32>
    %239 = arith.extf %176 : vector<24x512xbf16> to vector<24x512xf32>
    %240 = arith.addf %238, %239 : vector<24x512xf32>
    %cst_97 = arith.constant 0.000000e+00 : f32
    %241 = vector.broadcast %cst_97 : f32 to vector<24x512xf32>
    %242 = arith.cmpf oge, %240, %241 : vector<24x512xf32>
    %243 = vector.broadcast %178 : f32 to vector<24x512xf32>
    %244 = arith.mulf %243, %240 : vector<24x512xf32>
    %245 = arith.select %242, %240, %244 : vector<24x512xi1>, vector<24x512xf32>
    %246 = vector.extract_strided_slice %245 {offsets = [0, 0], sizes = [8, 512], strides = [1, 1]} : vector<24x512xf32> to vector<8x512xf32>
    %247 = vector.extract_strided_slice %245 {offsets = [8, 0], sizes = [8, 512], strides = [1, 1]} : vector<24x512xf32> to vector<8x512xf32>
    %248 = arith.maximumf %246, %247 : vector<8x512xf32>
    %249 = vector.extract_strided_slice %245 {offsets = [16, 0], sizes = [8, 512], strides = [1, 1]} : vector<24x512xf32> to vector<8x512xf32>
    %250 = arith.maximumf %248, %249 : vector<8x512xf32>
    %251 = arith.truncf %250 : vector<8x512xf32> to vector<8x512xbf16>
    %c0_98 = arith.constant 0 : index
    %c0_99 = arith.constant 0 : index
    %252 = vector.load %arg23[%c0_98, %c0_99] : memref<512x256xbf16, #tpu.memory_space<vmem>>, vector<512x256xbf16>
    %cst_100 = arith.constant dense<0.000000e+00> : vector<8x256xf32>
    %253 = tpu.matmul %251, %252, %cst_100 {dimension_numbers = #tpu.dot_dimension_numbers<[1], [0], [0], [1], [0, 0, 1, 1], [], []>} : vector<8x512xbf16>, vector<512x256xbf16>, vector<8x256xf32> -> vector<8x256xf32>
    %c0_101 = arith.constant 0 : index
    %c0_102 = arith.constant 0 : index
    %254 = vector.load %arg24[%c0_101, %c0_102] : memref<1x256xf32, #tpu.memory_space<vmem>>, vector<1x256xf32>
    %255 = vector.broadcast %254 : vector<1x256xf32> to vector<8x256xf32>
    %256 = arith.addf %253, %255 : vector<8x256xf32>
    %257 = vector.shape_cast %256 : vector<8x256xf32> to vector<2x4x256xf32>
    %cst_103 = arith.constant dense<0.000000e+00> : vector<2x256xf32>
    %258 = vector.multi_reduction <add>, %257, %cst_103 [1] : vector<2x4x256xf32> to vector<2x256xf32>
    %c0_104 = arith.constant 0 : index
    %c0_105 = arith.constant 0 : index
    %259 = vector.load %arg25[%c0_104, %c0_105] : memref<2x256xf32, #tpu.memory_space<vmem>>, vector<2x256xf32>
    tpu.vector_store %arg25[%c0_104, %c0_105], %258 {strides = array<i32>} : memref<2x256xf32, #tpu.memory_space<vmem>>, vector<2x256xf32>,
    return
  }
}

</mosaic_0001>

<llo_original>
// kernel: tpu_custom_call.1
$region0: #{tpu_custom_call.1}
  #allocation0 [shape = 'u32[]', space=smem, size = 0x4, offset = 0x4, fixed_abs, tag = 'smem constant byte address 0x4 - core index']
  #allocation1 [shape = 'u32[144,128]{1,0:T(1,128)}', space=vmem, size = 0x12000, scoped, tag = 'internal scratch']
  %s0 = inlined_call_operand.vmem [shape: f32[216,80], index: 0, kind: input, shape index: {}]
  %s1 = inlined_call_operand.vmem [shape: f32[6], index: 1, kind: input, shape index: {}]
  %s2 = inlined_call_operand.vmem [shape: bf16[80,256], index: 2, kind: input, shape index: {}]
  %s3 = inlined_call_operand.vmem [shape: f32[1,256], index: 3, kind: input, shape index: {}]
  %s4 = inlined_call_operand.vmem [shape: bf16[256,256], index: 4, kind: input, shape index: {}]
  %s5 = inlined_call_operand.hbm [shape: bf16[256,256], index: 5, kind: input, shape index: {}]
  %s6 = inlined_call_operand.vmem [shape: f32[1,256], index: 6, kind: input, shape index: {}]
  %s7 = inlined_call_operand.vmem [shape: f32[1,256], index: 7, kind: input, shape index: {}]
  %s8 = inlined_call_operand.vmem [shape: f32[1,256], index: 8, kind: input, shape index: {}]
  %s9 = inlined_call_operand.vmem [shape: f32[1,256], index: 9, kind: input, shape index: {}]
  %s10 = inlined_call_operand.hbm [shape: bf16[256,512], index: 10, kind: input, shape index: {}]
  %s11 = inlined_call_operand.hbm [shape: bf16[512,512], index: 11, kind: input, shape index: {}]
  %s12 = inlined_call_operand.hbm [shape: bf16[256,512], index: 12, kind: input, shape index: {}]
  %s13 = inlined_call_operand.vmem [shape: f32[1,512], index: 13, kind: input, shape index: {}]
  %s14 = inlined_call_operand.vmem [shape: f32[1,512], index: 14, kind: input, shape index: {}]
  %s15 = inlined_call_operand.vmem [shape: f32[1,512], index: 15, kind: input, shape index: {}]
  %s16 = inlined_call_operand.vmem [shape: f32[1,512], index: 16, kind: input, shape index: {}]
  %s17 = inlined_call_operand.hbm [shape: bf16[512,512], index: 17, kind: input, shape index: {}]
  %s18 = inlined_call_operand.hbm [shape: bf16[512,512], index: 18, kind: input, shape index: {}]
  %s19 = inlined_call_operand.vmem [shape: f32[1,512], index: 19, kind: input, shape index: {}]
  %s20 = inlined_call_operand.vmem [shape: f32[1,512], index: 20, kind: input, shape index: {}]
  %s21 = inlined_call_operand.vmem [shape: f32[1,512], index: 21, kind: input, shape index: {}]
  %s22 = inlined_call_operand.vmem [shape: f32[1,512], index: 22, kind: input, shape index: {}]
  %s23 = inlined_call_operand.hbm [shape: bf16[512,256], index: 23, kind: input, shape index: {}]
  %s24 = inlined_call_operand.vmem [shape: f32[1,256], index: 24, kind: input, shape index: {}]
  %s25 = inlined_call_operand.hbm [shape: f32[2,256], index: 25, kind: output, shape index: {}]
  %s26 = sld [smem:[#allocation0]]
  $region142: #{tpu_custom_call.1} parent=0
    _
  %s28 = ssub.s32 1, %s26
  %s29 = scalar_select 0, %s28, %s26
  $region1: #{tpu_custom_call.1} parent=0
    #allocation2 [shape = 'u8[512]{0}', space=smem, size = 0x200, scoped, tag = 'input window, operand 1, single buffered']
    #allocation3 [shape = 's32[1]{0}', space=sflag, size = 0x4, scoped, tag = 'scoped memory for tpu_custom_call.1']
    #allocation4 [shape = 's32[1]{0}', space=sflag, size = 0x4, scoped, tag = 'scoped memory for tpu_custom_call.1']
    #allocation5 [shape = 's32[1]{0}', space=sflag, size = 0x4, scoped, tag = 'scoped memory for tpu_custom_call.1']
    #allocation6 [shape = 'u8[131072]{0}', space=vmem, size = 0x20000, scoped, tag = 'input window, operand 5, single buffered']
    #allocation7 [shape = 'u8[262144]{0}', space=vmem, size = 0x40000, scoped, tag = 'input window, operand 10, single buffered']
    #allocation8 [shape = 's32[1]{0}', space=sflag, size = 0x4, scoped, tag = 'scoped memory for tpu_custom_call.1']
    #allocation9 [shape = 'u8[524288]{0}', space=vmem, size = 0x80000, scoped, tag = 'input window, operand 11, single buffered']
    #allocation10 [shape = 'u8[262144]{0}', space=vmem, size = 0x40000, scoped, tag = 'input window, operand 12, single buffered']
    #allocation11 [shape = 's32[1]{0}', space=sflag, size = 0x4, scoped, tag = 'scoped memory for tpu_custom_call.1']
    #allocation12 [shape = 'u8[524288]{0}', space=vmem, size = 0x80000, scoped, tag = 'input window, operand 17, single buffered']
    #allocation13 [shape = 'u8[524288]{0}', space=vmem, size = 0x80000, scoped, tag = 'input window, operand 18, single buffered']
    #allocation14 [shape = 's32[1]{0}', space=sflag, size = 0x4, scoped, tag = 'scoped memory for tpu_custom_call.1']
    #allocation15 [shape = 'u8[262144]{0}', space=vmem, size = 0x40000, scoped, tag = 'input window, operand 23, single buffered']
    #allocation16 [shape = 'u8[2048]{0}', space=vmem, size = 0x800, scoped, tag = 'output window, operand 0, single buffered']
    %30 = vsyncpa [#allocation5], 0
    %31 = vsyncpa [#allocation3], 0
    %32 = vsyncpa [#allocation8], 0
    %33 = vsyncpa [#allocation11], 0
    %34 = vsyncpa [#allocation14], 0
    %35 = vsyncpa [#allocation4], 0
    // Predicated region
    $region2: #{tpu_custom_call.1} parent=1 // pred_check
      _
    $region3: #{tpu_custom_call.1} parent=1 // pred_check_branch
      %37 = sbr.rel (0) target = $region5
    $region4: #{tpu_custom_call.1} parent=1 // pred_region
      _
    $region5: #{tpu_custom_call.1} parent=1 // pred_fallthru
      _
    // Predicated region
    $region6: #{tpu_custom_call.1} parent=1 // pred_check
      _
    $region7: #{tpu_custom_call.1} parent=1 // pred_check_branch
      %39 = sbr.rel (0) target = $region9
    $region8: #{tpu_custom_call.1} parent=1 // pred_region
      %s41 = ssub.s32 16, 16
      %42 = vsyncadd [#allocation5], %s41
      %s44 = sshll.u32 %s1, 4
      %s45 = int_to_ptr.vmem [resolvable:$true] %s44
      %47 = dma.vmem_to_smem %s45, 16, [#allocation2], [#allocation5]
    $region9: #{tpu_custom_call.1} parent=1 // pred_fallthru
      _
    // Predicated region
    $region10: #{tpu_custom_call.1} parent=1 // pred_check
      _
    $region11: #{tpu_custom_call.1} parent=1 // pred_check_branch
      %49 = sbr.rel (0) target = $region13
    $region12: #{tpu_custom_call.1} parent=1 // pred_region
      _
    $region13: #{tpu_custom_call.1} parent=1 // pred_fallthru
      _
    // Predicated region
    $region14: #{tpu_custom_call.1} parent=1 // pred_check
      _
    $region15: #{tpu_custom_call.1} parent=1 // pred_check_branch
      %51 = sbr.rel (0) target = $region17
    $region16: #{tpu_custom_call.1} parent=1 // pred_region
      _
    $region17: #{tpu_custom_call.1} parent=1 // pred_fallthru
      _
    // Predicated region
    $region18: #{tpu_custom_call.1} parent=1 // pred_check
      _
    $region19: #{tpu_custom_call.1} parent=1 // pred_check_branch
      %53 = sbr.rel (0) target = $region21
    $region20: #{tpu_custom_call.1} parent=1 // pred_region
      _
    $region21: #{tpu_custom_call.1} parent=1 // pred_fallthru
      _
    // Predicated region
    $region22: #{tpu_custom_call.1} parent=1 // pred_check
      _
    $region23: #{tpu_custom_call.1} parent=1 // pred_check_branch
      %55 = sbr.rel (0) target = $region25
    $region24: #{tpu_custom_call.1} parent=1 // pred_region
      %s57 = ssub.s32 4096, 4096
      %58 = vsyncadd [#allocation3], %s57
      %s59 = sshll.u32 [#allocation6], 4
      %s60 = int_to_ptr.vmem [resolvable:$true] %s59
      %65 = dma.hbm_to_vmem [thread:$0]  %s5, 4096, %s60, [#allocation3], 128, 128, 8
    $region25: #{tpu_custom_call.1} parent=1 // pred_fallthru
      _
    // Predicated region
    $region26: #{tpu_custom_call.1} parent=1 // pred_check
      _
    $region27: #{tpu_custom_call.1} parent=1 // pred_check_branch
      %67 = sbr.rel (0) target = $region29
    $region28: #{tpu_custom_call.1} parent=1 // pred_region
      _
    $region29: #{tpu_custom_call.1} parent=1 // pred_fallthru
      _
    // Predicated region
    $region30: #{tpu_custom_call.1} parent=1 // pred_check
      _
    $region31: #{tpu_custom_call.1} parent=1 // pred_check_branch
      %69 = sbr.rel (0) target = $region33
    $region32: #{tpu_custom_call.1} parent=1 // pred_region
      _
    $region33: #{tpu_custom_call.1} parent=1 // pred_fallthru
      _
    // Predicated region
    $region34: #{tpu_custom_call.1} parent=1 // pred_check
      _
    $region35: #{tpu_custom_call.1} parent=1 // pred_check_branch
      %71 = sbr.rel (0) target = $region37
    $region36: #{tpu_custom_call.1} parent=1 // pred_region
      _
    $region37: #{tpu_custom_call.1} parent=1 // pred_fallthru
      _
    // Predicated region
    $region38: #{tpu_custom_call.1} parent=1 // pred_check
      _
    $region39: #{tpu_custom_call.1} parent=1 // pred_check_branch
      %73 = sbr.rel (0) target = $region41
    $region40: #{tpu_custom_call.1} parent=1 // pred_region
      _
    $region41: #{tpu_custom_call.1} parent=1 // pred_fallthru
      _
    // Predicated region
    $region42: #{tpu_custom_call.1} parent=1 // pred_check
      _
    $region43: #{tpu_custom_call.1} parent=1 // pred_check_branch
      %75 = sbr.rel (0) target = $region45
    $region44: #{tpu_custom_call.1} parent=1 // pred_region
      %s77 = ssub.s32 8192, 8192
      %78 = vsyncadd [#allocation8], %s77
      %s79 = sshll.u32 [#allocation7], 4
      %s80 = int_to_ptr.vmem [resolvable:$true] %s79
      %85 = dma.hbm_to_vmem [thread:$0]  %s10, 8192, %s80, [#allocation8], 256, 256, 16
    $region45: #{tpu_custom_call.1} parent=1 // pred_fallthru
      _
    // Predicated region
    $region46: #{tpu_custom_call.1} parent=1 // pred_check
      _
    $region47: #{tpu_custom_call.1} parent=1 // pred_check_branch
      %87 = sbr.rel (0) target = $region49
    $region48: #{tpu_custom_call.1} parent=1 // pred_region
      %s89 = ssub.s32 16384, 16384
      %90 = vsyncadd [#allocation8], %s89
      %s91 = sshll.u32 [#allocation9], 4
      %s92 = int_to_ptr.vmem [resolvable:$true] %s91
      %97 = dma.hbm_to_vmem [thread:$0]  %s11, 16384, %s92, [#allocation8], 256, 256, 16
    $region49: #{tpu_custom_call.1} parent=1 // pred_fallthru
      _
    // Predicated region
    $region50: #{tpu_custom_call.1} parent=1 // pred_check
      _
    $region51: #{tpu_custom_call.1} parent=1 // pred_check_branch
      %99 = sbr.rel (0) target = $region53
    $region52: #{tpu_custom_call.1} parent=1 // pred_region
      %s101 = ssub.s32 8192, 8192
      %102 = vsyncadd [#allocation11], %s101
      %s103 = sshll.u32 [#allocation10], 4
      %s104 = int_to_ptr.vmem [resolvable:$true] %s103
      %109 = dma.hbm_to_vmem [thread:$0]  %s12, 8192, %s104, [#allocation11], 256, 256, 16
    $region53: #{tpu_custom_call.1} parent=1 // pred_fallthru
      _
    // Predicated region
    $region54: #{tpu_custom_call.1} parent=1 // pred_check
      _
    $region55: #{tpu_custom_call.1} parent=1 // pred_check_branch
      %111 = sbr.rel (0) target = $region57
    $region56: #{tpu_custom_call.1} parent=1 // pred_region
      _
    $region57: #{tpu_custom_call.1} parent=1 // pred_fallthru
      _
    // Predicated region
    $region58: #{tpu_custom_call.1} parent=1 // pred_check
      _
    $region59: #{tpu_custom_call.1} parent=1 // pred_check_branch
      %113 = sbr.rel (0) target = $region61
    $region60: #{tpu_custom_call.1} parent=1 // pred_region
      _
    $region61: #{tpu_custom_call.1} parent=1 // pred_fallthru
      _
    // Predicated region
    $region62: #{tpu_custom_call.1} parent=1 // pred_check
      _
    $region63: #{tpu_custom_call.1} parent=1 // pred_check_branch
      %115 = sbr.rel (0) target = $region65
    $region64: #{tpu_custom_call.1} parent=1 // pred_region
      _
    $region65: #{tpu_custom_call.1} parent=1 // pred_fallthru
      _
    // Predicated region
    $region66: #{tpu_custom_call.1} parent=1 // pred_check
      _
    $region67: #{tpu_custom_call.1} parent=1 // pred_check_branch
      %117 = sbr.rel (0) target = $region69
    $region68: #{tpu_custom_call.1} parent=1 // pred_region
      _
    $region69: #{tpu_custom_call.1} parent=1 // pred_fallthru
      _
    // Predicated region
    $region70: #{tpu_custom_call.1} parent=1 // pred_check
      _
    $region71: #{tpu_custom_call.1} parent=1 // pred_check_branch
      %119 = sbr.rel (0) target = $region73
    $region72: #{tpu_custom_call.1} parent=1 // pred_region
      %s121 = ssub.s32 16384, 16384
      %122 = vsyncadd [#allocation11], %s121
      %s123 = sshll.u32 [#allocation12], 4
      %s124 = int_to_ptr.vmem [resolvable:$true] %s123
      %129 = dma.hbm_to_vmem [thread:$0]  %s17, 16384, %s124, [#allocation11], 256, 256, 16
    $region73: #{tpu_custom_call.1} parent=1 // pred_fallthru
      _
    // Predicated region
    $region74: #{tpu_custom_call.1} parent=1 // pred_check
      _
    $region75: #{tpu_custom_call.1} parent=1 // pred_check_branch
      %131 = sbr.rel (0) target = $region77
    $region76: #{tpu_custom_call.1} parent=1 // pred_region
      %s133 = ssub.s32 16384, 16384
      %134 = vsyncadd [#allocation14], %s133
      %s135 = sshll.u32 [#allocation13], 4
      %s136 = int_to_ptr.vmem [resolvable:$true] %s135
      %141 = dma.hbm_to_vmem [thread:$0]  %s18, 16384, %s136, [#allocation14], 256, 256, 16
    $region77: #{tpu_custom_call.1} parent=1 // pred_fallthru
      _
    // Predicated region
    $region78: #{tpu_custom_call.1} parent=1 // pred_check
      _
    $region79: #{tpu_custom_call.1} parent=1 // pred_check_branch
      %143 = sbr.rel (0) target = $region81
    $region80: #{tpu_custom_call.1} parent=1 // pred_region
      _
    $region81: #{tpu_custom_call.1} parent=1 // pred_fallthru
      _
    // Predicated region
    $region82: #{tpu_custom_call.1} parent=1 // pred_check
      _
    $region83: #{tpu_custom_call.1} parent=1 // pred_check_branch
      %145 = sbr.rel (0) target = $region85
    $region84: #{tpu_custom_call.1} parent=1 // pred_region
      _
    $region85: #{tpu_custom_call.1} parent=1 // pred_fallthru
      _
    // Predicated region
    $region86: #{tpu_custom_call.1} parent=1 // pred_check
      _
    $region87: #{tpu_custom_call.1} parent=1 // pred_check_branch
      %147 = sbr.rel (0) target = $region89
    $region88: #{tpu_custom_call.1} parent=1 // pred_region
      _
    $region89: #{tpu_custom_call.1} parent=1 // pred_fallthru
      _
    // Predicated region
    $region90: #{tpu_custom_call.1} parent=1 // pred_check
      _
    $region91: #{tpu_custom_call.1} parent=1 // pred_check_branch
      %149 = sbr.rel (0) target = $region93
    $region92: #{tpu_custom_call.1} parent=1 // pred_region
      _
    $region93: #{tpu_custom_call.1} parent=1 // pred_fallthru
      _
    // Predicated region
    $region94: #{tpu_custom_call.1} parent=1 // pred_check
      _
    $region95: #{tpu_custom_call.1} parent=1 // pred_check_branch
      %151 = sbr.rel (0) target = $region97
    $region96: #{tpu_custom_call.1} parent=1 // pred_region
      %s153 = ssub.s32 8192, 8192
      %154 = vsyncadd [#allocation14], %s153
      %s155 = sshll.u32 [#allocation15], 4
      %s156 = int_to_ptr.vmem [resolvable:$true] %s155
      %161 = dma.hbm_to_vmem [thread:$0]  %s23, 8192, %s156, [#allocation14], 128, 128, 8
    $region97: #{tpu_custom_call.1} parent=1 // pred_fallthru
      _
    // Predicated region
    $region98: #{tpu_custom_call.1} parent=1 // pred_check
      _
    $region99: #{tpu_custom_call.1} parent=1 // pred_check_branch
      %163 = sbr.rel (0) target = $region101
    $region100: #{tpu_custom_call.1} parent=1 // pred_region
      _
    $region101: #{tpu_custom_call.1} parent=1 // pred_fallthru
      _
    // Predicated region
    $region102: #{tpu_custom_call.1} parent=1 // pred_check
      _
    $region103: #{tpu_custom_call.1} parent=1 // pred_check_branch
      %165 = sbr.rel (0) target = $region105
    $region104: #{tpu_custom_call.1} parent=1 // pred_region
      %166 = dma.done [#allocation5], 16
    $region105: #{tpu_custom_call.1} parent=1 // pred_fallthru
      _
    // Predicated region
    $region106: #{tpu_custom_call.1} parent=1 // pred_check
      _
    $region107: #{tpu_custom_call.1} parent=1 // pred_check_branch
      %168 = sbr.rel (0) target = $region109
    $region108: #{tpu_custom_call.1} parent=1 // pred_region
      %169 = dma.done [#allocation3], 4096
    $region109: #{tpu_custom_call.1} parent=1 // pred_fallthru
      _
    // Predicated region
    $region110: #{tpu_custom_call.1} parent=1 // pred_check
      _
    $region111: #{tpu_custom_call.1} parent=1 // pred_check_branch
      %171 = sbr.rel (0) target = $region113
    $region112: #{tpu_custom_call.1} parent=1 // pred_region
      %172 = dma.done [#allocation8], 8192
    $region113: #{tpu_custom_call.1} parent=1 // pred_fallthru
      _
    // Predicated region
    $region114: #{tpu_custom_call.1} parent=1 // pred_check
      _
    $region115: #{tpu_custom_call.1} parent=1 // pred_check_branch
      %174 = sbr.rel (0) target = $region117
    $region116: #{tpu_custom_call.1} parent=1 // pred_region
      %175 = dma.done [#allocation8], 16384
    $region117: #{tpu_custom_call.1} parent=1 // pred_fallthru
      _
    // Predicated region
    $region118: #{tpu_custom_call.1} parent=1 // pred_check
      _
    $region119: #{tpu_custom_call.1} parent=1 // pred_check_branch
      %177 = sbr.rel (0) target = $region121
    $region120: #{tpu_custom_call.1} parent=1 // pred_region
      %178 = dma.done [#allocation11], 8192
    $region121: #{tpu_custom_call.1} parent=1 // pred_fallthru
      _
    // Predicated region
    $region122: #{tpu_custom_call.1} parent=1 // pred_check
      _
    $region123: #{tpu_custom_call.1} parent=1 // pred_check_branch
      %180 = sbr.rel (0) target = $region125
    $region124: #{tpu_custom_call.1} parent=1 // pred_region
      %181 = dma.done [#allocation11], 16384
    $region125: #{tpu_custom_call.1} parent=1 // pred_fallthru
      _
    // Predicated region
    $region126: #{tpu_custom_call.1} parent=1 // pred_check
      _
    $region127: #{tpu_custom_call.1} parent=1 // pred_check_branch
      %183 = sbr.rel (0) target = $region129
    $region128: #{tpu_custom_call.1} parent=1 // pred_region
      %184 = dma.done [#allocation14], 16384
    $region129: #{tpu_custom_call.1} parent=1 // pred_fallthru
      _
    // Predicated region
    $region130: #{tpu_custom_call.1} parent=1 // pred_check
      _
    $region131: #{tpu_custom_call.1} parent=1 // pred_check_branch
      %186 = sbr.rel (0) target = $region133
    $region132: #{tpu_custom_call.1} parent=1 // pred_region
      %187 = dma.done [#allocation14], 8192
    $region133: #{tpu_custom_call.1} parent=1 // pred_fallthru
      _
    %188 = sfence
    %v190 = vld [vmem:[%s0] sm:$0xff]
    %v191 = vld [vmem:[%s0 + $0x8] sm:$0xff]
    %v192 = vld [vmem:[%s0 + $0x10] sm:$0xff]
    %v193 = vld [vmem:[%s0 + $0x18] sm:$0xff]
    %v194 = vld [vmem:[%s0 + $0x20] sm:$0xff]
    %v195 = vld [vmem:[%s0 + $0x28] sm:$0xff]
    %v196 = vld [vmem:[%s0 + $0x30] sm:$0xff]
    %v197 = vld [vmem:[%s0 + $0x38] sm:$0xff]
    %v198 = vld [vmem:[%s0 + $0x40] sm:$0xff]
    %v199 = vld [vmem:[%s0 + $0x48] sm:$0xff]
    %v200 = vld [vmem:[%s0 + $0x50] sm:$0xff]
    %v201 = vld [vmem:[%s0 + $0x58] sm:$0xff]
    %v202 = vld [vmem:[%s0 + $0x60] sm:$0xff]
    %v203 = vld [vmem:[%s0 + $0x68] sm:$0xff]
    %v204 = vld [vmem:[%s0 + $0x70] sm:$0xff]
    %v205 = vld [vmem:[%s0 + $0x78] sm:$0xff]
    %v206 = vld [vmem:[%s0 + $0x80] sm:$0xff]
    %v207 = vld [vmem:[%s0 + $0x88] sm:$0xff]
    %v208 = vld [vmem:[%s0 + $0x90] sm:$0xff]
    %v209 = vld [vmem:[%s0 + $0x98] sm:$0xff]
    %v210 = vld [vmem:[%s0 + $0xa0] sm:$0xff]
    %v211 = vld [vmem:[%s0 + $0xa8] sm:$0xff]
    %v212 = vld [vmem:[%s0 + $0xb0] sm:$0xff]
    %v213 = vld [vmem:[%s0 + $0xb8] sm:$0xff]
    %v214 = vld [vmem:[%s0 + $0xc0] sm:$0xff]
    %v215 = vld [vmem:[%s0 + $0xc8] sm:$0xff]
    %v216 = vld [vmem:[%s0 + $0xd0] sm:$0xff]
    %vm217 = vcmask 654336
    %v218 = vsel %vm217, %v190, 0.0
    %219 = vadd.xlane.f32.xlu0 %v218
    %v220 = vpop.xlane.xlu0 %219
    %v221 = vsel %vm217, %v191, 0.0
    %222 = vadd.xlane.f32.xlu0 %v221
    %v223 = vpop.xlane.xlu0 %222
    %v224 = vsel %vm217, %v192, 0.0
    %225 = vadd.xlane.f32.xlu0 %v224
    %v226 = vpop.xlane.xlu0 %225
    %v227 = vsel %vm217, %v193, 0.0
    %228 = vadd.xlane.f32.xlu0 %v227
    %v229 = vpop.xlane.xlu0 %228
    %v230 = vsel %vm217, %v194, 0.0
    %231 = vadd.xlane.f32.xlu0 %v230
    %v232 = vpop.xlane.xlu0 %231
    %v233 = vsel %vm217, %v195, 0.0
    %234 = vadd.xlane.f32.xlu0 %v233
    %v235 = vpop.xlane.xlu0 %234
    %v236 = vsel %vm217, %v196, 0.0
    %237 = vadd.xlane.f32.xlu0 %v236
    %v238 = vpop.xlane.xlu0 %237
    %v239 = vsel %vm217, %v197, 0.0
    %240 = vadd.xlane.f32.xlu0 %v239
    %v241 = vpop.xlane.xlu0 %240
    %v242 = vsel %vm217, %v198, 0.0
    %243 = vadd.xlane.f32.xlu0 %v242
    %v244 = vpop.xlane.xlu0 %243
    %v245 = vsel %vm217, %v199, 0.0
    %246 = vadd.xlane.f32.xlu0 %v245
    %v247 = vpop.xlane.xlu0 %246
    %v248 = vsel %vm217, %v200, 0.0
    %249 = vadd.xlane.f32.xlu0 %v248
    %v250 = vpop.xlane.xlu0 %249
    %v251 = vsel %vm217, %v201, 0.0
    %252 = vadd.xlane.f32.xlu0 %v251
    %v253 = vpop.xlane.xlu0 %252
    %v254 = vsel %vm217, %v202, 0.0
    %255 = vadd.xlane.f32.xlu0 %v254
    %v256 = vpop.xlane.xlu0 %255
    %v257 = vsel %vm217, %v203, 0.0
    %258 = vadd.xlane.f32.xlu0 %v257
    %v259 = vpop.xlane.xlu0 %258
    %v260 = vsel %vm217, %v204, 0.0
    %261 = vadd.xlane.f32.xlu0 %v260
    %v262 = vpop.xlane.xlu0 %261
    %v263 = vsel %vm217, %v205, 0.0
    %264 = vadd.xlane.f32.xlu0 %v263
    %v265 = vpop.xlane.xlu0 %264
    %v266 = vsel %vm217, %v206, 0.0
    %267 = vadd.xlane.f32.xlu0 %v266
    %v268 = vpop.xlane.xlu0 %267
    %v269 = vsel %vm217, %v207, 0.0
    %270 = vadd.xlane.f32.xlu0 %v269
    %v271 = vpop.xlane.xlu0 %270
    %v272 = vsel %vm217, %v208, 0.0
    %273 = vadd.xlane.f32.xlu0 %v272
    %v274 = vpop.xlane.xlu0 %273
    %v275 = vsel %vm217, %v209, 0.0
    %276 = vadd.xlane.f32.xlu0 %v275
    %v277 = vpop.xlane.xlu0 %276
    %v278 = vsel %vm217, %v210, 0.0
    %279 = vadd.xlane.f32.xlu0 %v278
    %v280 = vpop.xlane.xlu0 %279
    %v281 = vsel %vm217, %v211, 0.0
    %282 = vadd.xlane.f32.xlu0 %v281
    %v283 = vpop.xlane.xlu0 %282
    %v284 = vsel %vm217, %v212, 0.0
    %285 = vadd.xlane.f32.xlu0 %v284
    %v286 = vpop.xlane.xlu0 %285
    %v287 = vsel %vm217, %v213, 0.0
    %288 = vadd.xlane.f32.xlu0 %v287
    %v289 = vpop.xlane.xlu0 %288
    %v290 = vsel %vm217, %v214, 0.0
    %291 = vadd.xlane.f32.xlu0 %v290
    %v292 = vpop.xlane.xlu0 %291
    %v293 = vsel %vm217, %v215, 0.0
    %294 = vadd.xlane.f32.xlu0 %v293
    %v295 = vpop.xlane.xlu0 %294
    %v296 = vsel %vm217, %v216, 0.0
    %297 = vadd.xlane.f32.xlu0 %v296
    %v298 = vpop.xlane.xlu0 %297
    %v299 = vrcp.pop 80.0
    %v300 = vmul.f32 %v220, %v299
    %v301 = vmul.f32 %v223, %v299
    %v302 = vmul.f32 %v226, %v299
    %v303 = vmul.f32 %v229, %v299
    %v304 = vmul.f32 %v232, %v299
    %v305 = vmul.f32 %v235, %v299
    %v306 = vmul.f32 %v238, %v299
    %v307 = vmul.f32 %v241, %v299
    %v308 = vmul.f32 %v244, %v299
    %v309 = vmul.f32 %v247, %v299
    %v310 = vmul.f32 %v250, %v299
    %v311 = vmul.f32 %v253, %v299
    %v312 = vmul.f32 %v256, %v299
    %v313 = vmul.f32 %v259, %v299
    %v314 = vmul.f32 %v262, %v299
    %v315 = vmul.f32 %v265, %v299
    %v316 = vmul.f32 %v268, %v299
    %v317 = vmul.f32 %v271, %v299
    %v318 = vmul.f32 %v274, %v299
    %v319 = vmul.f32 %v277, %v299
    %v320 = vmul.f32 %v280, %v299
    %v321 = vmul.f32 %v283, %v299
    %v322 = vmul.f32 %v286, %v299
    %v323 = vmul.f32 %v289, %v299
    %v324 = vmul.f32 %v292, %v299
    %v325 = vmul.f32 %v295, %v299
    %v326 = vmul.f32 %v298, %v299
    %v327 = vsub.f32 %v190, %v300
    %v328 = vsub.f32 %v191, %v301
    %v329 = vsub.f32 %v192, %v302
    %v330 = vsub.f32 %v193, %v303
    %v331 = vsub.f32 %v194, %v304
    %v332 = vsub.f32 %v195, %v305
    %v333 = vsub.f32 %v196, %v306
    %v334 = vsub.f32 %v197, %v307
    %v335 = vsub.f32 %v198, %v308
    %v336 = vsub.f32 %v199, %v309
    %v337 = vsub.f32 %v200, %v310
    %v338 = vsub.f32 %v201, %v311
    %v339 = vsub.f32 %v202, %v312
    %v340 = vsub.f32 %v203, %v313
    %v341 = vsub.f32 %v204, %v314
    %v342 = vsub.f32 %v205, %v315
    %v343 = vsub.f32 %v206, %v316
    %v344 = vsub.f32 %v207, %v317
    %v345 = vsub.f32 %v208, %v318
    %v346 = vsub.f32 %v209, %v319
    %v347 = vsub.f32 %v210, %v320
    %v348 = vsub.f32 %v211, %v321
    %v349 = vsub.f32 %v212, %v322
    %v350 = vsub.f32 %v213, %v323
    %v351 = vsub.f32 %v214, %v324
    %v352 = vsub.f32 %v215, %v325
    %v353 = vsub.f32 %v216, %v326
    %v354 = vmul.f32 %v327, %v327
    %v355 = vmul.f32 %v328, %v328
    %v356 = vmul.f32 %v329, %v329
    %v357 = vmul.f32 %v330, %v330
    %v358 = vmul.f32 %v331, %v331
    %v359 = vmul.f32 %v332, %v332
    %v360 = vmul.f32 %v333, %v333
    %v361 = vmul.f32 %v334, %v334
    %v362 = vmul.f32 %v335, %v335
    %v363 = vmul.f32 %v336, %v336
    %v364 = vmul.f32 %v337, %v337
    %v365 = vmul.f32 %v338, %v338
    %v366 = vmul.f32 %v339, %v339
    %v367 = vmul.f32 %v340, %v340
    %v368 = vmul.f32 %v341, %v341
    %v369 = vmul.f32 %v342, %v342
    %v370 = vmul.f32 %v343, %v343
    %v371 = vmul.f32 %v344, %v344
    %v372 = vmul.f32 %v345, %v345
    %v373 = vmul.f32 %v346, %v346
    %v374 = vmul.f32 %v347, %v347
    %v375 = vmul.f32 %v348, %v348
    %v376 = vmul.f32 %v349, %v349
    %v377 = vmul.f32 %v350, %v350
    %v378 = vmul.f32 %v351, %v351
    %v379 = vmul.f32 %v352, %v352
    %v380 = vmul.f32 %v353, %v353
    %v381 = vsel %vm217, %v354, 0.0
    %382 = vadd.xlane.f32.xlu0 %v381
    %v383 = vpop.xlane.xlu0 %382
    %v384 = vsel %vm217, %v355, 0.0
    %385 = vadd.xlane.f32.xlu0 %v384
    %v386 = vpop.xlane.xlu0 %385
    %v387 = vsel %vm217, %v356, 0.0
    %388 = vadd.xlane.f32.xlu0 %v387
    %v389 = vpop.xlane.xlu0 %388
    %v390 = vsel %vm217, %v357, 0.0
    %391 = vadd.xlane.f32.xlu0 %v390
    %v392 = vpop.xlane.xlu0 %391
    %v393 = vsel %vm217, %v358, 0.0
    %394 = vadd.xlane.f32.xlu0 %v393
    %v395 = vpop.xlane.xlu0 %394
    %v396 = vsel %vm217, %v359, 0.0
    %397 = vadd.xlane.f32.xlu0 %v396
    %v398 = vpop.xlane.xlu0 %397
    %v399 = vsel %vm217, %v360, 0.0
    %400 = vadd.xlane.f32.xlu0 %v399
    %v401 = vpop.xlane.xlu0 %400
    %v402 = vsel %vm217, %v361, 0.0
    %403 = vadd.xlane.f32.xlu0 %v402
    %v404 = vpop.xlane.xlu0 %403
    %v405 = vsel %vm217, %v362, 0.0
    %406 = vadd.xlane.f32.xlu0 %v405
    %v407 = vpop.xlane.xlu0 %406
    %v408 = vsel %vm217, %v363, 0.0
    %409 = vadd.xlane.f32.xlu0 %v408
    %v410 = vpop.xlane.xlu0 %409
    %v411 = vsel %vm217, %v364, 0.0
    %412 = vadd.xlane.f32.xlu0 %v411
    %v413 = vpop.xlane.xlu0 %412
    %v414 = vsel %vm217, %v365, 0.0
    %415 = vadd.xlane.f32.xlu0 %v414
    %v416 = vpop.xlane.xlu0 %415
    %v417 = vsel %vm217, %v366, 0.0
    %418 = vadd.xlane.f32.xlu0 %v417
    %v419 = vpop.xlane.xlu0 %418
    %v420 = vsel %vm217, %v367, 0.0
    %421 = vadd.xlane.f32.xlu0 %v420
    %v422 = vpop.xlane.xlu0 %421
    %v423 = vsel %vm217, %v368, 0.0
    %424 = vadd.xlane.f32.xlu0 %v423
    %v425 = vpop.xlane.xlu0 %424
    %v426 = vsel %vm217, %v369, 0.0
    %427 = vadd.xlane.f32.xlu0 %v426
    %v428 = vpop.xlane.xlu0 %427
    %v429 = vsel %vm217, %v370, 0.0
    %430 = vadd.xlane.f32.xlu0 %v429
    %v431 = vpop.xlane.xlu0 %430
    %v432 = vsel %vm217, %v371, 0.0
    %433 = vadd.xlane.f32.xlu0 %v432
    %v434 = vpop.xlane.xlu0 %433
    %v435 = vsel %vm217, %v372, 0.0
    %436 = vadd.xlane.f32.xlu0 %v435
    %v437 = vpop.xlane.xlu0 %436
    %v438 = vsel %vm217, %v373, 0.0
    %439 = vadd.xlane.f32.xlu0 %v438
    %v440 = vpop.xlane.xlu0 %439
    %v441 = vsel %vm217, %v374, 0.0
    %442 = vadd.xlane.f32.xlu0 %v441
    %v443 = vpop.xlane.xlu0 %442
    %v444 = vsel %vm217, %v375, 0.0
    %445 = vadd.xlane.f32.xlu0 %v444
    %v446 = vpop.xlane.xlu0 %445
    %v447 = vsel %vm217, %v376, 0.0
    %448 = vadd.xlane.f32.xlu0 %v447
    %v449 = vpop.xlane.xlu0 %448
    %v450 = vsel %vm217, %v377, 0.0
    %451 = vadd.xlane.f32.xlu0 %v450
    %v452 = vpop.xlane.xlu0 %451
    %v453 = vsel %vm217, %v378, 0.0
    %454 = vadd.xlane.f32.xlu0 %v453
    %v455 = vpop.xlane.xlu0 %454
    %v456 = vsel %vm217, %v379, 0.0
    %457 = vadd.xlane.f32.xlu0 %v456
    %v458 = vpop.xlane.xlu0 %457
    %v459 = vsel %vm217, %v380, 0.0
    %460 = vadd.xlane.f32.xlu0 %v459
    %v461 = vpop.xlane.xlu0 %460
    %v462 = vmul.f32 %v383, %v299
    %v463 = vmul.f32 %v386, %v299
    %v464 = vmul.f32 %v389, %v299
    %v465 = vmul.f32 %v392, %v299
    %v466 = vmul.f32 %v395, %v299
    %v467 = vmul.f32 %v398, %v299
    %v468 = vmul.f32 %v401, %v299
    %v469 = vmul.f32 %v404, %v299
    %v470 = vmul.f32 %v407, %v299
    %v471 = vmul.f32 %v410, %v299
    %v472 = vmul.f32 %v413, %v299
    %v473 = vmul.f32 %v416, %v299
    %v474 = vmul.f32 %v419, %v299
    %v475 = vmul.f32 %v422, %v299
    %v476 = vmul.f32 %v425, %v299
    %v477 = vmul.f32 %v428, %v299
    %v478 = vmul.f32 %v431, %v299
    %v479 = vmul.f32 %v434, %v299
    %v480 = vmul.f32 %v437, %v299
    %v481 = vmul.f32 %v440, %v299
    %v482 = vmul.f32 %v443, %v299
    %v483 = vmul.f32 %v446, %v299
    %v484 = vmul.f32 %v449, %v299
    %v485 = vmul.f32 %v452, %v299
    %v486 = vmul.f32 %v455, %v299
    %v487 = vmul.f32 %v458, %v299
    %v488 = vmul.f32 %v461, %v299
    %v489 = vadd.f32 %v462, 1e-05
    %v490 = vadd.f32 %v463, 1e-05
    %v491 = vadd.f32 %v464, 1e-05
    %v492 = vadd.f32 %v465, 1e-05
    %v493 = vadd.f32 %v466, 1e-05
    %v494 = vadd.f32 %v467, 1e-05
    %v495 = vadd.f32 %v468, 1e-05
    %v496 = vadd.f32 %v469, 1e-05
    %v497 = vadd.f32 %v470, 1e-05
    %v498 = vadd.f32 %v471, 1e-05
    %v499 = vadd.f32 %v472, 1e-05
    %v500 = vadd.f32 %v473, 1e-05
    %v501 = vadd.f32 %v474, 1e-05
    %v502 = vadd.f32 %v475, 1e-05
    %v503 = vadd.f32 %v476, 1e-05
    %v504 = vadd.f32 %v477, 1e-05
    %v505 = vadd.f32 %v478, 1e-05
    %v506 = vadd.f32 %v479, 1e-05
    %v507 = vadd.f32 %v480, 1e-05
    %v508 = vadd.f32 %v481, 1e-05
    %v509 = vadd.f32 %v482, 1e-05
    %v510 = vadd.f32 %v483, 1e-05
    %v511 = vadd.f32 %v484, 1e-05
    %v512 = vadd.f32 %v485, 1e-05
    %v513 = vadd.f32 %v486, 1e-05
    %v514 = vadd.f32 %v487, 1e-05
    %v515 = vadd.f32 %v488, 1e-05
    %v516 = vrsqrt.pop %v489
    %v517 = vrsqrt.pop %v490
    %v518 = vrsqrt.pop %v491
    %v519 = vrsqrt.pop %v492
    %v520 = vrsqrt.pop %v493
    %v521 = vrsqrt.pop %v494
    %v522 = vrsqrt.pop %v495
    %v523 = vrsqrt.pop %v496
    %v524 = vrsqrt.pop %v497
    %v525 = vrsqrt.pop %v498
    %v526 = vrsqrt.pop %v499
    %v527 = vrsqrt.pop %v500
    %v528 = vrsqrt.pop %v501
    %v529 = vrsqrt.pop %v502
    %v530 = vrsqrt.pop %v503
    %v531 = vrsqrt.pop %v504
    %v532 = vrsqrt.pop %v505
    %v533 = vrsqrt.pop %v506
    %v534 = vrsqrt.pop %v507
    %v535 = vrsqrt.pop %v508
    %v536 = vrsqrt.pop %v509
    %v537 = vrsqrt.pop %v510
    %v538 = vrsqrt.pop %v511
    %v539 = vrsqrt.pop %v512
    %v540 = vrsqrt.pop %v513
    %v541 = vrsqrt.pop %v514
    %v542 = vrsqrt.pop %v515
    %v543 = vmul.f32 %v327, %v516
    %v544 = vmul.f32 %v328, %v517
    %v545 = vmul.f32 %v329, %v518
    %v546 = vmul.f32 %v330, %v519
    %v547 = vmul.f32 %v331, %v520
    %v548 = vmul.f32 %v332, %v521
    %v549 = vmul.f32 %v333, %v522
    %v550 = vmul.f32 %v334, %v523
    %v551 = vmul.f32 %v335, %v524
    %v552 = vmul.f32 %v336, %v525
    %v553 = vmul.f32 %v337, %v526
    %v554 = vmul.f32 %v338, %v527
    %v555 = vmul.f32 %v339, %v528
    %v556 = vmul.f32 %v340, %v529
    %v557 = vmul.f32 %v341, %v530
    %v558 = vmul.f32 %v342, %v531
    %v559 = vmul.f32 %v343, %v532
    %v560 = vmul.f32 %v344, %v533
    %v561 = vmul.f32 %v345, %v534
    %v562 = vmul.f32 %v346, %v535
    %v563 = vmul.f32 %v347, %v536
    %v564 = vmul.f32 %v348, %v537
    %v565 = vmul.f32 %v349, %v538
    %v566 = vmul.f32 %v350, %v539
    %v567 = vmul.f32 %v351, %v540
    %v568 = vmul.f32 %v352, %v541
    %v569 = vmul.f32 %v353, %v542
    %v570 = vpack.c.bf16 %v544, %v543
    %v571 = vpack.c.bf16 %v546, %v545
    %v572 = vpack.c.bf16 %v548, %v547
    %v573 = vpack.c.bf16 %v550, %v549
    %v574 = vpack.c.bf16 %v552, %v551
    %v575 = vpack.c.bf16 %v554, %v553
    %v576 = vpack.c.bf16 %v556, %v555
    %v577 = vpack.c.bf16 %v558, %v557
    %v578 = vpack.c.bf16 %v560, %v559
    %v579 = vpack.c.bf16 %v562, %v561
    %v580 = vpack.c.bf16 %v564, %v563
    %v581 = vpack.c.bf16 %v566, %v565
    %v582 = vpack.c.bf16 %v568, %v567
    %v583 = vpack.c.bf16 %v569, %v569
    %v584 = vld [vmem:[%s2] sm:$0xff]
    %v585 = vld [vmem:[%s2 + $0x8] sm:$0xff]
    %v586 = vld [vmem:[%s2 + $0x10] sm:$0xff]
    %v587 = vld [vmem:[%s2 + $0x18] sm:$0xff]
    %v588 = vld [vmem:[%s2 + $0x20] sm:$0xff]
    %v589 = vld [vmem:[%s2 + $0x28] sm:$0xff]
    %v590 = vld [vmem:[%s2 + $0x30] sm:$0xff]
    %v591 = vld [vmem:[%s2 + $0x38] sm:$0xff]
    %v592 = vld [vmem:[%s2 + $0x40] sm:$0xff]
    %v593 = vld [vmem:[%s2 + $0x48] sm:$0xff]
    %v594 = vld [vmem:[%s3] sm:$0x3]
    %v596 = vlaneseq
    %v597 = vshrl.u32 %v596, 7
    %v598 = vsub.s32 0, %v597
    %v599 = vrot.slane %v594, %v598
    %v600 = vlaneseq
    %v601 = vshrl.u32 %v600, 7
    %v602 = vsub.s32 1, %v601
    %v603 = vrot.slane %v594, %v602
    %v616 = vunpack.c.l.b16 %v584
    %v617 = vunpack.c.h.b16 %v584
    %v618 = vunpack.c.l.b16 %v585
    %v619 = vunpack.c.h.b16 %v585
    %v620 = vunpack.c.l.b16 %v586
    %v621 = vunpack.c.h.b16 %v586
    %v622 = vunpack.c.l.b16 %v587
    %v623 = vunpack.c.h.b16 %v587
    %v624 = vunpack.c.l.b16 %v588
    %v625 = vunpack.c.h.b16 %v588
    %v626 = vunpack.c.l.b16 %v589
    %v627 = vunpack.c.h.b16 %v589
    %v628 = vunpack.c.l.b16 %v590
    %v629 = vunpack.c.h.b16 %v590
    %v630 = vunpack.c.l.b16 %v591
    %v631 = vunpack.c.h.b16 %v591
    %v632 = vunpack.c.l.b16 %v592
    %v633 = vunpack.c.h.b16 %v592
    %v634 = vunpack.c.l.b16 %v593
    %v635 = vunpack.c.h.b16 %v593
    %v636 = vpack.c.b16 %v618, %v616
    %v637 = vpack.c.b16 %v619, %v617
    %v638 = vpack.c.b16 %v622, %v620
    %v639 = vpack.c.b16 %v623, %v621
    %v640 = vpack.c.b16 %v626, %v624
    %v641 = vpack.c.b16 %v627, %v625
    %v642 = vpack.c.b16 %v630, %v628
    %v643 = vpack.c.b16 %v631, %v629
    %v644 = vpack.c.b16 %v634, %v632
    %v645 = vpack.c.b16 %v635, %v633
    %v657 = vsel %vm217, %v570, 0
    %v660 = vsel %vm217, %v571, 0
    %v663 = vsel %vm217, %v572, 0
    %v666 = vsel %vm217, %v573, 0
    %v669 = vsel %vm217, %v574, 0
    %v672 = vsel %vm217, %v575, 0
    %v675 = vsel %vm217, %v576, 0
    %v678 = vsel %vm217, %v577, 0
    %v681 = vsel %vm217, %v578, 0
    %v684 = vsel %vm217, %v579, 0
    %v687 = vsel %vm217, %v580, 0
    %v690 = vsel %vm217, %v581, 0
    %v693 = vsel %vm217, %v582, 0
    %v696 = vsel %vm217, %v583, 0
    %698 = vmatprep.subr.bf16.mxu0 0
    %699 = vmatpush1.bf16.msra.mxu0 0
    %700 = vmatprep.subr.bf16.mxu0 0
    %701 = vmatpush1.bf16.msra.mxu0 0
    %702 = vmatprep.subr.bf16.mxu0 0
    %703 = vmatpush1.bf16.msra.mxu0 0
    %704 = vmatprep.subr.bf16.mxu0 %v645
    %705 = vmatpush1.bf16.msra.mxu0 %v644
    %706 = vmatprep.subr.bf16.mxu0 %v643
    %707 = vmatpush1.bf16.msra.mxu0 %v642
    %708 = vmatprep.subr.bf16.mxu0 %v641
    %709 = vmatpush1.bf16.msra.mxu0 %v640
    %710 = vmatprep.subr.bf16.mxu0 %v639
    %711 = vmatpush1.bf16.msra.mxu0 %v638
    %712 = vmatprep.subr.bf16.mxu0 %v637
    %713 = vmatpush1.bf16.msra.mxu0 %v636
    %714 = vmatprep.subr.bf16.mxu0 0
    %715 = vmatpush2.bf16.msra.mxu0 0
    %716 = vmatprep.subr.bf16.mxu0 0
    %717 = vmatpush2.bf16.msra.mxu0 0
    %718 = vmatprep.subr.bf16.mxu0 0
    %719 = vmatpush2.bf16.msra.mxu0 0
    %720 = vmatprep.subr.bf16.mxu0 0
    %721 = vmatpush2.bf16.msra.mxu0 0
    %722 = vmatprep.subr.bf16.mxu0 0
    %723 = vmatpush2.bf16.msra.mxu0 0
    %724 = vmatprep.subr.bf16.mxu0 0
    %725 = vmatpush2.bf16.msra.mxu0 0
    %726 = vmatprep.subr.bf16.mxu0 0
    %727 = vmatpush2.bf16.msra.mxu0 0
    %728 = vmatprep.subr.bf16.mxu0 0
    %729 = vmatpush2.bf16.msra.mxu0 0
    %730 = vmatprep.mubr.bf16.mxu0 0
    %731 = vmatmul.mubr.bf16.gmra.mxu0 %v657
    %v732 = vpop.f32.mrf.mxu0
    %v733 = vadd.f32 %v599, %v732
    %v734 = vpop.f32.mrf.mxu0
    %v735 = vadd.f32 %v603, %v734
    %v736 = vpop.f32.mrf.mxu0
    %v737 = vadd.f32 %v599, %v736
    %v738 = vpop.f32.mrf.mxu0
    %v739 = vadd.f32 %v603, %v738
    %740 = vmatprep.mubr.bf16.mxu0 0
    %741 = vmatmul.mubr.bf16.gmra.mxu0 %v660
    %v742 = vpop.f32.mrf.mxu0
    %v743 = vadd.f32 %v599, %v742
    %v744 = vpop.f32.mrf.mxu0
    %v745 = vadd.f32 %v603, %v744
    %v746 = vpop.f32.mrf.mxu0
    %v747 = vadd.f32 %v599, %v746
    %v748 = vpop.f32.mrf.mxu0
    %v749 = vadd.f32 %v603, %v748
    %750 = vmatprep.mubr.bf16.mxu0 0
    %751 = vmatmul.mubr.bf16.gmra.mxu0 %v663
    %v752 = vpop.f32.mrf.mxu0
    %v753 = vadd.f32 %v599, %v752
    %v754 = vpop.f32.mrf.mxu0
    %v755 = vadd.f32 %v603, %v754
    %v756 = vpop.f32.mrf.mxu0
    %v757 = vadd.f32 %v599, %v756
    %v758 = vpop.f32.mrf.mxu0
    %v759 = vadd.f32 %v603, %v758
    %760 = vmatprep.mubr.bf16.mxu0 0
    %761 = vmatmul.mubr.bf16.gmra.mxu0 %v666
    %v762 = vpop.f32.mrf.mxu0
    %v763 = vadd.f32 %v599, %v762
    %v764 = vpop.f32.mrf.mxu0
    %v765 = vadd.f32 %v603, %v764
    %v766 = vpop.f32.mrf.mxu0
    %v767 = vadd.f32 %v599, %v766
    %v768 = vpop.f32.mrf.mxu0
    %v769 = vadd.f32 %v603, %v768
    %770 = vmatprep.mubr.bf16.mxu0 0
    %771 = vmatmul.mubr.bf16.gmra.mxu0 %v669
    %v772 = vpop.f32.mrf.mxu0
    %v773 = vadd.f32 %v599, %v772
    %v774 = vpop.f32.mrf.mxu0
    %v775 = vadd.f32 %v603, %v774
    %v776 = vpop.f32.mrf.mxu0
    %v777 = vadd.f32 %v599, %v776
    %v778 = vpop.f32.mrf.mxu0
    %v779 = vadd.f32 %v603, %v778
    %780 = vmatprep.mubr.bf16.mxu0 0
    %781 = vmatmul.mubr.bf16.gmra.mxu0 %v672
    %v782 = vpop.f32.mrf.mxu0
    %v783 = vadd.f32 %v599, %v782
    %v784 = vpop.f32.mrf.mxu0
    %v785 = vadd.f32 %v603, %v784
    %v786 = vpop.f32.mrf.mxu0
    %v787 = vadd.f32 %v599, %v786
    %v788 = vpop.f32.mrf.mxu0
    %v789 = vadd.f32 %v603, %v788
    %790 = vmatprep.mubr.bf16.mxu0 0
    %791 = vmatmul.mubr.bf16.gmra.mxu0 %v675
    %v792 = vpop.f32.mrf.mxu0
    %v793 = vadd.f32 %v599, %v792
    %v794 = vpop.f32.mrf.mxu0
    %v795 = vadd.f32 %v603, %v794
    %v796 = vpop.f32.mrf.mxu0
    %v797 = vadd.f32 %v599, %v796
    %v798 = vpop.f32.mrf.mxu0
    %v799 = vadd.f32 %v603, %v798
    %800 = vmatprep.mubr.bf16.mxu0 0
    %801 = vmatmul.mubr.bf16.gmra.mxu0 %v678
    %v802 = vpop.f32.mrf.mxu0
    %v803 = vadd.f32 %v599, %v802
    %v804 = vpop.f32.mrf.mxu0
    %v805 = vadd.f32 %v603, %v804
    %v806 = vpop.f32.mrf.mxu0
    %v807 = vadd.f32 %v599, %v806
    %v808 = vpop.f32.mrf.mxu0
    %v809 = vadd.f32 %v603, %v808
    %810 = vmatprep.mubr.bf16.mxu0 0
    %811 = vmatmul.mubr.bf16.gmra.mxu0 %v681
    %v812 = vpop.f32.mrf.mxu0
    %v813 = vadd.f32 %v599, %v812
    %v814 = vpop.f32.mrf.mxu0
    %v815 = vadd.f32 %v603, %v814
    %v816 = vpop.f32.mrf.mxu0
    %v817 = vadd.f32 %v599, %v816
    %v818 = vpop.f32.mrf.mxu0
    %v819 = vadd.f32 %v603, %v818
    %820 = vmatprep.mubr.bf16.mxu0 0
    %821 = vmatmul.mubr.bf16.gmra.mxu0 %v684
    %v822 = vpop.f32.mrf.mxu0
    %v823 = vadd.f32 %v599, %v822
    %v824 = vpop.f32.mrf.mxu0
    %v825 = vadd.f32 %v603, %v824
    %v826 = vpop.f32.mrf.mxu0
    %v827 = vadd.f32 %v599, %v826
    %v828 = vpop.f32.mrf.mxu0
    %v829 = vadd.f32 %v603, %v828
    %830 = vmatprep.mubr.bf16.mxu0 0
    %831 = vmatmul.mubr.bf16.gmra.mxu0 %v687
    %v832 = vpop.f32.mrf.mxu0
    %v833 = vadd.f32 %v599, %v832
    %v834 = vpop.f32.mrf.mxu0
    %v835 = vadd.f32 %v603, %v834
    %v836 = vpop.f32.mrf.mxu0
    %v837 = vadd.f32 %v599, %v836
    %v838 = vpop.f32.mrf.mxu0
    %v839 = vadd.f32 %v603, %v838
    %840 = vmatprep.mubr.bf16.mxu0 0
    %841 = vmatmul.mubr.bf16.gmra.mxu0 %v690
    %v842 = vpop.f32.mrf.mxu0
    %v843 = vadd.f32 %v599, %v842
    %v844 = vpop.f32.mrf.mxu0
    %v845 = vadd.f32 %v603, %v844
    %v846 = vpop.f32.mrf.mxu0
    %v847 = vadd.f32 %v599, %v846
    %v848 = vpop.f32.mrf.mxu0
    %v849 = vadd.f32 %v603, %v848
    %850 = vmatprep.mubr.bf16.mxu0 0
    %851 = vmatmul.mubr.bf16.gmra.mxu0 %v693
    %v852 = vpop.f32.mrf.mxu0
    %v853 = vadd.f32 %v599, %v852
    %v854 = vpop.f32.mrf.mxu0
    %v855 = vadd.f32 %v603, %v854
    %v856 = vpop.f32.mrf.mxu0
    %v857 = vadd.f32 %v599, %v856
    %v858 = vpop.f32.mrf.mxu0
    %v859 = vadd.f32 %v603, %v858
    %860 = vmatprep.mubr.bf16.mxu0 0
    %861 = vmatmul.mubr.bf16.gmra.mxu0 %v696
    %v862 = vpop.f32.mrf.mxu0
    %v863 = vadd.f32 %v599, %v862
    %v864 = vpop.f32.mrf.mxu0
    %v865 = vadd.f32 %v603, %v864
    %v866 = vpop.f32.mrf.mxu0
    %v867 = vpop.f32.mrf.mxu0
    %868 = vdwg.mxu0
    %v869 = vpack.c.bf16 %v737, %v733
    %v870 = vpack.c.bf16 %v739, %v735
    %v871 = vpack.c.bf16 %v747, %v743
    %v872 = vpack.c.bf16 %v749, %v745
    %v873 = vpack.c.bf16 %v757, %v753
    %v874 = vpack.c.bf16 %v759, %v755
    %v875 = vpack.c.bf16 %v767, %v763
    %v876 = vpack.c.bf16 %v769, %v765
    %v877 = vpack.c.bf16 %v777, %v773
    %v878 = vpack.c.bf16 %v779, %v775
    %v879 = vpack.c.bf16 %v787, %v783
    %v880 = vpack.c.bf16 %v789, %v785
    %v881 = vpack.c.bf16 %v797, %v793
    %v882 = vpack.c.bf16 %v799, %v795
    %v883 = vpack.c.bf16 %v807, %v803
    %v884 = vpack.c.bf16 %v809, %v805
    %v885 = vpack.c.bf16 %v817, %v813
    %v886 = vpack.c.bf16 %v819, %v815
    %v887 = vpack.c.bf16 %v827, %v823
    %v888 = vpack.c.bf16 %v829, %v825
    %v889 = vpack.c.bf16 %v837, %v833
    %v890 = vpack.c.bf16 %v839, %v835
    %v891 = vpack.c.bf16 %v847, %v843
    %v892 = vpack.c.bf16 %v849, %v845
    %v893 = vpack.c.bf16 %v857, %v853
    %v894 = vpack.c.bf16 %v859, %v855
    %v895 = vpack.c.bf16 %v863, %v863
    %v896 = vpack.c.bf16 %v865, %v865
    %s897 = sld [smem:[#allocation2]]
    %s898 = sld [smem:[#allocation2 + $0x1]]
    %v899 = vld [vmem:[%s4] sm:$0xff]
    %v900 = vld [vmem:[%s4 + $0x8] sm:$0xff]
    %v901 = vld [vmem:[%s4 + $0x10] sm:$0xff]
    %v902 = vld [vmem:[%s4 + $0x18] sm:$0xff]
    %v903 = vld [vmem:[%s4 + $0x20] sm:$0xff]
    %v904 = vld [vmem:[%s4 + $0x28] sm:$0xff]
    %v905 = vld [vmem:[%s4 + $0x30] sm:$0xff]
    %v906 = vld [vmem:[%s4 + $0x38] sm:$0xff]
    %v907 = vld [vmem:[%s4 + $0x40] sm:$0xff]
    %v908 = vld [vmem:[%s4 + $0x48] sm:$0xff]
    %v909 = vld [vmem:[%s4 + $0x50] sm:$0xff]
    %v910 = vld [vmem:[%s4 + $0x58] sm:$0xff]
    %v911 = vld [vmem:[%s4 + $0x60] sm:$0xff]
    %v912 = vld [vmem:[%s4 + $0x68] sm:$0xff]
    %v913 = vld [vmem:[%s4 + $0x70] sm:$0xff]
    %v914 = vld [vmem:[%s4 + $0x78] sm:$0xff]
    %v915 = vld [vmem:[%s4 + $0x80] sm:$0xff]
    %v916 = vld [vmem:[%s4 + $0x88] sm:$0xff]
    %v917 = vld [vmem:[%s4 + $0x90] sm:$0xff]
    %v918 = vld [vmem:[%s4 + $0x98] sm:$0xff]
    %v919 = vld [vmem:[%s4 + $0xa0] sm:$0xff]
    %v920 = vld [vmem:[%s4 + $0xa8] sm:$0xff]
    %v921 = vld [vmem:[%s4 + $0xb0] sm:$0xff]
    %v922 = vld [vmem:[%s4 + $0xb8] sm:$0xff]
    %v923 = vld [vmem:[%s4 + $0xc0] sm:$0xff]
    %v924 = vld [vmem:[%s4 + $0xc8] sm:$0xff]
    %v925 = vld [vmem:[%s4 + $0xd0] sm:$0xff]
    %v926 = vld [vmem:[%s4 + $0xd8] sm:$0xff]
    %v927 = vld [vmem:[%s4 + $0xe0] sm:$0xff]
    %v928 = vld [vmem:[%s4 + $0xe8] sm:$0xff]
    %v929 = vld [vmem:[%s4 + $0xf0] sm:$0xff]
    %v930 = vld [vmem:[%s4 + $0xf8] sm:$0xff]
    %v963 = vunpack.c.l.b16 %v899
    %v964 = vunpack.c.h.b16 %v899
    %v965 = vunpack.c.l.b16 %v900
    %v966 = vunpack.c.h.b16 %v900
    %v967 = vunpack.c.l.b16 %v901
    %v968 = vunpack.c.h.b16 %v901
    %v969 = vunpack.c.l.b16 %v902
    %v970 = vunpack.c.h.b16 %v902
    %v971 = vunpack.c.l.b16 %v903
    %v972 = vunpack.c.h.b16 %v903
    %v973 = vunpack.c.l.b16 %v904
    %v974 = vunpack.c.h.b16 %v904
    %v975 = vunpack.c.l.b16 %v905
    %v976 = vunpack.c.h.b16 %v905
    %v977 = vunpack.c.l.b16 %v906
    %v978 = vunpack.c.h.b16 %v906
    %v979 = vunpack.c.l.b16 %v907
    %v980 = vunpack.c.h.b16 %v907
    %v981 = vunpack.c.l.b16 %v908
    %v982 = vunpack.c.h.b16 %v908
    %v983 = vunpack.c.l.b16 %v909
    %v984 = vunpack.c.h.b16 %v909
    %v985 = vunpack.c.l.b16 %v910
    %v986 = vunpack.c.h.b16 %v910
    %v987 = vunpack.c.l.b16 %v911
    %v988 = vunpack.c.h.b16 %v911
    %v989 = vunpack.c.l.b16 %v912
    %v990 = vunpack.c.h.b16 %v912
    %v991 = vunpack.c.l.b16 %v913
    %v992 = vunpack.c.h.b16 %v913
    %v993 = vunpack.c.l.b16 %v914
    %v994 = vunpack.c.h.b16 %v914
    %v995 = vunpack.c.l.b16 %v915
    %v996 = vunpack.c.h.b16 %v915
    %v997 = vunpack.c.l.b16 %v916
    %v998 = vunpack.c.h.b16 %v916
    %v999 = vunpack.c.l.b16 %v917
    %v1000 = vunpack.c.h.b16 %v917
    %v1001 = vunpack.c.l.b16 %v918
    %v1002 = vunpack.c.h.b16 %v918
    %v1003 = vunpack.c.l.b16 %v919
    %v1004 = vunpack.c.h.b16 %v919
    %v1005 = vunpack.c.l.b16 %v920
    %v1006 = vunpack.c.h.b16 %v920
    %v1007 = vunpack.c.l.b16 %v921
    %v1008 = vunpack.c.h.b16 %v921
    %v1009 = vunpack.c.l.b16 %v922
    %v1010 = vunpack.c.h.b16 %v922
    %v1011 = vunpack.c.l.b16 %v923
    %v1012 = vunpack.c.h.b16 %v923
    %v1013 = vunpack.c.l.b16 %v924
    %v1014 = vunpack.c.h.b16 %v924
    %v1015 = vunpack.c.l.b16 %v925
    %v1016 = vunpack.c.h.b16 %v925
    %v1017 = vunpack.c.l.b16 %v926
    %v1018 = vunpack.c.h.b16 %v926
    %v1019 = vunpack.c.l.b16 %v927
    %v1020 = vunpack.c.h.b16 %v927
    %v1021 = vunpack.c.l.b16 %v928
    %v1022 = vunpack.c.h.b16 %v928
    %v1023 = vunpack.c.l.b16 %v929
    %v1024 = vunpack.c.h.b16 %v929
    %v1025 = vunpack.c.l.b16 %v930
    %v1026 = vunpack.c.h.b16 %v930
    %v1027 = vpack.c.b16 %v965, %v963
    %v1028 = vpack.c.b16 %v966, %v964
    %v1029 = vpack.c.b16 %v969, %v967
    %v1030 = vpack.c.b16 %v970, %v968
    %v1031 = vpack.c.b16 %v973, %v971
    %v1032 = vpack.c.b16 %v974, %v972
    %v1033 = vpack.c.b16 %v977, %v975
    %v1034 = vpack.c.b16 %v978, %v976
    %v1035 = vpack.c.b16 %v981, %v979
    %v1036 = vpack.c.b16 %v982, %v980
    %v1037 = vpack.c.b16 %v985, %v983
    %v1038 = vpack.c.b16 %v986, %v984
    %v1039 = vpack.c.b16 %v989, %v987
    %v1040 = vpack.c.b16 %v990, %v988
    %v1041 = vpack.c.b16 %v993, %v991
    %v1042 = vpack.c.b16 %v994, %v992
    %v1043 = vpack.c.b16 %v997, %v995
    %v1044 = vpack.c.b16 %v998, %v996
    %v1045 = vpack.c.b16 %v1001, %v999
    %v1046 = vpack.c.b16 %v1002, %v1000
    %v1047 = vpack.c.b16 %v1005, %v1003
    %v1048 = vpack.c.b16 %v1006, %v1004
    %v1049 = vpack.c.b16 %v1009, %v1007
    %v1050 = vpack.c.b16 %v1010, %v1008
    %v1051 = vpack.c.b16 %v1013, %v1011
    %v1052 = vpack.c.b16 %v1014, %v1012
    %v1053 = vpack.c.b16 %v1017, %v1015
    %v1054 = vpack.c.b16 %v1018, %v1016
    %v1055 = vpack.c.b16 %v1021, %v1019
    %v1056 = vpack.c.b16 %v1022, %v1020
    %v1057 = vpack.c.b16 %v1025, %v1023
    %v1058 = vpack.c.b16 %v1026, %v1024
    %1091 = vmatprep.subr.bf16.mxu0 %v1042
    %1092 = vmatpush1.bf16.msra.mxu0 %v1041
    %1093 = vmatprep.subr.bf16.mxu0 %v1040
    %1094 = vmatpush1.bf16.msra.mxu0 %v1039
    %1095 = vmatprep.subr.bf16.mxu0 %v1038
    %1096 = vmatpush1.bf16.msra.mxu0 %v1037
    %1097 = vmatprep.subr.bf16.mxu0 %v1036
    %1098 = vmatpush1.bf16.msra.mxu0 %v1035
    %1099 = vmatprep.subr.bf16.mxu0 %v1034
    %1100 = vmatpush1.bf16.msra.mxu0 %v1033
    %1101 = vmatprep.subr.bf16.mxu0 %v1032
    %1102 = vmatpush1.bf16.msra.mxu0 %v1031
    %1103 = vmatprep.subr.bf16.mxu0 %v1030
    %1104 = vmatpush1.bf16.msra.mxu0 %v1029
    %1105 = vmatprep.subr.bf16.mxu0 %v1028
    %1106 = vmatpush1.bf16.msra.mxu0 %v1027
    %1107 = vmatprep.subr.bf16.mxu0 %v1058
    %1108 = vmatpush2.bf16.msra.mxu0 %v1057
    %1109 = vmatprep.subr.bf16.mxu0 %v1056
    %1110 = vmatpush2.bf16.msra.mxu0 %v1055
    %1111 = vmatprep.subr.bf16.mxu0 %v1054
    %1112 = vmatpush2.bf16.msra.mxu0 %v1053
    %1113 = vmatprep.subr.bf16.mxu0 %v1052
    %1114 = vmatpush2.bf16.msra.mxu0 %v1051
    %1115 = vmatprep.subr.bf16.mxu0 %v1050
    %1116 = vmatpush2.bf16.msra.mxu0 %v1049
    %1117 = vmatprep.subr.bf16.mxu0 %v1048
    %1118 = vmatpush2.bf16.msra.mxu0 %v1047
    %1119 = vmatprep.subr.bf16.mxu0 %v1046
    %1120 = vmatpush2.bf16.msra.mxu0 %v1045
    %1121 = vmatprep.subr.bf16.mxu0 %v1044
    %1122 = vmatpush2.bf16.msra.mxu0 %v1043
    %1123 = vmatprep.mubr.bf16.mxu0 %v870
    %1124 = vmatmul.mubr.bf16.gmra.mxu0 %v869
    %v1125 = vpop.f32.mrf.mxu0
    %v1126 = vadd.f32 0.0, %v1125
    %v1127 = vpop.f32.mrf.mxu0
    %v1128 = vadd.f32 0.0, %v1127
    %v1129 = vpop.f32.mrf.mxu0
    %v1130 = vadd.f32 0.0, %v1129
    %v1131 = vpop.f32.mrf.mxu0
    %v1132 = vadd.f32 0.0, %v1131
    %1133 = vmatprep.mubr.bf16.mxu0 %v872
    %1134 = vmatmul.mubr.bf16.gmra.mxu0 %v871
    %v1135 = vpop.f32.mrf.mxu0
    %v1136 = vadd.f32 0.0, %v1135
    %v1137 = vpop.f32.mrf.mxu0
    %v1138 = vadd.f32 0.0, %v1137
    %v1139 = vpop.f32.mrf.mxu0
    %v1140 = vadd.f32 0.0, %v1139
    %v1141 = vpop.f32.mrf.mxu0
    %v1142 = vadd.f32 0.0, %v1141
    %1143 = vmatprep.mubr.bf16.mxu0 %v874
    %1144 = vmatmul.mubr.bf16.gmra.mxu0 %v873
    %v1145 = vpop.f32.mrf.mxu0
    %v1146 = vadd.f32 0.0, %v1145
    %v1147 = vpop.f32.mrf.mxu0
    %v1148 = vadd.f32 0.0, %v1147
    %v1149 = vpop.f32.mrf.mxu0
    %v1150 = vadd.f32 0.0, %v1149
    %v1151 = vpop.f32.mrf.mxu0
    %v1152 = vadd.f32 0.0, %v1151
    %1153 = vmatprep.mubr.bf16.mxu0 %v876
    %1154 = vmatmul.mubr.bf16.gmra.mxu0 %v875
    %v1155 = vpop.f32.mrf.mxu0
    %v1156 = vadd.f32 0.0, %v1155
    %v1157 = vpop.f32.mrf.mxu0
    %v1158 = vadd.f32 0.0, %v1157
    %v1159 = vpop.f32.mrf.mxu0
    %v1160 = vadd.f32 0.0, %v1159
    %v1161 = vpop.f32.mrf.mxu0
    %v1162 = vadd.f32 0.0, %v1161
    %1163 = vmatprep.mubr.bf16.mxu0 %v878
    %1164 = vmatmul.mubr.bf16.gmra.mxu0 %v877
    %v1165 = vpop.f32.mrf.mxu0
    %v1166 = vadd.f32 0.0, %v1165
    %v1167 = vpop.f32.mrf.mxu0
    %v1168 = vadd.f32 0.0, %v1167
    %v1169 = vpop.f32.mrf.mxu0
    %v1170 = vadd.f32 0.0, %v1169
    %v1171 = vpop.f32.mrf.mxu0
    %v1172 = vadd.f32 0.0, %v1171
    %1173 = vmatprep.mubr.bf16.mxu0 %v880
    %1174 = vmatmul.mubr.bf16.gmra.mxu0 %v879
    %v1175 = vpop.f32.mrf.mxu0
    %v1176 = vadd.f32 0.0, %v1175
    %v1177 = vpop.f32.mrf.mxu0
    %v1178 = vadd.f32 0.0, %v1177
    %v1179 = vpop.f32.mrf.mxu0
    %v1180 = vadd.f32 0.0, %v1179
    %v1181 = vpop.f32.mrf.mxu0
    %v1182 = vadd.f32 0.0, %v1181
    %1183 = vmatprep.mubr.bf16.mxu0 %v882
    %1184 = vmatmul.mubr.bf16.gmra.mxu0 %v881
    %v1185 = vpop.f32.mrf.mxu0
    %v1186 = vadd.f32 0.0, %v1185
    %v1187 = vpop.f32.mrf.mxu0
    %v1188 = vadd.f32 0.0, %v1187
    %v1189 = vpop.f32.mrf.mxu0
    %v1190 = vadd.f32 0.0, %v1189
    %v1191 = vpop.f32.mrf.mxu0
    %v1192 = vadd.f32 0.0, %v1191
    %1193 = vmatprep.mubr.bf16.mxu0 %v884
    %1194 = vmatmul.mubr.bf16.gmra.mxu0 %v883
    %v1195 = vpop.f32.mrf.mxu0
    %v1196 = vadd.f32 0.0, %v1195
    %v1197 = vpop.f32.mrf.mxu0
    %v1198 = vadd.f32 0.0, %v1197
    %v1199 = vpop.f32.mrf.mxu0
    %v1200 = vadd.f32 0.0, %v1199
    %v1201 = vpop.f32.mrf.mxu0
    %v1202 = vadd.f32 0.0, %v1201
    %1203 = vmatprep.mubr.bf16.mxu0 %v886
    %1204 = vmatmul.mubr.bf16.gmra.mxu0 %v885
    %v1205 = vpop.f32.mrf.mxu0
    %v1206 = vadd.f32 0.0, %v1205
    %v1207 = vpop.f32.mrf.mxu0
    %v1208 = vadd.f32 0.0, %v1207
    %v1209 = vpop.f32.mrf.mxu0
    %v1210 = vadd.f32 0.0, %v1209
    %v1211 = vpop.f32.mrf.mxu0
    %v1212 = vadd.f32 0.0, %v1211
    %1213 = vmatprep.mubr.bf16.mxu0 %v888
    %1214 = vmatmul.mubr.bf16.gmra.mxu0 %v887
    %v1215 = vpop.f32.mrf.mxu0
    %v1216 = vadd.f32 0.0, %v1215
    %v1217 = vpop.f32.mrf.mxu0
    %v1218 = vadd.f32 0.0, %v1217
    %v1219 = vpop.f32.mrf.mxu0
    %v1220 = vadd.f32 0.0, %v1219
    %v1221 = vpop.f32.mrf.mxu0
    %v1222 = vadd.f32 0.0, %v1221
    %1223 = vmatprep.mubr.bf16.mxu0 %v890
    %1224 = vmatmul.mubr.bf16.gmra.mxu0 %v889
    %v1225 = vpop.f32.mrf.mxu0
    %v1226 = vadd.f32 0.0, %v1225
    %v1227 = vpop.f32.mrf.mxu0
    %v1228 = vadd.f32 0.0, %v1227
    %v1229 = vpop.f32.mrf.mxu0
    %v1230 = vadd.f32 0.0, %v1229
    %v1231 = vpop.f32.mrf.mxu0
    %v1232 = vadd.f32 0.0, %v1231
    %1233 = vmatprep.mubr.bf16.mxu0 %v892
    %1234 = vmatmul.mubr.bf16.gmra.mxu0 %v891
    %v1235 = vpop.f32.mrf.mxu0
    %v1236 = vadd.f32 0.0, %v1235
    %v1237 = vpop.f32.mrf.mxu0
    %v1238 = vadd.f32 0.0, %v1237
    %v1239 = vpop.f32.mrf.mxu0
    %v1240 = vadd.f32 0.0, %v1239
    %v1241 = vpop.f32.mrf.mxu0
    %v1242 = vadd.f32 0.0, %v1241
    %1243 = vmatprep.mubr.bf16.mxu0 %v894
    %1244 = vmatmul.mubr.bf16.gmra.mxu0 %v893
    %v1245 = vpop.f32.mrf.mxu0
    %v1246 = vadd.f32 0.0, %v1245
    %v1247 = vpop.f32.mrf.mxu0
    %v1248 = vadd.f32 0.0, %v1247
    %v1249 = vpop.f32.mrf.mxu0
    %v1250 = vadd.f32 0.0, %v1249
    %v1251 = vpop.f32.mrf.mxu0
    %v1252 = vadd.f32 0.0, %v1251
    %1253 = vmatprep.mubr.bf16.mxu0 %v896
    %1254 = vmatmul.mubr.bf16.gmra.mxu0 %v895
    %v1255 = vpop.f32.mrf.mxu0
    %v1256 = vadd.f32 0.0, %v1255
    %v1257 = vpop.f32.mrf.mxu0
    %v1258 = vadd.f32 0.0, %v1257
    %v1259 = vpop.f32.mrf.mxu0
    %v1260 = vpop.f32.mrf.mxu0
    %1261 = vdwg.mxu0
    %v1262 = vadd.f32 %v1126, %v1130
    %v1263 = vadd.f32 %v1262, %v1136
    %v1264 = vadd.f32 %v1263, %v1140
    %v1265 = vadd.f32 %v1264, %v1146
    %v1266 = vadd.f32 %v1265, %v1150
    %v1267 = vadd.f32 %v1266, %v1156
    %v1268 = vadd.f32 %v1267, %v1160
    %v1269 = vadd.f32 %v1268, %v1166
    %v1270 = vadd.f32 %v1269, %v1170
    %v1271 = vadd.f32 %v1270, %v1176
    %v1272 = vadd.f32 %v1271, %v1180
    %v1273 = vadd.f32 %v1272, %v1186
    %v1274 = vadd.f32 %v1273, %v1190
    %v1275 = vadd.f32 %v1274, %v1196
    %v1276 = vadd.f32 %v1275, %v1200
    %v1277 = vadd.f32 %v1276, %v1206
    %v1278 = vadd.f32 %v1277, %v1210
    %v1279 = vadd.f32 %v1278, %v1216
    %v1280 = vadd.f32 %v1279, %v1220
    %v1281 = vadd.f32 %v1280, %v1226
    %v1282 = vadd.f32 %v1281, %v1230
    %v1283 = vadd.f32 %v1282, %v1236
    %v1284 = vadd.f32 %v1283, %v1240
    %v1285 = vadd.f32 %v1284, %v1246
    %v1286 = vadd.f32 %v1285, %v1250
    %v1287 = vadd.f32 %v1286, %v1256
    %v1288 = vrot.slane %v1287, 4
    %v1289 = vadd.f32 %v1287, %v1288
    %v1290 = vrot.slane %v1289, 2
    %v1291 = vadd.f32 %v1289, %v1290
    %v1292 = vrot.slane %v1291, 1
    %v1293 = vadd.f32 %v1291, %v1292
    %v1294 = vadd.f32 %v1128, %v1132
    %v1295 = vadd.f32 %v1294, %v1138
    %v1296 = vadd.f32 %v1295, %v1142
    %v1297 = vadd.f32 %v1296, %v1148
    %v1298 = vadd.f32 %v1297, %v1152
    %v1299 = vadd.f32 %v1298, %v1158
    %v1300 = vadd.f32 %v1299, %v1162
    %v1301 = vadd.f32 %v1300, %v1168
    %v1302 = vadd.f32 %v1301, %v1172
    %v1303 = vadd.f32 %v1302, %v1178
    %v1304 = vadd.f32 %v1303, %v1182
    %v1305 = vadd.f32 %v1304, %v1188
    %v1306 = vadd.f32 %v1305, %v1192
    %v1307 = vadd.f32 %v1306, %v1198
    %v1308 = vadd.f32 %v1307, %v1202
    %v1309 = vadd.f32 %v1308, %v1208
    %v1310 = vadd.f32 %v1309, %v1212
    %v1311 = vadd.f32 %v1310, %v1218
    %v1312 = vadd.f32 %v1311, %v1222
    %v1313 = vadd.f32 %v1312, %v1228
    %v1314 = vadd.f32 %v1313, %v1232
    %v1315 = vadd.f32 %v1314, %v1238
    %v1316 = vadd.f32 %v1315, %v1242
    %v1317 = vadd.f32 %v1316, %v1248
    %v1318 = vadd.f32 %v1317, %v1252
    %v1319 = vadd.f32 %v1318, %v1258
    %v1320 = vrot.slane %v1319, 4
    %v1321 = vadd.f32 %v1319, %v1320
    %v1322 = vrot.slane %v1321, 2
    %v1323 = vadd.f32 %v1321, %v1322
    %v1324 = vrot.slane %v1323, 1
    %v1325 = vadd.f32 %v1323, %v1324
    %v1326 = vrcp.pop 216.0
    %v1327 = vmul.f32 %v1293, %v1326
    %v1328 = vmul.f32 %v1325, %v1326
    %v1329 = vmul.f32 %v1126, %v1126
    %v1330 = vmul.f32 %v1128, %v1128
    %v1331 = vmul.f32 %v1130, %v1130
    %v1332 = vmul.f32 %v1132, %v1132
    %v1333 = vmul.f32 %v1136, %v1136
    %v1334 = vmul.f32 %v1138, %v1138
    %v1335 = vmul.f32 %v1140, %v1140
    %v1336 = vmul.f32 %v1142, %v1142
    %v1337 = vmul.f32 %v1146, %v1146
    %v1338 = vmul.f32 %v1148, %v1148
    %v1339 = vmul.f32 %v1150, %v1150
    %v1340 = vmul.f32 %v1152, %v1152
    %v1341 = vmul.f32 %v1156, %v1156
    %v1342 = vmul.f32 %v1158, %v1158
    %v1343 = vmul.f32 %v1160, %v1160
    %v1344 = vmul.f32 %v1162, %v1162
    %v1345 = vmul.f32 %v1166, %v1166
    %v1346 = vmul.f32 %v1168, %v1168
    %v1347 = vmul.f32 %v1170, %v1170
    %v1348 = vmul.f32 %v1172, %v1172
    %v1349 = vmul.f32 %v1176, %v1176
    %v1350 = vmul.f32 %v1178, %v1178
    %v1351 = vmul.f32 %v1180, %v1180
    %v1352 = vmul.f32 %v1182, %v1182
    %v1353 = vmul.f32 %v1186, %v1186
    %v1354 = vmul.f32 %v1188, %v1188
    %v1355 = vmul.f32 %v1190, %v1190
    %v1356 = vmul.f32 %v1192, %v1192
    %v1357 = vmul.f32 %v1196, %v1196
    %v1358 = vmul.f32 %v1198, %v1198
    %v1359 = vmul.f32 %v1200, %v1200
    %v1360 = vmul.f32 %v1202, %v1202
    %v1361 = vmul.f32 %v1206, %v1206
    %v1362 = vmul.f32 %v1208, %v1208
    %v1363 = vmul.f32 %v1210, %v1210
    %v1364 = vmul.f32 %v1212, %v1212
    %v1365 = vmul.f32 %v1216, %v1216
    %v1366 = vmul.f32 %v1218, %v1218
    %v1367 = vmul.f32 %v1220, %v1220
    %v1368 = vmul.f32 %v1222, %v1222
    %v1369 = vmul.f32 %v1226, %v1226
    %v1370 = vmul.f32 %v1228, %v1228
    %v1371 = vmul.f32 %v1230, %v1230
    %v1372 = vmul.f32 %v1232, %v1232
    %v1373 = vmul.f32 %v1236, %v1236
    %v1374 = vmul.f32 %v1238, %v1238
    %v1375 = vmul.f32 %v1240, %v1240
    %v1376 = vmul.f32 %v1242, %v1242
    %v1377 = vmul.f32 %v1246, %v1246
    %v1378 = vmul.f32 %v1248, %v1248
    %v1379 = vmul.f32 %v1250, %v1250
    %v1380 = vmul.f32 %v1252, %v1252
    %v1381 = vmul.f32 %v1256, %v1256
    %v1382 = vmul.f32 %v1258, %v1258
    %v1383 = vadd.f32 %v1329, %v1331
    %v1384 = vadd.f32 %v1383, %v1333
    %v1385 = vadd.f32 %v1384, %v1335
    %v1386 = vadd.f32 %v1385, %v1337
    %v1387 = vadd.f32 %v1386, %v1339
    %v1388 = vadd.f32 %v1387, %v1341
    %v1389 = vadd.f32 %v1388, %v1343
    %v1390 = vadd.f32 %v1389, %v1345
    %v1391 = vadd.f32 %v1390, %v1347
    %v1392 = vadd.f32 %v1391, %v1349
    %v1393 = vadd.f32 %v1392, %v1351
    %v1394 = vadd.f32 %v1393, %v1353
    %v1395 = vadd.f32 %v1394, %v1355
    %v1396 = vadd.f32 %v1395, %v1357
    %v1397 = vadd.f32 %v1396, %v1359
    %v1398 = vadd.f32 %v1397, %v1361
    %v1399 = vadd.f32 %v1398, %v1363
    %v1400 = vadd.f32 %v1399, %v1365
    %v1401 = vadd.f32 %v1400, %v1367
    %v1402 = vadd.f32 %v1401, %v1369
    %v1403 = vadd.f32 %v1402, %v1371
    %v1404 = vadd.f32 %v1403, %v1373
    %v1405 = vadd.f32 %v1404, %v1375
    %v1406 = vadd.f32 %v1405, %v1377
    %v1407 = vadd.f32 %v1406, %v1379
    %v1408 = vadd.f32 %v1407, %v1381
    %v1409 = vrot.slane %v1408, 4
    %v1410 = vadd.f32 %v1408, %v1409
    %v1411 = vrot.slane %v1410, 2
    %v1412 = vadd.f32 %v1410, %v1411
    %v1413 = vrot.slane %v1412, 1
    %v1414 = vadd.f32 %v1412, %v1413
    %v1415 = vadd.f32 %v1330, %v1332
    %v1416 = vadd.f32 %v1415, %v1334
    %v1417 = vadd.f32 %v1416, %v1336
    %v1418 = vadd.f32 %v1417, %v1338
    %v1419 = vadd.f32 %v1418, %v1340
    %v1420 = vadd.f32 %v1419, %v1342
    %v1421 = vadd.f32 %v1420, %v1344
    %v1422 = vadd.f32 %v1421, %v1346
    %v1423 = vadd.f32 %v1422, %v1348
    %v1424 = vadd.f32 %v1423, %v1350
    %v1425 = vadd.f32 %v1424, %v1352
    %v1426 = vadd.f32 %v1425, %v1354
    %v1427 = vadd.f32 %v1426, %v1356
    %v1428 = vadd.f32 %v1427, %v1358
    %v1429 = vadd.f32 %v1428, %v1360
    %v1430 = vadd.f32 %v1429, %v1362
    %v1431 = vadd.f32 %v1430, %v1364
    %v1432 = vadd.f32 %v1431, %v1366
    %v1433 = vadd.f32 %v1432, %v1368
    %v1434 = vadd.f32 %v1433, %v1370
    %v1435 = vadd.f32 %v1434, %v1372
    %v1436 = vadd.f32 %v1435, %v1374
    %v1437 = vadd.f32 %v1436, %v1376
    %v1438 = vadd.f32 %v1437, %v1378
    %v1439 = vadd.f32 %v1438, %v1380
    %v1440 = vadd.f32 %v1439, %v1382
    %v1441 = vrot.slane %v1440, 4
    %v1442 = vadd.f32 %v1440, %v1441
    %v1443 = vrot.slane %v1442, 2
    %v1444 = vadd.f32 %v1442, %v1443
    %v1445 = vrot.slane %v1444, 1
    %v1446 = vadd.f32 %v1444, %v1445
    %v1447 = vmul.f32 %v1414, %v1326
    %v1448 = vmul.f32 %v1446, %v1326
    %v1449 = vmul.f32 %v1327, %v1327
    %v1450 = vmul.f32 %v1328, %v1328
    %v1451 = vsub.f32 %v1447, %v1449
    %v1452 = vsub.f32 %v1448, %v1450
    %v1453 = vmax.f32 %v1451, 0.0
    %v1454 = vmax.f32 %v1452, 0.0
    %v1455 = vadd.f32 %v1453, 1e-05
    %v1456 = vadd.f32 %v1454, 1e-05
    %v1457 = vrsqrt.pop %v1455
    %v1458 = vrsqrt.pop %v1456
    %v1459 = vld [vmem:[%s6] sm:$0x3]
    %v1461 = vlaneseq
    %v1462 = vshrl.u32 %v1461, 7
    %v1463 = vsub.s32 0, %v1462
    %v1464 = vrot.slane %v1459, %v1463
    %v1465 = vlaneseq
    %v1466 = vshrl.u32 %v1465, 7
    %v1467 = vsub.s32 1, %v1466
    %v1468 = vrot.slane %v1459, %v1467
    %v1471 = vmul.f32 %v1457, %v1464
    %v1472 = vmul.f32 %v1458, %v1468
    %v1473 = vld [vmem:[%s7] sm:$0x3]
    %v1474 = vmul.f32 %v1327, %v1471
    %v1475 = vmul.f32 %v1328, %v1472
    %v1478 = vcombine.low %v1474, %v1475
    %v1480 = vunpack.c.l.s4 1966171168
    %v1481 = vunpack.c.0.s8 %v1480
    %v1482 = vlaneseq
    %v1483 = vshrl.u32 %v1482, 7
    %v1484 = vsub.s32 %v1481, %v1483
    %v1485 = vrot.slane %v1478, %v1484
    %v1487 = vunpack.c.l.s4 1966171168
    %v1488 = vunpack.c.0.s8 %v1487
    %v1489 = vlaneseq
    %v1490 = vshrl.u32 %v1489, 7
    %v1491 = vsub.s32 %v1488, %v1490
    %v1492 = vrot.slane %v1485, %v1491
    %v1494 = vsub.f32 %v1473, %v1492
    %v1495 = vlaneseq
    %v1496 = vshrl.u32 %v1495, 7
    %v1497 = vsub.s32 0, %v1496
    %v1498 = vrot.slane %v1471, %v1497
    %v1499 = vlaneseq
    %v1500 = vshrl.u32 %v1499, 7
    %v1501 = vsub.s32 0, %v1500
    %v1502 = vrot.slane %v1472, %v1501
    %v1503 = vmul.f32 %v1126, %v1498
    %v1504 = vmul.f32 %v1128, %v1502
    %v1505 = vmul.f32 %v1130, %v1498
    %v1506 = vmul.f32 %v1132, %v1502
    %v1507 = vmul.f32 %v1136, %v1498
    %v1508 = vmul.f32 %v1138, %v1502
    %v1509 = vmul.f32 %v1140, %v1498
    %v1510 = vmul.f32 %v1142, %v1502
    %v1511 = vmul.f32 %v1146, %v1498
    %v1512 = vmul.f32 %v1148, %v1502
    %v1513 = vmul.f32 %v1150, %v1498
    %v1514 = vmul.f32 %v1152, %v1502
    %v1515 = vmul.f32 %v1156, %v1498
    %v1516 = vmul.f32 %v1158, %v1502
    %v1517 = vmul.f32 %v1160, %v1498
    %v1518 = vmul.f32 %v1162, %v1502
    %v1519 = vmul.f32 %v1166, %v1498
    %v1520 = vmul.f32 %v1168, %v1502
    %v1521 = vmul.f32 %v1170, %v1498
    %v1522 = vmul.f32 %v1172, %v1502
    %v1523 = vmul.f32 %v1176, %v1498
    %v1524 = vmul.f32 %v1178, %v1502
    %v1525 = vmul.f32 %v1180, %v1498
    %v1526 = vmul.f32 %v1182, %v1502
    %v1527 = vmul.f32 %v1186, %v1498
    %v1528 = vmul.f32 %v1188, %v1502
    %v1529 = vmul.f32 %v1190, %v1498
    %v1530 = vmul.f32 %v1192, %v1502
    %v1531 = vmul.f32 %v1196, %v1498
    %v1532 = vmul.f32 %v1198, %v1502
    %v1533 = vmul.f32 %v1200, %v1498
    %v1534 = vmul.f32 %v1202, %v1502
    %v1535 = vmul.f32 %v1206, %v1498
    %v1536 = vmul.f32 %v1208, %v1502
    %v1537 = vmul.f32 %v1210, %v1498
    %v1538 = vmul.f32 %v1212, %v1502
    %v1539 = vmul.f32 %v1216, %v1498
    %v1540 = vmul.f32 %v1218, %v1502
    %v1541 = vmul.f32 %v1220, %v1498
    %v1542 = vmul.f32 %v1222, %v1502
    %v1543 = vmul.f32 %v1226, %v1498
    %v1544 = vmul.f32 %v1228, %v1502
    %v1545 = vmul.f32 %v1230, %v1498
    %v1546 = vmul.f32 %v1232, %v1502
    %v1547 = vmul.f32 %v1236, %v1498
    %v1548 = vmul.f32 %v1238, %v1502
    %v1549 = vmul.f32 %v1240, %v1498
    %v1550 = vmul.f32 %v1242, %v1502
    %v1551 = vmul.f32 %v1246, %v1498
    %v1552 = vmul.f32 %v1248, %v1502
    %v1553 = vmul.f32 %v1250, %v1498
    %v1554 = vmul.f32 %v1252, %v1502
    %v1555 = vmul.f32 %v1256, %v1498
    %v1556 = vmul.f32 %v1258, %v1502
    %v1558 = vlaneseq
    %v1559 = vshrl.u32 %v1558, 7
    %v1560 = vsub.s32 0, %v1559
    %v1561 = vrot.slane %v1494, %v1560
    %v1562 = vlaneseq
    %v1563 = vshrl.u32 %v1562, 7
    %v1564 = vsub.s32 1, %v1563
    %v1565 = vrot.slane %v1494, %v1564
    %v1568 = vadd.f32 %v1503, %v1561
    %v1569 = vadd.f32 %v1504, %v1565
    %v1570 = vadd.f32 %v1505, %v1561
    %v1571 = vadd.f32 %v1506, %v1565
    %v1572 = vadd.f32 %v1507, %v1561
    %v1573 = vadd.f32 %v1508, %v1565
    %v1574 = vadd.f32 %v1509, %v1561
    %v1575 = vadd.f32 %v1510, %v1565
    %v1576 = vadd.f32 %v1511, %v1561
    %v1577 = vadd.f32 %v1512, %v1565
    %v1578 = vadd.f32 %v1513, %v1561
    %v1579 = vadd.f32 %v1514, %v1565
    %v1580 = vadd.f32 %v1515, %v1561
    %v1581 = vadd.f32 %v1516, %v1565
    %v1582 = vadd.f32 %v1517, %v1561
    %v1583 = vadd.f32 %v1518, %v1565
    %v1584 = vadd.f32 %v1519, %v1561
    %v1585 = vadd.f32 %v1520, %v1565
    %v1586 = vadd.f32 %v1521, %v1561
    %v1587 = vadd.f32 %v1522, %v1565
    %v1588 = vadd.f32 %v1523, %v1561
    %v1589 = vadd.f32 %v1524, %v1565
    %v1590 = vadd.f32 %v1525, %v1561
    %v1591 = vadd.f32 %v1526, %v1565
    %v1592 = vadd.f32 %v1527, %v1561
    %v1593 = vadd.f32 %v1528, %v1565
    %v1594 = vadd.f32 %v1529, %v1561
    %v1595 = vadd.f32 %v1530, %v1565
    %v1596 = vadd.f32 %v1531, %v1561
    %v1597 = vadd.f32 %v1532, %v1565
    %v1598 = vadd.f32 %v1533, %v1561
    %v1599 = vadd.f32 %v1534, %v1565
    %v1600 = vadd.f32 %v1535, %v1561
    %v1601 = vadd.f32 %v1536, %v1565
    %v1602 = vadd.f32 %v1537, %v1561
    %v1603 = vadd.f32 %v1538, %v1565
    %v1604 = vadd.f32 %v1539, %v1561
    %v1605 = vadd.f32 %v1540, %v1565
    %v1606 = vadd.f32 %v1541, %v1561
    %v1607 = vadd.f32 %v1542, %v1565
    %v1608 = vadd.f32 %v1543, %v1561
    %v1609 = vadd.f32 %v1544, %v1565
    %v1610 = vadd.f32 %v1545, %v1561
    %v1611 = vadd.f32 %v1546, %v1565
    %v1612 = vadd.f32 %v1547, %v1561
    %v1613 = vadd.f32 %v1548, %v1565
    %v1614 = vadd.f32 %v1549, %v1561
    %v1615 = vadd.f32 %v1550, %v1565
    %v1616 = vadd.f32 %v1551, %v1561
    %v1617 = vadd.f32 %v1552, %v1565
    %v1618 = vadd.f32 %v1553, %v1561
    %v1619 = vadd.f32 %v1554, %v1565
    %v1620 = vadd.f32 %v1555, %v1561
    %v1621 = vadd.f32 %v1556, %v1565
    %vm1622 = vcmp.ge.f32.partialorder %v1568, 0.0
    %vm1623 = vcmp.ge.f32.partialorder %v1569, 0.0
    %vm1624 = vcmp.ge.f32.partialorder %v1570, 0.0
    %vm1625 = vcmp.ge.f32.partialorder %v1571, 0.0
    %vm1626 = vcmp.ge.f32.partialorder %v1572, 0.0
    %vm1627 = vcmp.ge.f32.partialorder %v1573, 0.0
    %vm1628 = vcmp.ge.f32.partialorder %v1574, 0.0
    %vm1629 = vcmp.ge.f32.partialorder %v1575, 0.0
    %vm1630 = vcmp.ge.f32.partialorder %v1576, 0.0
    %vm1631 = vcmp.ge.f32.partialorder %v1577, 0.0
    %vm1632 = vcmp.ge.f32.partialorder %v1578, 0.0
    %vm1633 = vcmp.ge.f32.partialorder %v1579, 0.0
    %vm1634 = vcmp.ge.f32.partialorder %v1580, 0.0
    %vm1635 = vcmp.ge.f32.partialorder %v1581, 0.0
    %vm1636 = vcmp.ge.f32.partialorder %v1582, 0.0
    %vm1637 = vcmp.ge.f32.partialorder %v1583, 0.0
    %vm1638 = vcmp.ge.f32.partialorder %v1584, 0.0
    %vm1639 = vcmp.ge.f32.partialorder %v1585, 0.0
    %vm1640 = vcmp.ge.f32.partialorder %v1586, 0.0
    %vm1641 = vcmp.ge.f32.partialorder %v1587, 0.0
    %vm1642 = vcmp.ge.f32.partialorder %v1588, 0.0
    %vm1643 = vcmp.ge.f32.partialorder %v1589, 0.0
    %vm1644 = vcmp.ge.f32.partialorder %v1590, 0.0
    %vm1645 = vcmp.ge.f32.partialorder %v1591, 0.0
    %vm1646 = vcmp.ge.f32.partialorder %v1592, 0.0
    %vm1647 = vcmp.ge.f32.partialorder %v1593, 0.0
    %vm1648 = vcmp.ge.f32.partialorder %v1594, 0.0
    %vm1649 = vcmp.ge.f32.partialorder %v1595, 0.0
    %vm1650 = vcmp.ge.f32.partialorder %v1596, 0.0
    %vm1651 = vcmp.ge.f32.partialorder %v1597, 0.0
    %vm1652 = vcmp.ge.f32.partialorder %v1598, 0.0
    %vm1653 = vcmp.ge.f32.partialorder %v1599, 0.0
    %vm1654 = vcmp.ge.f32.partialorder %v1600, 0.0
    %vm1655 = vcmp.ge.f32.partialorder %v1601, 0.0
    %vm1656 = vcmp.ge.f32.partialorder %v1602, 0.0
    %vm1657 = vcmp.ge.f32.partialorder %v1603, 0.0
    %vm1658 = vcmp.ge.f32.partialorder %v1604, 0.0
    %vm1659 = vcmp.ge.f32.partialorder %v1605, 0.0
    %vm1660 = vcmp.ge.f32.partialorder %v1606, 0.0
    %vm1661 = vcmp.ge.f32.partialorder %v1607, 0.0
    %vm1662 = vcmp.ge.f32.partialorder %v1608, 0.0
    %vm1663 = vcmp.ge.f32.partialorder %v1609, 0.0
    %vm1664 = vcmp.ge.f32.partialorder %v1610, 0.0
    %vm1665 = vcmp.ge.f32.partialorder %v1611, 0.0
    %vm1666 = vcmp.ge.f32.partialorder %v1612, 0.0
    %vm1667 = vcmp.ge.f32.partialorder %v1613, 0.0
    %vm1668 = vcmp.ge.f32.partialorder %v1614, 0.0
    %vm1669 = vcmp.ge.f32.partialorder %v1615, 0.0
    %vm1670 = vcmp.ge.f32.partialorder %v1616, 0.0
    %vm1671 = vcmp.ge.f32.partialorder %v1617, 0.0
    %vm1672 = vcmp.ge.f32.partialorder %v1618, 0.0
    %vm1673 = vcmp.ge.f32.partialorder %v1619, 0.0
    %vm1674 = vcmp.ge.f32.partialorder %v1620, 0.0
    %vm1675 = vcmp.ge.f32.partialorder %v1621, 0.0
    %v1676 = vstv %s897
    %v1677 = vmul.f32 %v1676, %v1568
    %v1678 = vmul.f32 %v1676, %v1569
    %v1679 = vmul.f32 %v1676, %v1570
    %v1680 = vmul.f32 %v1676, %v1571
    %v1681 = vmul.f32 %v1676, %v1572
    %v1682 = vmul.f32 %v1676, %v1573
    %v1683 = vmul.f32 %v1676, %v1574
    %v1684 = vmul.f32 %v1676, %v1575
    %v1685 = vmul.f32 %v1676, %v1576
    %v1686 = vmul.f32 %v1676, %v1577
    %v1687 = vmul.f32 %v1676, %v1578
    %v1688 = vmul.f32 %v1676, %v1579
    %v1689 = vmul.f32 %v1676, %v1580
    %v1690 = vmul.f32 %v1676, %v1581
    %v1691 = vmul.f32 %v1676, %v1582
    %v1692 = vmul.f32 %v1676, %v1583
    %v1693 = vmul.f32 %v1676, %v1584
    %v1694 = vmul.f32 %v1676, %v1585
    %v1695 = vmul.f32 %v1676, %v1586
    %v1696 = vmul.f32 %v1676, %v1587
    %v1697 = vmul.f32 %v1676, %v1588
    %v1698 = vmul.f32 %v1676, %v1589
    %v1699 = vmul.f32 %v1676, %v1590
    %v1700 = vmul.f32 %v1676, %v1591
    %v1701 = vmul.f32 %v1676, %v1592
    %v1702 = vmul.f32 %v1676, %v1593
    %v1703 = vmul.f32 %v1676, %v1594
    %v1704 = vmul.f32 %v1676, %v1595
    %v1705 = vmul.f32 %v1676, %v1596
    %v1706 = vmul.f32 %v1676, %v1597
    %v1707 = vmul.f32 %v1676, %v1598
    %v1708 = vmul.f32 %v1676, %v1599
    %v1709 = vmul.f32 %v1676, %v1600
    %v1710 = vmul.f32 %v1676, %v1601
    %v1711 = vmul.f32 %v1676, %v1602
    %v1712 = vmul.f32 %v1676, %v1603
    %v1713 = vmul.f32 %v1676, %v1604
    %v1714 = vmul.f32 %v1676, %v1605
    %v1715 = vmul.f32 %v1676, %v1606
    %v1716 = vmul.f32 %v1676, %v1607
    %v1717 = vmul.f32 %v1676, %v1608
    %v1718 = vmul.f32 %v1676, %v1609
    %v1719 = vmul.f32 %v1676, %v1610
    %v1720 = vmul.f32 %v1676, %v1611
    %v1721 = vmul.f32 %v1676, %v1612
    %v1722 = vmul.f32 %v1676, %v1613
    %v1723 = vmul.f32 %v1676, %v1614
    %v1724 = vmul.f32 %v1676, %v1615
    %v1725 = vmul.f32 %v1676, %v1616
    %v1726 = vmul.f32 %v1676, %v1617
    %v1727 = vmul.f32 %v1676, %v1618
    %v1728 = vmul.f32 %v1676, %v1619
    %v1729 = vmul.f32 %v1676, %v1620
    %v1730 = vmul.f32 %v1676, %v1621
    %v1731 = vsel %vm1622, %v1568, %v1677
    %v1732 = vsel %vm1623, %v1569, %v1678
    %v1733 = vsel %vm1624, %v1570, %v1679
    %v1734 = vsel %vm1625, %v1571, %v1680
    %v1735 = vsel %vm1626, %v1572, %v1681
    %v1736 = vsel %vm1627, %v1573, %v1682
    %v1737 = vsel %vm1628, %v1574, %v1683
    %v1738 = vsel %vm1629, %v1575, %v1684
    %v1739 = vsel %vm1630, %v1576, %v1685
    %v1740 = vsel %vm1631, %v1577, %v1686
    %v1741 = vsel %vm1632, %v1578, %v1687
    %v1742 = vsel %vm1633, %v1579, %v1688
    %v1743 = vsel %vm1634, %v1580, %v1689
    %v1744 = vsel %vm1635, %v1581, %v1690
    %v1745 = vsel %vm1636, %v1582, %v1691
    %v1746 = vsel %vm1637, %v1583, %v1692
    %v1747 = vsel %vm1638, %v1584, %v1693
    %v1748 = vsel %vm1639, %v1585, %v1694
    %v1749 = vsel %vm1640, %v1586, %v1695
    %v1750 = vsel %vm1641, %v1587, %v1696
    %v1751 = vsel %vm1642, %v1588, %v1697
    %v1752 = vsel %vm1643, %v1589, %v1698
    %v1753 = vsel %vm1644, %v1590, %v1699
    %v1754 = vsel %vm1645, %v1591, %v1700
    %v1755 = vsel %vm1646, %v1592, %v1701
    %v1756 = vsel %vm1647, %v1593, %v1702
    %v1757 = vsel %vm1648, %v1594, %v1703
    %v1758 = vsel %vm1649, %v1595, %v1704
    %v1759 = vsel %vm1650, %v1596, %v1705
    %v1760 = vsel %vm1651, %v1597, %v1706
    %v1761 = vsel %vm1652, %v1598, %v1707
    %v1762 = vsel %vm1653, %v1599, %v1708
    %v1763 = vsel %vm1654, %v1600, %v1709
    %v1764 = vsel %vm1655, %v1601, %v1710
    %v1765 = vsel %vm1656, %v1602, %v1711
    %v1766 = vsel %vm1657, %v1603, %v1712
    %v1767 = vsel %vm1658, %v1604, %v1713
    %v1768 = vsel %vm1659, %v1605, %v1714
    %v1769 = vsel %vm1660, %v1606, %v1715
    %v1770 = vsel %vm1661, %v1607, %v1716
    %v1771 = vsel %vm1662, %v1608, %v1717
    %v1772 = vsel %vm1663, %v1609, %v1718
    %v1773 = vsel %vm1664, %v1610, %v1719
    %v1774 = vsel %vm1665, %v1611, %v1720
    %v1775 = vsel %vm1666, %v1612, %v1721
    %v1776 = vsel %vm1667, %v1613, %v1722
    %v1777 = vsel %vm1668, %v1614, %v1723
    %v1778 = vsel %vm1669, %v1615, %v1724
    %v1779 = vsel %vm1670, %v1616, %v1725
    %v1780 = vsel %vm1671, %v1617, %v1726
    %v1781 = vsel %vm1672, %v1618, %v1727
    %v1782 = vsel %vm1673, %v1619, %v1728
    %v1783 = vsel %vm1674, %v1620, %v1729
    %v1784 = vsel %vm1675, %v1621, %v1730
    %v1785 = vpack.c.bf16 %v1733, %v1731
    %v1786 = vpack.c.bf16 %v1734, %v1732
    %v1787 = vpack.c.bf16 %v1737, %v1735
    %v1788 = vpack.c.bf16 %v1738, %v1736
    %v1789 = vpack.c.bf16 %v1741, %v1739
    %v1790 = vpack.c.bf16 %v1742, %v1740
    %v1791 = vpack.c.bf16 %v1745, %v1743
    %v1792 = vpack.c.bf16 %v1746, %v1744
    %v1793 = vpack.c.bf16 %v1749, %v1747
    %v1794 = vpack.c.bf16 %v1750, %v1748
    %v1795 = vpack.c.bf16 %v1753, %v1751
    %v1796 = vpack.c.bf16 %v1754, %v1752
    %v1797 = vpack.c.bf16 %v1757, %v1755
    %v1798 = vpack.c.bf16 %v1758, %v1756
    %v1799 = vpack.c.bf16 %v1761, %v1759
    %v1800 = vpack.c.bf16 %v1762, %v1760
    %v1801 = vpack.c.bf16 %v1765, %v1763
    %v1802 = vpack.c.bf16 %v1766, %v1764
    %v1803 = vpack.c.bf16 %v1769, %v1767
    %v1804 = vpack.c.bf16 %v1770, %v1768
    %v1805 = vpack.c.bf16 %v1773, %v1771
    %v1806 = vpack.c.bf16 %v1774, %v1772
    %v1807 = vpack.c.bf16 %v1777, %v1775
    %v1808 = vpack.c.bf16 %v1778, %v1776
    %v1809 = vpack.c.bf16 %v1781, %v1779
    %v1810 = vpack.c.bf16 %v1782, %v1780
    %v1811 = vpack.c.bf16 %v1783, %v1783
    %v1812 = vpack.c.bf16 %v1784, %v1784
    %v1813 = vld [vmem:[#allocation6] sm:$0xff]
    %v1814 = vld [vmem:[#allocation6 + $0x8] sm:$0xff]
    %v1815 = vld [vmem:[#allocation6 + $0x10] sm:$0xff]
    %v1816 = vld [vmem:[#allocation6 + $0x18] sm:$0xff]
    %v1817 = vld [vmem:[#allocation6 + $0x20] sm:$0xff]
    %v1818 = vld [vmem:[#allocation6 + $0x28] sm:$0xff]
    %v1819 = vld [vmem:[#allocation6 + $0x30] sm:$0xff]
    %v1820 = vld [vmem:[#allocation6 + $0x38] sm:$0xff]
    %v1821 = vld [vmem:[#allocation6 + $0x40] sm:$0xff]
    %v1822 = vld [vmem:[#allocation6 + $0x48] sm:$0xff]
    %v1823 = vld [vmem:[#allocation6 + $0x50] sm:$0xff]
    %v1824 = vld [vmem:[#allocation6 + $0x58] sm:$0xff]
    %v1825 = vld [vmem:[#allocation6 + $0x60] sm:$0xff]
    %v1826 = vld [vmem:[#allocation6 + $0x68] sm:$0xff]
    %v1827 = vld [vmem:[#allocation6 + $0x70] sm:$0xff]
    %v1828 = vld [vmem:[#allocation6 + $0x78] sm:$0xff]
    %v1829 = vld [vmem:[#allocation6 + $0x80] sm:$0xff]
    %v1830 = vld [vmem:[#allocation6 + $0x88] sm:$0xff]
    %v1831 = vld [vmem:[#allocation6 + $0x90] sm:$0xff]
    %v1832 = vld [vmem:[#allocation6 + $0x98] sm:$0xff]
    %v1833 = vld [vmem:[#allocation6 + $0xa0] sm:$0xff]
    %v1834 = vld [vmem:[#allocation6 + $0xa8] sm:$0xff]
    %v1835 = vld [vmem:[#allocation6 + $0xb0] sm:$0xff]
    %v1836 = vld [vmem:[#allocation6 + $0xb8] sm:$0xff]
    %v1837 = vld [vmem:[#allocation6 + $0xc0] sm:$0xff]
    %v1838 = vld [vmem:[#allocation6 + $0xc8] sm:$0xff]
    %v1839 = vld [vmem:[#allocation6 + $0xd0] sm:$0xff]
    %v1840 = vld [vmem:[#allocation6 + $0xd8] sm:$0xff]
    %v1841 = vld [vmem:[#allocation6 + $0xe0] sm:$0xff]
    %v1842 = vld [vmem:[#allocation6 + $0xe8] sm:$0xff]
    %v1843 = vld [vmem:[#allocation6 + $0xf0] sm:$0xff]
    %v1844 = vld [vmem:[#allocation6 + $0xf8] sm:$0xff]
    %v1877 = vunpack.c.l.b16 %v1813
    %v1878 = vunpack.c.h.b16 %v1813
    %v1879 = vunpack.c.l.b16 %v1814
    %v1880 = vunpack.c.h.b16 %v1814
    %v1881 = vunpack.c.l.b16 %v1815
    %v1882 = vunpack.c.h.b16 %v1815
    %v1883 = vunpack.c.l.b16 %v1816
    %v1884 = vunpack.c.h.b16 %v1816
    %v1885 = vunpack.c.l.b16 %v1817
    %v1886 = vunpack.c.h.b16 %v1817
    %v1887 = vunpack.c.l.b16 %v1818
    %v1888 = vunpack.c.h.b16 %v1818
    %v1889 = vunpack.c.l.b16 %v1819
    %v1890 = vunpack.c.h.b16 %v1819
    %v1891 = vunpack.c.l.b16 %v1820
    %v1892 = vunpack.c.h.b16 %v1820
    %v1893 = vunpack.c.l.b16 %v1821
    %v1894 = vunpack.c.h.b16 %v1821
    %v1895 = vunpack.c.l.b16 %v1822
    %v1896 = vunpack.c.h.b16 %v1822
    %v1897 = vunpack.c.l.b16 %v1823
    %v1898 = vunpack.c.h.b16 %v1823
    %v1899 = vunpack.c.l.b16 %v1824
    %v1900 = vunpack.c.h.b16 %v1824
    %v1901 = vunpack.c.l.b16 %v1825
    %v1902 = vunpack.c.h.b16 %v1825
    %v1903 = vunpack.c.l.b16 %v1826
    %v1904 = vunpack.c.h.b16 %v1826
    %v1905 = vunpack.c.l.b16 %v1827
    %v1906 = vunpack.c.h.b16 %v1827
    %v1907 = vunpack.c.l.b16 %v1828
    %v1908 = vunpack.c.h.b16 %v1828
    %v1909 = vunpack.c.l.b16 %v1829
    %v1910 = vunpack.c.h.b16 %v1829
    %v1911 = vunpack.c.l.b16 %v1830
    %v1912 = vunpack.c.h.b16 %v1830
    %v1913 = vunpack.c.l.b16 %v1831
    %v1914 = vunpack.c.h.b16 %v1831
    %v1915 = vunpack.c.l.b16 %v1832
    %v1916 = vunpack.c.h.b16 %v1832
    %v1917 = vunpack.c.l.b16 %v1833
    %v1918 = vunpack.c.h.b16 %v1833
    %v1919 = vunpack.c.l.b16 %v1834
    %v1920 = vunpack.c.h.b16 %v1834
    %v1921 = vunpack.c.l.b16 %v1835
    %v1922 = vunpack.c.h.b16 %v1835
    %v1923 = vunpack.c.l.b16 %v1836
    %v1924 = vunpack.c.h.b16 %v1836
    %v1925 = vunpack.c.l.b16 %v1837
    %v1926 = vunpack.c.h.b16 %v1837
    %v1927 = vunpack.c.l.b16 %v1838
    %v1928 = vunpack.c.h.b16 %v1838
    %v1929 = vunpack.c.l.b16 %v1839
    %v1930 = vunpack.c.h.b16 %v1839
    %v1931 = vunpack.c.l.b16 %v1840
    %v1932 = vunpack.c.h.b16 %v1840
    %v1933 = vunpack.c.l.b16 %v1841
    %v1934 = vunpack.c.h.b16 %v1841
    %v1935 = vunpack.c.l.b16 %v1842
    %v1936 = vunpack.c.h.b16 %v1842
    %v1937 = vunpack.c.l.b16 %v1843
    %v1938 = vunpack.c.h.b16 %v1843
    %v1939 = vunpack.c.l.b16 %v1844
    %v1940 = vunpack.c.h.b16 %v1844
    %v1941 = vpack.c.b16 %v1879, %v1877
    %v1942 = vpack.c.b16 %v1880, %v1878
    %v1943 = vpack.c.b16 %v1883, %v1881
    %v1944 = vpack.c.b16 %v1884, %v1882
    %v1945 = vpack.c.b16 %v1887, %v1885
    %v1946 = vpack.c.b16 %v1888, %v1886
    %v1947 = vpack.c.b16 %v1891, %v1889
    %v1948 = vpack.c.b16 %v1892, %v1890
    %v1949 = vpack.c.b16 %v1895, %v1893
    %v1950 = vpack.c.b16 %v1896, %v1894
    %v1951 = vpack.c.b16 %v1899, %v1897
    %v1952 = vpack.c.b16 %v1900, %v1898
    %v1953 = vpack.c.b16 %v1903, %v1901
    %v1954 = vpack.c.b16 %v1904, %v1902
    %v1955 = vpack.c.b16 %v1907, %v1905
    %v1956 = vpack.c.b16 %v1908, %v1906
    %v1957 = vpack.c.b16 %v1911, %v1909
    %v1958 = vpack.c.b16 %v1912, %v1910
    %v1959 = vpack.c.b16 %v1915, %v1913
    %v1960 = vpack.c.b16 %v1916, %v1914
    %v1961 = vpack.c.b16 %v1919, %v1917
    %v1962 = vpack.c.b16 %v1920, %v1918
    %v1963 = vpack.c.b16 %v1923, %v1921
    %v1964 = vpack.c.b16 %v1924, %v1922
    %v1965 = vpack.c.b16 %v1927, %v1925
    %v1966 = vpack.c.b16 %v1928, %v1926
    %v1967 = vpack.c.b16 %v1931, %v1929
    %v1968 = vpack.c.b16 %v1932, %v1930
    %v1969 = vpack.c.b16 %v1935, %v1933
    %v1970 = vpack.c.b16 %v1936, %v1934
    %v1971 = vpack.c.b16 %v1939, %v1937
    %v1972 = vpack.c.b16 %v1940, %v1938
    %2005 = vmatprep.subr.bf16.mxu0 %v1956
    %2006 = vmatpush1.bf16.msra.mxu0 %v1955
    %2007 = vmatprep.subr.bf16.mxu0 %v1954
    %2008 = vmatpush1.bf16.msra.mxu0 %v1953
    %2009 = vmatprep.subr.bf16.mxu0 %v1952
    %2010 = vmatpush1.bf16.msra.mxu0 %v1951
    %2011 = vmatprep.subr.bf16.mxu0 %v1950
    %2012 = vmatpush1.bf16.msra.mxu0 %v1949
    %2013 = vmatprep.subr.bf16.mxu0 %v1948
    %2014 = vmatpush1.bf16.msra.mxu0 %v1947
    %2015 = vmatprep.subr.bf16.mxu0 %v1946
    %2016 = vmatpush1.bf16.msra.mxu0 %v1945
    %2017 = vmatprep.subr.bf16.mxu0 %v1944
    %2018 = vmatpush1.bf16.msra.mxu0 %v1943
    %2019 = vmatprep.subr.bf16.mxu0 %v1942
    %2020 = vmatpush1.bf16.msra.mxu0 %v1941
    %2021 = vmatprep.subr.bf16.mxu0 %v1972
    %2022 = vmatpush2.bf16.msra.mxu0 %v1971
    %2023 = vmatprep.subr.bf16.mxu0 %v1970
    %2024 = vmatpush2.bf16.msra.mxu0 %v1969
    %2025 = vmatprep.subr.bf16.mxu0 %v1968
    %2026 = vmatpush2.bf16.msra.mxu0 %v1967
    %2027 = vmatprep.subr.bf16.mxu0 %v1966
    %2028 = vmatpush2.bf16.msra.mxu0 %v1965
    %2029 = vmatprep.subr.bf16.mxu0 %v1964
    %2030 = vmatpush2.bf16.msra.mxu0 %v1963
    %2031 = vmatprep.subr.bf16.mxu0 %v1962
    %2032 = vmatpush2.bf16.msra.mxu0 %v1961
    %2033 = vmatprep.subr.bf16.mxu0 %v1960
    %2034 = vmatpush2.bf16.msra.mxu0 %v1959
    %2035 = vmatprep.subr.bf16.mxu0 %v1958
    %2036 = vmatpush2.bf16.msra.mxu0 %v1957
    %2037 = vmatprep.mubr.bf16.mxu0 %v1786
    %2038 = vmatmul.mubr.bf16.gmra.mxu0 %v1785
    %v2039 = vpop.f32.mrf.mxu0
    %v2040 = vadd.f32 0.0, %v2039
    %v2041 = vpop.f32.mrf.mxu0
    %v2042 = vadd.f32 0.0, %v2041
    %v2043 = vpop.f32.mrf.mxu0
    %v2044 = vadd.f32 0.0, %v2043
    %v2045 = vpop.f32.mrf.mxu0
    %v2046 = vadd.f32 0.0, %v2045
    %2047 = vmatprep.mubr.bf16.mxu0 %v1788
    %2048 = vmatmul.mubr.bf16.gmra.mxu0 %v1787
    %v2049 = vpop.f32.mrf.mxu0
    %v2050 = vadd.f32 0.0, %v2049
    %v2051 = vpop.f32.mrf.mxu0
    %v2052 = vadd.f32 0.0, %v2051
    %v2053 = vpop.f32.mrf.mxu0
    %v2054 = vadd.f32 0.0, %v2053
    %v2055 = vpop.f32.mrf.mxu0
    %v2056 = vadd.f32 0.0, %v2055
    %2057 = vmatprep.mubr.bf16.mxu0 %v1790
    %2058 = vmatmul.mubr.bf16.gmra.mxu0 %v1789
    %v2059 = vpop.f32.mrf.mxu0
    %v2060 = vadd.f32 0.0, %v2059
    %v2061 = vpop.f32.mrf.mxu0
    %v2062 = vadd.f32 0.0, %v2061
    %v2063 = vpop.f32.mrf.mxu0
    %v2064 = vadd.f32 0.0, %v2063
    %v2065 = vpop.f32.mrf.mxu0
    %v2066 = vadd.f32 0.0, %v2065
    %2067 = vmatprep.mubr.bf16.mxu0 %v1792
    %2068 = vmatmul.mubr.bf16.gmra.mxu0 %v1791
    %v2069 = vpop.f32.mrf.mxu0
    %v2070 = vadd.f32 0.0, %v2069
    %v2071 = vpop.f32.mrf.mxu0
    %v2072 = vadd.f32 0.0, %v2071
    %v2073 = vpop.f32.mrf.mxu0
    %v2074 = vadd.f32 0.0, %v2073
    %v2075 = vpop.f32.mrf.mxu0
    %v2076 = vadd.f32 0.0, %v2075
    %2077 = vmatprep.mubr.bf16.mxu0 %v1794
    %2078 = vmatmul.mubr.bf16.gmra.mxu0 %v1793
    %v2079 = vpop.f32.mrf.mxu0
    %v2080 = vadd.f32 0.0, %v2079
    %v2081 = vpop.f32.mrf.mxu0
    %v2082 = vadd.f32 0.0, %v2081
    %v2083 = vpop.f32.mrf.mxu0
    %v2084 = vadd.f32 0.0, %v2083
    %v2085 = vpop.f32.mrf.mxu0
    %v2086 = vadd.f32 0.0, %v2085
    %2087 = vmatprep.mubr.bf16.mxu0 %v1796
    %2088 = vmatmul.mubr.bf16.gmra.mxu0 %v1795
    %v2089 = vpop.f32.mrf.mxu0
    %v2090 = vadd.f32 0.0, %v2089
    %v2091 = vpop.f32.mrf.mxu0
    %v2092 = vadd.f32 0.0, %v2091
    %v2093 = vpop.f32.mrf.mxu0
    %v2094 = vadd.f32 0.0, %v2093
    %v2095 = vpop.f32.mrf.mxu0
    %v2096 = vadd.f32 0.0, %v2095
    %2097 = vmatprep.mubr.bf16.mxu0 %v1798
    %2098 = vmatmul.mubr.bf16.gmra.mxu0 %v1797
    %v2099 = vpop.f32.mrf.mxu0
    %v2100 = vadd.f32 0.0, %v2099
    %v2101 = vpop.f32.mrf.mxu0
    %v2102 = vadd.f32 0.0, %v2101
    %v2103 = vpop.f32.mrf.mxu0
    %v2104 = vadd.f32 0.0, %v2103
    %v2105 = vpop.f32.mrf.mxu0
    %v2106 = vadd.f32 0.0, %v2105
    %2107 = vmatprep.mubr.bf16.mxu0 %v1800
    %2108 = vmatmul.mubr.bf16.gmra.mxu0 %v1799
    %v2109 = vpop.f32.mrf.mxu0
    %v2110 = vadd.f32 0.0, %v2109
    %v2111 = vpop.f32.mrf.mxu0
    %v2112 = vadd.f32 0.0, %v2111
    %v2113 = vpop.f32.mrf.mxu0
    %v2114 = vadd.f32 0.0, %v2113
    %v2115 = vpop.f32.mrf.mxu0
    %v2116 = vadd.f32 0.0, %v2115
    %2117 = vmatprep.mubr.bf16.mxu0 %v1802
    %2118 = vmatmul.mubr.bf16.gmra.mxu0 %v1801
    %v2119 = vpop.f32.mrf.mxu0
    %v2120 = vadd.f32 0.0, %v2119
    %v2121 = vpop.f32.mrf.mxu0
    %v2122 = vadd.f32 0.0, %v2121
    %v2123 = vpop.f32.mrf.mxu0
    %v2124 = vadd.f32 0.0, %v2123
    %v2125 = vpop.f32.mrf.mxu0
    %v2126 = vadd.f32 0.0, %v2125
    %2127 = vmatprep.mubr.bf16.mxu0 %v1804
    %2128 = vmatmul.mubr.bf16.gmra.mxu0 %v1803
    %v2129 = vpop.f32.mrf.mxu0
    %v2130 = vadd.f32 0.0, %v2129
    %v2131 = vpop.f32.mrf.mxu0
    %v2132 = vadd.f32 0.0, %v2131
    %v2133 = vpop.f32.mrf.mxu0
    %v2134 = vadd.f32 0.0, %v2133
    %v2135 = vpop.f32.mrf.mxu0
    %v2136 = vadd.f32 0.0, %v2135
    %2137 = vmatprep.mubr.bf16.mxu0 %v1806
    %2138 = vmatmul.mubr.bf16.gmra.mxu0 %v1805
    %v2139 = vpop.f32.mrf.mxu0
    %v2140 = vadd.f32 0.0, %v2139
    %v2141 = vpop.f32.mrf.mxu0
    %v2142 = vadd.f32 0.0, %v2141
    %v2143 = vpop.f32.mrf.mxu0
    %v2144 = vadd.f32 0.0, %v2143
    %v2145 = vpop.f32.mrf.mxu0
    %v2146 = vadd.f32 0.0, %v2145
    %2147 = vmatprep.mubr.bf16.mxu0 %v1808
    %2148 = vmatmul.mubr.bf16.gmra.mxu0 %v1807
    %v2149 = vpop.f32.mrf.mxu0
    %v2150 = vadd.f32 0.0, %v2149
    %v2151 = vpop.f32.mrf.mxu0
    %v2152 = vadd.f32 0.0, %v2151
    %v2153 = vpop.f32.mrf.mxu0
    %v2154 = vadd.f32 0.0, %v2153
    %v2155 = vpop.f32.mrf.mxu0
    %v2156 = vadd.f32 0.0, %v2155
    %2157 = vmatprep.mubr.bf16.mxu0 %v1810
    %2158 = vmatmul.mubr.bf16.gmra.mxu0 %v1809
    %v2159 = vpop.f32.mrf.mxu0
    %v2160 = vadd.f32 0.0, %v2159
    %v2161 = vpop.f32.mrf.mxu0
    %v2162 = vadd.f32 0.0, %v2161
    %v2163 = vpop.f32.mrf.mxu0
    %v2164 = vadd.f32 0.0, %v2163
    %v2165 = vpop.f32.mrf.mxu0
    %v2166 = vadd.f32 0.0, %v2165
    %2167 = vmatprep.mubr.bf16.mxu0 %v1812
    %2168 = vmatmul.mubr.bf16.gmra.mxu0 %v1811
    %v2169 = vpop.f32.mrf.mxu0
    %v2170 = vadd.f32 0.0, %v2169
    %v2171 = vpop.f32.mrf.mxu0
    %v2172 = vadd.f32 0.0, %v2171
    %v2173 = vpop.f32.mrf.mxu0
    %v2174 = vpop.f32.mrf.mxu0
    %2175 = vdwg.mxu0
    %v2176 = vadd.f32 %v2040, %v2044
    %v2177 = vadd.f32 %v2176, %v2050
    %v2178 = vadd.f32 %v2177, %v2054
    %v2179 = vadd.f32 %v2178, %v2060
    %v2180 = vadd.f32 %v2179, %v2064
    %v2181 = vadd.f32 %v2180, %v2070
    %v2182 = vadd.f32 %v2181, %v2074
    %v2183 = vadd.f32 %v2182, %v2080
    %v2184 = vadd.f32 %v2183, %v2084
    %v2185 = vadd.f32 %v2184, %v2090
    %v2186 = vadd.f32 %v2185, %v2094
    %v2187 = vadd.f32 %v2186, %v2100
    %v2188 = vadd.f32 %v2187, %v2104
    %v2189 = vadd.f32 %v2188, %v2110
    %v2190 = vadd.f32 %v2189, %v2114
    %v2191 = vadd.f32 %v2190, %v2120
    %v2192 = vadd.f32 %v2191, %v2124
    %v2193 = vadd.f32 %v2192, %v2130
    %v2194 = vadd.f32 %v2193, %v2134
    %v2195 = vadd.f32 %v2194, %v2140
    %v2196 = vadd.f32 %v2195, %v2144
    %v2197 = vadd.f32 %v2196, %v2150
    %v2198 = vadd.f32 %v2197, %v2154
    %v2199 = vadd.f32 %v2198, %v2160
    %v2200 = vadd.f32 %v2199, %v2164
    %v2201 = vadd.f32 %v2200, %v2170
    %v2202 = vrot.slane %v2201, 4
    %v2203 = vadd.f32 %v2201, %v2202
    %v2204 = vrot.slane %v2203, 2
    %v2205 = vadd.f32 %v2203, %v2204
    %v2206 = vrot.slane %v2205, 1
    %v2207 = vadd.f32 %v2205, %v2206
    %v2208 = vadd.f32 %v2042, %v2046
    %v2209 = vadd.f32 %v2208, %v2052
    %v2210 = vadd.f32 %v2209, %v2056
    %v2211 = vadd.f32 %v2210, %v2062
    %v2212 = vadd.f32 %v2211, %v2066
    %v2213 = vadd.f32 %v2212, %v2072
    %v2214 = vadd.f32 %v2213, %v2076
    %v2215 = vadd.f32 %v2214, %v2082
    %v2216 = vadd.f32 %v2215, %v2086
    %v2217 = vadd.f32 %v2216, %v2092
    %v2218 = vadd.f32 %v2217, %v2096
    %v2219 = vadd.f32 %v2218, %v2102
    %v2220 = vadd.f32 %v2219, %v2106
    %v2221 = vadd.f32 %v2220, %v2112
    %v2222 = vadd.f32 %v2221, %v2116
    %v2223 = vadd.f32 %v2222, %v2122
    %v2224 = vadd.f32 %v2223, %v2126
    %v2225 = vadd.f32 %v2224, %v2132
    %v2226 = vadd.f32 %v2225, %v2136
    %v2227 = vadd.f32 %v2226, %v2142
    %v2228 = vadd.f32 %v2227, %v2146
    %v2229 = vadd.f32 %v2228, %v2152
    %v2230 = vadd.f32 %v2229, %v2156
    %v2231 = vadd.f32 %v2230, %v2162
    %v2232 = vadd.f32 %v2231, %v2166
    %v2233 = vadd.f32 %v2232, %v2172
    %v2234 = vrot.slane %v2233, 4
    %v2235 = vadd.f32 %v2233, %v2234
    %v2236 = vrot.slane %v2235, 2
    %v2237 = vadd.f32 %v2235, %v2236
    %v2238 = vrot.slane %v2237, 1
    %v2239 = vadd.f32 %v2237, %v2238
    %v2240 = vmul.f32 %v2207, %v1326
    %v2241 = vmul.f32 %v2239, %v1326
    %v2242 = vmul.f32 %v2040, %v2040
    %v2243 = vmul.f32 %v2042, %v2042
    %v2244 = vmul.f32 %v2044, %v2044
    %v2245 = vmul.f32 %v2046, %v2046
    %v2246 = vmul.f32 %v2050, %v2050
    %v2247 = vmul.f32 %v2052, %v2052
    %v2248 = vmul.f32 %v2054, %v2054
    %v2249 = vmul.f32 %v2056, %v2056
    %v2250 = vmul.f32 %v2060, %v2060
    %v2251 = vmul.f32 %v2062, %v2062
    %v2252 = vmul.f32 %v2064, %v2064
    %v2253 = vmul.f32 %v2066, %v2066
    %v2254 = vmul.f32 %v2070, %v2070
    %v2255 = vmul.f32 %v2072, %v2072
    %v2256 = vmul.f32 %v2074, %v2074
    %v2257 = vmul.f32 %v2076, %v2076
    %v2258 = vmul.f32 %v2080, %v2080
    %v2259 = vmul.f32 %v2082, %v2082
    %v2260 = vmul.f32 %v2084, %v2084
    %v2261 = vmul.f32 %v2086, %v2086
    %v2262 = vmul.f32 %v2090, %v2090
    %v2263 = vmul.f32 %v2092, %v2092
    %v2264 = vmul.f32 %v2094, %v2094
    %v2265 = vmul.f32 %v2096, %v2096
    %v2266 = vmul.f32 %v2100, %v2100
    %v2267 = vmul.f32 %v2102, %v2102
    %v2268 = vmul.f32 %v2104, %v2104
    %v2269 = vmul.f32 %v2106, %v2106
    %v2270 = vmul.f32 %v2110, %v2110
    %v2271 = vmul.f32 %v2112, %v2112
    %v2272 = vmul.f32 %v2114, %v2114
    %v2273 = vmul.f32 %v2116, %v2116
    %v2274 = vmul.f32 %v2120, %v2120
    %v2275 = vmul.f32 %v2122, %v2122
    %v2276 = vmul.f32 %v2124, %v2124
    %v2277 = vmul.f32 %v2126, %v2126
    %v2278 = vmul.f32 %v2130, %v2130
    %v2279 = vmul.f32 %v2132, %v2132
    %v2280 = vmul.f32 %v2134, %v2134
    %v2281 = vmul.f32 %v2136, %v2136
    %v2282 = vmul.f32 %v2140, %v2140
    %v2283 = vmul.f32 %v2142, %v2142
    %v2284 = vmul.f32 %v2144, %v2144
    %v2285 = vmul.f32 %v2146, %v2146
    %v2286 = vmul.f32 %v2150, %v2150
    %v2287 = vmul.f32 %v2152, %v2152
    %v2288 = vmul.f32 %v2154, %v2154
    %v2289 = vmul.f32 %v2156, %v2156
    %v2290 = vmul.f32 %v2160, %v2160
    %v2291 = vmul.f32 %v2162, %v2162
    %v2292 = vmul.f32 %v2164, %v2164
    %v2293 = vmul.f32 %v2166, %v2166
    %v2294 = vmul.f32 %v2170, %v2170
    %v2295 = vmul.f32 %v2172, %v2172
    %v2296 = vadd.f32 %v2242, %v2244
    %v2297 = vadd.f32 %v2296, %v2246
    %v2298 = vadd.f32 %v2297, %v2248
    %v2299 = vadd.f32 %v2298, %v2250
    %v2300 = vadd.f32 %v2299, %v2252
    %v2301 = vadd.f32 %v2300, %v2254
    %v2302 = vadd.f32 %v2301, %v2256
    %v2303 = vadd.f32 %v2302, %v2258
    %v2304 = vadd.f32 %v2303, %v2260
    %v2305 = vadd.f32 %v2304, %v2262
    %v2306 = vadd.f32 %v2305, %v2264
    %v2307 = vadd.f32 %v2306, %v2266
    %v2308 = vadd.f32 %v2307, %v2268
    %v2309 = vadd.f32 %v2308, %v2270
    %v2310 = vadd.f32 %v2309, %v2272
    %v2311 = vadd.f32 %v2310, %v2274
    %v2312 = vadd.f32 %v2311, %v2276
    %v2313 = vadd.f32 %v2312, %v2278
    %v2314 = vadd.f32 %v2313, %v2280
    %v2315 = vadd.f32 %v2314, %v2282
    %v2316 = vadd.f32 %v2315, %v2284
    %v2317 = vadd.f32 %v2316, %v2286
    %v2318 = vadd.f32 %v2317, %v2288
    %v2319 = vadd.f32 %v2318, %v2290
    %v2320 = vadd.f32 %v2319, %v2292
    %v2321 = vadd.f32 %v2320, %v2294
    %v2322 = vrot.slane %v2321, 4
    %v2323 = vadd.f32 %v2321, %v2322
    %v2324 = vrot.slane %v2323, 2
    %v2325 = vadd.f32 %v2323, %v2324
    %v2326 = vrot.slane %v2325, 1
    %v2327 = vadd.f32 %v2325, %v2326
    %v2328 = vadd.f32 %v2243, %v2245
    %v2329 = vadd.f32 %v2328, %v2247
    %v2330 = vadd.f32 %v2329, %v2249
    %v2331 = vadd.f32 %v2330, %v2251
    %v2332 = vadd.f32 %v2331, %v2253
    %v2333 = vadd.f32 %v2332, %v2255
    %v2334 = vadd.f32 %v2333, %v2257
    %v2335 = vadd.f32 %v2334, %v2259
    %v2336 = vadd.f32 %v2335, %v2261
    %v2337 = vadd.f32 %v2336, %v2263
    %v2338 = vadd.f32 %v2337, %v2265
    %v2339 = vadd.f32 %v2338, %v2267
    %v2340 = vadd.f32 %v2339, %v2269
    %v2341 = vadd.f32 %v2340, %v2271
    %v2342 = vadd.f32 %v2341, %v2273
    %v2343 = vadd.f32 %v2342, %v2275
    %v2344 = vadd.f32 %v2343, %v2277
    %v2345 = vadd.f32 %v2344, %v2279
    %v2346 = vadd.f32 %v2345, %v2281
    %v2347 = vadd.f32 %v2346, %v2283
    %v2348 = vadd.f32 %v2347, %v2285
    %v2349 = vadd.f32 %v2348, %v2287
    %v2350 = vadd.f32 %v2349, %v2289
    %v2351 = vadd.f32 %v2350, %v2291
    %v2352 = vadd.f32 %v2351, %v2293
    %v2353 = vadd.f32 %v2352, %v2295
    %v2354 = vrot.slane %v2353, 4
    %v2355 = vadd.f32 %v2353, %v2354
    %v2356 = vrot.slane %v2355, 2
    %v2357 = vadd.f32 %v2355, %v2356
    %v2358 = vrot.slane %v2357, 1
    %v2359 = vadd.f32 %v2357, %v2358
    %v2360 = vmul.f32 %v2327, %v1326
    %v2361 = vmul.f32 %v2359, %v1326
    %v2362 = vmul.f32 %v2240, %v2240
    %v2363 = vmul.f32 %v2241, %v2241
    %v2364 = vsub.f32 %v2360, %v2362
    %v2365 = vsub.f32 %v2361, %v2363
    %v2366 = vmax.f32 %v2364, 0.0
    %v2367 = vmax.f32 %v2365, 0.0
    %v2368 = vadd.f32 %v2366, 1e-05
    %v2369 = vadd.f32 %v2367, 1e-05
    %v2370 = vrsqrt.pop %v2368
    %v2371 = vrsqrt.pop %v2369
    %v2372 = vld [vmem:[%s8] sm:$0x3]
    %v2374 = vlaneseq
    %v2375 = vshrl.u32 %v2374, 7
    %v2376 = vsub.s32 0, %v2375
    %v2377 = vrot.slane %v2372, %v2376
    %v2378 = vlaneseq
    %v2379 = vshrl.u32 %v2378, 7
    %v2380 = vsub.s32 1, %v2379
    %v2381 = vrot.slane %v2372, %v2380
    %v2384 = vmul.f32 %v2370, %v2377
    %v2385 = vmul.f32 %v2371, %v2381
    %v2386 = vld [vmem:[%s9] sm:$0x3]
    %v2387 = vmul.f32 %v2240, %v2384
    %v2388 = vmul.f32 %v2241, %v2385
    %v2391 = vcombine.low %v2387, %v2388
    %v2393 = vunpack.c.l.s4 1966171168
    %v2394 = vunpack.c.0.s8 %v2393
    %v2395 = vlaneseq
    %v2396 = vshrl.u32 %v2395, 7
    %v2397 = vsub.s32 %v2394, %v2396
    %v2398 = vrot.slane %v2391, %v2397
    %v2400 = vunpack.c.l.s4 1966171168
    %v2401 = vunpack.c.0.s8 %v2400
    %v2402 = vlaneseq
    %v2403 = vshrl.u32 %v2402, 7
    %v2404 = vsub.s32 %v2401, %v2403
    %v2405 = vrot.slane %v2398, %v2404
    %v2407 = vsub.f32 %v2386, %v2405
    %v2408 = vlaneseq
    %v2409 = vshrl.u32 %v2408, 7
    %v2410 = vsub.s32 0, %v2409
    %v2411 = vrot.slane %v2384, %v2410
    %v2412 = vlaneseq
    %v2413 = vshrl.u32 %v2412, 7
    %v2414 = vsub.s32 0, %v2413
    %v2415 = vrot.slane %v2385, %v2414
    %v2416 = vmul.f32 %v2040, %v2411
    %v2417 = vmul.f32 %v2042, %v2415
    %v2418 = vmul.f32 %v2044, %v2411
    %v2419 = vmul.f32 %v2046, %v2415
    %v2420 = vmul.f32 %v2050, %v2411
    %v2421 = vmul.f32 %v2052, %v2415
    %v2422 = vmul.f32 %v2054, %v2411
    %v2423 = vmul.f32 %v2056, %v2415
    %v2424 = vmul.f32 %v2060, %v2411
    %v2425 = vmul.f32 %v2062, %v2415
    %v2426 = vmul.f32 %v2064, %v2411
    %v2427 = vmul.f32 %v2066, %v2415
    %v2428 = vmul.f32 %v2070, %v2411
    %v2429 = vmul.f32 %v2072, %v2415
    %v2430 = vmul.f32 %v2074, %v2411
    %v2431 = vmul.f32 %v2076, %v2415
    %v2432 = vmul.f32 %v2080, %v2411
    %v2433 = vmul.f32 %v2082, %v2415
    %v2434 = vmul.f32 %v2084, %v2411
    %v2435 = vmul.f32 %v2086, %v2415
    %v2436 = vmul.f32 %v2090, %v2411
    %v2437 = vmul.f32 %v2092, %v2415
    %v2438 = vmul.f32 %v2094, %v2411
    %v2439 = vmul.f32 %v2096, %v2415
    %v2440 = vmul.f32 %v2100, %v2411
    %v2441 = vmul.f32 %v2102, %v2415
    %v2442 = vmul.f32 %v2104, %v2411
    %v2443 = vmul.f32 %v2106, %v2415
    %v2444 = vmul.f32 %v2110, %v2411
    %v2445 = vmul.f32 %v2112, %v2415
    %v2446 = vmul.f32 %v2114, %v2411
    %v2447 = vmul.f32 %v2116, %v2415
    %v2448 = vmul.f32 %v2120, %v2411
    %v2449 = vmul.f32 %v2122, %v2415
    %v2450 = vmul.f32 %v2124, %v2411
    %v2451 = vmul.f32 %v2126, %v2415
    %v2452 = vmul.f32 %v2130, %v2411
    %v2453 = vmul.f32 %v2132, %v2415
    %v2454 = vmul.f32 %v2134, %v2411
    %v2455 = vmul.f32 %v2136, %v2415
    %v2456 = vmul.f32 %v2140, %v2411
    %v2457 = vmul.f32 %v2142, %v2415
    %v2458 = vmul.f32 %v2144, %v2411
    %v2459 = vmul.f32 %v2146, %v2415
    %v2460 = vmul.f32 %v2150, %v2411
    %v2461 = vmul.f32 %v2152, %v2415
    %v2462 = vmul.f32 %v2154, %v2411
    %v2463 = vmul.f32 %v2156, %v2415
    %v2464 = vmul.f32 %v2160, %v2411
    %v2465 = vmul.f32 %v2162, %v2415
    %v2466 = vmul.f32 %v2164, %v2411
    %v2467 = vmul.f32 %v2166, %v2415
    %v2468 = vmul.f32 %v2170, %v2411
    %v2469 = vmul.f32 %v2172, %v2415
    %v2471 = vlaneseq
    %v2472 = vshrl.u32 %v2471, 7
    %v2473 = vsub.s32 0, %v2472
    %v2474 = vrot.slane %v2407, %v2473
    %v2475 = vlaneseq
    %v2476 = vshrl.u32 %v2475, 7
    %v2477 = vsub.s32 1, %v2476
    %v2478 = vrot.slane %v2407, %v2477
    %v2481 = vadd.f32 %v2416, %v2474
    %v2482 = vadd.f32 %v2417, %v2478
    %v2483 = vadd.f32 %v2418, %v2474
    %v2484 = vadd.f32 %v2419, %v2478
    %v2485 = vadd.f32 %v2420, %v2474
    %v2486 = vadd.f32 %v2421, %v2478
    %v2487 = vadd.f32 %v2422, %v2474
    %v2488 = vadd.f32 %v2423, %v2478
    %v2489 = vadd.f32 %v2424, %v2474
    %v2490 = vadd.f32 %v2425, %v2478
    %v2491 = vadd.f32 %v2426, %v2474
    %v2492 = vadd.f32 %v2427, %v2478
    %v2493 = vadd.f32 %v2428, %v2474
    %v2494 = vadd.f32 %v2429, %v2478
    %v2495 = vadd.f32 %v2430, %v2474
    %v2496 = vadd.f32 %v2431, %v2478
    %v2497 = vadd.f32 %v2432, %v2474
    %v2498 = vadd.f32 %v2433, %v2478
    %v2499 = vadd.f32 %v2434, %v2474
    %v2500 = vadd.f32 %v2435, %v2478
    %v2501 = vadd.f32 %v2436, %v2474
    %v2502 = vadd.f32 %v2437, %v2478
    %v2503 = vadd.f32 %v2438, %v2474
    %v2504 = vadd.f32 %v2439, %v2478
    %v2505 = vadd.f32 %v2440, %v2474
    %v2506 = vadd.f32 %v2441, %v2478
    %v2507 = vadd.f32 %v2442, %v2474
    %v2508 = vadd.f32 %v2443, %v2478
    %v2509 = vadd.f32 %v2444, %v2474
    %v2510 = vadd.f32 %v2445, %v2478
    %v2511 = vadd.f32 %v2446, %v2474
    %v2512 = vadd.f32 %v2447, %v2478
    %v2513 = vadd.f32 %v2448, %v2474
    %v2514 = vadd.f32 %v2449, %v2478
    %v2515 = vadd.f32 %v2450, %v2474
    %v2516 = vadd.f32 %v2451, %v2478
    %v2517 = vadd.f32 %v2452, %v2474
    %v2518 = vadd.f32 %v2453, %v2478
    %v2519 = vadd.f32 %v2454, %v2474
    %v2520 = vadd.f32 %v2455, %v2478
    %v2521 = vadd.f32 %v2456, %v2474
    %v2522 = vadd.f32 %v2457, %v2478
    %v2523 = vadd.f32 %v2458, %v2474
    %v2524 = vadd.f32 %v2459, %v2478
    %v2525 = vadd.f32 %v2460, %v2474
    %v2526 = vadd.f32 %v2461, %v2478
    %v2527 = vadd.f32 %v2462, %v2474
    %v2528 = vadd.f32 %v2463, %v2478
    %v2529 = vadd.f32 %v2464, %v2474
    %v2530 = vadd.f32 %v2465, %v2478
    %v2531 = vadd.f32 %v2466, %v2474
    %v2532 = vadd.f32 %v2467, %v2478
    %v2533 = vadd.f32 %v2468, %v2474
    %v2534 = vadd.f32 %v2469, %v2478
    %v2535 = vunpack.c.l.bf16 %v869
    %v2536 = vunpack.c.l.bf16 %v870
    %v2537 = vunpack.c.h.bf16 %v869
    %v2538 = vunpack.c.h.bf16 %v870
    %v2539 = vunpack.c.l.bf16 %v871
    %v2540 = vunpack.c.l.bf16 %v872
    %v2541 = vunpack.c.h.bf16 %v871
    %v2542 = vunpack.c.h.bf16 %v872
    %v2543 = vunpack.c.l.bf16 %v873
    %v2544 = vunpack.c.l.bf16 %v874
    %v2545 = vunpack.c.h.bf16 %v873
    %v2546 = vunpack.c.h.bf16 %v874
    %v2547 = vunpack.c.l.bf16 %v875
    %v2548 = vunpack.c.l.bf16 %v876
    %v2549 = vunpack.c.h.bf16 %v875
    %v2550 = vunpack.c.h.bf16 %v876
    %v2551 = vunpack.c.l.bf16 %v877
    %v2552 = vunpack.c.l.bf16 %v878
    %v2553 = vunpack.c.h.bf16 %v877
    %v2554 = vunpack.c.h.bf16 %v878
    %v2555 = vunpack.c.l.bf16 %v879
    %v2556 = vunpack.c.l.bf16 %v880
    %v2557 = vunpack.c.h.bf16 %v879
    %v2558 = vunpack.c.h.bf16 %v880
    %v2559 = vunpack.c.l.bf16 %v881
    %v2560 = vunpack.c.l.bf16 %v882
    %v2561 = vunpack.c.h.bf16 %v881
    %v2562 = vunpack.c.h.bf16 %v882
    %v2563 = vunpack.c.l.bf16 %v883
    %v2564 = vunpack.c.l.bf16 %v884
    %v2565 = vunpack.c.h.bf16 %v883
    %v2566 = vunpack.c.h.bf16 %v884
    %v2567 = vunpack.c.l.bf16 %v885
    %v2568 = vunpack.c.l.bf16 %v886
    %v2569 = vunpack.c.h.bf16 %v885
    %v2570 = vunpack.c.h.bf16 %v886
    %v2571 = vunpack.c.l.bf16 %v887
    %v2572 = vunpack.c.l.bf16 %v888
    %v2573 = vunpack.c.h.bf16 %v887
    %v2574 = vunpack.c.h.bf16 %v888
    %v2575 = vunpack.c.l.bf16 %v889
    %v2576 = vunpack.c.l.bf16 %v890
    %v2577 = vunpack.c.h.bf16 %v889
    %v2578 = vunpack.c.h.bf16 %v890
    %v2579 = vunpack.c.l.bf16 %v891
    %v2580 = vunpack.c.l.bf16 %v892
    %v2581 = vunpack.c.h.bf16 %v891
    %v2582 = vunpack.c.h.bf16 %v892
    %v2583 = vunpack.c.l.bf16 %v893
    %v2584 = vunpack.c.l.bf16 %v894
    %v2585 = vunpack.c.h.bf16 %v893
    %v2586 = vunpack.c.h.bf16 %v894
    %v2587 = vunpack.c.l.bf16 %v895
    %v2588 = vunpack.c.l.bf16 %v896
    %v2589 = vadd.f32 %v2481, %v2535
    %v2590 = vadd.f32 %v2482, %v2536
    %v2591 = vadd.f32 %v2483, %v2537
    %v2592 = vadd.f32 %v2484, %v2538
    %v2593 = vadd.f32 %v2485, %v2539
    %v2594 = vadd.f32 %v2486, %v2540
    %v2595 = vadd.f32 %v2487, %v2541
    %v2596 = vadd.f32 %v2488, %v2542
    %v2597 = vadd.f32 %v2489, %v2543
    %v2598 = vadd.f32 %v2490, %v2544
    %v2599 = vadd.f32 %v2491, %v2545
    %v2600 = vadd.f32 %v2492, %v2546
    %v2601 = vadd.f32 %v2493, %v2547
    %v2602 = vadd.f32 %v2494, %v2548
    %v2603 = vadd.f32 %v2495, %v2549
    %v2604 = vadd.f32 %v2496, %v2550
    %v2605 = vadd.f32 %v2497, %v2551
    %v2606 = vadd.f32 %v2498, %v2552
    %v2607 = vadd.f32 %v2499, %v2553
    %v2608 = vadd.f32 %v2500, %v2554
    %v2609 = vadd.f32 %v2501, %v2555
    %v2610 = vadd.f32 %v2502, %v2556
    %v2611 = vadd.f32 %v2503, %v2557
    %v2612 = vadd.f32 %v2504, %v2558
    %v2613 = vadd.f32 %v2505, %v2559
    %v2614 = vadd.f32 %v2506, %v2560
    %v2615 = vadd.f32 %v2507, %v2561
    %v2616 = vadd.f32 %v2508, %v2562
    %v2617 = vadd.f32 %v2509, %v2563
    %v2618 = vadd.f32 %v2510, %v2564
    %v2619 = vadd.f32 %v2511, %v2565
    %v2620 = vadd.f32 %v2512, %v2566
    %v2621 = vadd.f32 %v2513, %v2567
    %v2622 = vadd.f32 %v2514, %v2568
    %v2623 = vadd.f32 %v2515, %v2569
    %v2624 = vadd.f32 %v2516, %v2570
    %v2625 = vadd.f32 %v2517, %v2571
    %v2626 = vadd.f32 %v2518, %v2572
    %v2627 = vadd.f32 %v2519, %v2573
    %v2628 = vadd.f32 %v2520, %v2574
    %v2629 = vadd.f32 %v2521, %v2575
    %v2630 = vadd.f32 %v2522, %v2576
    %v2631 = vadd.f32 %v2523, %v2577
    %v2632 = vadd.f32 %v2524, %v2578
    %v2633 = vadd.f32 %v2525, %v2579
    %v2634 = vadd.f32 %v2526, %v2580
    %v2635 = vadd.f32 %v2527, %v2581
    %v2636 = vadd.f32 %v2528, %v2582
    %v2637 = vadd.f32 %v2529, %v2583
    %v2638 = vadd.f32 %v2530, %v2584
    %v2639 = vadd.f32 %v2531, %v2585
    %v2640 = vadd.f32 %v2532, %v2586
    %v2641 = vadd.f32 %v2533, %v2587
    %v2642 = vadd.f32 %v2534, %v2588
    %vm2643 = vcmp.ge.f32.partialorder %v2589, 0.0
    %vm2644 = vcmp.ge.f32.partialorder %v2590, 0.0
    %vm2645 = vcmp.ge.f32.partialorder %v2591, 0.0
    %vm2646 = vcmp.ge.f32.partialorder %v2592, 0.0
    %vm2647 = vcmp.ge.f32.partialorder %v2593, 0.0
    %vm2648 = vcmp.ge.f32.partialorder %v2594, 0.0
    %vm2649 = vcmp.ge.f32.partialorder %v2595, 0.0
    %vm2650 = vcmp.ge.f32.partialorder %v2596, 0.0
    %vm2651 = vcmp.ge.f32.partialorder %v2597, 0.0
    %vm2652 = vcmp.ge.f32.partialorder %v2598, 0.0
    %vm2653 = vcmp.ge.f32.partialorder %v2599, 0.0
    %vm2654 = vcmp.ge.f32.partialorder %v2600, 0.0
    %vm2655 = vcmp.ge.f32.partialorder %v2601, 0.0
    %vm2656 = vcmp.ge.f32.partialorder %v2602, 0.0
    %vm2657 = vcmp.ge.f32.partialorder %v2603, 0.0
    %vm2658 = vcmp.ge.f32.partialorder %v2604, 0.0
    %vm2659 = vcmp.ge.f32.partialorder %v2605, 0.0
    %vm2660 = vcmp.ge.f32.partialorder %v2606, 0.0
    %vm2661 = vcmp.ge.f32.partialorder %v2607, 0.0
    %vm2662 = vcmp.ge.f32.partialorder %v2608, 0.0
    %vm2663 = vcmp.ge.f32.partialorder %v2609, 0.0
    %vm2664 = vcmp.ge.f32.partialorder %v2610, 0.0
    %vm2665 = vcmp.ge.f32.partialorder %v2611, 0.0
    %vm2666 = vcmp.ge.f32.partialorder %v2612, 0.0
    %vm2667 = vcmp.ge.f32.partialorder %v2613, 0.0
    %vm2668 = vcmp.ge.f32.partialorder %v2614, 0.0
    %vm2669 = vcmp.ge.f32.partialorder %v2615, 0.0
    %vm2670 = vcmp.ge.f32.partialorder %v2616, 0.0
    %vm2671 = vcmp.ge.f32.partialorder %v2617, 0.0
    %vm2672 = vcmp.ge.f32.partialorder %v2618, 0.0
    %vm2673 = vcmp.ge.f32.partialorder %v2619, 0.0
    %vm2674 = vcmp.ge.f32.partialorder %v2620, 0.0
    %vm2675 = vcmp.ge.f32.partialorder %v2621, 0.0
    %vm2676 = vcmp.ge.f32.partialorder %v2622, 0.0
    %vm2677 = vcmp.ge.f32.partialorder %v2623, 0.0
    %vm2678 = vcmp.ge.f32.partialorder %v2624, 0.0
    %vm2679 = vcmp.ge.f32.partialorder %v2625, 0.0
    %vm2680 = vcmp.ge.f32.partialorder %v2626, 0.0
    %vm2681 = vcmp.ge.f32.partialorder %v2627, 0.0
    %vm2682 = vcmp.ge.f32.partialorder %v2628, 0.0
    %vm2683 = vcmp.ge.f32.partialorder %v2629, 0.0
    %vm2684 = vcmp.ge.f32.partialorder %v2630, 0.0
    %vm2685 = vcmp.ge.f32.partialorder %v2631, 0.0
    %vm2686 = vcmp.ge.f32.partialorder %v2632, 0.0
    %vm2687 = vcmp.ge.f32.partialorder %v2633, 0.0
    %vm2688 = vcmp.ge.f32.partialorder %v2634, 0.0
    %vm2689 = vcmp.ge.f32.partialorder %v2635, 0.0
    %vm2690 = vcmp.ge.f32.partialorder %v2636, 0.0
    %vm2691 = vcmp.ge.f32.partialorder %v2637, 0.0
    %vm2692 = vcmp.ge.f32.partialorder %v2638, 0.0
    %vm2693 = vcmp.ge.f32.partialorder %v2639, 0.0
    %vm2694 = vcmp.ge.f32.partialorder %v2640, 0.0
    %vm2695 = vcmp.ge.f32.partialorder %v2641, 0.0
    %vm2696 = vcmp.ge.f32.partialorder %v2642, 0.0
    %v2697 = vstv %s898
    %v2698 = vmul.f32 %v2697, %v2589
    %v2699 = vmul.f32 %v2697, %v2590
    %v2700 = vmul.f32 %v2697, %v2591
    %v2701 = vmul.f32 %v2697, %v2592
    %v2702 = vmul.f32 %v2697, %v2593
    %v2703 = vmul.f32 %v2697, %v2594
    %v2704 = vmul.f32 %v2697, %v2595
    %v2705 = vmul.f32 %v2697, %v2596
    %v2706 = vmul.f32 %v2697, %v2597
    %v2707 = vmul.f32 %v2697, %v2598
    %v2708 = vmul.f32 %v2697, %v2599
    %v2709 = vmul.f32 %v2697, %v2600
    %v2710 = vmul.f32 %v2697, %v2601
    %v2711 = vmul.f32 %v2697, %v2602
    %v2712 = vmul.f32 %v2697, %v2603
    %v2713 = vmul.f32 %v2697, %v2604
    %v2714 = vmul.f32 %v2697, %v2605
    %v2715 = vmul.f32 %v2697, %v2606
    %v2716 = vmul.f32 %v2697, %v2607
    %v2717 = vmul.f32 %v2697, %v2608
    %v2718 = vmul.f32 %v2697, %v2609
    %v2719 = vmul.f32 %v2697, %v2610
    %v2720 = vmul.f32 %v2697, %v2611
    %v2721 = vmul.f32 %v2697, %v2612
    %v2722 = vmul.f32 %v2697, %v2613
    %v2723 = vmul.f32 %v2697, %v2614
    %v2724 = vmul.f32 %v2697, %v2615
    %v2725 = vmul.f32 %v2697, %v2616
    %v2726 = vmul.f32 %v2697, %v2617
    %v2727 = vmul.f32 %v2697, %v2618
    %v2728 = vmul.f32 %v2697, %v2619
    %v2729 = vmul.f32 %v2697, %v2620
    %v2730 = vmul.f32 %v2697, %v2621
    %v2731 = vmul.f32 %v2697, %v2622
    %v2732 = vmul.f32 %v2697, %v2623
    %v2733 = vmul.f32 %v2697, %v2624
    %v2734 = vmul.f32 %v2697, %v2625
    %v2735 = vmul.f32 %v2697, %v2626
    %v2736 = vmul.f32 %v2697, %v2627
    %v2737 = vmul.f32 %v2697, %v2628
    %v2738 = vmul.f32 %v2697, %v2629
    %v2739 = vmul.f32 %v2697, %v2630
    %v2740 = vmul.f32 %v2697, %v2631
    %v2741 = vmul.f32 %v2697, %v2632
    %v2742 = vmul.f32 %v2697, %v2633
    %v2743 = vmul.f32 %v2697, %v2634
    %v2744 = vmul.f32 %v2697, %v2635
    %v2745 = vmul.f32 %v2697, %v2636
    %v2746 = vmul.f32 %v2697, %v2637
    %v2747 = vmul.f32 %v2697, %v2638
    %v2748 = vmul.f32 %v2697, %v2639
    %v2749 = vmul.f32 %v2697, %v2640
    %v2750 = vmul.f32 %v2697, %v2641
    %v2751 = vmul.f32 %v2697, %v2642
    %v2752 = vsel %vm2643, %v2589, %v2698
    %v2753 = vsel %vm2644, %v2590, %v2699
    %v2754 = vsel %vm2645, %v2591, %v2700
    %v2755 = vsel %vm2646, %v2592, %v2701
    %v2756 = vsel %vm2647, %v2593, %v2702
    %v2757 = vsel %vm2648, %v2594, %v2703
    %v2758 = vsel %vm2649, %v2595, %v2704
    %v2759 = vsel %vm2650, %v2596, %v2705
    %v2760 = vsel %vm2651, %v2597, %v2706
    %v2761 = vsel %vm2652, %v2598, %v2707
    %v2762 = vsel %vm2653, %v2599, %v2708
    %v2763 = vsel %vm2654, %v2600, %v2709
    %v2764 = vsel %vm2655, %v2601, %v2710
    %v2765 = vsel %vm2656, %v2602, %v2711
    %v2766 = vsel %vm2657, %v2603, %v2712
    %v2767 = vsel %vm2658, %v2604, %v2713
    %v2768 = vsel %vm2659, %v2605, %v2714
    %v2769 = vsel %vm2660, %v2606, %v2715
    %v2770 = vsel %vm2661, %v2607, %v2716
    %v2771 = vsel %vm2662, %v2608, %v2717
    %v2772 = vsel %vm2663, %v2609, %v2718
    %v2773 = vsel %vm2664, %v2610, %v2719
    %v2774 = vsel %vm2665, %v2611, %v2720
    %v2775 = vsel %vm2666, %v2612, %v2721
    %v2776 = vsel %vm2667, %v2613, %v2722
    %v2777 = vsel %vm2668, %v2614, %v2723
    %v2778 = vsel %vm2669, %v2615, %v2724
    %v2779 = vsel %vm2670, %v2616, %v2725
    %v2780 = vsel %vm2671, %v2617, %v2726
    %v2781 = vsel %vm2672, %v2618, %v2727
    %v2782 = vsel %vm2673, %v2619, %v2728
    %v2783 = vsel %vm2674, %v2620, %v2729
    %v2784 = vsel %vm2675, %v2621, %v2730
    %v2785 = vsel %vm2676, %v2622, %v2731
    %v2786 = vsel %vm2677, %v2623, %v2732
    %v2787 = vsel %vm2678, %v2624, %v2733
    %v2788 = vsel %vm2679, %v2625, %v2734
    %v2789 = vsel %vm2680, %v2626, %v2735
    %v2790 = vsel %vm2681, %v2627, %v2736
    %v2791 = vsel %vm2682, %v2628, %v2737
    %v2792 = vsel %vm2683, %v2629, %v2738
    %v2793 = vsel %vm2684, %v2630, %v2739
    %v2794 = vsel %vm2685, %v2631, %v2740
    %v2795 = vsel %vm2686, %v2632, %v2741
    %v2796 = vsel %vm2687, %v2633, %v2742
    %v2797 = vsel %vm2688, %v2634, %v2743
    %v2798 = vsel %vm2689, %v2635, %v2744
    %v2799 = vsel %vm2690, %v2636, %v2745
    %v2800 = vsel %vm2691, %v2637, %v2746
    %v2801 = vsel %vm2692, %v2638, %v2747
    %v2802 = vsel %vm2693, %v2639, %v2748
    %v2803 = vsel %vm2694, %v2640, %v2749
    %v2804 = vsel %vm2695, %v2641, %v2750
    %v2805 = vsel %vm2696, %v2642, %v2751
    %v2806 = vmax.f32 %v2752, %v2770
    %v2807 = vmax.f32 %v2753, %v2771
    %v2808 = vmax.f32 %v2754, %v2772
    %v2809 = vmax.f32 %v2755, %v2773
    %v2810 = vmax.f32 %v2756, %v2774
    %v2811 = vmax.f32 %v2757, %v2775
    %v2812 = vmax.f32 %v2758, %v2776
    %v2813 = vmax.f32 %v2759, %v2777
    %v2814 = vmax.f32 %v2760, %v2778
    %v2815 = vmax.f32 %v2761, %v2779
    %v2816 = vmax.f32 %v2762, %v2780
    %v2817 = vmax.f32 %v2763, %v2781
    %v2818 = vmax.f32 %v2764, %v2782
    %v2819 = vmax.f32 %v2765, %v2783
    %v2820 = vmax.f32 %v2766, %v2784
    %v2821 = vmax.f32 %v2767, %v2785
    %v2822 = vmax.f32 %v2768, %v2786
    %v2823 = vmax.f32 %v2769, %v2787
    %v2824 = vmax.f32 %v2806, %v2788
    %v2825 = vmax.f32 %v2807, %v2789
    %v2826 = vmax.f32 %v2808, %v2790
    %v2827 = vmax.f32 %v2809, %v2791
    %v2828 = vmax.f32 %v2810, %v2792
    %v2829 = vmax.f32 %v2811, %v2793
    %v2830 = vmax.f32 %v2812, %v2794
    %v2831 = vmax.f32 %v2813, %v2795
    %v2832 = vmax.f32 %v2814, %v2796
    %v2833 = vmax.f32 %v2815, %v2797
    %v2834 = vmax.f32 %v2816, %v2798
    %v2835 = vmax.f32 %v2817, %v2799
    %v2836 = vmax.f32 %v2818, %v2800
    %v2837 = vmax.f32 %v2819, %v2801
    %v2838 = vmax.f32 %v2820, %v2802
    %v2839 = vmax.f32 %v2821, %v2803
    %v2840 = vmax.f32 %v2822, %v2804
    %v2841 = vmax.f32 %v2823, %v2805
    %v2842 = vpack.c.bf16 %v2826, %v2824
    %v2843 = vpack.c.bf16 %v2827, %v2825
    %v2844 = vpack.c.bf16 %v2830, %v2828
    %v2845 = vpack.c.bf16 %v2831, %v2829
    %v2846 = vpack.c.bf16 %v2834, %v2832
    %v2847 = vpack.c.bf16 %v2835, %v2833
    %v2848 = vpack.c.bf16 %v2838, %v2836
    %v2849 = vpack.c.bf16 %v2839, %v2837
    %v2850 = vpack.c.bf16 %v2840, %v2840
    %v2851 = vpack.c.bf16 %v2841, %v2841
    %s2852 = sld [smem:[#allocation2 + $0x2]]
    %s2853 = sld [smem:[#allocation2 + $0x3]]
    %v2854 = vld [vmem:[#allocation10] sm:$0xff]
    %v2855 = vld [vmem:[#allocation10 + $0x8] sm:$0xff]
    %v2856 = vld [vmem:[#allocation10 + $0x10] sm:$0xff]
    %v2857 = vld [vmem:[#allocation10 + $0x18] sm:$0xff]
    %v2858 = vld [vmem:[#allocation10 + $0x20] sm:$0xff]
    %v2859 = vld [vmem:[#allocation10 + $0x28] sm:$0xff]
    %v2860 = vld [vmem:[#allocation10 + $0x30] sm:$0xff]
    %v2861 = vld [vmem:[#allocation10 + $0x38] sm:$0xff]
    %v2862 = vld [vmem:[#allocation10 + $0x40] sm:$0xff]
    %v2863 = vld [vmem:[#allocation10 + $0x48] sm:$0xff]
    %v2864 = vld [vmem:[#allocation10 + $0x50] sm:$0xff]
    %v2865 = vld [vmem:[#allocation10 + $0x58] sm:$0xff]
    %v2866 = vld [vmem:[#allocation10 + $0x60] sm:$0xff]
    %v2867 = vld [vmem:[#allocation10 + $0x68] sm:$0xff]
    %v2868 = vld [vmem:[#allocation10 + $0x70] sm:$0xff]
    %v2869 = vld [vmem:[#allocation10 + $0x78] sm:$0xff]
    %v2870 = vld [vmem:[#allocation10 + $0x80] sm:$0xff]
    %v2871 = vld [vmem:[#allocation10 + $0x88] sm:$0xff]
    %v2872 = vld [vmem:[#allocation10 + $0x90] sm:$0xff]
    %v2873 = vld [vmem:[#allocation10 + $0x98] sm:$0xff]
    %v2874 = vld [vmem:[#allocation10 + $0xa0] sm:$0xff]
    %v2875 = vld [vmem:[#allocation10 + $0xa8] sm:$0xff]
    %v2876 = vld [vmem:[#allocation10 + $0xb0] sm:$0xff]
    %v2877 = vld [vmem:[#allocation10 + $0xb8] sm:$0xff]
    %v2878 = vld [vmem:[#allocation10 + $0xc0] sm:$0xff]
    %v2879 = vld [vmem:[#allocation10 + $0xc8] sm:$0xff]
    %v2880 = vld [vmem:[#allocation10 + $0xd0] sm:$0xff]
    %v2881 = vld [vmem:[#allocation10 + $0xd8] sm:$0xff]
    %v2882 = vld [vmem:[#allocation10 + $0xe0] sm:$0xff]
    %v2883 = vld [vmem:[#allocation10 + $0xe8] sm:$0xff]
    %v2884 = vld [vmem:[#allocation10 + $0xf0] sm:$0xff]
    %v2885 = vld [vmem:[#allocation10 + $0xf8] sm:$0xff]
    %v2886 = vld [vmem:[#allocation10 + $0x100] sm:$0xff]
    %v2887 = vld [vmem:[#allocation10 + $0x108] sm:$0xff]
    %v2888 = vld [vmem:[#allocation10 + $0x110] sm:$0xff]
    %v2889 = vld [vmem:[#allocation10 + $0x118] sm:$0xff]
    %v2890 = vld [vmem:[#allocation10 + $0x120] sm:$0xff]
    %v2891 = vld [vmem:[#allocation10 + $0x128] sm:$0xff]
    %v2892 = vld [vmem:[#allocation10 + $0x130] sm:$0xff]
    %v2893 = vld [vmem:[#allocation10 + $0x138] sm:$0xff]
    %v2894 = vld [vmem:[#allocation10 + $0x140] sm:$0xff]
    %v2895 = vld [vmem:[#allocation10 + $0x148] sm:$0xff]
    %v2896 = vld [vmem:[#allocation10 + $0x150] sm:$0xff]
    %v2897 = vld [vmem:[#allocation10 + $0x158] sm:$0xff]
    %v2898 = vld [vmem:[#allocation10 + $0x160] sm:$0xff]
    %v2899 = vld [vmem:[#allocation10 + $0x168] sm:$0xff]
    %v2900 = vld [vmem:[#allocation10 + $0x170] sm:$0xff]
    %v2901 = vld [vmem:[#allocation10 + $0x178] sm:$0xff]
    %v2902 = vld [vmem:[#allocation10 + $0x180] sm:$0xff]
    %v2903 = vld [vmem:[#allocation10 + $0x188] sm:$0xff]
    %v2904 = vld [vmem:[#allocation10 + $0x190] sm:$0xff]
    %v2905 = vld [vmem:[#allocation10 + $0x198] sm:$0xff]
    %v2906 = vld [vmem:[#allocation10 + $0x1a0] sm:$0xff]
    %v2907 = vld [vmem:[#allocation10 + $0x1a8] sm:$0xff]
    %v2908 = vld [vmem:[#allocation10 + $0x1b0] sm:$0xff]
    %v2909 = vld [vmem:[#allocation10 + $0x1b8] sm:$0xff]
    %v2910 = vld [vmem:[#allocation10 + $0x1c0] sm:$0xff]
    %v2911 = vld [vmem:[#allocation10 + $0x1c8] sm:$0xff]
    %v2912 = vld [vmem:[#allocation10 + $0x1d0] sm:$0xff]
    %v2913 = vld [vmem:[#allocation10 + $0x1d8] sm:$0xff]
    %v2914 = vld [vmem:[#allocation10 + $0x1e0] sm:$0xff]
    %v2915 = vld [vmem:[#allocation10 + $0x1e8] sm:$0xff]
    %v2916 = vld [vmem:[#allocation10 + $0x1f0] sm:$0xff]
    %v2917 = vld [vmem:[#allocation10 + $0x1f8] sm:$0xff]
    %v2982 = vunpack.c.l.b16 %v2854
    %v2983 = vunpack.c.h.b16 %v2854
    %v2984 = vunpack.c.l.b16 %v2855
    %v2985 = vunpack.c.h.b16 %v2855
    %v2986 = vunpack.c.l.b16 %v2856
    %v2987 = vunpack.c.h.b16 %v2856
    %v2988 = vunpack.c.l.b16 %v2857
    %v2989 = vunpack.c.h.b16 %v2857
    %v2990 = vunpack.c.l.b16 %v2858
    %v2991 = vunpack.c.h.b16 %v2858
    %v2992 = vunpack.c.l.b16 %v2859
    %v2993 = vunpack.c.h.b16 %v2859
    %v2994 = vunpack.c.l.b16 %v2860
    %v2995 = vunpack.c.h.b16 %v2860
    %v2996 = vunpack.c.l.b16 %v2861
    %v2997 = vunpack.c.h.b16 %v2861
    %v2998 = vunpack.c.l.b16 %v2862
    %v2999 = vunpack.c.h.b16 %v2862
    %v3000 = vunpack.c.l.b16 %v2863
    %v3001 = vunpack.c.h.b16 %v2863
    %v3002 = vunpack.c.l.b16 %v2864
    %v3003 = vunpack.c.h.b16 %v2864
    %v3004 = vunpack.c.l.b16 %v2865
    %v3005 = vunpack.c.h.b16 %v2865
    %v3006 = vunpack.c.l.b16 %v2866
    %v3007 = vunpack.c.h.b16 %v2866
    %v3008 = vunpack.c.l.b16 %v2867
    %v3009 = vunpack.c.h.b16 %v2867
    %v3010 = vunpack.c.l.b16 %v2868
    %v3011 = vunpack.c.h.b16 %v2868
    %v3012 = vunpack.c.l.b16 %v2869
    %v3013 = vunpack.c.h.b16 %v2869
    %v3014 = vunpack.c.l.b16 %v2870
    %v3015 = vunpack.c.h.b16 %v2870
    %v3016 = vunpack.c.l.b16 %v2871
    %v3017 = vunpack.c.h.b16 %v2871
    %v3018 = vunpack.c.l.b16 %v2872
    %v3019 = vunpack.c.h.b16 %v2872
    %v3020 = vunpack.c.l.b16 %v2873
    %v3021 = vunpack.c.h.b16 %v2873
    %v3022 = vunpack.c.l.b16 %v2874
    %v3023 = vunpack.c.h.b16 %v2874
    %v3024 = vunpack.c.l.b16 %v2875
    %v3025 = vunpack.c.h.b16 %v2875
    %v3026 = vunpack.c.l.b16 %v2876
    %v3027 = vunpack.c.h.b16 %v2876
    %v3028 = vunpack.c.l.b16 %v2877
    %v3029 = vunpack.c.h.b16 %v2877
    %v3030 = vunpack.c.l.b16 %v2878
    %v3031 = vunpack.c.h.b16 %v2878
    %v3032 = vunpack.c.l.b16 %v2879
    %v3033 = vunpack.c.h.b16 %v2879
    %v3034 = vunpack.c.l.b16 %v2880
    %v3035 = vunpack.c.h.b16 %v2880
    %v3036 = vunpack.c.l.b16 %v2881
    %v3037 = vunpack.c.h.b16 %v2881
    %v3038 = vunpack.c.l.b16 %v2882
    %v3039 = vunpack.c.h.b16 %v2882
    %v3040 = vunpack.c.l.b16 %v2883
    %v3041 = vunpack.c.h.b16 %v2883
    %v3042 = vunpack.c.l.b16 %v2884
    %v3043 = vunpack.c.h.b16 %v2884
    %v3044 = vunpack.c.l.b16 %v2885
    %v3045 = vunpack.c.h.b16 %v2885
    %v3046 = vunpack.c.l.b16 %v2886
    %v3047 = vunpack.c.h.b16 %v2886
    %v3048 = vunpack.c.l.b16 %v2887
    %v3049 = vunpack.c.h.b16 %v2887
    %v3050 = vunpack.c.l.b16 %v2888
    %v3051 = vunpack.c.h.b16 %v2888
    %v3052 = vunpack.c.l.b16 %v2889
    %v3053 = vunpack.c.h.b16 %v2889
    %v3054 = vunpack.c.l.b16 %v2890
    %v3055 = vunpack.c.h.b16 %v2890
    %v3056 = vunpack.c.l.b16 %v2891
    %v3057 = vunpack.c.h.b16 %v2891
    %v3058 = vunpack.c.l.b16 %v2892
    %v3059 = vunpack.c.h.b16 %v2892
    %v3060 = vunpack.c.l.b16 %v2893
    %v3061 = vunpack.c.h.b16 %v2893
    %v3062 = vunpack.c.l.b16 %v2894
    %v3063 = vunpack.c.h.b16 %v2894
    %v3064 = vunpack.c.l.b16 %v2895
    %v3065 = vunpack.c.h.b16 %v2895
    %v3066 = vunpack.c.l.b16 %v2896
    %v3067 = vunpack.c.h.b16 %v2896
    %v3068 = vunpack.c.l.b16 %v2897
    %v3069 = vunpack.c.h.b16 %v2897
    %v3070 = vunpack.c.l.b16 %v2898
    %v3071 = vunpack.c.h.b16 %v2898
    %v3072 = vunpack.c.l.b16 %v2899
    %v3073 = vunpack.c.h.b16 %v2899
    %v3074 = vunpack.c.l.b16 %v2900
    %v3075 = vunpack.c.h.b16 %v2900
    %v3076 = vunpack.c.l.b16 %v2901
    %v3077 = vunpack.c.h.b16 %v2901
    %v3078 = vunpack.c.l.b16 %v2902
    %v3079 = vunpack.c.h.b16 %v2902
    %v3080 = vunpack.c.l.b16 %v2903
    %v3081 = vunpack.c.h.b16 %v2903
    %v3082 = vunpack.c.l.b16 %v2904
    %v3083 = vunpack.c.h.b16 %v2904
    %v3084 = vunpack.c.l.b16 %v2905
    %v3085 = vunpack.c.h.b16 %v2905
    %v3086 = vunpack.c.l.b16 %v2906
    %v3087 = vunpack.c.h.b16 %v2906
    %v3088 = vunpack.c.l.b16 %v2907
    %v3089 = vunpack.c.h.b16 %v2907
    %v3090 = vunpack.c.l.b16 %v2908
    %v3091 = vunpack.c.h.b16 %v2908
    %v3092 = vunpack.c.l.b16 %v2909
    %v3093 = vunpack.c.h.b16 %v2909
    %v3094 = vunpack.c.l.b16 %v2910
    %v3095 = vunpack.c.h.b16 %v2910
    %v3096 = vunpack.c.l.b16 %v2911
    %v3097 = vunpack.c.h.b16 %v2911
    %v3098 = vunpack.c.l.b16 %v2912
    %v3099 = vunpack.c.h.b16 %v2912
    %v3100 = vunpack.c.l.b16 %v2913
    %v3101 = vunpack.c.h.b16 %v2913
    %v3102 = vunpack.c.l.b16 %v2914
    %v3103 = vunpack.c.h.b16 %v2914
    %v3104 = vunpack.c.l.b16 %v2915
    %v3105 = vunpack.c.h.b16 %v2915
    %v3106 = vunpack.c.l.b16 %v2916
    %v3107 = vunpack.c.h.b16 %v2916
    %v3108 = vunpack.c.l.b16 %v2917
    %v3109 = vunpack.c.h.b16 %v2917
    %v3110 = vpack.c.b16 %v2986, %v2982
    %v3111 = vpack.c.b16 %v2987, %v2983
    %v3112 = vpack.c.b16 %v2988, %v2984
    %v3113 = vpack.c.b16 %v2989, %v2985
    %v3114 = vpack.c.b16 %v2994, %v2990
    %v3115 = vpack.c.b16 %v2995, %v2991
    %v3116 = vpack.c.b16 %v2996, %v2992
    %v3117 = vpack.c.b16 %v2997, %v2993
    %v3118 = vpack.c.b16 %v3002, %v2998
    %v3119 = vpack.c.b16 %v3003, %v2999
    %v3120 = vpack.c.b16 %v3004, %v3000
    %v3121 = vpack.c.b16 %v3005, %v3001
    %v3122 = vpack.c.b16 %v3010, %v3006
    %v3123 = vpack.c.b16 %v3011, %v3007
    %v3124 = vpack.c.b16 %v3012, %v3008
    %v3125 = vpack.c.b16 %v3013, %v3009
    %v3126 = vpack.c.b16 %v3018, %v3014
    %v3127 = vpack.c.b16 %v3019, %v3015
    %v3128 = vpack.c.b16 %v3020, %v3016
    %v3129 = vpack.c.b16 %v3021, %v3017
    %v3130 = vpack.c.b16 %v3026, %v3022
    %v3131 = vpack.c.b16 %v3027, %v3023
    %v3132 = vpack.c.b16 %v3028, %v3024
    %v3133 = vpack.c.b16 %v3029, %v3025
    %v3134 = vpack.c.b16 %v3034, %v3030
    %v3135 = vpack.c.b16 %v3035, %v3031
    %v3136 = vpack.c.b16 %v3036, %v3032
    %v3137 = vpack.c.b16 %v3037, %v3033
    %v3138 = vpack.c.b16 %v3042, %v3038
    %v3139 = vpack.c.b16 %v3043, %v3039
    %v3140 = vpack.c.b16 %v3044, %v3040
    %v3141 = vpack.c.b16 %v3045, %v3041
    %v3142 = vpack.c.b16 %v3050, %v3046
    %v3143 = vpack.c.b16 %v3051, %v3047
    %v3144 = vpack.c.b16 %v3052, %v3048
    %v3145 = vpack.c.b16 %v3053, %v3049
    %v3146 = vpack.c.b16 %v3058, %v3054
    %v3147 = vpack.c.b16 %v3059, %v3055
    %v3148 = vpack.c.b16 %v3060, %v3056
    %v3149 = vpack.c.b16 %v3061, %v3057
    %v3150 = vpack.c.b16 %v3066, %v3062
    %v3151 = vpack.c.b16 %v3067, %v3063
    %v3152 = vpack.c.b16 %v3068, %v3064
    %v3153 = vpack.c.b16 %v3069, %v3065
    %v3154 = vpack.c.b16 %v3074, %v3070
    %v3155 = vpack.c.b16 %v3075, %v3071
    %v3156 = vpack.c.b16 %v3076, %v3072
    %v3157 = vpack.c.b16 %v3077, %v3073
    %v3158 = vpack.c.b16 %v3082, %v3078
    %v3159 = vpack.c.b16 %v3083, %v3079
    %v3160 = vpack.c.b16 %v3084, %v3080
    %v3161 = vpack.c.b16 %v3085, %v3081
    %v3162 = vpack.c.b16 %v3090, %v3086
    %v3163 = vpack.c.b16 %v3091, %v3087
    %v3164 = vpack.c.b16 %v3092, %v3088
    %v3165 = vpack.c.b16 %v3093, %v3089
    %v3166 = vpack.c.b16 %v3098, %v3094
    %v3167 = vpack.c.b16 %v3099, %v3095
    %v3168 = vpack.c.b16 %v3100, %v3096
    %v3169 = vpack.c.b16 %v3101, %v3097
    %v3170 = vpack.c.b16 %v3106, %v3102
    %v3171 = vpack.c.b16 %v3107, %v3103
    %v3172 = vpack.c.b16 %v3108, %v3104
    %v3173 = vpack.c.b16 %v3109, %v3105
    %3238 = vmatprep.subr.bf16.mxu0 %v3139
    %3239 = vmatpush1.bf16.msra.mxu0 %v3138
    %3240 = vmatprep.subr.bf16.mxu0 %v3135
    %3241 = vmatpush1.bf16.msra.mxu0 %v3134
    %3242 = vmatprep.subr.bf16.mxu0 %v3131
    %3243 = vmatpush1.bf16.msra.mxu0 %v3130
    %3244 = vmatprep.subr.bf16.mxu0 %v3127
    %3245 = vmatpush1.bf16.msra.mxu0 %v3126
    %3246 = vmatprep.subr.bf16.mxu0 %v3123
    %3247 = vmatpush1.bf16.msra.mxu0 %v3122
    %3248 = vmatprep.subr.bf16.mxu0 %v3119
    %3249 = vmatpush1.bf16.msra.mxu0 %v3118
    %3250 = vmatprep.subr.bf16.mxu0 %v3115
    %3251 = vmatpush1.bf16.msra.mxu0 %v3114
    %3252 = vmatprep.subr.bf16.mxu0 %v3111
    %3253 = vmatpush1.bf16.msra.mxu0 %v3110
    %3254 = vmatprep.subr.bf16.mxu0 %v3171
    %3255 = vmatpush2.bf16.msra.mxu0 %v3170
    %3256 = vmatprep.subr.bf16.mxu0 %v3167
    %3257 = vmatpush2.bf16.msra.mxu0 %v3166
    %3258 = vmatprep.subr.bf16.mxu0 %v3163
    %3259 = vmatpush2.bf16.msra.mxu0 %v3162
    %3260 = vmatprep.subr.bf16.mxu0 %v3159
    %3261 = vmatpush2.bf16.msra.mxu0 %v3158
    %3262 = vmatprep.subr.bf16.mxu0 %v3155
    %3263 = vmatpush2.bf16.msra.mxu0 %v3154
    %3264 = vmatprep.subr.bf16.mxu0 %v3151
    %3265 = vmatpush2.bf16.msra.mxu0 %v3150
    %3266 = vmatprep.subr.bf16.mxu0 %v3147
    %3267 = vmatpush2.bf16.msra.mxu0 %v3146
    %3268 = vmatprep.subr.bf16.mxu0 %v3143
    %3269 = vmatpush2.bf16.msra.mxu0 %v3142
    %3270 = vmatprep.mubr.bf16.mxu0 %v2843
    %3271 = vmatmul.mubr.bf16.gmra.mxu0 %v2842
    %v3272 = vpop.f32.mrf.mxu0
    %v3273 = vadd.f32 0.0, %v3272
    %v3274 = vpop.f32.mrf.mxu0
    %v3275 = vadd.f32 0.0, %v3274
    %v3276 = vpop.f32.mrf.mxu0
    %v3277 = vadd.f32 0.0, %v3276
    %v3278 = vpop.f32.mrf.mxu0
    %v3279 = vadd.f32 0.0, %v3278
    %3280 = vmatprep.mubr.bf16.mxu0 %v2845
    %3281 = vmatmul.mubr.bf16.gmra.mxu0 %v2844
    %v3282 = vpop.f32.mrf.mxu0
    %v3283 = vadd.f32 0.0, %v3282
    %v3284 = vpop.f32.mrf.mxu0
    %v3285 = vadd.f32 0.0, %v3284
    %v3286 = vpop.f32.mrf.mxu0
    %v3287 = vadd.f32 0.0, %v3286
    %v3288 = vpop.f32.mrf.mxu0
    %v3289 = vadd.f32 0.0, %v3288
    %3290 = vmatprep.mubr.bf16.mxu0 %v2847
    %3291 = vmatmul.mubr.bf16.gmra.mxu0 %v2846
    %v3292 = vpop.f32.mrf.mxu0
    %v3293 = vadd.f32 0.0, %v3292
    %v3294 = vpop.f32.mrf.mxu0
    %v3295 = vadd.f32 0.0, %v3294
    %v3296 = vpop.f32.mrf.mxu0
    %v3297 = vadd.f32 0.0, %v3296
    %v3298 = vpop.f32.mrf.mxu0
    %v3299 = vadd.f32 0.0, %v3298
    %3300 = vmatprep.mubr.bf16.mxu0 %v2849
    %3301 = vmatmul.mubr.bf16.gmra.mxu0 %v2848
    %v3302 = vpop.f32.mrf.mxu0
    %v3303 = vadd.f32 0.0, %v3302
    %v3304 = vpop.f32.mrf.mxu0
    %v3305 = vadd.f32 0.0, %v3304
    %v3306 = vpop.f32.mrf.mxu0
    %v3307 = vadd.f32 0.0, %v3306
    %v3308 = vpop.f32.mrf.mxu0
    %v3309 = vadd.f32 0.0, %v3308
    %3310 = vmatprep.mubr.bf16.mxu0 %v2851
    %3311 = vmatmul.mubr.bf16.gmra.mxu0 %v2850
    %v3312 = vpop.f32.mrf.mxu0
    %v3313 = vadd.f32 0.0, %v3312
    %v3314 = vpop.f32.mrf.mxu0
    %v3315 = vadd.f32 0.0, %v3314
    %v3316 = vpop.f32.mrf.mxu0
    %v3317 = vpop.f32.mrf.mxu0
    %3318 = vdwg.mxu0
    %3319 = vmatprep.subr.bf16.mxu0 %v3141
    %3320 = vmatpush1.bf16.msra.mxu0 %v3140
    %3321 = vmatprep.subr.bf16.mxu0 %v3137
    %3322 = vmatpush1.bf16.msra.mxu0 %v3136
    %3323 = vmatprep.subr.bf16.mxu0 %v3133
    %3324 = vmatpush1.bf16.msra.mxu0 %v3132
    %3325 = vmatprep.subr.bf16.mxu0 %v3129
    %3326 = vmatpush1.bf16.msra.mxu0 %v3128
    %3327 = vmatprep.subr.bf16.mxu0 %v3125
    %3328 = vmatpush1.bf16.msra.mxu0 %v3124
    %3329 = vmatprep.subr.bf16.mxu0 %v3121
    %3330 = vmatpush1.bf16.msra.mxu0 %v3120
    %3331 = vmatprep.subr.bf16.mxu0 %v3117
    %3332 = vmatpush1.bf16.msra.mxu0 %v3116
    %3333 = vmatprep.subr.bf16.mxu0 %v3113
    %3334 = vmatpush1.bf16.msra.mxu0 %v3112
    %3335 = vmatprep.subr.bf16.mxu0 %v3173
    %3336 = vmatpush2.bf16.msra.mxu0 %v3172
    %3337 = vmatprep.subr.bf16.mxu0 %v3169
    %3338 = vmatpush2.bf16.msra.mxu0 %v3168
    %3339 = vmatprep.subr.bf16.mxu0 %v3165
    %3340 = vmatpush2.bf16.msra.mxu0 %v3164
    %3341 = vmatprep.subr.bf16.mxu0 %v3161
    %3342 = vmatpush2.bf16.msra.mxu0 %v3160
    %3343 = vmatprep.subr.bf16.mxu0 %v3157
    %3344 = vmatpush2.bf16.msra.mxu0 %v3156
    %3345 = vmatprep.subr.bf16.mxu0 %v3153
    %3346 = vmatpush2.bf16.msra.mxu0 %v3152
    %3347 = vmatprep.subr.bf16.mxu0 %v3149
    %3348 = vmatpush2.bf16.msra.mxu0 %v3148
    %3349 = vmatprep.subr.bf16.mxu0 %v3145
    %3350 = vmatpush2.bf16.msra.mxu0 %v3144
    %3351 = vmatprep.mubr.bf16.mxu0 %v2843
    %3352 = vmatmul.mubr.bf16.gmra.mxu0 %v2842
    %v3353 = vpop.f32.mrf.mxu0
    %v3354 = vadd.f32 0.0, %v3353
    %v3355 = vpop.f32.mrf.mxu0
    %v3356 = vadd.f32 0.0, %v3355
    %v3357 = vpop.f32.mrf.mxu0
    %v3358 = vadd.f32 0.0, %v3357
    %v3359 = vpop.f32.mrf.mxu0
    %v3360 = vadd.f32 0.0, %v3359
    %3361 = vmatprep.mubr.bf16.mxu0 %v2845
    %3362 = vmatmul.mubr.bf16.gmra.mxu0 %v2844
    %v3363 = vpop.f32.mrf.mxu0
    %v3364 = vadd.f32 0.0, %v3363
    %v3365 = vpop.f32.mrf.mxu0
    %v3366 = vadd.f32 0.0, %v3365
    %v3367 = vpop.f32.mrf.mxu0
    %v3368 = vadd.f32 0.0, %v3367
    %v3369 = vpop.f32.mrf.mxu0
    %v3370 = vadd.f32 0.0, %v3369
    %3371 = vmatprep.mubr.bf16.mxu0 %v2847
    %3372 = vmatmul.mubr.bf16.gmra.mxu0 %v2846
    %v3373 = vpop.f32.mrf.mxu0
    %v3374 = vadd.f32 0.0, %v3373
    %v3375 = vpop.f32.mrf.mxu0
    %v3376 = vadd.f32 0.0, %v3375
    %v3377 = vpop.f32.mrf.mxu0
    %v3378 = vadd.f32 0.0, %v3377
    %v3379 = vpop.f32.mrf.mxu0
    %v3380 = vadd.f32 0.0, %v3379
    %3381 = vmatprep.mubr.bf16.mxu0 %v2849
    %3382 = vmatmul.mubr.bf16.gmra.mxu0 %v2848
    %v3383 = vpop.f32.mrf.mxu0
    %v3384 = vadd.f32 0.0, %v3383
    %v3385 = vpop.f32.mrf.mxu0
    %v3386 = vadd.f32 0.0, %v3385
    %v3387 = vpop.f32.mrf.mxu0
    %v3388 = vadd.f32 0.0, %v3387
    %v3389 = vpop.f32.mrf.mxu0
    %v3390 = vadd.f32 0.0, %v3389
    %3391 = vmatprep.mubr.bf16.mxu0 %v2851
    %3392 = vmatmul.mubr.bf16.gmra.mxu0 %v2850
    %v3393 = vpop.f32.mrf.mxu0
    %v3394 = vadd.f32 0.0, %v3393
    %v3395 = vpop.f32.mrf.mxu0
    %v3396 = vadd.f32 0.0, %v3395
    %v3397 = vpop.f32.mrf.mxu0
    %v3398 = vpop.f32.mrf.mxu0
    %3399 = vdwg.mxu0
    %v3400 = vld [vmem:[#allocation7] sm:$0xff]
    %v3401 = vld [vmem:[#allocation7 + $0x8] sm:$0xff]
    %v3402 = vld [vmem:[#allocation7 + $0x10] sm:$0xff]
    %v3403 = vld [vmem:[#allocation7 + $0x18] sm:$0xff]
    %v3404 = vld [vmem:[#allocation7 + $0x20] sm:$0xff]
    %v3405 = vld [vmem:[#allocation7 + $0x28] sm:$0xff]
    %v3406 = vld [vmem:[#allocation7 + $0x30] sm:$0xff]
    %v3407 = vld [vmem:[#allocation7 + $0x38] sm:$0xff]
    %v3408 = vld [vmem:[#allocation7 + $0x40] sm:$0xff]
    %v3409 = vld [vmem:[#allocation7 + $0x48] sm:$0xff]
    %v3410 = vld [vmem:[#allocation7 + $0x50] sm:$0xff]
    %v3411 = vld [vmem:[#allocation7 + $0x58] sm:$0xff]
    %v3412 = vld [vmem:[#allocation7 + $0x60] sm:$0xff]
    %v3413 = vld [vmem:[#allocation7 + $0x68] sm:$0xff]
    %v3414 = vld [vmem:[#allocation7 + $0x70] sm:$0xff]
    %v3415 = vld [vmem:[#allocation7 + $0x78] sm:$0xff]
    %v3416 = vld [vmem:[#allocation7 + $0x80] sm:$0xff]
    %v3417 = vld [vmem:[#allocation7 + $0x88] sm:$0xff]
    %v3418 = vld [vmem:[#allocation7 + $0x90] sm:$0xff]
    %v3419 = vld [vmem:[#allocation7 + $0x98] sm:$0xff]
    %v3420 = vld [vmem:[#allocation7 + $0xa0] sm:$0xff]
    %v3421 = vld [vmem:[#allocation7 + $0xa8] sm:$0xff]
    %v3422 = vld [vmem:[#allocation7 + $0xb0] sm:$0xff]
    %v3423 = vld [vmem:[#allocation7 + $0xb8] sm:$0xff]
    %v3424 = vld [vmem:[#allocation7 + $0xc0] sm:$0xff]
    %v3425 = vld [vmem:[#allocation7 + $0xc8] sm:$0xff]
    %v3426 = vld [vmem:[#allocation7 + $0xd0] sm:$0xff]
    %v3427 = vld [vmem:[#allocation7 + $0xd8] sm:$0xff]
    %v3428 = vld [vmem:[#allocation7 + $0xe0] sm:$0xff]
    %v3429 = vld [vmem:[#allocation7 + $0xe8] sm:$0xff]
    %v3430 = vld [vmem:[#allocation7 + $0xf0] sm:$0xff]
    %v3431 = vld [vmem:[#allocation7 + $0xf8] sm:$0xff]
    %v3432 = vld [vmem:[#allocation7 + $0x100] sm:$0xff]
    %v3433 = vld [vmem:[#allocation7 + $0x108] sm:$0xff]
    %v3434 = vld [vmem:[#allocation7 + $0x110] sm:$0xff]
    %v3435 = vld [vmem:[#allocation7 + $0x118] sm:$0xff]
    %v3436 = vld [vmem:[#allocation7 + $0x120] sm:$0xff]
    %v3437 = vld [vmem:[#allocation7 + $0x128] sm:$0xff]
    %v3438 = vld [vmem:[#allocation7 + $0x130] sm:$0xff]
    %v3439 = vld [vmem:[#allocation7 + $0x138] sm:$0xff]
    %v3440 = vld [vmem:[#allocation7 + $0x140] sm:$0xff]
    %v3441 = vld [vmem:[#allocation7 + $0x148] sm:$0xff]
    %v3442 = vld [vmem:[#allocation7 + $0x150] sm:$0xff]
    %v3443 = vld [vmem:[#allocation7 + $0x158] sm:$0xff]
    %v3444 = vld [vmem:[#allocation7 + $0x160] sm:$0xff]
    %v3445 = vld [vmem:[#allocation7 + $0x168] sm:$0xff]
    %v3446 = vld [vmem:[#allocation7 + $0x170] sm:$0xff]
    %v3447 = vld [vmem:[#allocation7 + $0x178] sm:$0xff]
    %v3448 = vld [vmem:[#allocation7 + $0x180] sm:$0xff]
    %v3449 = vld [vmem:[#allocation7 + $0x188] sm:$0xff]
    %v3450 = vld [vmem:[#allocation7 + $0x190] sm:$0xff]
    %v3451 = vld [vmem:[#allocation7 + $0x198] sm:$0xff]
    %v3452 = vld [vmem:[#allocation7 + $0x1a0] sm:$0xff]
    %v3453 = vld [vmem:[#allocation7 + $0x1a8] sm:$0xff]
    %v3454 = vld [vmem:[#allocation7 + $0x1b0] sm:$0xff]
    %v3455 = vld [vmem:[#allocation7 + $0x1b8] sm:$0xff]
    %v3456 = vld [vmem:[#allocation7 + $0x1c0] sm:$0xff]
    %v3457 = vld [vmem:[#allocation7 + $0x1c8] sm:$0xff]
    %v3458 = vld [vmem:[#allocation7 + $0x1d0] sm:$0xff]
    %v3459 = vld [vmem:[#allocation7 + $0x1d8] sm:$0xff]
    %v3460 = vld [vmem:[#allocation7 + $0x1e0] sm:$0xff]
    %v3461 = vld [vmem:[#allocation7 + $0x1e8] sm:$0xff]
    %v3462 = vld [vmem:[#allocation7 + $0x1f0] sm:$0xff]
    %v3463 = vld [vmem:[#allocation7 + $0x1f8] sm:$0xff]
    %v3528 = vunpack.c.l.b16 %v3400
    %v3529 = vunpack.c.h.b16 %v3400
    %v3530 = vunpack.c.l.b16 %v3401
    %v3531 = vunpack.c.h.b16 %v3401
    %v3532 = vunpack.c.l.b16 %v3402
    %v3533 = vunpack.c.h.b16 %v3402
    %v3534 = vunpack.c.l.b16 %v3403
    %v3535 = vunpack.c.h.b16 %v3403
    %v3536 = vunpack.c.l.b16 %v3404
    %v3537 = vunpack.c.h.b16 %v3404
    %v3538 = vunpack.c.l.b16 %v3405
    %v3539 = vunpack.c.h.b16 %v3405
    %v3540 = vunpack.c.l.b16 %v3406
    %v3541 = vunpack.c.h.b16 %v3406
    %v3542 = vunpack.c.l.b16 %v3407
    %v3543 = vunpack.c.h.b16 %v3407
    %v3544 = vunpack.c.l.b16 %v3408
    %v3545 = vunpack.c.h.b16 %v3408
    %v3546 = vunpack.c.l.b16 %v3409
    %v3547 = vunpack.c.h.b16 %v3409
    %v3548 = vunpack.c.l.b16 %v3410
    %v3549 = vunpack.c.h.b16 %v3410
    %v3550 = vunpack.c.l.b16 %v3411
    %v3551 = vunpack.c.h.b16 %v3411
    %v3552 = vunpack.c.l.b16 %v3412
    %v3553 = vunpack.c.h.b16 %v3412
    %v3554 = vunpack.c.l.b16 %v3413
    %v3555 = vunpack.c.h.b16 %v3413
    %v3556 = vunpack.c.l.b16 %v3414
    %v3557 = vunpack.c.h.b16 %v3414
    %v3558 = vunpack.c.l.b16 %v3415
    %v3559 = vunpack.c.h.b16 %v3415
    %v3560 = vunpack.c.l.b16 %v3416
    %v3561 = vunpack.c.h.b16 %v3416
    %v3562 = vunpack.c.l.b16 %v3417
    %v3563 = vunpack.c.h.b16 %v3417
    %v3564 = vunpack.c.l.b16 %v3418
    %v3565 = vunpack.c.h.b16 %v3418
    %v3566 = vunpack.c.l.b16 %v3419
    %v3567 = vunpack.c.h.b16 %v3419
    %v3568 = vunpack.c.l.b16 %v3420
    %v3569 = vunpack.c.h.b16 %v3420
    %v3570 = vunpack.c.l.b16 %v3421
    %v3571 = vunpack.c.h.b16 %v3421
    %v3572 = vunpack.c.l.b16 %v3422
    %v3573 = vunpack.c.h.b16 %v3422
    %v3574 = vunpack.c.l.b16 %v3423
    %v3575 = vunpack.c.h.b16 %v3423
    %v3576 = vunpack.c.l.b16 %v3424
    %v3577 = vunpack.c.h.b16 %v3424
    %v3578 = vunpack.c.l.b16 %v3425
    %v3579 = vunpack.c.h.b16 %v3425
    %v3580 = vunpack.c.l.b16 %v3426
    %v3581 = vunpack.c.h.b16 %v3426
    %v3582 = vunpack.c.l.b16 %v3427
    %v3583 = vunpack.c.h.b16 %v3427
    %v3584 = vunpack.c.l.b16 %v3428
    %v3585 = vunpack.c.h.b16 %v3428
    %v3586 = vunpack.c.l.b16 %v3429
    %v3587 = vunpack.c.h.b16 %v3429
    %v3588 = vunpack.c.l.b16 %v3430
    %v3589 = vunpack.c.h.b16 %v3430
    %v3590 = vunpack.c.l.b16 %v3431
    %v3591 = vunpack.c.h.b16 %v3431
    %v3592 = vunpack.c.l.b16 %v3432
    %v3593 = vunpack.c.h.b16 %v3432
    %v3594 = vunpack.c.l.b16 %v3433
    %v3595 = vunpack.c.h.b16 %v3433
    %v3596 = vunpack.c.l.b16 %v3434
    %v3597 = vunpack.c.h.b16 %v3434
    %v3598 = vunpack.c.l.b16 %v3435
    %v3599 = vunpack.c.h.b16 %v3435
    %v3600 = vunpack.c.l.b16 %v3436
    %v3601 = vunpack.c.h.b16 %v3436
    %v3602 = vunpack.c.l.b16 %v3437
    %v3603 = vunpack.c.h.b16 %v3437
    %v3604 = vunpack.c.l.b16 %v3438
    %v3605 = vunpack.c.h.b16 %v3438
    %v3606 = vunpack.c.l.b16 %v3439
    %v3607 = vunpack.c.h.b16 %v3439
    %v3608 = vunpack.c.l.b16 %v3440
    %v3609 = vunpack.c.h.b16 %v3440
    %v3610 = vunpack.c.l.b16 %v3441
    %v3611 = vunpack.c.h.b16 %v3441
    %v3612 = vunpack.c.l.b16 %v3442
    %v3613 = vunpack.c.h.b16 %v3442
    %v3614 = vunpack.c.l.b16 %v3443
    %v3615 = vunpack.c.h.b16 %v3443
    %v3616 = vunpack.c.l.b16 %v3444
    %v3617 = vunpack.c.h.b16 %v3444
    %v3618 = vunpack.c.l.b16 %v3445
    %v3619 = vunpack.c.h.b16 %v3445
    %v3620 = vunpack.c.l.b16 %v3446
    %v3621 = vunpack.c.h.b16 %v3446
    %v3622 = vunpack.c.l.b16 %v3447
    %v3623 = vunpack.c.h.b16 %v3447
    %v3624 = vunpack.c.l.b16 %v3448
    %v3625 = vunpack.c.h.b16 %v3448
    %v3626 = vunpack.c.l.b16 %v3449
    %v3627 = vunpack.c.h.b16 %v3449
    %v3628 = vunpack.c.l.b16 %v3450
    %v3629 = vunpack.c.h.b16 %v3450
    %v3630 = vunpack.c.l.b16 %v3451
    %v3631 = vunpack.c.h.b16 %v3451
    %v3632 = vunpack.c.l.b16 %v3452
    %v3633 = vunpack.c.h.b16 %v3452
    %v3634 = vunpack.c.l.b16 %v3453
    %v3635 = vunpack.c.h.b16 %v3453
    %v3636 = vunpack.c.l.b16 %v3454
    %v3637 = vunpack.c.h.b16 %v3454
    %v3638 = vunpack.c.l.b16 %v3455
    %v3639 = vunpack.c.h.b16 %v3455
    %v3640 = vunpack.c.l.b16 %v3456
    %v3641 = vunpack.c.h.b16 %v3456
    %v3642 = vunpack.c.l.b16 %v3457
    %v3643 = vunpack.c.h.b16 %v3457
    %v3644 = vunpack.c.l.b16 %v3458
    %v3645 = vunpack.c.h.b16 %v3458
    %v3646 = vunpack.c.l.b16 %v3459
    %v3647 = vunpack.c.h.b16 %v3459
    %v3648 = vunpack.c.l.b16 %v3460
    %v3649 = vunpack.c.h.b16 %v3460
    %v3650 = vunpack.c.l.b16 %v3461
    %v3651 = vunpack.c.h.b16 %v3461
    %v3652 = vunpack.c.l.b16 %v3462
    %v3653 = vunpack.c.h.b16 %v3462
    %v3654 = vunpack.c.l.b16 %v3463
    %v3655 = vunpack.c.h.b16 %v3463
    %v3656 = vpack.c.b16 %v3532, %v3528
    %v3657 = vpack.c.b16 %v3533, %v3529
    %v3658 = vpack.c.b16 %v3534, %v3530
    %v3659 = vpack.c.b16 %v3535, %v3531
    %v3660 = vpack.c.b16 %v3540, %v3536
    %v3661 = vpack.c.b16 %v3541, %v3537
    %v3662 = vpack.c.b16 %v3542, %v3538
    %v3663 = vpack.c.b16 %v3543, %v3539
    %v3664 = vpack.c.b16 %v3548, %v3544
    %v3665 = vpack.c.b16 %v3549, %v3545
    %v3666 = vpack.c.b16 %v3550, %v3546
    %v3667 = vpack.c.b16 %v3551, %v3547
    %v3668 = vpack.c.b16 %v3556, %v3552
    %v3669 = vpack.c.b16 %v3557, %v3553
    %v3670 = vpack.c.b16 %v3558, %v3554
    %v3671 = vpack.c.b16 %v3559, %v3555
    %v3672 = vpack.c.b16 %v3564, %v3560
    %v3673 = vpack.c.b16 %v3565, %v3561
    %v3674 = vpack.c.b16 %v3566, %v3562
    %v3675 = vpack.c.b16 %v3567, %v3563
    %v3676 = vpack.c.b16 %v3572, %v3568
    %v3677 = vpack.c.b16 %v3573, %v3569
    %v3678 = vpack.c.b16 %v3574, %v3570
    %v3679 = vpack.c.b16 %v3575, %v3571
    %v3680 = vpack.c.b16 %v3580, %v3576
    %v3681 = vpack.c.b16 %v3581, %v3577
    %v3682 = vpack.c.b16 %v3582, %v3578
    %v3683 = vpack.c.b16 %v3583, %v3579
    %v3684 = vpack.c.b16 %v3588, %v3584
    %v3685 = vpack.c.b16 %v3589, %v3585
    %v3686 = vpack.c.b16 %v3590, %v3586
    %v3687 = vpack.c.b16 %v3591, %v3587
    %v3688 = vpack.c.b16 %v3596, %v3592
    %v3689 = vpack.c.b16 %v3597, %v3593
    %v3690 = vpack.c.b16 %v3598, %v3594
    %v3691 = vpack.c.b16 %v3599, %v3595
    %v3692 = vpack.c.b16 %v3604, %v3600
    %v3693 = vpack.c.b16 %v3605, %v3601
    %v3694 = vpack.c.b16 %v3606, %v3602
    %v3695 = vpack.c.b16 %v3607, %v3603
    %v3696 = vpack.c.b16 %v3612, %v3608
    %v3697 = vpack.c.b16 %v3613, %v3609
    %v3698 = vpack.c.b16 %v3614, %v3610
    %v3699 = vpack.c.b16 %v3615, %v3611
    %v3700 = vpack.c.b16 %v3620, %v3616
    %v3701 = vpack.c.b16 %v3621, %v3617
    %v3702 = vpack.c.b16 %v3622, %v3618
    %v3703 = vpack.c.b16 %v3623, %v3619
    %v3704 = vpack.c.b16 %v3628, %v3624
    %v3705 = vpack.c.b16 %v3629, %v3625
    %v3706 = vpack.c.b16 %v3630, %v3626
    %v3707 = vpack.c.b16 %v3631, %v3627
    %v3708 = vpack.c.b16 %v3636, %v3632
    %v3709 = vpack.c.b16 %v3637, %v3633
    %v3710 = vpack.c.b16 %v3638, %v3634
    %v3711 = vpack.c.b16 %v3639, %v3635
    %v3712 = vpack.c.b16 %v3644, %v3640
    %v3713 = vpack.c.b16 %v3645, %v3641
    %v3714 = vpack.c.b16 %v3646, %v3642
    %v3715 = vpack.c.b16 %v3647, %v3643
    %v3716 = vpack.c.b16 %v3652, %v3648
    %v3717 = vpack.c.b16 %v3653, %v3649
    %v3718 = vpack.c.b16 %v3654, %v3650
    %v3719 = vpack.c.b16 %v3655, %v3651
    %3784 = vmatprep.subr.bf16.mxu0 %v3685
    %3785 = vmatpush1.bf16.msra.mxu0 %v3684
    %3786 = vmatprep.subr.bf16.mxu0 %v3681
    %3787 = vmatpush1.bf16.msra.mxu0 %v3680
    %3788 = vmatprep.subr.bf16.mxu0 %v3677
    %3789 = vmatpush1.bf16.msra.mxu0 %v3676
    %3790 = vmatprep.subr.bf16.mxu0 %v3673
    %3791 = vmatpush1.bf16.msra.mxu0 %v3672
    %3792 = vmatprep.subr.bf16.mxu0 %v3669
    %3793 = vmatpush1.bf16.msra.mxu0 %v3668
    %3794 = vmatprep.subr.bf16.mxu0 %v3665
    %3795 = vmatpush1.bf16.msra.mxu0 %v3664
    %3796 = vmatprep.subr.bf16.mxu0 %v3661
    %3797 = vmatpush1.bf16.msra.mxu0 %v3660
    %3798 = vmatprep.subr.bf16.mxu0 %v3657
    %3799 = vmatpush1.bf16.msra.mxu0 %v3656
    %3800 = vmatprep.subr.bf16.mxu0 %v3717
    %3801 = vmatpush2.bf16.msra.mxu0 %v3716
    %3802 = vmatprep.subr.bf16.mxu0 %v3713
    %3803 = vmatpush2.bf16.msra.mxu0 %v3712
    %3804 = vmatprep.subr.bf16.mxu0 %v3709
    %3805 = vmatpush2.bf16.msra.mxu0 %v3708
    %3806 = vmatprep.subr.bf16.mxu0 %v3705
    %3807 = vmatpush2.bf16.msra.mxu0 %v3704
    %3808 = vmatprep.subr.bf16.mxu0 %v3701
    %3809 = vmatpush2.bf16.msra.mxu0 %v3700
    %3810 = vmatprep.subr.bf16.mxu0 %v3697
    %3811 = vmatpush2.bf16.msra.mxu0 %v3696
    %3812 = vmatprep.subr.bf16.mxu0 %v3693
    %3813 = vmatpush2.bf16.msra.mxu0 %v3692
    %3814 = vmatprep.subr.bf16.mxu0 %v3689
    %3815 = vmatpush2.bf16.msra.mxu0 %v3688
    %3816 = vmatprep.mubr.bf16.mxu0 %v2843
    %3817 = vmatmul.mubr.bf16.gmra.mxu0 %v2842
    %v3818 = vpop.f32.mrf.mxu0
    %v3819 = vadd.f32 0.0, %v3818
    %v3820 = vpop.f32.mrf.mxu0
    %v3821 = vadd.f32 0.0, %v3820
    %v3822 = vpop.f32.mrf.mxu0
    %v3823 = vadd.f32 0.0, %v3822
    %v3824 = vpop.f32.mrf.mxu0
    %v3825 = vadd.f32 0.0, %v3824
    %3826 = vmatprep.mubr.bf16.mxu0 %v2845
    %3827 = vmatmul.mubr.bf16.gmra.mxu0 %v2844
    %v3828 = vpop.f32.mrf.mxu0
    %v3829 = vadd.f32 0.0, %v3828
    %v3830 = vpop.f32.mrf.mxu0
    %v3831 = vadd.f32 0.0, %v3830
    %v3832 = vpop.f32.mrf.mxu0
    %v3833 = vadd.f32 0.0, %v3832
    %v3834 = vpop.f32.mrf.mxu0
    %v3835 = vadd.f32 0.0, %v3834
    %3836 = vmatprep.mubr.bf16.mxu0 %v2847
    %3837 = vmatmul.mubr.bf16.gmra.mxu0 %v2846
    %v3838 = vpop.f32.mrf.mxu0
    %v3839 = vadd.f32 0.0, %v3838
    %v3840 = vpop.f32.mrf.mxu0
    %v3841 = vadd.f32 0.0, %v3840
    %v3842 = vpop.f32.mrf.mxu0
    %v3843 = vadd.f32 0.0, %v3842
    %v3844 = vpop.f32.mrf.mxu0
    %v3845 = vadd.f32 0.0, %v3844
    %3846 = vmatprep.mubr.bf16.mxu0 %v2849
    %3847 = vmatmul.mubr.bf16.gmra.mxu0 %v2848
    %v3848 = vpop.f32.mrf.mxu0
    %v3849 = vadd.f32 0.0, %v3848
    %v3850 = vpop.f32.mrf.mxu0
    %v3851 = vadd.f32 0.0, %v3850
    %v3852 = vpop.f32.mrf.mxu0
    %v3853 = vadd.f32 0.0, %v3852
    %v3854 = vpop.f32.mrf.mxu0
    %v3855 = vadd.f32 0.0, %v3854
    %3856 = vmatprep.mubr.bf16.mxu0 %v2851
    %3857 = vmatmul.mubr.bf16.gmra.mxu0 %v2850
    %v3858 = vpop.f32.mrf.mxu0
    %v3859 = vadd.f32 0.0, %v3858
    %v3860 = vpop.f32.mrf.mxu0
    %v3861 = vadd.f32 0.0, %v3860
    %v3862 = vpop.f32.mrf.mxu0
    %v3863 = vpop.f32.mrf.mxu0
    %3864 = vdwg.mxu0
    %3865 = vmatprep.subr.bf16.mxu0 %v3687
    %3866 = vmatpush1.bf16.msra.mxu0 %v3686
    %3867 = vmatprep.subr.bf16.mxu0 %v3683
    %3868 = vmatpush1.bf16.msra.mxu0 %v3682
    %3869 = vmatprep.subr.bf16.mxu0 %v3679
    %3870 = vmatpush1.bf16.msra.mxu0 %v3678
    %3871 = vmatprep.subr.bf16.mxu0 %v3675
    %3872 = vmatpush1.bf16.msra.mxu0 %v3674
    %3873 = vmatprep.subr.bf16.mxu0 %v3671
    %3874 = vmatpush1.bf16.msra.mxu0 %v3670
    %3875 = vmatprep.subr.bf16.mxu0 %v3667
    %3876 = vmatpush1.bf16.msra.mxu0 %v3666
    %3877 = vmatprep.subr.bf16.mxu0 %v3663
    %3878 = vmatpush1.bf16.msra.mxu0 %v3662
    %3879 = vmatprep.subr.bf16.mxu0 %v3659
    %3880 = vmatpush1.bf16.msra.mxu0 %v3658
    %3881 = vmatprep.subr.bf16.mxu0 %v3719
    %3882 = vmatpush2.bf16.msra.mxu0 %v3718
    %3883 = vmatprep.subr.bf16.mxu0 %v3715
    %3884 = vmatpush2.bf16.msra.mxu0 %v3714
    %3885 = vmatprep.subr.bf16.mxu0 %v3711
    %3886 = vmatpush2.bf16.msra.mxu0 %v3710
    %3887 = vmatprep.subr.bf16.mxu0 %v3707
    %3888 = vmatpush2.bf16.msra.mxu0 %v3706
    %3889 = vmatprep.subr.bf16.mxu0 %v3703
    %3890 = vmatpush2.bf16.msra.mxu0 %v3702
    %3891 = vmatprep.subr.bf16.mxu0 %v3699
    %3892 = vmatpush2.bf16.msra.mxu0 %v3698
    %3893 = vmatprep.subr.bf16.mxu0 %v3695
    %3894 = vmatpush2.bf16.msra.mxu0 %v3694
    %3895 = vmatprep.subr.bf16.mxu0 %v3691
    %3896 = vmatpush2.bf16.msra.mxu0 %v3690
    %3897 = vmatprep.mubr.bf16.mxu0 %v2843
    %3898 = vmatmul.mubr.bf16.gmra.mxu0 %v2842
    %v3899 = vpop.f32.mrf.mxu0
    %v3900 = vadd.f32 0.0, %v3899
    %v3901 = vpop.f32.mrf.mxu0
    %v3902 = vadd.f32 0.0, %v3901
    %v3903 = vpop.f32.mrf.mxu0
    %v3904 = vadd.f32 0.0, %v3903
    %v3905 = vpop.f32.mrf.mxu0
    %v3906 = vadd.f32 0.0, %v3905
    %3907 = vmatprep.mubr.bf16.mxu0 %v2845
    %3908 = vmatmul.mubr.bf16.gmra.mxu0 %v2844
    %v3909 = vpop.f32.mrf.mxu0
    %v3910 = vadd.f32 0.0, %v3909
    %v3911 = vpop.f32.mrf.mxu0
    %v3912 = vadd.f32 0.0, %v3911
    %v3913 = vpop.f32.mrf.mxu0
    %v3914 = vadd.f32 0.0, %v3913
    %v3915 = vpop.f32.mrf.mxu0
    %v3916 = vadd.f32 0.0, %v3915
    %3917 = vmatprep.mubr.bf16.mxu0 %v2847
    %3918 = vmatmul.mubr.bf16.gmra.mxu0 %v2846
    %v3919 = vpop.f32.mrf.mxu0
    %v3920 = vadd.f32 0.0, %v3919
    %v3921 = vpop.f32.mrf.mxu0
    %v3922 = vadd.f32 0.0, %v3921
    %v3923 = vpop.f32.mrf.mxu0
    %v3924 = vadd.f32 0.0, %v3923
    %v3925 = vpop.f32.mrf.mxu0
    %v3926 = vadd.f32 0.0, %v3925
    %3927 = vmatprep.mubr.bf16.mxu0 %v2849
    %3928 = vmatmul.mubr.bf16.gmra.mxu0 %v2848
    %v3929 = vpop.f32.mrf.mxu0
    %v3930 = vadd.f32 0.0, %v3929
    %v3931 = vpop.f32.mrf.mxu0
    %v3932 = vadd.f32 0.0, %v3931
    %v3933 = vpop.f32.mrf.mxu0
    %v3934 = vadd.f32 0.0, %v3933
    %v3935 = vpop.f32.mrf.mxu0
    %v3936 = vadd.f32 0.0, %v3935
    %3937 = vmatprep.mubr.bf16.mxu0 %v2851
    %3938 = vmatmul.mubr.bf16.gmra.mxu0 %v2850
    %v3939 = vpop.f32.mrf.mxu0
    %v3940 = vadd.f32 0.0, %v3939
    %v3941 = vpop.f32.mrf.mxu0
    %v3942 = vadd.f32 0.0, %v3941
    %v3943 = vpop.f32.mrf.mxu0
    %v3944 = vpop.f32.mrf.mxu0
    %3945 = vdwg.mxu0
    %v3946 = vadd.f32 %v3819, %v3823
    %v3947 = vadd.f32 %v3946, %v3829
    %v3948 = vadd.f32 %v3947, %v3833
    %v3949 = vadd.f32 %v3948, %v3839
    %v3950 = vadd.f32 %v3949, %v3843
    %v3951 = vadd.f32 %v3950, %v3849
    %v3952 = vadd.f32 %v3951, %v3853
    %v3953 = vadd.f32 %v3952, %v3859
    %v3954 = vrot.slane %v3953, 4
    %v3955 = vadd.f32 %v3953, %v3954
    %v3956 = vrot.slane %v3955, 2
    %v3957 = vadd.f32 %v3955, %v3956
    %v3958 = vrot.slane %v3957, 1
    %v3959 = vadd.f32 %v3957, %v3958
    %v3960 = vadd.f32 %v3821, %v3825
    %v3961 = vadd.f32 %v3960, %v3831
    %v3962 = vadd.f32 %v3961, %v3835
    %v3963 = vadd.f32 %v3962, %v3841
    %v3964 = vadd.f32 %v3963, %v3845
    %v3965 = vadd.f32 %v3964, %v3851
    %v3966 = vadd.f32 %v3965, %v3855
    %v3967 = vadd.f32 %v3966, %v3861
    %v3968 = vrot.slane %v3967, 4
    %v3969 = vadd.f32 %v3967, %v3968
    %v3970 = vrot.slane %v3969, 2
    %v3971 = vadd.f32 %v3969, %v3970
    %v3972 = vrot.slane %v3971, 1
    %v3973 = vadd.f32 %v3971, %v3972
    %v3974 = vadd.f32 %v3900, %v3904
    %v3975 = vadd.f32 %v3974, %v3910
    %v3976 = vadd.f32 %v3975, %v3914
    %v3977 = vadd.f32 %v3976, %v3920
    %v3978 = vadd.f32 %v3977, %v3924
    %v3979 = vadd.f32 %v3978, %v3930
    %v3980 = vadd.f32 %v3979, %v3934
    %v3981 = vadd.f32 %v3980, %v3940
    %v3982 = vrot.slane %v3981, 4
    %v3983 = vadd.f32 %v3981, %v3982
    %v3984 = vrot.slane %v3983, 2
    %v3985 = vadd.f32 %v3983, %v3984
    %v3986 = vrot.slane %v3985, 1
    %v3987 = vadd.f32 %v3985, %v3986
    %v3988 = vadd.f32 %v3902, %v3906
    %v3989 = vadd.f32 %v3988, %v3912
    %v3990 = vadd.f32 %v3989, %v3916
    %v3991 = vadd.f32 %v3990, %v3922
    %v3992 = vadd.f32 %v3991, %v3926
    %v3993 = vadd.f32 %v3992, %v3932
    %v3994 = vadd.f32 %v3993, %v3936
    %v3995 = vadd.f32 %v3994, %v3942
    %v3996 = vrot.slane %v3995, 4
    %v3997 = vadd.f32 %v3995, %v3996
    %v3998 = vrot.slane %v3997, 2
    %v3999 = vadd.f32 %v3997, %v3998
    %v4000 = vrot.slane %v3999, 1
    %v4001 = vadd.f32 %v3999, %v4000
    %v4002 = vrcp.pop 72.0
    %v4003 = vmul.f32 %v3959, %v4002
    %v4004 = vmul.f32 %v3973, %v4002
    %v4005 = vmul.f32 %v3987, %v4002
    %v4006 = vmul.f32 %v4001, %v4002
    %v4007 = vmul.f32 %v3819, %v3819
    %v4008 = vmul.f32 %v3821, %v3821
    %v4009 = vmul.f32 %v3900, %v3900
    %v4010 = vmul.f32 %v3902, %v3902
    %v4011 = vmul.f32 %v3823, %v3823
    %v4012 = vmul.f32 %v3825, %v3825
    %v4013 = vmul.f32 %v3904, %v3904
    %v4014 = vmul.f32 %v3906, %v3906
    %v4015 = vmul.f32 %v3829, %v3829
    %v4016 = vmul.f32 %v3831, %v3831
    %v4017 = vmul.f32 %v3910, %v3910
    %v4018 = vmul.f32 %v3912, %v3912
    %v4019 = vmul.f32 %v3833, %v3833
    %v4020 = vmul.f32 %v3835, %v3835
    %v4021 = vmul.f32 %v3914, %v3914
    %v4022 = vmul.f32 %v3916, %v3916
    %v4023 = vmul.f32 %v3839, %v3839
    %v4024 = vmul.f32 %v3841, %v3841
    %v4025 = vmul.f32 %v3920, %v3920
    %v4026 = vmul.f32 %v3922, %v3922
    %v4027 = vmul.f32 %v3843, %v3843
    %v4028 = vmul.f32 %v3845, %v3845
    %v4029 = vmul.f32 %v3924, %v3924
    %v4030 = vmul.f32 %v3926, %v3926
    %v4031 = vmul.f32 %v3849, %v3849
    %v4032 = vmul.f32 %v3851, %v3851
    %v4033 = vmul.f32 %v3930, %v3930
    %v4034 = vmul.f32 %v3932, %v3932
    %v4035 = vmul.f32 %v3853, %v3853
    %v4036 = vmul.f32 %v3855, %v3855
    %v4037 = vmul.f32 %v3934, %v3934
    %v4038 = vmul.f32 %v3936, %v3936
    %v4039 = vmul.f32 %v3859, %v3859
    %v4040 = vmul.f32 %v3861, %v3861
    %v4041 = vmul.f32 %v3940, %v3940
    %v4042 = vmul.f32 %v3942, %v3942
    %v4043 = vadd.f32 %v4007, %v4011
    %v4044 = vadd.f32 %v4043, %v4015
    %v4045 = vadd.f32 %v4044, %v4019
    %v4046 = vadd.f32 %v4045, %v4023
    %v4047 = vadd.f32 %v4046, %v4027
    %v4048 = vadd.f32 %v4047, %v4031
    %v4049 = vadd.f32 %v4048, %v4035
    %v4050 = vadd.f32 %v4049, %v4039
    %v4051 = vrot.slane %v4050, 4
    %v4052 = vadd.f32 %v4050, %v4051
    %v4053 = vrot.slane %v4052, 2
    %v4054 = vadd.f32 %v4052, %v4053
    %v4055 = vrot.slane %v4054, 1
    %v4056 = vadd.f32 %v4054, %v4055
    %v4057 = vadd.f32 %v4008, %v4012
    %v4058 = vadd.f32 %v4057, %v4016
    %v4059 = vadd.f32 %v4058, %v4020
    %v4060 = vadd.f32 %v4059, %v4024
    %v4061 = vadd.f32 %v4060, %v4028
    %v4062 = vadd.f32 %v4061, %v4032
    %v4063 = vadd.f32 %v4062, %v4036
    %v4064 = vadd.f32 %v4063, %v4040
    %v4065 = vrot.slane %v4064, 4
    %v4066 = vadd.f32 %v4064, %v4065
    %v4067 = vrot.slane %v4066, 2
    %v4068 = vadd.f32 %v4066, %v4067
    %v4069 = vrot.slane %v4068, 1
    %v4070 = vadd.f32 %v4068, %v4069
    %v4071 = vadd.f32 %v4009, %v4013
    %v4072 = vadd.f32 %v4071, %v4017
    %v4073 = vadd.f32 %v4072, %v4021
    %v4074 = vadd.f32 %v4073, %v4025
    %v4075 = vadd.f32 %v4074, %v4029
    %v4076 = vadd.f32 %v4075, %v4033
    %v4077 = vadd.f32 %v4076, %v4037
    %v4078 = vadd.f32 %v4077, %v4041
    %v4079 = vrot.slane %v4078, 4
    %v4080 = vadd.f32 %v4078, %v4079
    %v4081 = vrot.slane %v4080, 2
    %v4082 = vadd.f32 %v4080, %v4081
    %v4083 = vrot.slane %v4082, 1
    %v4084 = vadd.f32 %v4082, %v4083
    %v4085 = vadd.f32 %v4010, %v4014
    %v4086 = vadd.f32 %v4085, %v4018
    %v4087 = vadd.f32 %v4086, %v4022
    %v4088 = vadd.f32 %v4087, %v4026
    %v4089 = vadd.f32 %v4088, %v4030
    %v4090 = vadd.f32 %v4089, %v4034
    %v4091 = vadd.f32 %v4090, %v4038
    %v4092 = vadd.f32 %v4091, %v4042
    %v4093 = vrot.slane %v4092, 4
    %v4094 = vadd.f32 %v4092, %v4093
    %v4095 = vrot.slane %v4094, 2
    %v4096 = vadd.f32 %v4094, %v4095
    %v4097 = vrot.slane %v4096, 1
    %v4098 = vadd.f32 %v4096, %v4097
    %v4099 = vmul.f32 %v4056, %v4002
    %v4100 = vmul.f32 %v4070, %v4002
    %v4101 = vmul.f32 %v4084, %v4002
    %v4102 = vmul.f32 %v4098, %v4002
    %v4103 = vmul.f32 %v4003, %v4003
    %v4104 = vmul.f32 %v4004, %v4004
    %v4105 = vmul.f32 %v4005, %v4005
    %v4106 = vmul.f32 %v4006, %v4006
    %v4107 = vsub.f32 %v4099, %v4103
    %v4108 = vsub.f32 %v4100, %v4104
    %v4109 = vsub.f32 %v4101, %v4105
    %v4110 = vsub.f32 %v4102, %v4106
    %v4111 = vmax.f32 %v4107, 0.0
    %v4112 = vmax.f32 %v4108, 0.0
    %v4113 = vmax.f32 %v4109, 0.0
    %v4114 = vmax.f32 %v4110, 0.0
    %v4115 = vadd.f32 %v4111, 1e-05
    %v4116 = vadd.f32 %v4112, 1e-05
    %v4117 = vadd.f32 %v4113, 1e-05
    %v4118 = vadd.f32 %v4114, 1e-05
    %v4119 = vrsqrt.pop %v4115
    %v4120 = vrsqrt.pop %v4116
    %v4121 = vrsqrt.pop %v4117
    %v4122 = vrsqrt.pop %v4118
    %v4123 = vld [vmem:[%s13] sm:$0xf]
    %v4125 = vlaneseq
    %v4126 = vshrl.u32 %v4125, 7
    %v4127 = vsub.s32 0, %v4126
    %v4128 = vrot.slane %v4123, %v4127
    %v4129 = vlaneseq
    %v4130 = vshrl.u32 %v4129, 7
    %v4131 = vsub.s32 1, %v4130
    %v4132 = vrot.slane %v4123, %v4131
    %v4133 = vlaneseq
    %v4134 = vshrl.u32 %v4133, 7
    %v4135 = vsub.s32 2, %v4134
    %v4136 = vrot.slane %v4123, %v4135
    %v4137 = vlaneseq
    %v4138 = vshrl.u32 %v4137, 7
    %v4139 = vsub.s32 3, %v4138
    %v4140 = vrot.slane %v4123, %v4139
    %v4145 = vmul.f32 %v4119, %v4128
    %v4146 = vmul.f32 %v4120, %v4132
    %v4147 = vmul.f32 %v4121, %v4136
    %v4148 = vmul.f32 %v4122, %v4140
    %v4149 = vld [vmem:[%s14] sm:$0xf]
    %v4150 = vmul.f32 %v4003, %v4145
    %v4151 = vmul.f32 %v4004, %v4146
    %v4152 = vmul.f32 %v4005, %v4147
    %v4153 = vmul.f32 %v4006, %v4148
    %v4158 = vcombine.low %v4150, %v4151
    %v4159 = vcombine.low %v4152, %v4153
    %v4161 = vunpack.c.l.s4 1966171168
    %v4162 = vunpack.c.0.s8 %v4161
    %v4163 = vlaneseq
    %v4164 = vshrl.u32 %v4163, 7
    %v4165 = vsub.s32 %v4162, %v4164
    %v4166 = vrot.slane %v4158, %v4165
    %v4168 = vunpack.c.l.s4 1966171168
    %v4169 = vunpack.c.0.s8 %v4168
    %v4170 = vlaneseq
    %v4171 = vshrl.u32 %v4170, 7
    %v4172 = vsub.s32 %v4169, %v4171
    %v4173 = vrot.slane %v4159, %v4172
    %v4174 = vcombine.low %v4166, %v4173
    %v4176 = vunpack.c.l.s4 1966171168
    %v4177 = vunpack.c.0.s8 %v4176
    %v4178 = vlaneseq
    %v4179 = vshrl.u32 %v4178, 7
    %v4180 = vsub.s32 %v4177, %v4179
    %v4181 = vrot.slane %v4174, %v4180
    %v4183 = vsub.f32 %v4149, %v4181
    %v4184 = vlaneseq
    %v4185 = vshrl.u32 %v4184, 7
    %v4186 = vsub.s32 0, %v4185
    %v4187 = vrot.slane %v4145, %v4186
    %v4188 = vlaneseq
    %v4189 = vshrl.u32 %v4188, 7
    %v4190 = vsub.s32 0, %v4189
    %v4191 = vrot.slane %v4146, %v4190
    %v4192 = vlaneseq
    %v4193 = vshrl.u32 %v4192, 7
    %v4194 = vsub.s32 0, %v4193
    %v4195 = vrot.slane %v4147, %v4194
    %v4196 = vlaneseq
    %v4197 = vshrl.u32 %v4196, 7
    %v4198 = vsub.s32 0, %v4197
    %v4199 = vrot.slane %v4148, %v4198
    %v4200 = vmul.f32 %v3819, %v4187
    %v4201 = vmul.f32 %v3821, %v4191
    %v4202 = vmul.f32 %v3900, %v4195
    %v4203 = vmul.f32 %v3902, %v4199
    %v4204 = vmul.f32 %v3823, %v4187
    %v4205 = vmul.f32 %v3825, %v4191
    %v4206 = vmul.f32 %v3904, %v4195
    %v4207 = vmul.f32 %v3906, %v4199
    %v4208 = vmul.f32 %v3829, %v4187
    %v4209 = vmul.f32 %v3831, %v4191
    %v4210 = vmul.f32 %v3910, %v4195
    %v4211 = vmul.f32 %v3912, %v4199
    %v4212 = vmul.f32 %v3833, %v4187
    %v4213 = vmul.f32 %v3835, %v4191
    %v4214 = vmul.f32 %v3914, %v4195
    %v4215 = vmul.f32 %v3916, %v4199
    %v4216 = vmul.f32 %v3839, %v4187
    %v4217 = vmul.f32 %v3841, %v4191
    %v4218 = vmul.f32 %v3920, %v4195
    %v4219 = vmul.f32 %v3922, %v4199
    %v4220 = vmul.f32 %v3843, %v4187
    %v4221 = vmul.f32 %v3845, %v4191
    %v4222 = vmul.f32 %v3924, %v4195
    %v4223 = vmul.f32 %v3926, %v4199
    %v4224 = vmul.f32 %v3849, %v4187
    %v4225 = vmul.f32 %v3851, %v4191
    %v4226 = vmul.f32 %v3930, %v4195
    %v4227 = vmul.f32 %v3932, %v4199
    %v4228 = vmul.f32 %v3853, %v4187
    %v4229 = vmul.f32 %v3855, %v4191
    %v4230 = vmul.f32 %v3934, %v4195
    %v4231 = vmul.f32 %v3936, %v4199
    %v4232 = vmul.f32 %v3859, %v4187
    %v4233 = vmul.f32 %v3861, %v4191
    %v4234 = vmul.f32 %v3940, %v4195
    %v4235 = vmul.f32 %v3942, %v4199
    %v4237 = vlaneseq
    %v4238 = vshrl.u32 %v4237, 7
    %v4239 = vsub.s32 0, %v4238
    %v4240 = vrot.slane %v4183, %v4239
    %v4241 = vlaneseq
    %v4242 = vshrl.u32 %v4241, 7
    %v4243 = vsub.s32 1, %v4242
    %v4244 = vrot.slane %v4183, %v4243
    %v4245 = vlaneseq
    %v4246 = vshrl.u32 %v4245, 7
    %v4247 = vsub.s32 2, %v4246
    %v4248 = vrot.slane %v4183, %v4247
    %v4249 = vlaneseq
    %v4250 = vshrl.u32 %v4249, 7
    %v4251 = vsub.s32 3, %v4250
    %v4252 = vrot.slane %v4183, %v4251
    %v4257 = vadd.f32 %v4200, %v4240
    %v4258 = vadd.f32 %v4201, %v4244
    %v4259 = vadd.f32 %v4202, %v4248
    %v4260 = vadd.f32 %v4203, %v4252
    %v4261 = vadd.f32 %v4204, %v4240
    %v4262 = vadd.f32 %v4205, %v4244
    %v4263 = vadd.f32 %v4206, %v4248
    %v4264 = vadd.f32 %v4207, %v4252
    %v4265 = vadd.f32 %v4208, %v4240
    %v4266 = vadd.f32 %v4209, %v4244
    %v4267 = vadd.f32 %v4210, %v4248
    %v4268 = vadd.f32 %v4211, %v4252
    %v4269 = vadd.f32 %v4212, %v4240
    %v4270 = vadd.f32 %v4213, %v4244
    %v4271 = vadd.f32 %v4214, %v4248
    %v4272 = vadd.f32 %v4215, %v4252
    %v4273 = vadd.f32 %v4216, %v4240
    %v4274 = vadd.f32 %v4217, %v4244
    %v4275 = vadd.f32 %v4218, %v4248
    %v4276 = vadd.f32 %v4219, %v4252
    %v4277 = vadd.f32 %v4220, %v4240
    %v4278 = vadd.f32 %v4221, %v4244
    %v4279 = vadd.f32 %v4222, %v4248
    %v4280 = vadd.f32 %v4223, %v4252
    %v4281 = vadd.f32 %v4224, %v4240
    %v4282 = vadd.f32 %v4225, %v4244
    %v4283 = vadd.f32 %v4226, %v4248
    %v4284 = vadd.f32 %v4227, %v4252
    %v4285 = vadd.f32 %v4228, %v4240
    %v4286 = vadd.f32 %v4229, %v4244
    %v4287 = vadd.f32 %v4230, %v4248
    %v4288 = vadd.f32 %v4231, %v4252
    %v4289 = vadd.f32 %v4232, %v4240
    %v4290 = vadd.f32 %v4233, %v4244
    %v4291 = vadd.f32 %v4234, %v4248
    %v4292 = vadd.f32 %v4235, %v4252
    %vm4293 = vcmp.ge.f32.partialorder %v4257, 0.0
    %vm4294 = vcmp.ge.f32.partialorder %v4258, 0.0
    %vm4295 = vcmp.ge.f32.partialorder %v4259, 0.0
    %vm4296 = vcmp.ge.f32.partialorder %v4260, 0.0
    %vm4297 = vcmp.ge.f32.partialorder %v4261, 0.0
    %vm4298 = vcmp.ge.f32.partialorder %v4262, 0.0
    %vm4299 = vcmp.ge.f32.partialorder %v4263, 0.0
    %vm4300 = vcmp.ge.f32.partialorder %v4264, 0.0
    %vm4301 = vcmp.ge.f32.partialorder %v4265, 0.0
    %vm4302 = vcmp.ge.f32.partialorder %v4266, 0.0
    %vm4303 = vcmp.ge.f32.partialorder %v4267, 0.0
    %vm4304 = vcmp.ge.f32.partialorder %v4268, 0.0
    %vm4305 = vcmp.ge.f32.partialorder %v4269, 0.0
    %vm4306 = vcmp.ge.f32.partialorder %v4270, 0.0
    %vm4307 = vcmp.ge.f32.partialorder %v4271, 0.0
    %vm4308 = vcmp.ge.f32.partialorder %v4272, 0.0
    %vm4309 = vcmp.ge.f32.partialorder %v4273, 0.0
    %vm4310 = vcmp.ge.f32.partialorder %v4274, 0.0
    %vm4311 = vcmp.ge.f32.partialorder %v4275, 0.0
    %vm4312 = vcmp.ge.f32.partialorder %v4276, 0.0
    %vm4313 = vcmp.ge.f32.partialorder %v4277, 0.0
    %vm4314 = vcmp.ge.f32.partialorder %v4278, 0.0
    %vm4315 = vcmp.ge.f32.partialorder %v4279, 0.0
    %vm4316 = vcmp.ge.f32.partialorder %v4280, 0.0
    %vm4317 = vcmp.ge.f32.partialorder %v4281, 0.0
    %vm4318 = vcmp.ge.f32.partialorder %v4282, 0.0
    %vm4319 = vcmp.ge.f32.partialorder %v4283, 0.0
    %vm4320 = vcmp.ge.f32.partialorder %v4284, 0.0
    %vm4321 = vcmp.ge.f32.partialorder %v4285, 0.0
    %vm4322 = vcmp.ge.f32.partialorder %v4286, 0.0
    %vm4323 = vcmp.ge.f32.partialorder %v4287, 0.0
    %vm4324 = vcmp.ge.f32.partialorder %v4288, 0.0
    %vm4325 = vcmp.ge.f32.partialorder %v4289, 0.0
    %vm4326 = vcmp.ge.f32.partialorder %v4290, 0.0
    %vm4327 = vcmp.ge.f32.partialorder %v4291, 0.0
    %vm4328 = vcmp.ge.f32.partialorder %v4292, 0.0
    %v4329 = vstv %s2852
    %v4330 = vmul.f32 %v4329, %v4257
    %v4331 = vmul.f32 %v4329, %v4258
    %v4332 = vmul.f32 %v4329, %v4259
    %v4333 = vmul.f32 %v4329, %v4260
    %v4334 = vmul.f32 %v4329, %v4261
    %v4335 = vmul.f32 %v4329, %v4262
    %v4336 = vmul.f32 %v4329, %v4263
    %v4337 = vmul.f32 %v4329, %v4264
    %v4338 = vmul.f32 %v4329, %v4265
    %v4339 = vmul.f32 %v4329, %v4266
    %v4340 = vmul.f32 %v4329, %v4267
    %v4341 = vmul.f32 %v4329, %v4268
    %v4342 = vmul.f32 %v4329, %v4269
    %v4343 = vmul.f32 %v4329, %v4270
    %v4344 = vmul.f32 %v4329, %v4271
    %v4345 = vmul.f32 %v4329, %v4272
    %v4346 = vmul.f32 %v4329, %v4273
    %v4347 = vmul.f32 %v4329, %v4274
    %v4348 = vmul.f32 %v4329, %v4275
    %v4349 = vmul.f32 %v4329, %v4276
    %v4350 = vmul.f32 %v4329, %v4277
    %v4351 = vmul.f32 %v4329, %v4278
    %v4352 = vmul.f32 %v4329, %v4279
    %v4353 = vmul.f32 %v4329, %v4280
    %v4354 = vmul.f32 %v4329, %v4281
    %v4355 = vmul.f32 %v4329, %v4282
    %v4356 = vmul.f32 %v4329, %v4283
    %v4357 = vmul.f32 %v4329, %v4284
    %v4358 = vmul.f32 %v4329, %v4285
    %v4359 = vmul.f32 %v4329, %v4286
    %v4360 = vmul.f32 %v4329, %v4287
    %v4361 = vmul.f32 %v4329, %v4288
    %v4362 = vmul.f32 %v4329, %v4289
    %v4363 = vmul.f32 %v4329, %v4290
    %v4364 = vmul.f32 %v4329, %v4291
    %v4365 = vmul.f32 %v4329, %v4292
    %v4366 = vsel %vm4293, %v4257, %v4330
    %v4367 = vsel %vm4294, %v4258, %v4331
    %v4368 = vsel %vm4295, %v4259, %v4332
    %v4369 = vsel %vm4296, %v4260, %v4333
    %v4370 = vsel %vm4297, %v4261, %v4334
    %v4371 = vsel %vm4298, %v4262, %v4335
    %v4372 = vsel %vm4299, %v4263, %v4336
    %v4373 = vsel %vm4300, %v4264, %v4337
    %v4374 = vsel %vm4301, %v4265, %v4338
    %v4375 = vsel %vm4302, %v4266, %v4339
    %v4376 = vsel %vm4303, %v4267, %v4340
    %v4377 = vsel %vm4304, %v4268, %v4341
    %v4378 = vsel %vm4305, %v4269, %v4342
    %v4379 = vsel %vm4306, %v4270, %v4343
    %v4380 = vsel %vm4307, %v4271, %v4344
    %v4381 = vsel %vm4308, %v4272, %v4345
    %v4382 = vsel %vm4309, %v4273, %v4346
    %v4383 = vsel %vm4310, %v4274, %v4347
    %v4384 = vsel %vm4311, %v4275, %v4348
    %v4385 = vsel %vm4312, %v4276, %v4349
    %v4386 = vsel %vm4313, %v4277, %v4350
    %v4387 = vsel %vm4314, %v4278, %v4351
    %v4388 = vsel %vm4315, %v4279, %v4352
    %v4389 = vsel %vm4316, %v4280, %v4353
    %v4390 = vsel %vm4317, %v4281, %v4354
    %v4391 = vsel %vm4318, %v4282, %v4355
    %v4392 = vsel %vm4319, %v4283, %v4356
    %v4393 = vsel %vm4320, %v4284, %v4357
    %v4394 = vsel %vm4321, %v4285, %v4358
    %v4395 = vsel %vm4322, %v4286, %v4359
    %v4396 = vsel %vm4323, %v4287, %v4360
    %v4397 = vsel %vm4324, %v4288, %v4361
    %v4398 = vsel %vm4325, %v4289, %v4362
    %v4399 = vsel %vm4326, %v4290, %v4363
    %v4400 = vsel %vm4327, %v4291, %v4364
    %v4401 = vsel %vm4328, %v4292, %v4365
    %v4402 = vpack.c.bf16 %v4370, %v4366
    %v4403 = vpack.c.bf16 %v4371, %v4367
    %v4404 = vpack.c.bf16 %v4372, %v4368
    %v4405 = vpack.c.bf16 %v4373, %v4369
    %v4406 = vpack.c.bf16 %v4378, %v4374
    %v4407 = vpack.c.bf16 %v4379, %v4375
    %v4408 = vpack.c.bf16 %v4380, %v4376
    %v4409 = vpack.c.bf16 %v4381, %v4377
    %v4410 = vpack.c.bf16 %v4386, %v4382
    %v4411 = vpack.c.bf16 %v4387, %v4383
    %v4412 = vpack.c.bf16 %v4388, %v4384
    %v4413 = vpack.c.bf16 %v4389, %v4385
    %v4414 = vpack.c.bf16 %v4394, %v4390
    %v4415 = vpack.c.bf16 %v4395, %v4391
    %v4416 = vpack.c.bf16 %v4396, %v4392
    %v4417 = vpack.c.bf16 %v4397, %v4393
    %v4418 = vpack.c.bf16 %v4398, %v4398
    %v4419 = vpack.c.bf16 %v4399, %v4399
    %v4420 = vpack.c.bf16 %v4400, %v4400
    %v4421 = vpack.c.bf16 %v4401, %v4401
    %v4422 = vld [vmem:[#allocation9] sm:$0xff]
    %v4423 = vld [vmem:[#allocation9 + $0x8] sm:$0xff]
    %v4424 = vld [vmem:[#allocation9 + $0x10] sm:$0xff]
    %v4425 = vld [vmem:[#allocation9 + $0x18] sm:$0xff]
    %v4426 = vld [vmem:[#allocation9 + $0x20] sm:$0xff]
    %v4427 = vld [vmem:[#allocation9 + $0x28] sm:$0xff]
    %v4428 = vld [vmem:[#allocation9 + $0x30] sm:$0xff]
    %v4429 = vld [vmem:[#allocation9 + $0x38] sm:$0xff]
    %v4430 = vld [vmem:[#allocation9 + $0x40] sm:$0xff]
    %v4431 = vld [vmem:[#allocation9 + $0x48] sm:$0xff]
    %v4432 = vld [vmem:[#allocation9 + $0x50] sm:$0xff]
    %v4433 = vld [vmem:[#allocation9 + $0x58] sm:$0xff]
    %v4434 = vld [vmem:[#allocation9 + $0x60] sm:$0xff]
    %v4435 = vld [vmem:[#allocation9 + $0x68] sm:$0xff]
    %v4436 = vld [vmem:[#allocation9 + $0x70] sm:$0xff]
    %v4437 = vld [vmem:[#allocation9 + $0x78] sm:$0xff]
    %v4438 = vld [vmem:[#allocation9 + $0x80] sm:$0xff]
    %v4439 = vld [vmem:[#allocation9 + $0x88] sm:$0xff]
    %v4440 = vld [vmem:[#allocation9 + $0x90] sm:$0xff]
    %v4441 = vld [vmem:[#allocation9 + $0x98] sm:$0xff]
    %v4442 = vld [vmem:[#allocation9 + $0xa0] sm:$0xff]
    %v4443 = vld [vmem:[#allocation9 + $0xa8] sm:$0xff]
    %v4444 = vld [vmem:[#allocation9 + $0xb0] sm:$0xff]
    %v4445 = vld [vmem:[#allocation9 + $0xb8] sm:$0xff]
    %v4446 = vld [vmem:[#allocation9 + $0xc0] sm:$0xff]
    %v4447 = vld [vmem:[#allocation9 + $0xc8] sm:$0xff]
    %v4448 = vld [vmem:[#allocation9 + $0xd0] sm:$0xff]
    %v4449 = vld [vmem:[#allocation9 + $0xd8] sm:$0xff]
    %v4450 = vld [vmem:[#allocation9 + $0xe0] sm:$0xff]
    %v4451 = vld [vmem:[#allocation9 + $0xe8] sm:$0xff]
    %v4452 = vld [vmem:[#allocation9 + $0xf0] sm:$0xff]
    %v4453 = vld [vmem:[#allocation9 + $0xf8] sm:$0xff]
    %v4454 = vld [vmem:[#allocation9 + $0x100] sm:$0xff]
    %v4455 = vld [vmem:[#allocation9 + $0x108] sm:$0xff]
    %v4456 = vld [vmem:[#allocation9 + $0x110] sm:$0xff]
    %v4457 = vld [vmem:[#allocation9 + $0x118] sm:$0xff]
    %v4458 = vld [vmem:[#allocation9 + $0x120] sm:$0xff]
    %v4459 = vld [vmem:[#allocation9 + $0x128] sm:$0xff]
    %v4460 = vld [vmem:[#allocation9 + $0x130] sm:$0xff]
    %v4461 = vld [vmem:[#allocation9 + $0x138] sm:$0xff]
    %v4462 = vld [vmem:[#allocation9 + $0x140] sm:$0xff]
    %v4463 = vld [vmem:[#allocation9 + $0x148] sm:$0xff]
    %v4464 = vld [vmem:[#allocation9 + $0x150] sm:$0xff]
    %v4465 = vld [vmem:[#allocation9 + $0x158] sm:$0xff]
    %v4466 = vld [vmem:[#allocation9 + $0x160] sm:$0xff]
    %v4467 = vld [vmem:[#allocation9 + $0x168] sm:$0xff]
    %v4468 = vld [vmem:[#allocation9 + $0x170] sm:$0xff]
    %v4469 = vld [vmem:[#allocation9 + $0x178] sm:$0xff]
    %v4470 = vld [vmem:[#allocation9 + $0x180] sm:$0xff]
    %v4471 = vld [vmem:[#allocation9 + $0x188] sm:$0xff]
    %v4472 = vld [vmem:[#allocation9 + $0x190] sm:$0xff]
    %v4473 = vld [vmem:[#allocation9 + $0x198] sm:$0xff]
    %v4474 = vld [vmem:[#allocation9 + $0x1a0] sm:$0xff]
    %v4475 = vld [vmem:[#allocation9 + $0x1a8] sm:$0xff]
    %v4476 = vld [vmem:[#allocation9 + $0x1b0] sm:$0xff]
    %v4477 = vld [vmem:[#allocation9 + $0x1b8] sm:$0xff]
    %v4478 = vld [vmem:[#allocation9 + $0x1c0] sm:$0xff]
    %v4479 = vld [vmem:[#allocation9 + $0x1c8] sm:$0xff]
    %v4480 = vld [vmem:[#allocation9 + $0x1d0] sm:$0xff]
    %v4481 = vld [vmem:[#allocation9 + $0x1d8] sm:$0xff]
    %v4482 = vld [vmem:[#allocation9 + $0x1e0] sm:$0xff]
    %v4483 = vld [vmem:[#allocation9 + $0x1e8] sm:$0xff]
    %v4484 = vld [vmem:[#allocation9 + $0x1f0] sm:$0xff]
    %v4485 = vld [vmem:[#allocation9 + $0x1f8] sm:$0xff]
    %v4486 = vld [vmem:[#allocation9 + $0x200] sm:$0xff]
    %v4487 = vld [vmem:[#allocation9 + $0x208] sm:$0xff]
    %v4488 = vld [vmem:[#allocation9 + $0x210] sm:$0xff]
    %v4489 = vld [vmem:[#allocation9 + $0x218] sm:$0xff]
    %v4490 = vld [vmem:[#allocation9 + $0x220] sm:$0xff]
    %v4491 = vld [vmem:[#allocation9 + $0x228] sm:$0xff]
    %v4492 = vld [vmem:[#allocation9 + $0x230] sm:$0xff]
    %v4493 = vld [vmem:[#allocation9 + $0x238] sm:$0xff]
    %v4494 = vld [vmem:[#allocation9 + $0x240] sm:$0xff]
    %v4495 = vld [vmem:[#allocation9 + $0x248] sm:$0xff]
    %v4496 = vld [vmem:[#allocation9 + $0x250] sm:$0xff]
    %v4497 = vld [vmem:[#allocation9 + $0x258] sm:$0xff]
    %v4498 = vld [vmem:[#allocation9 + $0x260] sm:$0xff]
    %v4499 = vld [vmem:[#allocation9 + $0x268] sm:$0xff]
    %v4500 = vld [vmem:[#allocation9 + $0x270] sm:$0xff]
    %v4501 = vld [vmem:[#allocation9 + $0x278] sm:$0xff]
    %v4502 = vld [vmem:[#allocation9 + $0x280] sm:$0xff]
    %v4503 = vld [vmem:[#allocation9 + $0x288] sm:$0xff]
    %v4504 = vld [vmem:[#allocation9 + $0x290] sm:$0xff]
    %v4505 = vld [vmem:[#allocation9 + $0x298] sm:$0xff]
    %v4506 = vld [vmem:[#allocation9 + $0x2a0] sm:$0xff]
    %v4507 = vld [vmem:[#allocation9 + $0x2a8] sm:$0xff]
    %v4508 = vld [vmem:[#allocation9 + $0x2b0] sm:$0xff]
    %v4509 = vld [vmem:[#allocation9 + $0x2b8] sm:$0xff]
    %v4510 = vld [vmem:[#allocation9 + $0x2c0] sm:$0xff]
    %v4511 = vld [vmem:[#allocation9 + $0x2c8] sm:$0xff]
    %v4512 = vld [vmem:[#allocation9 + $0x2d0] sm:$0xff]
    %v4513 = vld [vmem:[#allocation9 + $0x2d8] sm:$0xff]
    %v4514 = vld [vmem:[#allocation9 + $0x2e0] sm:$0xff]
    %v4515 = vld [vmem:[#allocation9 + $0x2e8] sm:$0xff]
    %v4516 = vld [vmem:[#allocation9 + $0x2f0] sm:$0xff]
    %v4517 = vld [vmem:[#allocation9 + $0x2f8] sm:$0xff]
    %v4518 = vld [vmem:[#allocation9 + $0x300] sm:$0xff]
    %v4519 = vld [vmem:[#allocation9 + $0x308] sm:$0xff]
    %v4520 = vld [vmem:[#allocation9 + $0x310] sm:$0xff]
    %v4521 = vld [vmem:[#allocation9 + $0x318] sm:$0xff]
    %v4522 = vld [vmem:[#allocation9 + $0x320] sm:$0xff]
    %v4523 = vld [vmem:[#allocation9 + $0x328] sm:$0xff]
    %v4524 = vld [vmem:[#allocation9 + $0x330] sm:$0xff]
    %v4525 = vld [vmem:[#allocation9 + $0x338] sm:$0xff]
    %v4526 = vld [vmem:[#allocation9 + $0x340] sm:$0xff]
    %v4527 = vld [vmem:[#allocation9 + $0x348] sm:$0xff]
    %v4528 = vld [vmem:[#allocation9 + $0x350] sm:$0xff]
    %v4529 = vld [vmem:[#allocation9 + $0x358] sm:$0xff]
    %v4530 = vld [vmem:[#allocation9 + $0x360] sm:$0xff]
    %v4531 = vld [vmem:[#allocation9 + $0x368] sm:$0xff]
    %v4532 = vld [vmem:[#allocation9 + $0x370] sm:$0xff]
    %v4533 = vld [vmem:[#allocation9 + $0x378] sm:$0xff]
    %v4534 = vld [vmem:[#allocation9 + $0x380] sm:$0xff]
    %v4535 = vld [vmem:[#allocation9 + $0x388] sm:$0xff]
    %v4536 = vld [vmem:[#allocation9 + $0x390] sm:$0xff]
    %v4537 = vld [vmem:[#allocation9 + $0x398] sm:$0xff]
    %v4538 = vld [vmem:[#allocation9 + $0x3a0] sm:$0xff]
    %v4539 = vld [vmem:[#allocation9 + $0x3a8] sm:$0xff]
    %v4540 = vld [vmem:[#allocation9 + $0x3b0] sm:$0xff]
    %v4541 = vld [vmem:[#allocation9 + $0x3b8] sm:$0xff]
    %v4542 = vld [vmem:[#allocation9 + $0x3c0] sm:$0xff]
    %v4543 = vld [vmem:[#allocation9 + $0x3c8] sm:$0xff]
    %v4544 = vld [vmem:[#allocation9 + $0x3d0] sm:$0xff]
    %v4545 = vld [vmem:[#allocation9 + $0x3d8] sm:$0xff]
    %v4546 = vld [vmem:[#allocation9 + $0x3e0] sm:$0xff]
    %v4547 = vld [vmem:[#allocation9 + $0x3e8] sm:$0xff]
    %v4548 = vld [vmem:[#allocation9 + $0x3f0] sm:$0xff]
    %v4549 = vld [vmem:[#allocation9 + $0x3f8] sm:$0xff]
    %v4678 = vunpack.c.l.b16 %v4422
    %v4679 = vunpack.c.h.b16 %v4422
    %v4680 = vunpack.c.l.b16 %v4423
    %v4681 = vunpack.c.h.b16 %v4423
    %v4682 = vunpack.c.l.b16 %v4424
    %v4683 = vunpack.c.h.b16 %v4424
    %v4684 = vunpack.c.l.b16 %v4425
    %v4685 = vunpack.c.h.b16 %v4425
    %v4686 = vunpack.c.l.b16 %v4426
    %v4687 = vunpack.c.h.b16 %v4426
    %v4688 = vunpack.c.l.b16 %v4427
    %v4689 = vunpack.c.h.b16 %v4427
    %v4690 = vunpack.c.l.b16 %v4428
    %v4691 = vunpack.c.h.b16 %v4428
    %v4692 = vunpack.c.l.b16 %v4429
    %v4693 = vunpack.c.h.b16 %v4429
    %v4694 = vunpack.c.l.b16 %v4430
    %v4695 = vunpack.c.h.b16 %v4430
    %v4696 = vunpack.c.l.b16 %v4431
    %v4697 = vunpack.c.h.b16 %v4431
    %v4698 = vunpack.c.l.b16 %v4432
    %v4699 = vunpack.c.h.b16 %v4432
    %v4700 = vunpack.c.l.b16 %v4433
    %v4701 = vunpack.c.h.b16 %v4433
    %v4702 = vunpack.c.l.b16 %v4434
    %v4703 = vunpack.c.h.b16 %v4434
    %v4704 = vunpack.c.l.b16 %v4435
    %v4705 = vunpack.c.h.b16 %v4435
    %v4706 = vunpack.c.l.b16 %v4436
    %v4707 = vunpack.c.h.b16 %v4436
    %v4708 = vunpack.c.l.b16 %v4437
    %v4709 = vunpack.c.h.b16 %v4437
    %v4710 = vunpack.c.l.b16 %v4438
    %v4711 = vunpack.c.h.b16 %v4438
    %v4712 = vunpack.c.l.b16 %v4439
    %v4713 = vunpack.c.h.b16 %v4439
    %v4714 = vunpack.c.l.b16 %v4440
    %v4715 = vunpack.c.h.b16 %v4440
    %v4716 = vunpack.c.l.b16 %v4441
    %v4717 = vunpack.c.h.b16 %v4441
    %v4718 = vunpack.c.l.b16 %v4442
    %v4719 = vunpack.c.h.b16 %v4442
    %v4720 = vunpack.c.l.b16 %v4443
    %v4721 = vunpack.c.h.b16 %v4443
    %v4722 = vunpack.c.l.b16 %v4444
    %v4723 = vunpack.c.h.b16 %v4444
    %v4724 = vunpack.c.l.b16 %v4445
    %v4725 = vunpack.c.h.b16 %v4445
    %v4726 = vunpack.c.l.b16 %v4446
    %v4727 = vunpack.c.h.b16 %v4446
    %v4728 = vunpack.c.l.b16 %v4447
    %v4729 = vunpack.c.h.b16 %v4447
    %v4730 = vunpack.c.l.b16 %v4448
    %v4731 = vunpack.c.h.b16 %v4448
    %v4732 = vunpack.c.l.b16 %v4449
    %v4733 = vunpack.c.h.b16 %v4449
    %v4734 = vunpack.c.l.b16 %v4450
    %v4735 = vunpack.c.h.b16 %v4450
    %v4736 = vunpack.c.l.b16 %v4451
    %v4737 = vunpack.c.h.b16 %v4451
    %v4738 = vunpack.c.l.b16 %v4452
    %v4739 = vunpack.c.h.b16 %v4452
    %v4740 = vunpack.c.l.b16 %v4453
    %v4741 = vunpack.c.h.b16 %v4453
    %v4742 = vunpack.c.l.b16 %v4454
    %v4743 = vunpack.c.h.b16 %v4454
    %v4744 = vunpack.c.l.b16 %v4455
    %v4745 = vunpack.c.h.b16 %v4455
    %v4746 = vunpack.c.l.b16 %v4456
    %v4747 = vunpack.c.h.b16 %v4456
    %v4748 = vunpack.c.l.b16 %v4457
    %v4749 = vunpack.c.h.b16 %v4457
    %v4750 = vunpack.c.l.b16 %v4458
    %v4751 = vunpack.c.h.b16 %v4458
    %v4752 = vunpack.c.l.b16 %v4459
    %v4753 = vunpack.c.h.b16 %v4459
    %v4754 = vunpack.c.l.b16 %v4460
    %v4755 = vunpack.c.h.b16 %v4460
    %v4756 = vunpack.c.l.b16 %v4461
    %v4757 = vunpack.c.h.b16 %v4461
    %v4758 = vunpack.c.l.b16 %v4462
    %v4759 = vunpack.c.h.b16 %v4462
    %v4760 = vunpack.c.l.b16 %v4463
    %v4761 = vunpack.c.h.b16 %v4463
    %v4762 = vunpack.c.l.b16 %v4464
    %v4763 = vunpack.c.h.b16 %v4464
    %v4764 = vunpack.c.l.b16 %v4465
    %v4765 = vunpack.c.h.b16 %v4465
    %v4766 = vunpack.c.l.b16 %v4466
    %v4767 = vunpack.c.h.b16 %v4466
    %v4768 = vunpack.c.l.b16 %v4467
    %v4769 = vunpack.c.h.b16 %v4467
    %v4770 = vunpack.c.l.b16 %v4468
    %v4771 = vunpack.c.h.b16 %v4468
    %v4772 = vunpack.c.l.b16 %v4469
    %v4773 = vunpack.c.h.b16 %v4469
    %v4774 = vunpack.c.l.b16 %v4470
    %v4775 = vunpack.c.h.b16 %v4470
    %v4776 = vunpack.c.l.b16 %v4471
    %v4777 = vunpack.c.h.b16 %v4471
    %v4778 = vunpack.c.l.b16 %v4472
    %v4779 = vunpack.c.h.b16 %v4472
    %v4780 = vunpack.c.l.b16 %v4473
    %v4781 = vunpack.c.h.b16 %v4473
    %v4782 = vunpack.c.l.b16 %v4474
    %v4783 = vunpack.c.h.b16 %v4474
    %v4784 = vunpack.c.l.b16 %v4475
    %v4785 = vunpack.c.h.b16 %v4475
    %v4786 = vunpack.c.l.b16 %v4476
    %v4787 = vunpack.c.h.b16 %v4476
    %v4788 = vunpack.c.l.b16 %v4477
    %v4789 = vunpack.c.h.b16 %v4477
    %v4790 = vunpack.c.l.b16 %v4478
    %v4791 = vunpack.c.h.b16 %v4478
    %v4792 = vunpack.c.l.b16 %v4479
    %v4793 = vunpack.c.h.b16 %v4479
    %v4794 = vunpack.c.l.b16 %v4480
    %v4795 = vunpack.c.h.b16 %v4480
    %v4796 = vunpack.c.l.b16 %v4481
    %v4797 = vunpack.c.h.b16 %v4481
    %v4798 = vunpack.c.l.b16 %v4482
    %v4799 = vunpack.c.h.b16 %v4482
    %v4800 = vunpack.c.l.b16 %v4483
    %v4801 = vunpack.c.h.b16 %v4483
    %v4802 = vunpack.c.l.b16 %v4484
    %v4803 = vunpack.c.h.b16 %v4484
    %v4804 = vunpack.c.l.b16 %v4485
    %v4805 = vunpack.c.h.b16 %v4485
    %v4806 = vunpack.c.l.b16 %v4486
    %v4807 = vunpack.c.h.b16 %v4486
    %v4808 = vunpack.c.l.b16 %v4487
    %v4809 = vunpack.c.h.b16 %v4487
    %v4810 = vunpack.c.l.b16 %v4488
    %v4811 = vunpack.c.h.b16 %v4488
    %v4812 = vunpack.c.l.b16 %v4489
    %v4813 = vunpack.c.h.b16 %v4489
    %v4814 = vunpack.c.l.b16 %v4490
    %v4815 = vunpack.c.h.b16 %v4490
    %v4816 = vunpack.c.l.b16 %v4491
    %v4817 = vunpack.c.h.b16 %v4491
    %v4818 = vunpack.c.l.b16 %v4492
    %v4819 = vunpack.c.h.b16 %v4492
    %v4820 = vunpack.c.l.b16 %v4493
    %v4821 = vunpack.c.h.b16 %v4493
    %v4822 = vunpack.c.l.b16 %v4494
    %v4823 = vunpack.c.h.b16 %v4494
    %v4824 = vunpack.c.l.b16 %v4495
    %v4825 = vunpack.c.h.b16 %v4495
    %v4826 = vunpack.c.l.b16 %v4496
    %v4827 = vunpack.c.h.b16 %v4496
    %v4828 = vunpack.c.l.b16 %v4497
    %v4829 = vunpack.c.h.b16 %v4497
    %v4830 = vunpack.c.l.b16 %v4498
    %v4831 = vunpack.c.h.b16 %v4498
    %v4832 = vunpack.c.l.b16 %v4499
    %v4833 = vunpack.c.h.b16 %v4499
    %v4834 = vunpack.c.l.b16 %v4500
    %v4835 = vunpack.c.h.b16 %v4500
    %v4836 = vunpack.c.l.b16 %v4501
    %v4837 = vunpack.c.h.b16 %v4501
    %v4838 = vunpack.c.l.b16 %v4502
    %v4839 = vunpack.c.h.b16 %v4502
    %v4840 = vunpack.c.l.b16 %v4503
    %v4841 = vunpack.c.h.b16 %v4503
    %v4842 = vunpack.c.l.b16 %v4504
    %v4843 = vunpack.c.h.b16 %v4504
    %v4844 = vunpack.c.l.b16 %v4505
    %v4845 = vunpack.c.h.b16 %v4505
    %v4846 = vunpack.c.l.b16 %v4506
    %v4847 = vunpack.c.h.b16 %v4506
    %v4848 = vunpack.c.l.b16 %v4507
    %v4849 = vunpack.c.h.b16 %v4507
    %v4850 = vunpack.c.l.b16 %v4508
    %v4851 = vunpack.c.h.b16 %v4508
    %v4852 = vunpack.c.l.b16 %v4509
    %v4853 = vunpack.c.h.b16 %v4509
    %v4854 = vunpack.c.l.b16 %v4510
    %v4855 = vunpack.c.h.b16 %v4510
    %v4856 = vunpack.c.l.b16 %v4511
    %v4857 = vunpack.c.h.b16 %v4511
    %v4858 = vunpack.c.l.b16 %v4512
    %v4859 = vunpack.c.h.b16 %v4512
    %v4860 = vunpack.c.l.b16 %v4513
    %v4861 = vunpack.c.h.b16 %v4513
    %v4862 = vunpack.c.l.b16 %v4514
    %v4863 = vunpack.c.h.b16 %v4514
    %v4864 = vunpack.c.l.b16 %v4515
    %v4865 = vunpack.c.h.b16 %v4515
    %v4866 = vunpack.c.l.b16 %v4516
    %v4867 = vunpack.c.h.b16 %v4516
    %v4868 = vunpack.c.l.b16 %v4517
    %v4869 = vunpack.c.h.b16 %v4517
    %v4870 = vunpack.c.l.b16 %v4518
    %v4871 = vunpack.c.h.b16 %v4518
    %v4872 = vunpack.c.l.b16 %v4519
    %v4873 = vunpack.c.h.b16 %v4519
    %v4874 = vunpack.c.l.b16 %v4520
    %v4875 = vunpack.c.h.b16 %v4520
    %v4876 = vunpack.c.l.b16 %v4521
    %v4877 = vunpack.c.h.b16 %v4521
    %v4878 = vunpack.c.l.b16 %v4522
    %v4879 = vunpack.c.h.b16 %v4522
    %v4880 = vunpack.c.l.b16 %v4523
    %v4881 = vunpack.c.h.b16 %v4523
    %v4882 = vunpack.c.l.b16 %v4524
    %v4883 = vunpack.c.h.b16 %v4524
    %v4884 = vunpack.c.l.b16 %v4525
    %v4885 = vunpack.c.h.b16 %v4525
    %v4886 = vunpack.c.l.b16 %v4526
    %v4887 = vunpack.c.h.b16 %v4526
    %v4888 = vunpack.c.l.b16 %v4527
    %v4889 = vunpack.c.h.b16 %v4527
    %v4890 = vunpack.c.l.b16 %v4528
    %v4891 = vunpack.c.h.b16 %v4528
    %v4892 = vunpack.c.l.b16 %v4529
    %v4893 = vunpack.c.h.b16 %v4529
    %v4894 = vunpack.c.l.b16 %v4530
    %v4895 = vunpack.c.h.b16 %v4530
    %v4896 = vunpack.c.l.b16 %v4531
    %v4897 = vunpack.c.h.b16 %v4531
    %v4898 = vunpack.c.l.b16 %v4532
    %v4899 = vunpack.c.h.b16 %v4532
    %v4900 = vunpack.c.l.b16 %v4533
    %v4901 = vunpack.c.h.b16 %v4533
    %v4902 = vunpack.c.l.b16 %v4534
    %v4903 = vunpack.c.h.b16 %v4534
    %v4904 = vunpack.c.l.b16 %v4535
    %v4905 = vunpack.c.h.b16 %v4535
    %v4906 = vunpack.c.l.b16 %v4536
    %v4907 = vunpack.c.h.b16 %v4536
    %v4908 = vunpack.c.l.b16 %v4537
    %v4909 = vunpack.c.h.b16 %v4537
    %v4910 = vunpack.c.l.b16 %v4538
    %v4911 = vunpack.c.h.b16 %v4538
    %v4912 = vunpack.c.l.b16 %v4539
    %v4913 = vunpack.c.h.b16 %v4539
    %v4914 = vunpack.c.l.b16 %v4540
    %v4915 = vunpack.c.h.b16 %v4540
    %v4916 = vunpack.c.l.b16 %v4541
    %v4917 = vunpack.c.h.b16 %v4541
    %v4918 = vunpack.c.l.b16 %v4542
    %v4919 = vunpack.c.h.b16 %v4542
    %v4920 = vunpack.c.l.b16 %v4543
    %v4921 = vunpack.c.h.b16 %v4543
    %v4922 = vunpack.c.l.b16 %v4544
    %v4923 = vunpack.c.h.b16 %v4544
    %v4924 = vunpack.c.l.b16 %v4545
    %v4925 = vunpack.c.h.b16 %v4545
    %v4926 = vunpack.c.l.b16 %v4546
    %v4927 = vunpack.c.h.b16 %v4546
    %v4928 = vunpack.c.l.b16 %v4547
    %v4929 = vunpack.c.h.b16 %v4547
    %v4930 = vunpack.c.l.b16 %v4548
    %v4931 = vunpack.c.h.b16 %v4548
    %v4932 = vunpack.c.l.b16 %v4549
    %v4933 = vunpack.c.h.b16 %v4549
    %v4934 = vpack.c.b16 %v4682, %v4678
    %v4935 = vpack.c.b16 %v4683, %v4679
    %v4936 = vpack.c.b16 %v4684, %v4680
    %v4937 = vpack.c.b16 %v4685, %v4681
    %v4938 = vpack.c.b16 %v4690, %v4686
    %v4939 = vpack.c.b16 %v4691, %v4687
    %v4940 = vpack.c.b16 %v4692, %v4688
    %v4941 = vpack.c.b16 %v4693, %v4689
    %v4942 = vpack.c.b16 %v4698, %v4694
    %v4943 = vpack.c.b16 %v4699, %v4695
    %v4944 = vpack.c.b16 %v4700, %v4696
    %v4945 = vpack.c.b16 %v4701, %v4697
    %v4946 = vpack.c.b16 %v4706, %v4702
    %v4947 = vpack.c.b16 %v4707, %v4703
    %v4948 = vpack.c.b16 %v4708, %v4704
    %v4949 = vpack.c.b16 %v4709, %v4705
    %v4950 = vpack.c.b16 %v4714, %v4710
    %v4951 = vpack.c.b16 %v4715, %v4711
    %v4952 = vpack.c.b16 %v4716, %v4712
    %v4953 = vpack.c.b16 %v4717, %v4713
    %v4954 = vpack.c.b16 %v4722, %v4718
    %v4955 = vpack.c.b16 %v4723, %v4719
    %v4956 = vpack.c.b16 %v4724, %v4720
    %v4957 = vpack.c.b16 %v4725, %v4721
    %v4958 = vpack.c.b16 %v4730, %v4726
    %v4959 = vpack.c.b16 %v4731, %v4727
    %v4960 = vpack.c.b16 %v4732, %v4728
    %v4961 = vpack.c.b16 %v4733, %v4729
    %v4962 = vpack.c.b16 %v4738, %v4734
    %v4963 = vpack.c.b16 %v4739, %v4735
    %v4964 = vpack.c.b16 %v4740, %v4736
    %v4965 = vpack.c.b16 %v4741, %v4737
    %v4966 = vpack.c.b16 %v4746, %v4742
    %v4967 = vpack.c.b16 %v4747, %v4743
    %v4968 = vpack.c.b16 %v4748, %v4744
    %v4969 = vpack.c.b16 %v4749, %v4745
    %v4970 = vpack.c.b16 %v4754, %v4750
    %v4971 = vpack.c.b16 %v4755, %v4751
    %v4972 = vpack.c.b16 %v4756, %v4752
    %v4973 = vpack.c.b16 %v4757, %v4753
    %v4974 = vpack.c.b16 %v4762, %v4758
    %v4975 = vpack.c.b16 %v4763, %v4759
    %v4976 = vpack.c.b16 %v4764, %v4760
    %v4977 = vpack.c.b16 %v4765, %v4761
    %v4978 = vpack.c.b16 %v4770, %v4766
    %v4979 = vpack.c.b16 %v4771, %v4767
    %v4980 = vpack.c.b16 %v4772, %v4768
    %v4981 = vpack.c.b16 %v4773, %v4769
    %v4982 = vpack.c.b16 %v4778, %v4774
    %v4983 = vpack.c.b16 %v4779, %v4775
    %v4984 = vpack.c.b16 %v4780, %v4776
    %v4985 = vpack.c.b16 %v4781, %v4777
    %v4986 = vpack.c.b16 %v4786, %v4782
    %v4987 = vpack.c.b16 %v4787, %v4783
    %v4988 = vpack.c.b16 %v4788, %v4784
    %v4989 = vpack.c.b16 %v4789, %v4785
    %v4990 = vpack.c.b16 %v4794, %v4790
    %v4991 = vpack.c.b16 %v4795, %v4791
    %v4992 = vpack.c.b16 %v4796, %v4792
    %v4993 = vpack.c.b16 %v4797, %v4793
    %v4994 = vpack.c.b16 %v4802, %v4798
    %v4995 = vpack.c.b16 %v4803, %v4799
    %v4996 = vpack.c.b16 %v4804, %v4800
    %v4997 = vpack.c.b16 %v4805, %v4801
    %v4998 = vpack.c.b16 %v4810, %v4806
    %v4999 = vpack.c.b16 %v4811, %v4807
    %v5000 = vpack.c.b16 %v4812, %v4808
    %v5001 = vpack.c.b16 %v4813, %v4809
    %v5002 = vpack.c.b16 %v4818, %v4814
    %v5003 = vpack.c.b16 %v4819, %v4815
    %v5004 = vpack.c.b16 %v4820, %v4816
    %v5005 = vpack.c.b16 %v4821, %v4817
    %v5006 = vpack.c.b16 %v4826, %v4822
    %v5007 = vpack.c.b16 %v4827, %v4823
    %v5008 = vpack.c.b16 %v4828, %v4824
    %v5009 = vpack.c.b16 %v4829, %v4825
    %v5010 = vpack.c.b16 %v4834, %v4830
    %v5011 = vpack.c.b16 %v4835, %v4831
    %v5012 = vpack.c.b16 %v4836, %v4832
    %v5013 = vpack.c.b16 %v4837, %v4833
    %v5014 = vpack.c.b16 %v4842, %v4838
    %v5015 = vpack.c.b16 %v4843, %v4839
    %v5016 = vpack.c.b16 %v4844, %v4840
    %v5017 = vpack.c.b16 %v4845, %v4841
    %v5018 = vpack.c.b16 %v4850, %v4846
    %v5019 = vpack.c.b16 %v4851, %v4847
    %v5020 = vpack.c.b16 %v4852, %v4848
    %v5021 = vpack.c.b16 %v4853, %v4849
    %v5022 = vpack.c.b16 %v4858, %v4854
    %v5023 = vpack.c.b16 %v4859, %v4855
    %v5024 = vpack.c.b16 %v4860, %v4856
    %v5025 = vpack.c.b16 %v4861, %v4857
    %v5026 = vpack.c.b16 %v4866, %v4862
    %v5027 = vpack.c.b16 %v4867, %v4863
    %v5028 = vpack.c.b16 %v4868, %v4864
    %v5029 = vpack.c.b16 %v4869, %v4865
    %v5030 = vpack.c.b16 %v4874, %v4870
    %v5031 = vpack.c.b16 %v4875, %v4871
    %v5032 = vpack.c.b16 %v4876, %v4872
    %v5033 = vpack.c.b16 %v4877, %v4873
    %v5034 = vpack.c.b16 %v4882, %v4878
    %v5035 = vpack.c.b16 %v4883, %v4879
    %v5036 = vpack.c.b16 %v4884, %v4880
    %v5037 = vpack.c.b16 %v4885, %v4881
    %v5038 = vpack.c.b16 %v4890, %v4886
    %v5039 = vpack.c.b16 %v4891, %v4887
    %v5040 = vpack.c.b16 %v4892, %v4888
    %v5041 = vpack.c.b16 %v4893, %v4889
    %v5042 = vpack.c.b16 %v4898, %v4894
    %v5043 = vpack.c.b16 %v4899, %v4895
    %v5044 = vpack.c.b16 %v4900, %v4896
    %v5045 = vpack.c.b16 %v4901, %v4897
    %v5046 = vpack.c.b16 %v4906, %v4902
    %v5047 = vpack.c.b16 %v4907, %v4903
    %v5048 = vpack.c.b16 %v4908, %v4904
    %v5049 = vpack.c.b16 %v4909, %v4905
    %v5050 = vpack.c.b16 %v4914, %v4910
    %v5051 = vpack.c.b16 %v4915, %v4911
    %v5052 = vpack.c.b16 %v4916, %v4912
    %v5053 = vpack.c.b16 %v4917, %v4913
    %v5054 = vpack.c.b16 %v4922, %v4918
    %v5055 = vpack.c.b16 %v4923, %v4919
    %v5056 = vpack.c.b16 %v4924, %v4920
    %v5057 = vpack.c.b16 %v4925, %v4921
    %v5058 = vpack.c.b16 %v4930, %v4926
    %v5059 = vpack.c.b16 %v4931, %v4927
    %v5060 = vpack.c.b16 %v4932, %v4928
    %v5061 = vpack.c.b16 %v4933, %v4929
    %5190 = vmatprep.subr.bf16.mxu0 %v4963
    %5191 = vmatpush1.bf16.msra.mxu0 %v4962
    %5192 = vmatprep.subr.bf16.mxu0 %v4959
    %5193 = vmatpush1.bf16.msra.mxu0 %v4958
    %5194 = vmatprep.subr.bf16.mxu0 %v4955
    %5195 = vmatpush1.bf16.msra.mxu0 %v4954
    %5196 = vmatprep.subr.bf16.mxu0 %v4951
    %5197 = vmatpush1.bf16.msra.mxu0 %v4950
    %5198 = vmatprep.subr.bf16.mxu0 %v4947
    %5199 = vmatpush1.bf16.msra.mxu0 %v4946
    %5200 = vmatprep.subr.bf16.mxu0 %v4943
    %5201 = vmatpush1.bf16.msra.mxu0 %v4942
    %5202 = vmatprep.subr.bf16.mxu0 %v4939
    %5203 = vmatpush1.bf16.msra.mxu0 %v4938
    %5204 = vmatprep.subr.bf16.mxu0 %v4935
    %5205 = vmatpush1.bf16.msra.mxu0 %v4934
    %5206 = vmatprep.subr.bf16.mxu0 %v4995
    %5207 = vmatpush2.bf16.msra.mxu0 %v4994
    %5208 = vmatprep.subr.bf16.mxu0 %v4991
    %5209 = vmatpush2.bf16.msra.mxu0 %v4990
    %5210 = vmatprep.subr.bf16.mxu0 %v4987
    %5211 = vmatpush2.bf16.msra.mxu0 %v4986
    %5212 = vmatprep.subr.bf16.mxu0 %v4983
    %5213 = vmatpush2.bf16.msra.mxu0 %v4982
    %5214 = vmatprep.subr.bf16.mxu0 %v4979
    %5215 = vmatpush2.bf16.msra.mxu0 %v4978
    %5216 = vmatprep.subr.bf16.mxu0 %v4975
    %5217 = vmatpush2.bf16.msra.mxu0 %v4974
    %5218 = vmatprep.subr.bf16.mxu0 %v4971
    %5219 = vmatpush2.bf16.msra.mxu0 %v4970
    %5220 = vmatprep.subr.bf16.mxu0 %v4967
    %5221 = vmatpush2.bf16.msra.mxu0 %v4966
    %5222 = vmatprep.mubr.bf16.mxu0 %v4403
    %5223 = vmatmul.mubr.bf16.gmra.mxu0 %v4402
    %v5224 = vpop.f32.mrf.mxu0
    %v5225 = vadd.f32 0.0, %v5224
    %v5226 = vpop.f32.mrf.mxu0
    %v5227 = vadd.f32 0.0, %v5226
    %v5228 = vpop.f32.mrf.mxu0
    %v5229 = vadd.f32 0.0, %v5228
    %v5230 = vpop.f32.mrf.mxu0
    %v5231 = vadd.f32 0.0, %v5230
    %5232 = vmatprep.mubr.bf16.mxu0 %v4407
    %5233 = vmatmul.mubr.bf16.gmra.mxu0 %v4406
    %v5234 = vpop.f32.mrf.mxu0
    %v5235 = vadd.f32 0.0, %v5234
    %v5236 = vpop.f32.mrf.mxu0
    %v5237 = vadd.f32 0.0, %v5236
    %v5238 = vpop.f32.mrf.mxu0
    %v5239 = vadd.f32 0.0, %v5238
    %v5240 = vpop.f32.mrf.mxu0
    %v5241 = vadd.f32 0.0, %v5240
    %5242 = vmatprep.mubr.bf16.mxu0 %v4411
    %5243 = vmatmul.mubr.bf16.gmra.mxu0 %v4410
    %v5244 = vpop.f32.mrf.mxu0
    %v5245 = vadd.f32 0.0, %v5244
    %v5246 = vpop.f32.mrf.mxu0
    %v5247 = vadd.f32 0.0, %v5246
    %v5248 = vpop.f32.mrf.mxu0
    %v5249 = vadd.f32 0.0, %v5248
    %v5250 = vpop.f32.mrf.mxu0
    %v5251 = vadd.f32 0.0, %v5250
    %5252 = vmatprep.mubr.bf16.mxu0 %v4415
    %5253 = vmatmul.mubr.bf16.gmra.mxu0 %v4414
    %v5254 = vpop.f32.mrf.mxu0
    %v5255 = vadd.f32 0.0, %v5254
    %v5256 = vpop.f32.mrf.mxu0
    %v5257 = vadd.f32 0.0, %v5256
    %v5258 = vpop.f32.mrf.mxu0
    %v5259 = vadd.f32 0.0, %v5258
    %v5260 = vpop.f32.mrf.mxu0
    %v5261 = vadd.f32 0.0, %v5260
    %5262 = vmatprep.mubr.bf16.mxu0 %v4419
    %5263 = vmatmul.mubr.bf16.gmra.mxu0 %v4418
    %v5264 = vpop.f32.mrf.mxu0
    %v5265 = vadd.f32 0.0, %v5264
    %v5266 = vpop.f32.mrf.mxu0
    %v5267 = vadd.f32 0.0, %v5266
    %v5268 = vpop.f32.mrf.mxu0
    %v5269 = vpop.f32.mrf.mxu0
    %5270 = vdwg.mxu0
    %5271 = vmatprep.subr.bf16.mxu0 %v5027
    %5272 = vmatpush1.bf16.msra.mxu0 %v5026
    %5273 = vmatprep.subr.bf16.mxu0 %v5023
    %5274 = vmatpush1.bf16.msra.mxu0 %v5022
    %5275 = vmatprep.subr.bf16.mxu0 %v5019
    %5276 = vmatpush1.bf16.msra.mxu0 %v5018
    %5277 = vmatprep.subr.bf16.mxu0 %v5015
    %5278 = vmatpush1.bf16.msra.mxu0 %v5014
    %5279 = vmatprep.subr.bf16.mxu0 %v5011
    %5280 = vmatpush1.bf16.msra.mxu0 %v5010
    %5281 = vmatprep.subr.bf16.mxu0 %v5007
    %5282 = vmatpush1.bf16.msra.mxu0 %v5006
    %5283 = vmatprep.subr.bf16.mxu0 %v5003
    %5284 = vmatpush1.bf16.msra.mxu0 %v5002
    %5285 = vmatprep.subr.bf16.mxu0 %v4999
    %5286 = vmatpush1.bf16.msra.mxu0 %v4998
    %5287 = vmatprep.subr.bf16.mxu0 %v5059
    %5288 = vmatpush2.bf16.msra.mxu0 %v5058
    %5289 = vmatprep.subr.bf16.mxu0 %v5055
    %5290 = vmatpush2.bf16.msra.mxu0 %v5054
    %5291 = vmatprep.subr.bf16.mxu0 %v5051
    %5292 = vmatpush2.bf16.msra.mxu0 %v5050
    %5293 = vmatprep.subr.bf16.mxu0 %v5047
    %5294 = vmatpush2.bf16.msra.mxu0 %v5046
    %5295 = vmatprep.subr.bf16.mxu0 %v5043
    %5296 = vmatpush2.bf16.msra.mxu0 %v5042
    %5297 = vmatprep.subr.bf16.mxu0 %v5039
    %5298 = vmatpush2.bf16.msra.mxu0 %v5038
    %5299 = vmatprep.subr.bf16.mxu0 %v5035
    %5300 = vmatpush2.bf16.msra.mxu0 %v5034
    %5301 = vmatprep.subr.bf16.mxu0 %v5031
    %5302 = vmatpush2.bf16.msra.mxu0 %v5030
    %5303 = vmatprep.mubr.bf16.mxu0 %v4405
    %5304 = vmatmul.mubr.bf16.gmra.mxu0 %v4404
    %v5305 = vpop.f32.mrf.mxu0
    %v5306 = vadd.f32 %v5225, %v5305
    %v5307 = vpop.f32.mrf.mxu0
    %v5308 = vadd.f32 %v5227, %v5307
    %v5309 = vpop.f32.mrf.mxu0
    %v5310 = vadd.f32 %v5229, %v5309
    %v5311 = vpop.f32.mrf.mxu0
    %v5312 = vadd.f32 %v5231, %v5311
    %5313 = vmatprep.mubr.bf16.mxu0 %v4409
    %5314 = vmatmul.mubr.bf16.gmra.mxu0 %v4408
    %v5315 = vpop.f32.mrf.mxu0
    %v5316 = vadd.f32 %v5235, %v5315
    %v5317 = vpop.f32.mrf.mxu0
    %v5318 = vadd.f32 %v5237, %v5317
    %v5319 = vpop.f32.mrf.mxu0
    %v5320 = vadd.f32 %v5239, %v5319
    %v5321 = vpop.f32.mrf.mxu0
    %v5322 = vadd.f32 %v5241, %v5321
    %5323 = vmatprep.mubr.bf16.mxu0 %v4413
    %5324 = vmatmul.mubr.bf16.gmra.mxu0 %v4412
    %v5325 = vpop.f32.mrf.mxu0
    %v5326 = vadd.f32 %v5245, %v5325
    %v5327 = vpop.f32.mrf.mxu0
    %v5328 = vadd.f32 %v5247, %v5327
    %v5329 = vpop.f32.mrf.mxu0
    %v5330 = vadd.f32 %v5249, %v5329
    %v5331 = vpop.f32.mrf.mxu0
    %v5332 = vadd.f32 %v5251, %v5331
    %5333 = vmatprep.mubr.bf16.mxu0 %v4417
    %5334 = vmatmul.mubr.bf16.gmra.mxu0 %v4416
    %v5335 = vpop.f32.mrf.mxu0
    %v5336 = vadd.f32 %v5255, %v5335
    %v5337 = vpop.f32.mrf.mxu0
    %v5338 = vadd.f32 %v5257, %v5337
    %v5339 = vpop.f32.mrf.mxu0
    %v5340 = vadd.f32 %v5259, %v5339
    %v5341 = vpop.f32.mrf.mxu0
    %v5342 = vadd.f32 %v5261, %v5341
    %5343 = vmatprep.mubr.bf16.mxu0 %v4421
    %5344 = vmatmul.mubr.bf16.gmra.mxu0 %v4420
    %v5345 = vpop.f32.mrf.mxu0
    %v5346 = vadd.f32 %v5265, %v5345
    %v5347 = vpop.f32.mrf.mxu0
    %v5348 = vadd.f32 %v5267, %v5347
    %v5349 = vpop.f32.mrf.mxu0
    %v5350 = vpop.f32.mrf.mxu0
    %5351 = vdwg.mxu0
    %5352 = vmatprep.subr.bf16.mxu0 %v4965
    %5353 = vmatpush1.bf16.msra.mxu0 %v4964
    %5354 = vmatprep.subr.bf16.mxu0 %v4961
    %5355 = vmatpush1.bf16.msra.mxu0 %v4960
    %5356 = vmatprep.subr.bf16.mxu0 %v4957
    %5357 = vmatpush1.bf16.msra.mxu0 %v4956
    %5358 = vmatprep.subr.bf16.mxu0 %v4953
    %5359 = vmatpush1.bf16.msra.mxu0 %v4952
    %5360 = vmatprep.subr.bf16.mxu0 %v4949
    %5361 = vmatpush1.bf16.msra.mxu0 %v4948
    %5362 = vmatprep.subr.bf16.mxu0 %v4945
    %5363 = vmatpush1.bf16.msra.mxu0 %v4944
    %5364 = vmatprep.subr.bf16.mxu0 %v4941
    %5365 = vmatpush1.bf16.msra.mxu0 %v4940
    %5366 = vmatprep.subr.bf16.mxu0 %v4937
    %5367 = vmatpush1.bf16.msra.mxu0 %v4936
    %5368 = vmatprep.subr.bf16.mxu0 %v4997
    %5369 = vmatpush2.bf16.msra.mxu0 %v4996
    %5370 = vmatprep.subr.bf16.mxu0 %v4993
    %5371 = vmatpush2.bf16.msra.mxu0 %v4992
    %5372 = vmatprep.subr.bf16.mxu0 %v4989
    %5373 = vmatpush2.bf16.msra.mxu0 %v4988
    %5374 = vmatprep.subr.bf16.mxu0 %v4985
    %5375 = vmatpush2.bf16.msra.mxu0 %v4984
    %5376 = vmatprep.subr.bf16.mxu0 %v4981
    %5377 = vmatpush2.bf16.msra.mxu0 %v4980
    %5378 = vmatprep.subr.bf16.mxu0 %v4977
    %5379 = vmatpush2.bf16.msra.mxu0 %v4976
    %5380 = vmatprep.subr.bf16.mxu0 %v4973
    %5381 = vmatpush2.bf16.msra.mxu0 %v4972
    %5382 = vmatprep.subr.bf16.mxu0 %v4969
    %5383 = vmatpush2.bf16.msra.mxu0 %v4968
    %5384 = vmatprep.mubr.bf16.mxu0 %v4403
    %5385 = vmatmul.mubr.bf16.gmra.mxu0 %v4402
    %v5386 = vpop.f32.mrf.mxu0
    %v5387 = vadd.f32 0.0, %v5386
    %v5388 = vpop.f32.mrf.mxu0
    %v5389 = vadd.f32 0.0, %v5388
    %v5390 = vpop.f32.mrf.mxu0
    %v5391 = vadd.f32 0.0, %v5390
    %v5392 = vpop.f32.mrf.mxu0
    %v5393 = vadd.f32 0.0, %v5392
    %5394 = vmatprep.mubr.bf16.mxu0 %v4407
    %5395 = vmatmul.mubr.bf16.gmra.mxu0 %v4406
    %v5396 = vpop.f32.mrf.mxu0
    %v5397 = vadd.f32 0.0, %v5396
    %v5398 = vpop.f32.mrf.mxu0
    %v5399 = vadd.f32 0.0, %v5398
    %v5400 = vpop.f32.mrf.mxu0
    %v5401 = vadd.f32 0.0, %v5400
    %v5402 = vpop.f32.mrf.mxu0
    %v5403 = vadd.f32 0.0, %v5402
    %5404 = vmatprep.mubr.bf16.mxu0 %v4411
    %5405 = vmatmul.mubr.bf16.gmra.mxu0 %v4410
    %v5406 = vpop.f32.mrf.mxu0
    %v5407 = vadd.f32 0.0, %v5406
    %v5408 = vpop.f32.mrf.mxu0
    %v5409 = vadd.f32 0.0, %v5408
    %v5410 = vpop.f32.mrf.mxu0
    %v5411 = vadd.f32 0.0, %v5410
    %v5412 = vpop.f32.mrf.mxu0
    %v5413 = vadd.f32 0.0, %v5412
    %5414 = vmatprep.mubr.bf16.mxu0 %v4415
    %5415 = vmatmul.mubr.bf16.gmra.mxu0 %v4414
    %v5416 = vpop.f32.mrf.mxu0
    %v5417 = vadd.f32 0.0, %v5416
    %v5418 = vpop.f32.mrf.mxu0
    %v5419 = vadd.f32 0.0, %v5418
    %v5420 = vpop.f32.mrf.mxu0
    %v5421 = vadd.f32 0.0, %v5420
    %v5422 = vpop.f32.mrf.mxu0
    %v5423 = vadd.f32 0.0, %v5422
    %5424 = vmatprep.mubr.bf16.mxu0 %v4419
    %5425 = vmatmul.mubr.bf16.gmra.mxu0 %v4418
    %v5426 = vpop.f32.mrf.mxu0
    %v5427 = vadd.f32 0.0, %v5426
    %v5428 = vpop.f32.mrf.mxu0
    %v5429 = vadd.f32 0.0, %v5428
    %v5430 = vpop.f32.mrf.mxu0
    %v5431 = vpop.f32.mrf.mxu0
    %5432 = vdwg.mxu0
    %5433 = vmatprep.subr.bf16.mxu0 %v5029
    %5434 = vmatpush1.bf16.msra.mxu0 %v5028
    %5435 = vmatprep.subr.bf16.mxu0 %v5025
    %5436 = vmatpush1.bf16.msra.mxu0 %v5024
    %5437 = vmatprep.subr.bf16.mxu0 %v5021
    %5438 = vmatpush1.bf16.msra.mxu0 %v5020
    %5439 = vmatprep.subr.bf16.mxu0 %v5017
    %5440 = vmatpush1.bf16.msra.mxu0 %v5016
    %5441 = vmatprep.subr.bf16.mxu0 %v5013
    %5442 = vmatpush1.bf16.msra.mxu0 %v5012
    %5443 = vmatprep.subr.bf16.mxu0 %v5009
    %5444 = vmatpush1.bf16.msra.mxu0 %v5008
    %5445 = vmatprep.subr.bf16.mxu0 %v5005
    %5446 = vmatpush1.bf16.msra.mxu0 %v5004
    %5447 = vmatprep.subr.bf16.mxu0 %v5001
    %5448 = vmatpush1.bf16.msra.mxu0 %v5000
    %5449 = vmatprep.subr.bf16.mxu0 %v5061
    %5450 = vmatpush2.bf16.msra.mxu0 %v5060
    %5451 = vmatprep.subr.bf16.mxu0 %v5057
    %5452 = vmatpush2.bf16.msra.mxu0 %v5056
    %5453 = vmatprep.subr.bf16.mxu0 %v5053
    %5454 = vmatpush2.bf16.msra.mxu0 %v5052
    %5455 = vmatprep.subr.bf16.mxu0 %v5049
    %5456 = vmatpush2.bf16.msra.mxu0 %v5048
    %5457 = vmatprep.subr.bf16.mxu0 %v5045
    %5458 = vmatpush2.bf16.msra.mxu0 %v5044
    %5459 = vmatprep.subr.bf16.mxu0 %v5041
    %5460 = vmatpush2.bf16.msra.mxu0 %v5040
    %5461 = vmatprep.subr.bf16.mxu0 %v5037
    %5462 = vmatpush2.bf16.msra.mxu0 %v5036
    %5463 = vmatprep.subr.bf16.mxu0 %v5033
    %5464 = vmatpush2.bf16.msra.mxu0 %v5032
    %5465 = vmatprep.mubr.bf16.mxu0 %v4405
    %5466 = vmatmul.mubr.bf16.gmra.mxu0 %v4404
    %v5467 = vpop.f32.mrf.mxu0
    %v5468 = vadd.f32 %v5387, %v5467
    %v5469 = vpop.f32.mrf.mxu0
    %v5470 = vadd.f32 %v5389, %v5469
    %v5471 = vpop.f32.mrf.mxu0
    %v5472 = vadd.f32 %v5391, %v5471
    %v5473 = vpop.f32.mrf.mxu0
    %v5474 = vadd.f32 %v5393, %v5473
    %5475 = vmatprep.mubr.bf16.mxu0 %v4409
    %5476 = vmatmul.mubr.bf16.gmra.mxu0 %v4408
    %v5477 = vpop.f32.mrf.mxu0
    %v5478 = vadd.f32 %v5397, %v5477
    %v5479 = vpop.f32.mrf.mxu0
    %v5480 = vadd.f32 %v5399, %v5479
    %v5481 = vpop.f32.mrf.mxu0
    %v5482 = vadd.f32 %v5401, %v5481
    %v5483 = vpop.f32.mrf.mxu0
    %v5484 = vadd.f32 %v5403, %v5483
    %5485 = vmatprep.mubr.bf16.mxu0 %v4413
    %5486 = vmatmul.mubr.bf16.gmra.mxu0 %v4412
    %v5487 = vpop.f32.mrf.mxu0
    %v5488 = vadd.f32 %v5407, %v5487
    %v5489 = vpop.f32.mrf.mxu0
    %v5490 = vadd.f32 %v5409, %v5489
    %v5491 = vpop.f32.mrf.mxu0
    %v5492 = vadd.f32 %v5411, %v5491
    %v5493 = vpop.f32.mrf.mxu0
    %v5494 = vadd.f32 %v5413, %v5493
    %5495 = vmatprep.mubr.bf16.mxu0 %v4417
    %5496 = vmatmul.mubr.bf16.gmra.mxu0 %v4416
    %v5497 = vpop.f32.mrf.mxu0
    %v5498 = vadd.f32 %v5417, %v5497
    %v5499 = vpop.f32.mrf.mxu0
    %v5500 = vadd.f32 %v5419, %v5499
    %v5501 = vpop.f32.mrf.mxu0
    %v5502 = vadd.f32 %v5421, %v5501
    %v5503 = vpop.f32.mrf.mxu0
    %v5504 = vadd.f32 %v5423, %v5503
    %5505 = vmatprep.mubr.bf16.mxu0 %v4421
    %5506 = vmatmul.mubr.bf16.gmra.mxu0 %v4420
    %v5507 = vpop.f32.mrf.mxu0
    %v5508 = vadd.f32 %v5427, %v5507
    %v5509 = vpop.f32.mrf.mxu0
    %v5510 = vadd.f32 %v5429, %v5509
    %v5511 = vpop.f32.mrf.mxu0
    %v5512 = vpop.f32.mrf.mxu0
    %5513 = vdwg.mxu0
    %v5514 = vadd.f32 %v5306, %v5310
    %v5515 = vadd.f32 %v5514, %v5316
    %v5516 = vadd.f32 %v5515, %v5320
    %v5517 = vadd.f32 %v5516, %v5326
    %v5518 = vadd.f32 %v5517, %v5330
    %v5519 = vadd.f32 %v5518, %v5336
    %v5520 = vadd.f32 %v5519, %v5340
    %v5521 = vadd.f32 %v5520, %v5346
    %v5522 = vrot.slane %v5521, 4
    %v5523 = vadd.f32 %v5521, %v5522
    %v5524 = vrot.slane %v5523, 2
    %v5525 = vadd.f32 %v5523, %v5524
    %v5526 = vrot.slane %v5525, 1
    %v5527 = vadd.f32 %v5525, %v5526
    %v5528 = vadd.f32 %v5308, %v5312
    %v5529 = vadd.f32 %v5528, %v5318
    %v5530 = vadd.f32 %v5529, %v5322
    %v5531 = vadd.f32 %v5530, %v5328
    %v5532 = vadd.f32 %v5531, %v5332
    %v5533 = vadd.f32 %v5532, %v5338
    %v5534 = vadd.f32 %v5533, %v5342
    %v5535 = vadd.f32 %v5534, %v5348
    %v5536 = vrot.slane %v5535, 4
    %v5537 = vadd.f32 %v5535, %v5536
    %v5538 = vrot.slane %v5537, 2
    %v5539 = vadd.f32 %v5537, %v5538
    %v5540 = vrot.slane %v5539, 1
    %v5541 = vadd.f32 %v5539, %v5540
    %v5542 = vadd.f32 %v5468, %v5472
    %v5543 = vadd.f32 %v5542, %v5478
    %v5544 = vadd.f32 %v5543, %v5482
    %v5545 = vadd.f32 %v5544, %v5488
    %v5546 = vadd.f32 %v5545, %v5492
    %v5547 = vadd.f32 %v5546, %v5498
    %v5548 = vadd.f32 %v5547, %v5502
    %v5549 = vadd.f32 %v5548, %v5508
    %v5550 = vrot.slane %v5549, 4
    %v5551 = vadd.f32 %v5549, %v5550
    %v5552 = vrot.slane %v5551, 2
    %v5553 = vadd.f32 %v5551, %v5552
    %v5554 = vrot.slane %v5553, 1
    %v5555 = vadd.f32 %v5553, %v5554
    %v5556 = vadd.f32 %v5470, %v5474
    %v5557 = vadd.f32 %v5556, %v5480
    %v5558 = vadd.f32 %v5557, %v5484
    %v5559 = vadd.f32 %v5558, %v5490
    %v5560 = vadd.f32 %v5559, %v5494
    %v5561 = vadd.f32 %v5560, %v5500
    %v5562 = vadd.f32 %v5561, %v5504
    %v5563 = vadd.f32 %v5562, %v5510
    %v5564 = vrot.slane %v5563, 4
    %v5565 = vadd.f32 %v5563, %v5564
    %v5566 = vrot.slane %v5565, 2
    %v5567 = vadd.f32 %v5565, %v5566
    %v5568 = vrot.slane %v5567, 1
    %v5569 = vadd.f32 %v5567, %v5568
    %v5570 = vmul.f32 %v5527, %v4002
    %v5571 = vmul.f32 %v5541, %v4002
    %v5572 = vmul.f32 %v5555, %v4002
    %v5573 = vmul.f32 %v5569, %v4002
    %v5574 = vmul.f32 %v5306, %v5306
    %v5575 = vmul.f32 %v5308, %v5308
    %v5576 = vmul.f32 %v5468, %v5468
    %v5577 = vmul.f32 %v5470, %v5470
    %v5578 = vmul.f32 %v5310, %v5310
    %v5579 = vmul.f32 %v5312, %v5312
    %v5580 = vmul.f32 %v5472, %v5472
    %v5581 = vmul.f32 %v5474, %v5474
    %v5582 = vmul.f32 %v5316, %v5316
    %v5583 = vmul.f32 %v5318, %v5318
    %v5584 = vmul.f32 %v5478, %v5478
    %v5585 = vmul.f32 %v5480, %v5480
    %v5586 = vmul.f32 %v5320, %v5320
    %v5587 = vmul.f32 %v5322, %v5322
    %v5588 = vmul.f32 %v5482, %v5482
    %v5589 = vmul.f32 %v5484, %v5484
    %v5590 = vmul.f32 %v5326, %v5326
    %v5591 = vmul.f32 %v5328, %v5328
    %v5592 = vmul.f32 %v5488, %v5488
    %v5593 = vmul.f32 %v5490, %v5490
    %v5594 = vmul.f32 %v5330, %v5330
    %v5595 = vmul.f32 %v5332, %v5332
    %v5596 = vmul.f32 %v5492, %v5492
    %v5597 = vmul.f32 %v5494, %v5494
    %v5598 = vmul.f32 %v5336, %v5336
    %v5599 = vmul.f32 %v5338, %v5338
    %v5600 = vmul.f32 %v5498, %v5498
    %v5601 = vmul.f32 %v5500, %v5500
    %v5602 = vmul.f32 %v5340, %v5340
    %v5603 = vmul.f32 %v5342, %v5342
    %v5604 = vmul.f32 %v5502, %v5502
    %v5605 = vmul.f32 %v5504, %v5504
    %v5606 = vmul.f32 %v5346, %v5346
    %v5607 = vmul.f32 %v5348, %v5348
    %v5608 = vmul.f32 %v5508, %v5508
    %v5609 = vmul.f32 %v5510, %v5510
    %v5610 = vadd.f32 %v5574, %v5578
    %v5611 = vadd.f32 %v5610, %v5582
    %v5612 = vadd.f32 %v5611, %v5586
    %v5613 = vadd.f32 %v5612, %v5590
    %v5614 = vadd.f32 %v5613, %v5594
    %v5615 = vadd.f32 %v5614, %v5598
    %v5616 = vadd.f32 %v5615, %v5602
    %v5617 = vadd.f32 %v5616, %v5606
    %v5618 = vrot.slane %v5617, 4
    %v5619 = vadd.f32 %v5617, %v5618
    %v5620 = vrot.slane %v5619, 2
    %v5621 = vadd.f32 %v5619, %v5620
    %v5622 = vrot.slane %v5621, 1
    %v5623 = vadd.f32 %v5621, %v5622
    %v5624 = vadd.f32 %v5575, %v5579
    %v5625 = vadd.f32 %v5624, %v5583
    %v5626 = vadd.f32 %v5625, %v5587
    %v5627 = vadd.f32 %v5626, %v5591
    %v5628 = vadd.f32 %v5627, %v5595
    %v5629 = vadd.f32 %v5628, %v5599
    %v5630 = vadd.f32 %v5629, %v5603
    %v5631 = vadd.f32 %v5630, %v5607
    %v5632 = vrot.slane %v5631, 4
    %v5633 = vadd.f32 %v5631, %v5632
    %v5634 = vrot.slane %v5633, 2
    %v5635 = vadd.f32 %v5633, %v5634
    %v5636 = vrot.slane %v5635, 1
    %v5637 = vadd.f32 %v5635, %v5636
    %v5638 = vadd.f32 %v5576, %v5580
    %v5639 = vadd.f32 %v5638, %v5584
    %v5640 = vadd.f32 %v5639, %v5588
    %v5641 = vadd.f32 %v5640, %v5592
    %v5642 = vadd.f32 %v5641, %v5596
    %v5643 = vadd.f32 %v5642, %v5600
    %v5644 = vadd.f32 %v5643, %v5604
    %v5645 = vadd.f32 %v5644, %v5608
    %v5646 = vrot.slane %v5645, 4
    %v5647 = vadd.f32 %v5645, %v5646
    %v5648 = vrot.slane %v5647, 2
    %v5649 = vadd.f32 %v5647, %v5648
    %v5650 = vrot.slane %v5649, 1
    %v5651 = vadd.f32 %v5649, %v5650
    %v5652 = vadd.f32 %v5577, %v5581
    %v5653 = vadd.f32 %v5652, %v5585
    %v5654 = vadd.f32 %v5653, %v5589
    %v5655 = vadd.f32 %v5654, %v5593
    %v5656 = vadd.f32 %v5655, %v5597
    %v5657 = vadd.f32 %v5656, %v5601
    %v5658 = vadd.f32 %v5657, %v5605
    %v5659 = vadd.f32 %v5658, %v5609
    %v5660 = vrot.slane %v5659, 4
    %v5661 = vadd.f32 %v5659, %v5660
    %v5662 = vrot.slane %v5661, 2
    %v5663 = vadd.f32 %v5661, %v5662
    %v5664 = vrot.slane %v5663, 1
    %v5665 = vadd.f32 %v5663, %v5664
    %v5666 = vmul.f32 %v5623, %v4002
    %v5667 = vmul.f32 %v5637, %v4002
    %v5668 = vmul.f32 %v5651, %v4002
    %v5669 = vmul.f32 %v5665, %v4002
    %v5670 = vmul.f32 %v5570, %v5570
    %v5671 = vmul.f32 %v5571, %v5571
    %v5672 = vmul.f32 %v5572, %v5572
    %v5673 = vmul.f32 %v5573, %v5573
    %v5674 = vsub.f32 %v5666, %v5670
    %v5675 = vsub.f32 %v5667, %v5671
    %v5676 = vsub.f32 %v5668, %v5672
    %v5677 = vsub.f32 %v5669, %v5673
    %v5678 = vmax.f32 %v5674, 0.0
    %v5679 = vmax.f32 %v5675, 0.0
    %v5680 = vmax.f32 %v5676, 0.0
    %v5681 = vmax.f32 %v5677, 0.0
    %v5682 = vadd.f32 %v5678, 1e-05
    %v5683 = vadd.f32 %v5679, 1e-05
    %v5684 = vadd.f32 %v5680, 1e-05
    %v5685 = vadd.f32 %v5681, 1e-05
    %v5686 = vrsqrt.pop %v5682
    %v5687 = vrsqrt.pop %v5683
    %v5688 = vrsqrt.pop %v5684
    %v5689 = vrsqrt.pop %v5685
    %v5690 = vld [vmem:[%s15] sm:$0xf]
    %v5692 = vlaneseq
    %v5693 = vshrl.u32 %v5692, 7
    %v5694 = vsub.s32 0, %v5693
    %v5695 = vrot.slane %v5690, %v5694
    %v5696 = vlaneseq
    %v5697 = vshrl.u32 %v5696, 7
    %v5698 = vsub.s32 1, %v5697
    %v5699 = vrot.slane %v5690, %v5698
    %v5700 = vlaneseq
    %v5701 = vshrl.u32 %v5700, 7
    %v5702 = vsub.s32 2, %v5701
    %v5703 = vrot.slane %v5690, %v5702
    %v5704 = vlaneseq
    %v5705 = vshrl.u32 %v5704, 7
    %v5706 = vsub.s32 3, %v5705
    %v5707 = vrot.slane %v5690, %v5706
    %v5712 = vmul.f32 %v5686, %v5695
    %v5713 = vmul.f32 %v5687, %v5699
    %v5714 = vmul.f32 %v5688, %v5703
    %v5715 = vmul.f32 %v5689, %v5707
    %v5716 = vld [vmem:[%s16] sm:$0xf]
    %v5717 = vmul.f32 %v5570, %v5712
    %v5718 = vmul.f32 %v5571, %v5713
    %v5719 = vmul.f32 %v5572, %v5714
    %v5720 = vmul.f32 %v5573, %v5715
    %v5725 = vcombine.low %v5717, %v5718
    %v5726 = vcombine.low %v5719, %v5720
    %v5728 = vunpack.c.l.s4 1966171168
    %v5729 = vunpack.c.0.s8 %v5728
    %v5730 = vlaneseq
    %v5731 = vshrl.u32 %v5730, 7
    %v5732 = vsub.s32 %v5729, %v5731
    %v5733 = vrot.slane %v5725, %v5732
    %v5735 = vunpack.c.l.s4 1966171168
    %v5736 = vunpack.c.0.s8 %v5735
    %v5737 = vlaneseq
    %v5738 = vshrl.u32 %v5737, 7
    %v5739 = vsub.s32 %v5736, %v5738
    %v5740 = vrot.slane %v5726, %v5739
    %v5741 = vcombine.low %v5733, %v5740
    %v5743 = vunpack.c.l.s4 1966171168
    %v5744 = vunpack.c.0.s8 %v5743
    %v5745 = vlaneseq
    %v5746 = vshrl.u32 %v5745, 7
    %v5747 = vsub.s32 %v5744, %v5746
    %v5748 = vrot.slane %v5741, %v5747
    %v5750 = vsub.f32 %v5716, %v5748
    %v5751 = vlaneseq
    %v5752 = vshrl.u32 %v5751, 7
    %v5753 = vsub.s32 0, %v5752
    %v5754 = vrot.slane %v5712, %v5753
    %v5755 = vlaneseq
    %v5756 = vshrl.u32 %v5755, 7
    %v5757 = vsub.s32 0, %v5756
    %v5758 = vrot.slane %v5713, %v5757
    %v5759 = vlaneseq
    %v5760 = vshrl.u32 %v5759, 7
    %v5761 = vsub.s32 0, %v5760
    %v5762 = vrot.slane %v5714, %v5761
    %v5763 = vlaneseq
    %v5764 = vshrl.u32 %v5763, 7
    %v5765 = vsub.s32 0, %v5764
    %v5766 = vrot.slane %v5715, %v5765
    %v5767 = vmul.f32 %v5306, %v5754
    %v5768 = vmul.f32 %v5308, %v5758
    %v5769 = vmul.f32 %v5468, %v5762
    %v5770 = vmul.f32 %v5470, %v5766
    %v5771 = vmul.f32 %v5310, %v5754
    %v5772 = vmul.f32 %v5312, %v5758
    %v5773 = vmul.f32 %v5472, %v5762
    %v5774 = vmul.f32 %v5474, %v5766
    %v5775 = vmul.f32 %v5316, %v5754
    %v5776 = vmul.f32 %v5318, %v5758
    %v5777 = vmul.f32 %v5478, %v5762
    %v5778 = vmul.f32 %v5480, %v5766
    %v5779 = vmul.f32 %v5320, %v5754
    %v5780 = vmul.f32 %v5322, %v5758
    %v5781 = vmul.f32 %v5482, %v5762
    %v5782 = vmul.f32 %v5484, %v5766
    %v5783 = vmul.f32 %v5326, %v5754
    %v5784 = vmul.f32 %v5328, %v5758
    %v5785 = vmul.f32 %v5488, %v5762
    %v5786 = vmul.f32 %v5490, %v5766
    %v5787 = vmul.f32 %v5330, %v5754
    %v5788 = vmul.f32 %v5332, %v5758
    %v5789 = vmul.f32 %v5492, %v5762
    %v5790 = vmul.f32 %v5494, %v5766
    %v5791 = vmul.f32 %v5336, %v5754
    %v5792 = vmul.f32 %v5338, %v5758
    %v5793 = vmul.f32 %v5498, %v5762
    %v5794 = vmul.f32 %v5500, %v5766
    %v5795 = vmul.f32 %v5340, %v5754
    %v5796 = vmul.f32 %v5342, %v5758
    %v5797 = vmul.f32 %v5502, %v5762
    %v5798 = vmul.f32 %v5504, %v5766
    %v5799 = vmul.f32 %v5346, %v5754
    %v5800 = vmul.f32 %v5348, %v5758
    %v5801 = vmul.f32 %v5508, %v5762
    %v5802 = vmul.f32 %v5510, %v5766
    %v5804 = vlaneseq
    %v5805 = vshrl.u32 %v5804, 7
    %v5806 = vsub.s32 0, %v5805
    %v5807 = vrot.slane %v5750, %v5806
    %v5808 = vlaneseq
    %v5809 = vshrl.u32 %v5808, 7
    %v5810 = vsub.s32 1, %v5809
    %v5811 = vrot.slane %v5750, %v5810
    %v5812 = vlaneseq
    %v5813 = vshrl.u32 %v5812, 7
    %v5814 = vsub.s32 2, %v5813
    %v5815 = vrot.slane %v5750, %v5814
    %v5816 = vlaneseq
    %v5817 = vshrl.u32 %v5816, 7
    %v5818 = vsub.s32 3, %v5817
    %v5819 = vrot.slane %v5750, %v5818
    %v5824 = vadd.f32 %v5767, %v5807
    %v5825 = vadd.f32 %v5768, %v5811
    %v5826 = vadd.f32 %v5769, %v5815
    %v5827 = vadd.f32 %v5770, %v5819
    %v5828 = vadd.f32 %v5771, %v5807
    %v5829 = vadd.f32 %v5772, %v5811
    %v5830 = vadd.f32 %v5773, %v5815
    %v5831 = vadd.f32 %v5774, %v5819
    %v5832 = vadd.f32 %v5775, %v5807
    %v5833 = vadd.f32 %v5776, %v5811
    %v5834 = vadd.f32 %v5777, %v5815
    %v5835 = vadd.f32 %v5778, %v5819
    %v5836 = vadd.f32 %v5779, %v5807
    %v5837 = vadd.f32 %v5780, %v5811
    %v5838 = vadd.f32 %v5781, %v5815
    %v5839 = vadd.f32 %v5782, %v5819
    %v5840 = vadd.f32 %v5783, %v5807
    %v5841 = vadd.f32 %v5784, %v5811
    %v5842 = vadd.f32 %v5785, %v5815
    %v5843 = vadd.f32 %v5786, %v5819
    %v5844 = vadd.f32 %v5787, %v5807
    %v5845 = vadd.f32 %v5788, %v5811
    %v5846 = vadd.f32 %v5789, %v5815
    %v5847 = vadd.f32 %v5790, %v5819
    %v5848 = vadd.f32 %v5791, %v5807
    %v5849 = vadd.f32 %v5792, %v5811
    %v5850 = vadd.f32 %v5793, %v5815
    %v5851 = vadd.f32 %v5794, %v5819
    %v5852 = vadd.f32 %v5795, %v5807
    %v5853 = vadd.f32 %v5796, %v5811
    %v5854 = vadd.f32 %v5797, %v5815
    %v5855 = vadd.f32 %v5798, %v5819
    %v5856 = vadd.f32 %v5799, %v5807
    %v5857 = vadd.f32 %v5800, %v5811
    %v5858 = vadd.f32 %v5801, %v5815
    %v5859 = vadd.f32 %v5802, %v5819
    %v5860 = vadd.f32 %v5824, %v3273
    %v5861 = vadd.f32 %v5825, %v3275
    %v5862 = vadd.f32 %v5826, %v3354
    %v5863 = vadd.f32 %v5827, %v3356
    %v5864 = vadd.f32 %v5828, %v3277
    %v5865 = vadd.f32 %v5829, %v3279
    %v5866 = vadd.f32 %v5830, %v3358
    %v5867 = vadd.f32 %v5831, %v3360
    %v5868 = vadd.f32 %v5832, %v3283
    %v5869 = vadd.f32 %v5833, %v3285
    %v5870 = vadd.f32 %v5834, %v3364
    %v5871 = vadd.f32 %v5835, %v3366
    %v5872 = vadd.f32 %v5836, %v3287
    %v5873 = vadd.f32 %v5837, %v3289
    %v5874 = vadd.f32 %v5838, %v3368
    %v5875 = vadd.f32 %v5839, %v3370
    %v5876 = vadd.f32 %v5840, %v3293
    %v5877 = vadd.f32 %v5841, %v3295
    %v5878 = vadd.f32 %v5842, %v3374
    %v5879 = vadd.f32 %v5843, %v3376
    %v5880 = vadd.f32 %v5844, %v3297
    %v5881 = vadd.f32 %v5845, %v3299
    %v5882 = vadd.f32 %v5846, %v3378
    %v5883 = vadd.f32 %v5847, %v3380
    %v5884 = vadd.f32 %v5848, %v3303
    %v5885 = vadd.f32 %v5849, %v3305
    %v5886 = vadd.f32 %v5850, %v3384
    %v5887 = vadd.f32 %v5851, %v3386
    %v5888 = vadd.f32 %v5852, %v3307
    %v5889 = vadd.f32 %v5853, %v3309
    %v5890 = vadd.f32 %v5854, %v3388
    %v5891 = vadd.f32 %v5855, %v3390
    %v5892 = vadd.f32 %v5856, %v3313
    %v5893 = vadd.f32 %v5857, %v3315
    %v5894 = vadd.f32 %v5858, %v3394
    %v5895 = vadd.f32 %v5859, %v3396
    %vm5896 = vcmp.ge.f32.partialorder %v5860, 0.0
    %vm5897 = vcmp.ge.f32.partialorder %v5861, 0.0
    %vm5898 = vcmp.ge.f32.partialorder %v5862, 0.0
    %vm5899 = vcmp.ge.f32.partialorder %v5863, 0.0
    %vm5900 = vcmp.ge.f32.partialorder %v5864, 0.0
    %vm5901 = vcmp.ge.f32.partialorder %v5865, 0.0
    %vm5902 = vcmp.ge.f32.partialorder %v5866, 0.0
    %vm5903 = vcmp.ge.f32.partialorder %v5867, 0.0
    %vm5904 = vcmp.ge.f32.partialorder %v5868, 0.0
    %vm5905 = vcmp.ge.f32.partialorder %v5869, 0.0
    %vm5906 = vcmp.ge.f32.partialorder %v5870, 0.0
    %vm5907 = vcmp.ge.f32.partialorder %v5871, 0.0
    %vm5908 = vcmp.ge.f32.partialorder %v5872, 0.0
    %vm5909 = vcmp.ge.f32.partialorder %v5873, 0.0
    %vm5910 = vcmp.ge.f32.partialorder %v5874, 0.0
    %vm5911 = vcmp.ge.f32.partialorder %v5875, 0.0
    %vm5912 = vcmp.ge.f32.partialorder %v5876, 0.0
    %vm5913 = vcmp.ge.f32.partialorder %v5877, 0.0
    %vm5914 = vcmp.ge.f32.partialorder %v5878, 0.0
    %vm5915 = vcmp.ge.f32.partialorder %v5879, 0.0
    %vm5916 = vcmp.ge.f32.partialorder %v5880, 0.0
    %vm5917 = vcmp.ge.f32.partialorder %v5881, 0.0
    %vm5918 = vcmp.ge.f32.partialorder %v5882, 0.0
    %vm5919 = vcmp.ge.f32.partialorder %v5883, 0.0
    %vm5920 = vcmp.ge.f32.partialorder %v5884, 0.0
    %vm5921 = vcmp.ge.f32.partialorder %v5885, 0.0
    %vm5922 = vcmp.ge.f32.partialorder %v5886, 0.0
    %vm5923 = vcmp.ge.f32.partialorder %v5887, 0.0
    %vm5924 = vcmp.ge.f32.partialorder %v5888, 0.0
    %vm5925 = vcmp.ge.f32.partialorder %v5889, 0.0
    %vm5926 = vcmp.ge.f32.partialorder %v5890, 0.0
    %vm5927 = vcmp.ge.f32.partialorder %v5891, 0.0
    %vm5928 = vcmp.ge.f32.partialorder %v5892, 0.0
    %vm5929 = vcmp.ge.f32.partialorder %v5893, 0.0
    %vm5930 = vcmp.ge.f32.partialorder %v5894, 0.0
    %vm5931 = vcmp.ge.f32.partialorder %v5895, 0.0
    %v5932 = vstv %s2853
    %v5933 = vmul.f32 %v5932, %v5860
    %v5934 = vmul.f32 %v5932, %v5861
    %v5935 = vmul.f32 %v5932, %v5862
    %v5936 = vmul.f32 %v5932, %v5863
    %v5937 = vmul.f32 %v5932, %v5864
    %v5938 = vmul.f32 %v5932, %v5865
    %v5939 = vmul.f32 %v5932, %v5866
    %v5940 = vmul.f32 %v5932, %v5867
    %v5941 = vmul.f32 %v5932, %v5868
    %v5942 = vmul.f32 %v5932, %v5869
    %v5943 = vmul.f32 %v5932, %v5870
    %v5944 = vmul.f32 %v5932, %v5871
    %v5945 = vmul.f32 %v5932, %v5872
    %v5946 = vmul.f32 %v5932, %v5873
    %v5947 = vmul.f32 %v5932, %v5874
    %v5948 = vmul.f32 %v5932, %v5875
    %v5949 = vmul.f32 %v5932, %v5876
    %v5950 = vmul.f32 %v5932, %v5877
    %v5951 = vmul.f32 %v5932, %v5878
    %v5952 = vmul.f32 %v5932, %v5879
    %v5953 = vmul.f32 %v5932, %v5880
    %v5954 = vmul.f32 %v5932, %v5881
    %v5955 = vmul.f32 %v5932, %v5882
    %v5956 = vmul.f32 %v5932, %v5883
    %v5957 = vmul.f32 %v5932, %v5884
    %v5958 = vmul.f32 %v5932, %v5885
    %v5959 = vmul.f32 %v5932, %v5886
    %v5960 = vmul.f32 %v5932, %v5887
    %v5961 = vmul.f32 %v5932, %v5888
    %v5962 = vmul.f32 %v5932, %v5889
    %v5963 = vmul.f32 %v5932, %v5890
    %v5964 = vmul.f32 %v5932, %v5891
    %v5965 = vmul.f32 %v5932, %v5892
    %v5966 = vmul.f32 %v5932, %v5893
    %v5967 = vmul.f32 %v5932, %v5894
    %v5968 = vmul.f32 %v5932, %v5895
    %v5969 = vsel %vm5896, %v5860, %v5933
    %v5970 = vsel %vm5897, %v5861, %v5934
    %v5971 = vsel %vm5898, %v5862, %v5935
    %v5972 = vsel %vm5899, %v5863, %v5936
    %v5973 = vsel %vm5900, %v5864, %v5937
    %v5974 = vsel %vm5901, %v5865, %v5938
    %v5975 = vsel %vm5902, %v5866, %v5939
    %v5976 = vsel %vm5903, %v5867, %v5940
    %v5977 = vsel %vm5904, %v5868, %v5941
    %v5978 = vsel %vm5905, %v5869, %v5942
    %v5979 = vsel %vm5906, %v5870, %v5943
    %v5980 = vsel %vm5907, %v5871, %v5944
    %v5981 = vsel %vm5908, %v5872, %v5945
    %v5982 = vsel %vm5909, %v5873, %v5946
    %v5983 = vsel %vm5910, %v5874, %v5947
    %v5984 = vsel %vm5911, %v5875, %v5948
    %v5985 = vsel %vm5912, %v5876, %v5949
    %v5986 = vsel %vm5913, %v5877, %v5950
    %v5987 = vsel %vm5914, %v5878, %v5951
    %v5988 = vsel %vm5915, %v5879, %v5952
    %v5989 = vsel %vm5916, %v5880, %v5953
    %v5990 = vsel %vm5917, %v5881, %v5954
    %v5991 = vsel %vm5918, %v5882, %v5955
    %v5992 = vsel %vm5919, %v5883, %v5956
    %v5993 = vsel %vm5920, %v5884, %v5957
    %v5994 = vsel %vm5921, %v5885, %v5958
    %v5995 = vsel %vm5922, %v5886, %v5959
    %v5996 = vsel %vm5923, %v5887, %v5960
    %v5997 = vsel %vm5924, %v5888, %v5961
    %v5998 = vsel %vm5925, %v5889, %v5962
    %v5999 = vsel %vm5926, %v5890, %v5963
    %v6000 = vsel %vm5927, %v5891, %v5964
    %v6001 = vsel %vm5928, %v5892, %v5965
    %v6002 = vsel %vm5929, %v5893, %v5966
    %v6003 = vsel %vm5930, %v5894, %v5967
    %v6004 = vsel %vm5931, %v5895, %v5968
    %v6005 = vmax.f32 %v5969, %v5981
    %v6006 = vmax.f32 %v5970, %v5982
    %v6007 = vmax.f32 %v5971, %v5983
    %v6008 = vmax.f32 %v5972, %v5984
    %v6009 = vmax.f32 %v5973, %v5985
    %v6010 = vmax.f32 %v5974, %v5986
    %v6011 = vmax.f32 %v5975, %v5987
    %v6012 = vmax.f32 %v5976, %v5988
    %v6013 = vmax.f32 %v5977, %v5989
    %v6014 = vmax.f32 %v5978, %v5990
    %v6015 = vmax.f32 %v5979, %v5991
    %v6016 = vmax.f32 %v5980, %v5992
    %v6017 = vmax.f32 %v6005, %v5993
    %v6018 = vmax.f32 %v6006, %v5994
    %v6019 = vmax.f32 %v6007, %v5995
    %v6020 = vmax.f32 %v6008, %v5996
    %v6021 = vmax.f32 %v6009, %v5997
    %v6022 = vmax.f32 %v6010, %v5998
    %v6023 = vmax.f32 %v6011, %v5999
    %v6024 = vmax.f32 %v6012, %v6000
    %v6025 = vmax.f32 %v6013, %v6001
    %v6026 = vmax.f32 %v6014, %v6002
    %v6027 = vmax.f32 %v6015, %v6003
    %v6028 = vmax.f32 %v6016, %v6004
    %v6029 = vpack.c.bf16 %v6021, %v6017
    %v6030 = vpack.c.bf16 %v6022, %v6018
    %v6031 = vpack.c.bf16 %v6023, %v6019
    %v6032 = vpack.c.bf16 %v6024, %v6020
    %v6033 = vpack.c.bf16 %v6025, %v6025
    %v6034 = vpack.c.bf16 %v6026, %v6026
    %v6035 = vpack.c.bf16 %v6027, %v6027
    %v6036 = vpack.c.bf16 %v6028, %v6028
    %s6037 = sld [smem:[#allocation2 + $0x4]]
    %s6038 = sld [smem:[#allocation2 + $0x5]]
    %v6039 = vld [vmem:[#allocation12] sm:$0xff]
    %v6040 = vld [vmem:[#allocation12 + $0x8] sm:$0xff]
    %v6041 = vld [vmem:[#allocation12 + $0x10] sm:$0xff]
    %v6042 = vld [vmem:[#allocation12 + $0x18] sm:$0xff]
    %v6043 = vld [vmem:[#allocation12 + $0x20] sm:$0xff]
    %v6044 = vld [vmem:[#allocation12 + $0x28] sm:$0xff]
    %v6045 = vld [vmem:[#allocation12 + $0x30] sm:$0xff]
    %v6046 = vld [vmem:[#allocation12 + $0x38] sm:$0xff]
    %v6047 = vld [vmem:[#allocation12 + $0x40] sm:$0xff]
    %v6048 = vld [vmem:[#allocation12 + $0x48] sm:$0xff]
    %v6049 = vld [vmem:[#allocation12 + $0x50] sm:$0xff]
    %v6050 = vld [vmem:[#allocation12 + $0x58] sm:$0xff]
    %v6051 = vld [vmem:[#allocation12 + $0x60] sm:$0xff]
    %v6052 = vld [vmem:[#allocation12 + $0x68] sm:$0xff]
    %v6053 = vld [vmem:[#allocation12 + $0x70] sm:$0xff]
    %v6054 = vld [vmem:[#allocation12 + $0x78] sm:$0xff]
    %v6055 = vld [vmem:[#allocation12 + $0x80] sm:$0xff]
    %v6056 = vld [vmem:[#allocation12 + $0x88] sm:$0xff]
    %v6057 = vld [vmem:[#allocation12 + $0x90] sm:$0xff]
    %v6058 = vld [vmem:[#allocation12 + $0x98] sm:$0xff]
    %v6059 = vld [vmem:[#allocation12 + $0xa0] sm:$0xff]
    %v6060 = vld [vmem:[#allocation12 + $0xa8] sm:$0xff]
    %v6061 = vld [vmem:[#allocation12 + $0xb0] sm:$0xff]
    %v6062 = vld [vmem:[#allocation12 + $0xb8] sm:$0xff]
    %v6063 = vld [vmem:[#allocation12 + $0xc0] sm:$0xff]
    %v6064 = vld [vmem:[#allocation12 + $0xc8] sm:$0xff]
    %v6065 = vld [vmem:[#allocation12 + $0xd0] sm:$0xff]
    %v6066 = vld [vmem:[#allocation12 + $0xd8] sm:$0xff]
    %v6067 = vld [vmem:[#allocation12 + $0xe0] sm:$0xff]
    %v6068 = vld [vmem:[#allocation12 + $0xe8] sm:$0xff]
    %v6069 = vld [vmem:[#allocation12 + $0xf0] sm:$0xff]
    %v6070 = vld [vmem:[#allocation12 + $0xf8] sm:$0xff]
    %v6071 = vld [vmem:[#allocation12 + $0x100] sm:$0xff]
    %v6072 = vld [vmem:[#allocation12 + $0x108] sm:$0xff]
    %v6073 = vld [vmem:[#allocation12 + $0x110] sm:$0xff]
    %v6074 = vld [vmem:[#allocation12 + $0x118] sm:$0xff]
    %v6075 = vld [vmem:[#allocation12 + $0x120] sm:$0xff]
    %v6076 = vld [vmem:[#allocation12 + $0x128] sm:$0xff]
    %v6077 = vld [vmem:[#allocation12 + $0x130] sm:$0xff]
    %v6078 = vld [vmem:[#allocation12 + $0x138] sm:$0xff]
    %v6079 = vld [vmem:[#allocation12 + $0x140] sm:$0xff]
    %v6080 = vld [vmem:[#allocation12 + $0x148] sm:$0xff]
    %v6081 = vld [vmem:[#allocation12 + $0x150] sm:$0xff]
    %v6082 = vld [vmem:[#allocation12 + $0x158] sm:$0xff]
    %v6083 = vld [vmem:[#allocation12 + $0x160] sm:$0xff]
    %v6084 = vld [vmem:[#allocation12 + $0x168] sm:$0xff]
    %v6085 = vld [vmem:[#allocation12 + $0x170] sm:$0xff]
    %v6086 = vld [vmem:[#allocation12 + $0x178] sm:$0xff]
    %v6087 = vld [vmem:[#allocation12 + $0x180] sm:$0xff]
    %v6088 = vld [vmem:[#allocation12 + $0x188] sm:$0xff]
    %v6089 = vld [vmem:[#allocation12 + $0x190] sm:$0xff]
    %v6090 = vld [vmem:[#allocation12 + $0x198] sm:$0xff]
    %v6091 = vld [vmem:[#allocation12 + $0x1a0] sm:$0xff]
    %v6092 = vld [vmem:[#allocation12 + $0x1a8] sm:$0xff]
    %v6093 = vld [vmem:[#allocation12 + $0x1b0] sm:$0xff]
    %v6094 = vld [vmem:[#allocation12 + $0x1b8] sm:$0xff]
    %v6095 = vld [vmem:[#allocation12 + $0x1c0] sm:$0xff]
    %v6096 = vld [vmem:[#allocation12 + $0x1c8] sm:$0xff]
    %v6097 = vld [vmem:[#allocation12 + $0x1d0] sm:$0xff]
    %v6098 = vld [vmem:[#allocation12 + $0x1d8] sm:$0xff]
    %v6099 = vld [vmem:[#allocation12 + $0x1e0] sm:$0xff]
    %v6100 = vld [vmem:[#allocation12 + $0x1e8] sm:$0xff]
    %v6101 = vld [vmem:[#allocation12 + $0x1f0] sm:$0xff]
    %v6102 = vld [vmem:[#allocation12 + $0x1f8] sm:$0xff]
    %v6103 = vld [vmem:[#allocation12 + $0x200] sm:$0xff]
    %v6104 = vld [vmem:[#allocation12 + $0x208] sm:$0xff]
    %v6105 = vld [vmem:[#allocation12 + $0x210] sm:$0xff]
    %v6106 = vld [vmem:[#allocation12 + $0x218] sm:$0xff]
    %v6107 = vld [vmem:[#allocation12 + $0x220] sm:$0xff]
    %v6108 = vld [vmem:[#allocation12 + $0x228] sm:$0xff]
    %v6109 = vld [vmem:[#allocation12 + $0x230] sm:$0xff]
    %v6110 = vld [vmem:[#allocation12 + $0x238] sm:$0xff]
    %v6111 = vld [vmem:[#allocation12 + $0x240] sm:$0xff]
    %v6112 = vld [vmem:[#allocation12 + $0x248] sm:$0xff]
    %v6113 = vld [vmem:[#allocation12 + $0x250] sm:$0xff]
    %v6114 = vld [vmem:[#allocation12 + $0x258] sm:$0xff]
    %v6115 = vld [vmem:[#allocation12 + $0x260] sm:$0xff]
    %v6116 = vld [vmem:[#allocation12 + $0x268] sm:$0xff]
    %v6117 = vld [vmem:[#allocation12 + $0x270] sm:$0xff]
    %v6118 = vld [vmem:[#allocation12 + $0x278] sm:$0xff]
    %v6119 = vld [vmem:[#allocation12 + $0x280] sm:$0xff]
    %v6120 = vld [vmem:[#allocation12 + $0x288] sm:$0xff]
    %v6121 = vld [vmem:[#allocation12 + $0x290] sm:$0xff]
    %v6122 = vld [vmem:[#allocation12 + $0x298] sm:$0xff]
    %v6123 = vld [vmem:[#allocation12 + $0x2a0] sm:$0xff]
    %v6124 = vld [vmem:[#allocation12 + $0x2a8] sm:$0xff]
    %v6125 = vld [vmem:[#allocation12 + $0x2b0] sm:$0xff]
    %v6126 = vld [vmem:[#allocation12 + $0x2b8] sm:$0xff]
    %v6127 = vld [vmem:[#allocation12 + $0x2c0] sm:$0xff]
    %v6128 = vld [vmem:[#allocation12 + $0x2c8] sm:$0xff]
    %v6129 = vld [vmem:[#allocation12 + $0x2d0] sm:$0xff]
    %v6130 = vld [vmem:[#allocation12 + $0x2d8] sm:$0xff]
    %v6131 = vld [vmem:[#allocation12 + $0x2e0] sm:$0xff]
    %v6132 = vld [vmem:[#allocation12 + $0x2e8] sm:$0xff]
    %v6133 = vld [vmem:[#allocation12 + $0x2f0] sm:$0xff]
    %v6134 = vld [vmem:[#allocation12 + $0x2f8] sm:$0xff]
    %v6135 = vld [vmem:[#allocation12 + $0x300] sm:$0xff]
    %v6136 = vld [vmem:[#allocation12 + $0x308] sm:$0xff]
    %v6137 = vld [vmem:[#allocation12 + $0x310] sm:$0xff]
    %v6138 = vld [vmem:[#allocation12 + $0x318] sm:$0xff]
    %v6139 = vld [vmem:[#allocation12 + $0x320] sm:$0xff]
    %v6140 = vld [vmem:[#allocation12 + $0x328] sm:$0xff]
    %v6141 = vld [vmem:[#allocation12 + $0x330] sm:$0xff]
    %v6142 = vld [vmem:[#allocation12 + $0x338] sm:$0xff]
    %v6143 = vld [vmem:[#allocation12 + $0x340] sm:$0xff]
    %v6144 = vld [vmem:[#allocation12 + $0x348] sm:$0xff]
    %v6145 = vld [vmem:[#allocation12 + $0x350] sm:$0xff]
    %v6146 = vld [vmem:[#allocation12 + $0x358] sm:$0xff]
    %v6147 = vld [vmem:[#allocation12 + $0x360] sm:$0xff]
    %v6148 = vld [vmem:[#allocation12 + $0x368] sm:$0xff]
    %v6149 = vld [vmem:[#allocation12 + $0x370] sm:$0xff]
    %v6150 = vld [vmem:[#allocation12 + $0x378] sm:$0xff]
    %v6151 = vld [vmem:[#allocation12 + $0x380] sm:$0xff]
    %v6152 = vld [vmem:[#allocation12 + $0x388] sm:$0xff]
    %v6153 = vld [vmem:[#allocation12 + $0x390] sm:$0xff]
    %v6154 = vld [vmem:[#allocation12 + $0x398] sm:$0xff]
    %v6155 = vld [vmem:[#allocation12 + $0x3a0] sm:$0xff]
    %v6156 = vld [vmem:[#allocation12 + $0x3a8] sm:$0xff]
    %v6157 = vld [vmem:[#allocation12 + $0x3b0] sm:$0xff]
    %v6158 = vld [vmem:[#allocation12 + $0x3b8] sm:$0xff]
    %v6159 = vld [vmem:[#allocation12 + $0x3c0] sm:$0xff]
    %v6160 = vld [vmem:[#allocation12 + $0x3c8] sm:$0xff]
    %v6161 = vld [vmem:[#allocation12 + $0x3d0] sm:$0xff]
    %v6162 = vld [vmem:[#allocation12 + $0x3d8] sm:$0xff]
    %v6163 = vld [vmem:[#allocation12 + $0x3e0] sm:$0xff]
    %v6164 = vld [vmem:[#allocation12 + $0x3e8] sm:$0xff]
    %v6165 = vld [vmem:[#allocation12 + $0x3f0] sm:$0xff]
    %v6166 = vld [vmem:[#allocation12 + $0x3f8] sm:$0xff]
    %v6295 = vunpack.c.l.b16 %v6039
    %v6296 = vunpack.c.h.b16 %v6039
    %v6297 = vunpack.c.l.b16 %v6040
    %v6298 = vunpack.c.h.b16 %v6040
    %v6299 = vunpack.c.l.b16 %v6041
    %v6300 = vunpack.c.h.b16 %v6041
    %v6301 = vunpack.c.l.b16 %v6042
    %v6302 = vunpack.c.h.b16 %v6042
    %v6303 = vunpack.c.l.b16 %v6043
    %v6304 = vunpack.c.h.b16 %v6043
    %v6305 = vunpack.c.l.b16 %v6044
    %v6306 = vunpack.c.h.b16 %v6044
    %v6307 = vunpack.c.l.b16 %v6045
    %v6308 = vunpack.c.h.b16 %v6045
    %v6309 = vunpack.c.l.b16 %v6046
    %v6310 = vunpack.c.h.b16 %v6046
    %v6311 = vunpack.c.l.b16 %v6047
    %v6312 = vunpack.c.h.b16 %v6047
    %v6313 = vunpack.c.l.b16 %v6048
    %v6314 = vunpack.c.h.b16 %v6048
    %v6315 = vunpack.c.l.b16 %v6049
    %v6316 = vunpack.c.h.b16 %v6049
    %v6317 = vunpack.c.l.b16 %v6050
    %v6318 = vunpack.c.h.b16 %v6050
    %v6319 = vunpack.c.l.b16 %v6051
    %v6320 = vunpack.c.h.b16 %v6051
    %v6321 = vunpack.c.l.b16 %v6052
    %v6322 = vunpack.c.h.b16 %v6052
    %v6323 = vunpack.c.l.b16 %v6053
    %v6324 = vunpack.c.h.b16 %v6053
    %v6325 = vunpack.c.l.b16 %v6054
    %v6326 = vunpack.c.h.b16 %v6054
    %v6327 = vunpack.c.l.b16 %v6055
    %v6328 = vunpack.c.h.b16 %v6055
    %v6329 = vunpack.c.l.b16 %v6056
    %v6330 = vunpack.c.h.b16 %v6056
    %v6331 = vunpack.c.l.b16 %v6057
    %v6332 = vunpack.c.h.b16 %v6057
    %v6333 = vunpack.c.l.b16 %v6058
    %v6334 = vunpack.c.h.b16 %v6058
    %v6335 = vunpack.c.l.b16 %v6059
    %v6336 = vunpack.c.h.b16 %v6059
    %v6337 = vunpack.c.l.b16 %v6060
    %v6338 = vunpack.c.h.b16 %v6060
    %v6339 = vunpack.c.l.b16 %v6061
    %v6340 = vunpack.c.h.b16 %v6061
    %v6341 = vunpack.c.l.b16 %v6062
    %v6342 = vunpack.c.h.b16 %v6062
    %v6343 = vunpack.c.l.b16 %v6063
    %v6344 = vunpack.c.h.b16 %v6063
    %v6345 = vunpack.c.l.b16 %v6064
    %v6346 = vunpack.c.h.b16 %v6064
    %v6347 = vunpack.c.l.b16 %v6065
    %v6348 = vunpack.c.h.b16 %v6065
    %v6349 = vunpack.c.l.b16 %v6066
    %v6350 = vunpack.c.h.b16 %v6066
    %v6351 = vunpack.c.l.b16 %v6067
    %v6352 = vunpack.c.h.b16 %v6067
    %v6353 = vunpack.c.l.b16 %v6068
    %v6354 = vunpack.c.h.b16 %v6068
    %v6355 = vunpack.c.l.b16 %v6069
    %v6356 = vunpack.c.h.b16 %v6069
    %v6357 = vunpack.c.l.b16 %v6070
    %v6358 = vunpack.c.h.b16 %v6070
    %v6359 = vunpack.c.l.b16 %v6071
    %v6360 = vunpack.c.h.b16 %v6071
    %v6361 = vunpack.c.l.b16 %v6072
    %v6362 = vunpack.c.h.b16 %v6072
    %v6363 = vunpack.c.l.b16 %v6073
    %v6364 = vunpack.c.h.b16 %v6073
    %v6365 = vunpack.c.l.b16 %v6074
    %v6366 = vunpack.c.h.b16 %v6074
    %v6367 = vunpack.c.l.b16 %v6075
    %v6368 = vunpack.c.h.b16 %v6075
    %v6369 = vunpack.c.l.b16 %v6076
    %v6370 = vunpack.c.h.b16 %v6076
    %v6371 = vunpack.c.l.b16 %v6077
    %v6372 = vunpack.c.h.b16 %v6077
    %v6373 = vunpack.c.l.b16 %v6078
    %v6374 = vunpack.c.h.b16 %v6078
    %v6375 = vunpack.c.l.b16 %v6079
    %v6376 = vunpack.c.h.b16 %v6079
    %v6377 = vunpack.c.l.b16 %v6080
    %v6378 = vunpack.c.h.b16 %v6080
    %v6379 = vunpack.c.l.b16 %v6081
    %v6380 = vunpack.c.h.b16 %v6081
    %v6381 = vunpack.c.l.b16 %v6082
    %v6382 = vunpack.c.h.b16 %v6082
    %v6383 = vunpack.c.l.b16 %v6083
    %v6384 = vunpack.c.h.b16 %v6083
    %v6385 = vunpack.c.l.b16 %v6084
    %v6386 = vunpack.c.h.b16 %v6084
    %v6387 = vunpack.c.l.b16 %v6085
    %v6388 = vunpack.c.h.b16 %v6085
    %v6389 = vunpack.c.l.b16 %v6086
    %v6390 = vunpack.c.h.b16 %v6086
    %v6391 = vunpack.c.l.b16 %v6087
    %v6392 = vunpack.c.h.b16 %v6087
    %v6393 = vunpack.c.l.b16 %v6088
    %v6394 = vunpack.c.h.b16 %v6088
    %v6395 = vunpack.c.l.b16 %v6089
    %v6396 = vunpack.c.h.b16 %v6089
    %v6397 = vunpack.c.l.b16 %v6090
    %v6398 = vunpack.c.h.b16 %v6090
    %v6399 = vunpack.c.l.b16 %v6091
    %v6400 = vunpack.c.h.b16 %v6091
    %v6401 = vunpack.c.l.b16 %v6092
    %v6402 = vunpack.c.h.b16 %v6092
    %v6403 = vunpack.c.l.b16 %v6093
    %v6404 = vunpack.c.h.b16 %v6093
    %v6405 = vunpack.c.l.b16 %v6094
    %v6406 = vunpack.c.h.b16 %v6094
    %v6407 = vunpack.c.l.b16 %v6095
    %v6408 = vunpack.c.h.b16 %v6095
    %v6409 = vunpack.c.l.b16 %v6096
    %v6410 = vunpack.c.h.b16 %v6096
    %v6411 = vunpack.c.l.b16 %v6097
    %v6412 = vunpack.c.h.b16 %v6097
    %v6413 = vunpack.c.l.b16 %v6098
    %v6414 = vunpack.c.h.b16 %v6098
    %v6415 = vunpack.c.l.b16 %v6099
    %v6416 = vunpack.c.h.b16 %v6099
    %v6417 = vunpack.c.l.b16 %v6100
    %v6418 = vunpack.c.h.b16 %v6100
    %v6419 = vunpack.c.l.b16 %v6101
    %v6420 = vunpack.c.h.b16 %v6101
    %v6421 = vunpack.c.l.b16 %v6102
    %v6422 = vunpack.c.h.b16 %v6102
    %v6423 = vunpack.c.l.b16 %v6103
    %v6424 = vunpack.c.h.b16 %v6103
    %v6425 = vunpack.c.l.b16 %v6104
    %v6426 = vunpack.c.h.b16 %v6104
    %v6427 = vunpack.c.l.b16 %v6105
    %v6428 = vunpack.c.h.b16 %v6105
    %v6429 = vunpack.c.l.b16 %v6106
    %v6430 = vunpack.c.h.b16 %v6106
    %v6431 = vunpack.c.l.b16 %v6107
    %v6432 = vunpack.c.h.b16 %v6107
    %v6433 = vunpack.c.l.b16 %v6108
    %v6434 = vunpack.c.h.b16 %v6108
    %v6435 = vunpack.c.l.b16 %v6109
    %v6436 = vunpack.c.h.b16 %v6109
    %v6437 = vunpack.c.l.b16 %v6110
    %v6438 = vunpack.c.h.b16 %v6110
    %v6439 = vunpack.c.l.b16 %v6111
    %v6440 = vunpack.c.h.b16 %v6111
    %v6441 = vunpack.c.l.b16 %v6112
    %v6442 = vunpack.c.h.b16 %v6112
    %v6443 = vunpack.c.l.b16 %v6113
    %v6444 = vunpack.c.h.b16 %v6113
    %v6445 = vunpack.c.l.b16 %v6114
    %v6446 = vunpack.c.h.b16 %v6114
    %v6447 = vunpack.c.l.b16 %v6115
    %v6448 = vunpack.c.h.b16 %v6115
    %v6449 = vunpack.c.l.b16 %v6116
    %v6450 = vunpack.c.h.b16 %v6116
    %v6451 = vunpack.c.l.b16 %v6117
    %v6452 = vunpack.c.h.b16 %v6117
    %v6453 = vunpack.c.l.b16 %v6118
    %v6454 = vunpack.c.h.b16 %v6118
    %v6455 = vunpack.c.l.b16 %v6119
    %v6456 = vunpack.c.h.b16 %v6119
    %v6457 = vunpack.c.l.b16 %v6120
    %v6458 = vunpack.c.h.b16 %v6120
    %v6459 = vunpack.c.l.b16 %v6121
    %v6460 = vunpack.c.h.b16 %v6121
    %v6461 = vunpack.c.l.b16 %v6122
    %v6462 = vunpack.c.h.b16 %v6122
    %v6463 = vunpack.c.l.b16 %v6123
    %v6464 = vunpack.c.h.b16 %v6123
    %v6465 = vunpack.c.l.b16 %v6124
    %v6466 = vunpack.c.h.b16 %v6124
    %v6467 = vunpack.c.l.b16 %v6125
    %v6468 = vunpack.c.h.b16 %v6125
    %v6469 = vunpack.c.l.b16 %v6126
    %v6470 = vunpack.c.h.b16 %v6126
    %v6471 = vunpack.c.l.b16 %v6127
    %v6472 = vunpack.c.h.b16 %v6127
    %v6473 = vunpack.c.l.b16 %v6128
    %v6474 = vunpack.c.h.b16 %v6128
    %v6475 = vunpack.c.l.b16 %v6129
    %v6476 = vunpack.c.h.b16 %v6129
    %v6477 = vunpack.c.l.b16 %v6130
    %v6478 = vunpack.c.h.b16 %v6130
    %v6479 = vunpack.c.l.b16 %v6131
    %v6480 = vunpack.c.h.b16 %v6131
    %v6481 = vunpack.c.l.b16 %v6132
    %v6482 = vunpack.c.h.b16 %v6132
    %v6483 = vunpack.c.l.b16 %v6133
    %v6484 = vunpack.c.h.b16 %v6133
    %v6485 = vunpack.c.l.b16 %v6134
    %v6486 = vunpack.c.h.b16 %v6134
    %v6487 = vunpack.c.l.b16 %v6135
    %v6488 = vunpack.c.h.b16 %v6135
    %v6489 = vunpack.c.l.b16 %v6136
    %v6490 = vunpack.c.h.b16 %v6136
    %v6491 = vunpack.c.l.b16 %v6137
    %v6492 = vunpack.c.h.b16 %v6137
    %v6493 = vunpack.c.l.b16 %v6138
    %v6494 = vunpack.c.h.b16 %v6138
    %v6495 = vunpack.c.l.b16 %v6139
    %v6496 = vunpack.c.h.b16 %v6139
    %v6497 = vunpack.c.l.b16 %v6140
    %v6498 = vunpack.c.h.b16 %v6140
    %v6499 = vunpack.c.l.b16 %v6141
    %v6500 = vunpack.c.h.b16 %v6141
    %v6501 = vunpack.c.l.b16 %v6142
    %v6502 = vunpack.c.h.b16 %v6142
    %v6503 = vunpack.c.l.b16 %v6143
    %v6504 = vunpack.c.h.b16 %v6143
    %v6505 = vunpack.c.l.b16 %v6144
    %v6506 = vunpack.c.h.b16 %v6144
    %v6507 = vunpack.c.l.b16 %v6145
    %v6508 = vunpack.c.h.b16 %v6145
    %v6509 = vunpack.c.l.b16 %v6146
    %v6510 = vunpack.c.h.b16 %v6146
    %v6511 = vunpack.c.l.b16 %v6147
    %v6512 = vunpack.c.h.b16 %v6147
    %v6513 = vunpack.c.l.b16 %v6148
    %v6514 = vunpack.c.h.b16 %v6148
    %v6515 = vunpack.c.l.b16 %v6149
    %v6516 = vunpack.c.h.b16 %v6149
    %v6517 = vunpack.c.l.b16 %v6150
    %v6518 = vunpack.c.h.b16 %v6150
    %v6519 = vunpack.c.l.b16 %v6151
    %v6520 = vunpack.c.h.b16 %v6151
    %v6521 = vunpack.c.l.b16 %v6152
    %v6522 = vunpack.c.h.b16 %v6152
    %v6523 = vunpack.c.l.b16 %v6153
    %v6524 = vunpack.c.h.b16 %v6153
    %v6525 = vunpack.c.l.b16 %v6154
    %v6526 = vunpack.c.h.b16 %v6154
    %v6527 = vunpack.c.l.b16 %v6155
    %v6528 = vunpack.c.h.b16 %v6155
    %v6529 = vunpack.c.l.b16 %v6156
    %v6530 = vunpack.c.h.b16 %v6156
    %v6531 = vunpack.c.l.b16 %v6157
    %v6532 = vunpack.c.h.b16 %v6157
    %v6533 = vunpack.c.l.b16 %v6158
    %v6534 = vunpack.c.h.b16 %v6158
    %v6535 = vunpack.c.l.b16 %v6159
    %v6536 = vunpack.c.h.b16 %v6159
    %v6537 = vunpack.c.l.b16 %v6160
    %v6538 = vunpack.c.h.b16 %v6160
    %v6539 = vunpack.c.l.b16 %v6161
    %v6540 = vunpack.c.h.b16 %v6161
    %v6541 = vunpack.c.l.b16 %v6162
    %v6542 = vunpack.c.h.b16 %v6162
    %v6543 = vunpack.c.l.b16 %v6163
    %v6544 = vunpack.c.h.b16 %v6163
    %v6545 = vunpack.c.l.b16 %v6164
    %v6546 = vunpack.c.h.b16 %v6164
    %v6547 = vunpack.c.l.b16 %v6165
    %v6548 = vunpack.c.h.b16 %v6165
    %v6549 = vunpack.c.l.b16 %v6166
    %v6550 = vunpack.c.h.b16 %v6166
    %v6551 = vpack.c.b16 %v6299, %v6295
    %v6552 = vpack.c.b16 %v6300, %v6296
    %v6553 = vpack.c.b16 %v6301, %v6297
    %v6554 = vpack.c.b16 %v6302, %v6298
    %v6555 = vpack.c.b16 %v6307, %v6303
    %v6556 = vpack.c.b16 %v6308, %v6304
    %v6557 = vpack.c.b16 %v6309, %v6305
    %v6558 = vpack.c.b16 %v6310, %v6306
    %v6559 = vpack.c.b16 %v6315, %v6311
    %v6560 = vpack.c.b16 %v6316, %v6312
    %v6561 = vpack.c.b16 %v6317, %v6313
    %v6562 = vpack.c.b16 %v6318, %v6314
    %v6563 = vpack.c.b16 %v6323, %v6319
    %v6564 = vpack.c.b16 %v6324, %v6320
    %v6565 = vpack.c.b16 %v6325, %v6321
    %v6566 = vpack.c.b16 %v6326, %v6322
    %v6567 = vpack.c.b16 %v6331, %v6327
    %v6568 = vpack.c.b16 %v6332, %v6328
    %v6569 = vpack.c.b16 %v6333, %v6329
    %v6570 = vpack.c.b16 %v6334, %v6330
    %v6571 = vpack.c.b16 %v6339, %v6335
    %v6572 = vpack.c.b16 %v6340, %v6336
    %v6573 = vpack.c.b16 %v6341, %v6337
    %v6574 = vpack.c.b16 %v6342, %v6338
    %v6575 = vpack.c.b16 %v6347, %v6343
    %v6576 = vpack.c.b16 %v6348, %v6344
    %v6577 = vpack.c.b16 %v6349, %v6345
    %v6578 = vpack.c.b16 %v6350, %v6346
    %v6579 = vpack.c.b16 %v6355, %v6351
    %v6580 = vpack.c.b16 %v6356, %v6352
    %v6581 = vpack.c.b16 %v6357, %v6353
    %v6582 = vpack.c.b16 %v6358, %v6354
    %v6583 = vpack.c.b16 %v6363, %v6359
    %v6584 = vpack.c.b16 %v6364, %v6360
    %v6585 = vpack.c.b16 %v6365, %v6361
    %v6586 = vpack.c.b16 %v6366, %v6362
    %v6587 = vpack.c.b16 %v6371, %v6367
    %v6588 = vpack.c.b16 %v6372, %v6368
    %v6589 = vpack.c.b16 %v6373, %v6369
    %v6590 = vpack.c.b16 %v6374, %v6370
    %v6591 = vpack.c.b16 %v6379, %v6375
    %v6592 = vpack.c.b16 %v6380, %v6376
    %v6593 = vpack.c.b16 %v6381, %v6377
    %v6594 = vpack.c.b16 %v6382, %v6378
    %v6595 = vpack.c.b16 %v6387, %v6383
    %v6596 = vpack.c.b16 %v6388, %v6384
    %v6597 = vpack.c.b16 %v6389, %v6385
    %v6598 = vpack.c.b16 %v6390, %v6386
    %v6599 = vpack.c.b16 %v6395, %v6391
    %v6600 = vpack.c.b16 %v6396, %v6392
    %v6601 = vpack.c.b16 %v6397, %v6393
    %v6602 = vpack.c.b16 %v6398, %v6394
    %v6603 = vpack.c.b16 %v6403, %v6399
    %v6604 = vpack.c.b16 %v6404, %v6400
    %v6605 = vpack.c.b16 %v6405, %v6401
    %v6606 = vpack.c.b16 %v6406, %v6402
    %v6607 = vpack.c.b16 %v6411, %v6407
    %v6608 = vpack.c.b16 %v6412, %v6408
    %v6609 = vpack.c.b16 %v6413, %v6409
    %v6610 = vpack.c.b16 %v6414, %v6410
    %v6611 = vpack.c.b16 %v6419, %v6415
    %v6612 = vpack.c.b16 %v6420, %v6416
    %v6613 = vpack.c.b16 %v6421, %v6417
    %v6614 = vpack.c.b16 %v6422, %v6418
    %v6615 = vpack.c.b16 %v6427, %v6423
    %v6616 = vpack.c.b16 %v6428, %v6424
    %v6617 = vpack.c.b16 %v6429, %v6425
    %v6618 = vpack.c.b16 %v6430, %v6426
    %v6619 = vpack.c.b16 %v6435, %v6431
    %v6620 = vpack.c.b16 %v6436, %v6432
    %v6621 = vpack.c.b16 %v6437, %v6433
    %v6622 = vpack.c.b16 %v6438, %v6434
    %v6623 = vpack.c.b16 %v6443, %v6439
    %v6624 = vpack.c.b16 %v6444, %v6440
    %v6625 = vpack.c.b16 %v6445, %v6441
    %v6626 = vpack.c.b16 %v6446, %v6442
    %v6627 = vpack.c.b16 %v6451, %v6447
    %v6628 = vpack.c.b16 %v6452, %v6448
    %v6629 = vpack.c.b16 %v6453, %v6449
    %v6630 = vpack.c.b16 %v6454, %v6450
    %v6631 = vpack.c.b16 %v6459, %v6455
    %v6632 = vpack.c.b16 %v6460, %v6456
    %v6633 = vpack.c.b16 %v6461, %v6457
    %v6634 = vpack.c.b16 %v6462, %v6458
    %v6635 = vpack.c.b16 %v6467, %v6463
    %v6636 = vpack.c.b16 %v6468, %v6464
    %v6637 = vpack.c.b16 %v6469, %v6465
    %v6638 = vpack.c.b16 %v6470, %v6466
    %v6639 = vpack.c.b16 %v6475, %v6471
    %v6640 = vpack.c.b16 %v6476, %v6472
    %v6641 = vpack.c.b16 %v6477, %v6473
    %v6642 = vpack.c.b16 %v6478, %v6474
    %v6643 = vpack.c.b16 %v6483, %v6479
    %v6644 = vpack.c.b16 %v6484, %v6480
    %v6645 = vpack.c.b16 %v6485, %v6481
    %v6646 = vpack.c.b16 %v6486, %v6482
    %v6647 = vpack.c.b16 %v6491, %v6487
    %v6648 = vpack.c.b16 %v6492, %v6488
    %v6649 = vpack.c.b16 %v6493, %v6489
    %v6650 = vpack.c.b16 %v6494, %v6490
    %v6651 = vpack.c.b16 %v6499, %v6495
    %v6652 = vpack.c.b16 %v6500, %v6496
    %v6653 = vpack.c.b16 %v6501, %v6497
    %v6654 = vpack.c.b16 %v6502, %v6498
    %v6655 = vpack.c.b16 %v6507, %v6503
    %v6656 = vpack.c.b16 %v6508, %v6504
    %v6657 = vpack.c.b16 %v6509, %v6505
    %v6658 = vpack.c.b16 %v6510, %v6506
    %v6659 = vpack.c.b16 %v6515, %v6511
    %v6660 = vpack.c.b16 %v6516, %v6512
    %v6661 = vpack.c.b16 %v6517, %v6513
    %v6662 = vpack.c.b16 %v6518, %v6514
    %v6663 = vpack.c.b16 %v6523, %v6519
    %v6664 = vpack.c.b16 %v6524, %v6520
    %v6665 = vpack.c.b16 %v6525, %v6521
    %v6666 = vpack.c.b16 %v6526, %v6522
    %v6667 = vpack.c.b16 %v6531, %v6527
    %v6668 = vpack.c.b16 %v6532, %v6528
    %v6669 = vpack.c.b16 %v6533, %v6529
    %v6670 = vpack.c.b16 %v6534, %v6530
    %v6671 = vpack.c.b16 %v6539, %v6535
    %v6672 = vpack.c.b16 %v6540, %v6536
    %v6673 = vpack.c.b16 %v6541, %v6537
    %v6674 = vpack.c.b16 %v6542, %v6538
    %v6675 = vpack.c.b16 %v6547, %v6543
    %v6676 = vpack.c.b16 %v6548, %v6544
    %v6677 = vpack.c.b16 %v6549, %v6545
    %v6678 = vpack.c.b16 %v6550, %v6546
    %6807 = vmatprep.subr.bf16.mxu0 %v6580
    %6808 = vmatpush1.bf16.msra.mxu0 %v6579
    %6809 = vmatprep.subr.bf16.mxu0 %v6576
    %6810 = vmatpush1.bf16.msra.mxu0 %v6575
    %6811 = vmatprep.subr.bf16.mxu0 %v6572
    %6812 = vmatpush1.bf16.msra.mxu0 %v6571
    %6813 = vmatprep.subr.bf16.mxu0 %v6568
    %6814 = vmatpush1.bf16.msra.mxu0 %v6567
    %6815 = vmatprep.subr.bf16.mxu0 %v6564
    %6816 = vmatpush1.bf16.msra.mxu0 %v6563
    %6817 = vmatprep.subr.bf16.mxu0 %v6560
    %6818 = vmatpush1.bf16.msra.mxu0 %v6559
    %6819 = vmatprep.subr.bf16.mxu0 %v6556
    %6820 = vmatpush1.bf16.msra.mxu0 %v6555
    %6821 = vmatprep.subr.bf16.mxu0 %v6552
    %6822 = vmatpush1.bf16.msra.mxu0 %v6551
    %6823 = vmatprep.subr.bf16.mxu0 %v6612
    %6824 = vmatpush2.bf16.msra.mxu0 %v6611
    %6825 = vmatprep.subr.bf16.mxu0 %v6608
    %6826 = vmatpush2.bf16.msra.mxu0 %v6607
    %6827 = vmatprep.subr.bf16.mxu0 %v6604
    %6828 = vmatpush2.bf16.msra.mxu0 %v6603
    %6829 = vmatprep.subr.bf16.mxu0 %v6600
    %6830 = vmatpush2.bf16.msra.mxu0 %v6599
    %6831 = vmatprep.subr.bf16.mxu0 %v6596
    %6832 = vmatpush2.bf16.msra.mxu0 %v6595
    %6833 = vmatprep.subr.bf16.mxu0 %v6592
    %6834 = vmatpush2.bf16.msra.mxu0 %v6591
    %6835 = vmatprep.subr.bf16.mxu0 %v6588
    %6836 = vmatpush2.bf16.msra.mxu0 %v6587
    %6837 = vmatprep.subr.bf16.mxu0 %v6584
    %6838 = vmatpush2.bf16.msra.mxu0 %v6583
    %6839 = vmatprep.mubr.bf16.mxu0 %v6030
    %6840 = vmatmul.mubr.bf16.gmra.mxu0 %v6029
    %v6841 = vpop.f32.mrf.mxu0
    %v6842 = vadd.f32 0.0, %v6841
    %v6843 = vpop.f32.mrf.mxu0
    %v6844 = vadd.f32 0.0, %v6843
    %v6845 = vpop.f32.mrf.mxu0
    %v6846 = vadd.f32 0.0, %v6845
    %v6847 = vpop.f32.mrf.mxu0
    %v6848 = vadd.f32 0.0, %v6847
    %6849 = vmatprep.mubr.bf16.mxu0 %v6034
    %6850 = vmatmul.mubr.bf16.gmra.mxu0 %v6033
    %v6851 = vpop.f32.mrf.mxu0
    %v6852 = vadd.f32 0.0, %v6851
    %v6853 = vpop.f32.mrf.mxu0
    %v6854 = vadd.f32 0.0, %v6853
    %v6855 = vpop.f32.mrf.mxu0
    %v6856 = vpop.f32.mrf.mxu0
    %6857 = vdwg.mxu0
    %6858 = vmatprep.subr.bf16.mxu0 %v6644
    %6859 = vmatpush1.bf16.msra.mxu0 %v6643
    %6860 = vmatprep.subr.bf16.mxu0 %v6640
    %6861 = vmatpush1.bf16.msra.mxu0 %v6639
    %6862 = vmatprep.subr.bf16.mxu0 %v6636
    %6863 = vmatpush1.bf16.msra.mxu0 %v6635
    %6864 = vmatprep.subr.bf16.mxu0 %v6632
    %6865 = vmatpush1.bf16.msra.mxu0 %v6631
    %6866 = vmatprep.subr.bf16.mxu0 %v6628
    %6867 = vmatpush1.bf16.msra.mxu0 %v6627
    %6868 = vmatprep.subr.bf16.mxu0 %v6624
    %6869 = vmatpush1.bf16.msra.mxu0 %v6623
    %6870 = vmatprep.subr.bf16.mxu0 %v6620
    %6871 = vmatpush1.bf16.msra.mxu0 %v6619
    %6872 = vmatprep.subr.bf16.mxu0 %v6616
    %6873 = vmatpush1.bf16.msra.mxu0 %v6615
    %6874 = vmatprep.subr.bf16.mxu0 %v6676
    %6875 = vmatpush2.bf16.msra.mxu0 %v6675
    %6876 = vmatprep.subr.bf16.mxu0 %v6672
    %6877 = vmatpush2.bf16.msra.mxu0 %v6671
    %6878 = vmatprep.subr.bf16.mxu0 %v6668
    %6879 = vmatpush2.bf16.msra.mxu0 %v6667
    %6880 = vmatprep.subr.bf16.mxu0 %v6664
    %6881 = vmatpush2.bf16.msra.mxu0 %v6663
    %6882 = vmatprep.subr.bf16.mxu0 %v6660
    %6883 = vmatpush2.bf16.msra.mxu0 %v6659
    %6884 = vmatprep.subr.bf16.mxu0 %v6656
    %6885 = vmatpush2.bf16.msra.mxu0 %v6655
    %6886 = vmatprep.subr.bf16.mxu0 %v6652
    %6887 = vmatpush2.bf16.msra.mxu0 %v6651
    %6888 = vmatprep.subr.bf16.mxu0 %v6648
    %6889 = vmatpush2.bf16.msra.mxu0 %v6647
    %6890 = vmatprep.mubr.bf16.mxu0 %v6032
    %6891 = vmatmul.mubr.bf16.gmra.mxu0 %v6031
    %v6892 = vpop.f32.mrf.mxu0
    %v6893 = vadd.f32 %v6842, %v6892
    %v6894 = vpop.f32.mrf.mxu0
    %v6895 = vadd.f32 %v6844, %v6894
    %v6896 = vpop.f32.mrf.mxu0
    %v6897 = vadd.f32 %v6846, %v6896
    %v6898 = vpop.f32.mrf.mxu0
    %v6899 = vadd.f32 %v6848, %v6898
    %6900 = vmatprep.mubr.bf16.mxu0 %v6036
    %6901 = vmatmul.mubr.bf16.gmra.mxu0 %v6035
    %v6902 = vpop.f32.mrf.mxu0
    %v6903 = vadd.f32 %v6852, %v6902
    %v6904 = vpop.f32.mrf.mxu0
    %v6905 = vadd.f32 %v6854, %v6904
    %v6906 = vpop.f32.mrf.mxu0
    %v6907 = vpop.f32.mrf.mxu0
    %6908 = vdwg.mxu0
    %6909 = vmatprep.subr.bf16.mxu0 %v6582
    %6910 = vmatpush1.bf16.msra.mxu0 %v6581
    %6911 = vmatprep.subr.bf16.mxu0 %v6578
    %6912 = vmatpush1.bf16.msra.mxu0 %v6577
    %6913 = vmatprep.subr.bf16.mxu0 %v6574
    %6914 = vmatpush1.bf16.msra.mxu0 %v6573
    %6915 = vmatprep.subr.bf16.mxu0 %v6570
    %6916 = vmatpush1.bf16.msra.mxu0 %v6569
    %6917 = vmatprep.subr.bf16.mxu0 %v6566
    %6918 = vmatpush1.bf16.msra.mxu0 %v6565
    %6919 = vmatprep.subr.bf16.mxu0 %v6562
    %6920 = vmatpush1.bf16.msra.mxu0 %v6561
    %6921 = vmatprep.subr.bf16.mxu0 %v6558
    %6922 = vmatpush1.bf16.msra.mxu0 %v6557
    %6923 = vmatprep.subr.bf16.mxu0 %v6554
    %6924 = vmatpush1.bf16.msra.mxu0 %v6553
    %6925 = vmatprep.subr.bf16.mxu0 %v6614
    %6926 = vmatpush2.bf16.msra.mxu0 %v6613
    %6927 = vmatprep.subr.bf16.mxu0 %v6610
    %6928 = vmatpush2.bf16.msra.mxu0 %v6609
    %6929 = vmatprep.subr.bf16.mxu0 %v6606
    %6930 = vmatpush2.bf16.msra.mxu0 %v6605
    %6931 = vmatprep.subr.bf16.mxu0 %v6602
    %6932 = vmatpush2.bf16.msra.mxu0 %v6601
    %6933 = vmatprep.subr.bf16.mxu0 %v6598
    %6934 = vmatpush2.bf16.msra.mxu0 %v6597
    %6935 = vmatprep.subr.bf16.mxu0 %v6594
    %6936 = vmatpush2.bf16.msra.mxu0 %v6593
    %6937 = vmatprep.subr.bf16.mxu0 %v6590
    %6938 = vmatpush2.bf16.msra.mxu0 %v6589
    %6939 = vmatprep.subr.bf16.mxu0 %v6586
    %6940 = vmatpush2.bf16.msra.mxu0 %v6585
    %6941 = vmatprep.mubr.bf16.mxu0 %v6030
    %6942 = vmatmul.mubr.bf16.gmra.mxu0 %v6029
    %v6943 = vpop.f32.mrf.mxu0
    %v6944 = vadd.f32 0.0, %v6943
    %v6945 = vpop.f32.mrf.mxu0
    %v6946 = vadd.f32 0.0, %v6945
    %v6947 = vpop.f32.mrf.mxu0
    %v6948 = vadd.f32 0.0, %v6947
    %v6949 = vpop.f32.mrf.mxu0
    %v6950 = vadd.f32 0.0, %v6949
    %6951 = vmatprep.mubr.bf16.mxu0 %v6034
    %6952 = vmatmul.mubr.bf16.gmra.mxu0 %v6033
    %v6953 = vpop.f32.mrf.mxu0
    %v6954 = vadd.f32 0.0, %v6953
    %v6955 = vpop.f32.mrf.mxu0
    %v6956 = vadd.f32 0.0, %v6955
    %v6957 = vpop.f32.mrf.mxu0
    %v6958 = vpop.f32.mrf.mxu0
    %6959 = vdwg.mxu0
    %6960 = vmatprep.subr.bf16.mxu0 %v6646
    %6961 = vmatpush1.bf16.msra.mxu0 %v6645
    %6962 = vmatprep.subr.bf16.mxu0 %v6642
    %6963 = vmatpush1.bf16.msra.mxu0 %v6641
    %6964 = vmatprep.subr.bf16.mxu0 %v6638
    %6965 = vmatpush1.bf16.msra.mxu0 %v6637
    %6966 = vmatprep.subr.bf16.mxu0 %v6634
    %6967 = vmatpush1.bf16.msra.mxu0 %v6633
    %6968 = vmatprep.subr.bf16.mxu0 %v6630
    %6969 = vmatpush1.bf16.msra.mxu0 %v6629
    %6970 = vmatprep.subr.bf16.mxu0 %v6626
    %6971 = vmatpush1.bf16.msra.mxu0 %v6625
    %6972 = vmatprep.subr.bf16.mxu0 %v6622
    %6973 = vmatpush1.bf16.msra.mxu0 %v6621
    %6974 = vmatprep.subr.bf16.mxu0 %v6618
    %6975 = vmatpush1.bf16.msra.mxu0 %v6617
    %6976 = vmatprep.subr.bf16.mxu0 %v6678
    %6977 = vmatpush2.bf16.msra.mxu0 %v6677
    %6978 = vmatprep.subr.bf16.mxu0 %v6674
    %6979 = vmatpush2.bf16.msra.mxu0 %v6673
    %6980 = vmatprep.subr.bf16.mxu0 %v6670
    %6981 = vmatpush2.bf16.msra.mxu0 %v6669
    %6982 = vmatprep.subr.bf16.mxu0 %v6666
    %6983 = vmatpush2.bf16.msra.mxu0 %v6665
    %6984 = vmatprep.subr.bf16.mxu0 %v6662
    %6985 = vmatpush2.bf16.msra.mxu0 %v6661
    %6986 = vmatprep.subr.bf16.mxu0 %v6658
    %6987 = vmatpush2.bf16.msra.mxu0 %v6657
    %6988 = vmatprep.subr.bf16.mxu0 %v6654
    %6989 = vmatpush2.bf16.msra.mxu0 %v6653
    %6990 = vmatprep.subr.bf16.mxu0 %v6650
    %6991 = vmatpush2.bf16.msra.mxu0 %v6649
    %6992 = vmatprep.mubr.bf16.mxu0 %v6032
    %6993 = vmatmul.mubr.bf16.gmra.mxu0 %v6031
    %v6994 = vpop.f32.mrf.mxu0
    %v6995 = vadd.f32 %v6944, %v6994
    %v6996 = vpop.f32.mrf.mxu0
    %v6997 = vadd.f32 %v6946, %v6996
    %v6998 = vpop.f32.mrf.mxu0
    %v6999 = vadd.f32 %v6948, %v6998
    %v7000 = vpop.f32.mrf.mxu0
    %v7001 = vadd.f32 %v6950, %v7000
    %7002 = vmatprep.mubr.bf16.mxu0 %v6036
    %7003 = vmatmul.mubr.bf16.gmra.mxu0 %v6035
    %v7004 = vpop.f32.mrf.mxu0
    %v7005 = vadd.f32 %v6954, %v7004
    %v7006 = vpop.f32.mrf.mxu0
    %v7007 = vadd.f32 %v6956, %v7006
    %v7008 = vpop.f32.mrf.mxu0
    %v7009 = vpop.f32.mrf.mxu0
    %7010 = vdwg.mxu0
    %v7011 = vadd.f32 %v6893, %v6897
    %v7012 = vadd.f32 %v7011, %v6903
    %v7013 = vrot.slane %v7012, 4
    %v7014 = vadd.f32 %v7012, %v7013
    %v7015 = vrot.slane %v7014, 2
    %v7016 = vadd.f32 %v7014, %v7015
    %v7017 = vrot.slane %v7016, 1
    %v7018 = vadd.f32 %v7016, %v7017
    %v7019 = vadd.f32 %v6895, %v6899
    %v7020 = vadd.f32 %v7019, %v6905
    %v7021 = vrot.slane %v7020, 4
    %v7022 = vadd.f32 %v7020, %v7021
    %v7023 = vrot.slane %v7022, 2
    %v7024 = vadd.f32 %v7022, %v7023
    %v7025 = vrot.slane %v7024, 1
    %v7026 = vadd.f32 %v7024, %v7025
    %v7027 = vadd.f32 %v6995, %v6999
    %v7028 = vadd.f32 %v7027, %v7005
    %v7029 = vrot.slane %v7028, 4
    %v7030 = vadd.f32 %v7028, %v7029
    %v7031 = vrot.slane %v7030, 2
    %v7032 = vadd.f32 %v7030, %v7031
    %v7033 = vrot.slane %v7032, 1
    %v7034 = vadd.f32 %v7032, %v7033
    %v7035 = vadd.f32 %v6997, %v7001
    %v7036 = vadd.f32 %v7035, %v7007
    %v7037 = vrot.slane %v7036, 4
    %v7038 = vadd.f32 %v7036, %v7037
    %v7039 = vrot.slane %v7038, 2
    %v7040 = vadd.f32 %v7038, %v7039
    %v7041 = vrot.slane %v7040, 1
    %v7042 = vadd.f32 %v7040, %v7041
    %v7043 = vrcp.pop 24.0
    %v7044 = vmul.f32 %v7018, %v7043
    %v7045 = vmul.f32 %v7026, %v7043
    %v7046 = vmul.f32 %v7034, %v7043
    %v7047 = vmul.f32 %v7042, %v7043
    %v7048 = vmul.f32 %v6893, %v6893
    %v7049 = vmul.f32 %v6895, %v6895
    %v7050 = vmul.f32 %v6995, %v6995
    %v7051 = vmul.f32 %v6997, %v6997
    %v7052 = vmul.f32 %v6897, %v6897
    %v7053 = vmul.f32 %v6899, %v6899
    %v7054 = vmul.f32 %v6999, %v6999
    %v7055 = vmul.f32 %v7001, %v7001
    %v7056 = vmul.f32 %v6903, %v6903
    %v7057 = vmul.f32 %v6905, %v6905
    %v7058 = vmul.f32 %v7005, %v7005
    %v7059 = vmul.f32 %v7007, %v7007
    %v7060 = vadd.f32 %v7048, %v7052
    %v7061 = vadd.f32 %v7060, %v7056
    %v7062 = vrot.slane %v7061, 4
    %v7063 = vadd.f32 %v7061, %v7062
    %v7064 = vrot.slane %v7063, 2
    %v7065 = vadd.f32 %v7063, %v7064
    %v7066 = vrot.slane %v7065, 1
    %v7067 = vadd.f32 %v7065, %v7066
    %v7068 = vadd.f32 %v7049, %v7053
    %v7069 = vadd.f32 %v7068, %v7057
    %v7070 = vrot.slane %v7069, 4
    %v7071 = vadd.f32 %v7069, %v7070
    %v7072 = vrot.slane %v7071, 2
    %v7073 = vadd.f32 %v7071, %v7072
    %v7074 = vrot.slane %v7073, 1
    %v7075 = vadd.f32 %v7073, %v7074
    %v7076 = vadd.f32 %v7050, %v7054
    %v7077 = vadd.f32 %v7076, %v7058
    %v7078 = vrot.slane %v7077, 4
    %v7079 = vadd.f32 %v7077, %v7078
    %v7080 = vrot.slane %v7079, 2
    %v7081 = vadd.f32 %v7079, %v7080
    %v7082 = vrot.slane %v7081, 1
    %v7083 = vadd.f32 %v7081, %v7082
    %v7084 = vadd.f32 %v7051, %v7055
    %v7085 = vadd.f32 %v7084, %v7059
    %v7086 = vrot.slane %v7085, 4
    %v7087 = vadd.f32 %v7085, %v7086
    %v7088 = vrot.slane %v7087, 2
    %v7089 = vadd.f32 %v7087, %v7088
    %v7090 = vrot.slane %v7089, 1
    %v7091 = vadd.f32 %v7089, %v7090
    %v7092 = vmul.f32 %v7067, %v7043
    %v7093 = vmul.f32 %v7075, %v7043
    %v7094 = vmul.f32 %v7083, %v7043
    %v7095 = vmul.f32 %v7091, %v7043
    %v7096 = vmul.f32 %v7044, %v7044
    %v7097 = vmul.f32 %v7045, %v7045
    %v7098 = vmul.f32 %v7046, %v7046
    %v7099 = vmul.f32 %v7047, %v7047
    %v7100 = vsub.f32 %v7092, %v7096
    %v7101 = vsub.f32 %v7093, %v7097
    %v7102 = vsub.f32 %v7094, %v7098
    %v7103 = vsub.f32 %v7095, %v7099
    %v7104 = vmax.f32 %v7100, 0.0
    %v7105 = vmax.f32 %v7101, 0.0
    %v7106 = vmax.f32 %v7102, 0.0
    %v7107 = vmax.f32 %v7103, 0.0
    %v7108 = vadd.f32 %v7104, 1e-05
    %v7109 = vadd.f32 %v7105, 1e-05
    %v7110 = vadd.f32 %v7106, 1e-05
    %v7111 = vadd.f32 %v7107, 1e-05
    %v7112 = vrsqrt.pop %v7108
    %v7113 = vrsqrt.pop %v7109
    %v7114 = vrsqrt.pop %v7110
    %v7115 = vrsqrt.pop %v7111
    %v7116 = vld [vmem:[%s19] sm:$0xf]
    %v7118 = vlaneseq
    %v7119 = vshrl.u32 %v7118, 7
    %v7120 = vsub.s32 0, %v7119
    %v7121 = vrot.slane %v7116, %v7120
    %v7122 = vlaneseq
    %v7123 = vshrl.u32 %v7122, 7
    %v7124 = vsub.s32 1, %v7123
    %v7125 = vrot.slane %v7116, %v7124
    %v7126 = vlaneseq
    %v7127 = vshrl.u32 %v7126, 7
    %v7128 = vsub.s32 2, %v7127
    %v7129 = vrot.slane %v7116, %v7128
    %v7130 = vlaneseq
    %v7131 = vshrl.u32 %v7130, 7
    %v7132 = vsub.s32 3, %v7131
    %v7133 = vrot.slane %v7116, %v7132
    %v7138 = vmul.f32 %v7112, %v7121
    %v7139 = vmul.f32 %v7113, %v7125
    %v7140 = vmul.f32 %v7114, %v7129
    %v7141 = vmul.f32 %v7115, %v7133
    %v7142 = vld [vmem:[%s20] sm:$0xf]
    %v7143 = vmul.f32 %v7044, %v7138
    %v7144 = vmul.f32 %v7045, %v7139
    %v7145 = vmul.f32 %v7046, %v7140
    %v7146 = vmul.f32 %v7047, %v7141
    %v7151 = vcombine.low %v7143, %v7144
    %v7152 = vcombine.low %v7145, %v7146
    %v7154 = vunpack.c.l.s4 1966171168
    %v7155 = vunpack.c.0.s8 %v7154
    %v7156 = vlaneseq
    %v7157 = vshrl.u32 %v7156, 7
    %v7158 = vsub.s32 %v7155, %v7157
    %v7159 = vrot.slane %v7151, %v7158
    %v7161 = vunpack.c.l.s4 1966171168
    %v7162 = vunpack.c.0.s8 %v7161
    %v7163 = vlaneseq
    %v7164 = vshrl.u32 %v7163, 7
    %v7165 = vsub.s32 %v7162, %v7164
    %v7166 = vrot.slane %v7152, %v7165
    %v7167 = vcombine.low %v7159, %v7166
    %v7169 = vunpack.c.l.s4 1966171168
    %v7170 = vunpack.c.0.s8 %v7169
    %v7171 = vlaneseq
    %v7172 = vshrl.u32 %v7171, 7
    %v7173 = vsub.s32 %v7170, %v7172
    %v7174 = vrot.slane %v7167, %v7173
    %v7176 = vsub.f32 %v7142, %v7174
    %v7177 = vlaneseq
    %v7178 = vshrl.u32 %v7177, 7
    %v7179 = vsub.s32 0, %v7178
    %v7180 = vrot.slane %v7138, %v7179
    %v7181 = vlaneseq
    %v7182 = vshrl.u32 %v7181, 7
    %v7183 = vsub.s32 0, %v7182
    %v7184 = vrot.slane %v7139, %v7183
    %v7185 = vlaneseq
    %v7186 = vshrl.u32 %v7185, 7
    %v7187 = vsub.s32 0, %v7186
    %v7188 = vrot.slane %v7140, %v7187
    %v7189 = vlaneseq
    %v7190 = vshrl.u32 %v7189, 7
    %v7191 = vsub.s32 0, %v7190
    %v7192 = vrot.slane %v7141, %v7191
    %v7193 = vmul.f32 %v6893, %v7180
    %v7194 = vmul.f32 %v6895, %v7184
    %v7195 = vmul.f32 %v6995, %v7188
    %v7196 = vmul.f32 %v6997, %v7192
    %v7197 = vmul.f32 %v6897, %v7180
    %v7198 = vmul.f32 %v6899, %v7184
    %v7199 = vmul.f32 %v6999, %v7188
    %v7200 = vmul.f32 %v7001, %v7192
    %v7201 = vmul.f32 %v6903, %v7180
    %v7202 = vmul.f32 %v6905, %v7184
    %v7203 = vmul.f32 %v7005, %v7188
    %v7204 = vmul.f32 %v7007, %v7192
    %v7206 = vlaneseq
    %v7207 = vshrl.u32 %v7206, 7
    %v7208 = vsub.s32 0, %v7207
    %v7209 = vrot.slane %v7176, %v7208
    %v7210 = vlaneseq
    %v7211 = vshrl.u32 %v7210, 7
    %v7212 = vsub.s32 1, %v7211
    %v7213 = vrot.slane %v7176, %v7212
    %v7214 = vlaneseq
    %v7215 = vshrl.u32 %v7214, 7
    %v7216 = vsub.s32 2, %v7215
    %v7217 = vrot.slane %v7176, %v7216
    %v7218 = vlaneseq
    %v7219 = vshrl.u32 %v7218, 7
    %v7220 = vsub.s32 3, %v7219
    %v7221 = vrot.slane %v7176, %v7220
    %v7226 = vadd.f32 %v7193, %v7209
    %v7227 = vadd.f32 %v7194, %v7213
    %v7228 = vadd.f32 %v7195, %v7217
    %v7229 = vadd.f32 %v7196, %v7221
    %v7230 = vadd.f32 %v7197, %v7209
    %v7231 = vadd.f32 %v7198, %v7213
    %v7232 = vadd.f32 %v7199, %v7217
    %v7233 = vadd.f32 %v7200, %v7221
    %v7234 = vadd.f32 %v7201, %v7209
    %v7235 = vadd.f32 %v7202, %v7213
    %v7236 = vadd.f32 %v7203, %v7217
    %v7237 = vadd.f32 %v7204, %v7221
    %vm7238 = vcmp.ge.f32.partialorder %v7226, 0.0
    %vm7239 = vcmp.ge.f32.partialorder %v7227, 0.0
    %vm7240 = vcmp.ge.f32.partialorder %v7228, 0.0
    %vm7241 = vcmp.ge.f32.partialorder %v7229, 0.0
    %vm7242 = vcmp.ge.f32.partialorder %v7230, 0.0
    %vm7243 = vcmp.ge.f32.partialorder %v7231, 0.0
    %vm7244 = vcmp.ge.f32.partialorder %v7232, 0.0
    %vm7245 = vcmp.ge.f32.partialorder %v7233, 0.0
    %vm7246 = vcmp.ge.f32.partialorder %v7234, 0.0
    %vm7247 = vcmp.ge.f32.partialorder %v7235, 0.0
    %vm7248 = vcmp.ge.f32.partialorder %v7236, 0.0
    %vm7249 = vcmp.ge.f32.partialorder %v7237, 0.0
    %v7250 = vstv %s6037
    %v7251 = vmul.f32 %v7250, %v7226
    %v7252 = vmul.f32 %v7250, %v7227
    %v7253 = vmul.f32 %v7250, %v7228
    %v7254 = vmul.f32 %v7250, %v7229
    %v7255 = vmul.f32 %v7250, %v7230
    %v7256 = vmul.f32 %v7250, %v7231
    %v7257 = vmul.f32 %v7250, %v7232
    %v7258 = vmul.f32 %v7250, %v7233
    %v7259 = vmul.f32 %v7250, %v7234
    %v7260 = vmul.f32 %v7250, %v7235
    %v7261 = vmul.f32 %v7250, %v7236
    %v7262 = vmul.f32 %v7250, %v7237
    %v7263 = vsel %vm7238, %v7226, %v7251
    %v7264 = vsel %vm7239, %v7227, %v7252
    %v7265 = vsel %vm7240, %v7228, %v7253
    %v7266 = vsel %vm7241, %v7229, %v7254
    %v7267 = vsel %vm7242, %v7230, %v7255
    %v7268 = vsel %vm7243, %v7231, %v7256
    %v7269 = vsel %vm7244, %v7232, %v7257
    %v7270 = vsel %vm7245, %v7233, %v7258
    %v7271 = vsel %vm7246, %v7234, %v7259
    %v7272 = vsel %vm7247, %v7235, %v7260
    %v7273 = vsel %vm7248, %v7236, %v7261
    %v7274 = vsel %vm7249, %v7237, %v7262
    %v7275 = vpack.c.bf16 %v7267, %v7263
    %v7276 = vpack.c.bf16 %v7268, %v7264
    %v7277 = vpack.c.bf16 %v7269, %v7265
    %v7278 = vpack.c.bf16 %v7270, %v7266
    %v7279 = vpack.c.bf16 %v7271, %v7271
    %v7280 = vpack.c.bf16 %v7272, %v7272
    %v7281 = vpack.c.bf16 %v7273, %v7273
    %v7282 = vpack.c.bf16 %v7274, %v7274
    %v7283 = vld [vmem:[#allocation13] sm:$0xff]
    %v7284 = vld [vmem:[#allocation13 + $0x8] sm:$0xff]
    %v7285 = vld [vmem:[#allocation13 + $0x10] sm:$0xff]
    %v7286 = vld [vmem:[#allocation13 + $0x18] sm:$0xff]
    %v7287 = vld [vmem:[#allocation13 + $0x20] sm:$0xff]
    %v7288 = vld [vmem:[#allocation13 + $0x28] sm:$0xff]
    %v7289 = vld [vmem:[#allocation13 + $0x30] sm:$0xff]
    %v7290 = vld [vmem:[#allocation13 + $0x38] sm:$0xff]
    %v7291 = vld [vmem:[#allocation13 + $0x40] sm:$0xff]
    %v7292 = vld [vmem:[#allocation13 + $0x48] sm:$0xff]
    %v7293 = vld [vmem:[#allocation13 + $0x50] sm:$0xff]
    %v7294 = vld [vmem:[#allocation13 + $0x58] sm:$0xff]
    %v7295 = vld [vmem:[#allocation13 + $0x60] sm:$0xff]
    %v7296 = vld [vmem:[#allocation13 + $0x68] sm:$0xff]
    %v7297 = vld [vmem:[#allocation13 + $0x70] sm:$0xff]
    %v7298 = vld [vmem:[#allocation13 + $0x78] sm:$0xff]
    %v7299 = vld [vmem:[#allocation13 + $0x80] sm:$0xff]
    %v7300 = vld [vmem:[#allocation13 + $0x88] sm:$0xff]
    %v7301 = vld [vmem:[#allocation13 + $0x90] sm:$0xff]
    %v7302 = vld [vmem:[#allocation13 + $0x98] sm:$0xff]
    %v7303 = vld [vmem:[#allocation13 + $0xa0] sm:$0xff]
    %v7304 = vld [vmem:[#allocation13 + $0xa8] sm:$0xff]
    %v7305 = vld [vmem:[#allocation13 + $0xb0] sm:$0xff]
    %v7306 = vld [vmem:[#allocation13 + $0xb8] sm:$0xff]
    %v7307 = vld [vmem:[#allocation13 + $0xc0] sm:$0xff]
    %v7308 = vld [vmem:[#allocation13 + $0xc8] sm:$0xff]
    %v7309 = vld [vmem:[#allocation13 + $0xd0] sm:$0xff]
    %v7310 = vld [vmem:[#allocation13 + $0xd8] sm:$0xff]
    %v7311 = vld [vmem:[#allocation13 + $0xe0] sm:$0xff]
    %v7312 = vld [vmem:[#allocation13 + $0xe8] sm:$0xff]
    %v7313 = vld [vmem:[#allocation13 + $0xf0] sm:$0xff]
    %v7314 = vld [vmem:[#allocation13 + $0xf8] sm:$0xff]
    %v7315 = vld [vmem:[#allocation13 + $0x100] sm:$0xff]
    %v7316 = vld [vmem:[#allocation13 + $0x108] sm:$0xff]
    %v7317 = vld [vmem:[#allocation13 + $0x110] sm:$0xff]
    %v7318 = vld [vmem:[#allocation13 + $0x118] sm:$0xff]
    %v7319 = vld [vmem:[#allocation13 + $0x120] sm:$0xff]
    %v7320 = vld [vmem:[#allocation13 + $0x128] sm:$0xff]
    %v7321 = vld [vmem:[#allocation13 + $0x130] sm:$0xff]
    %v7322 = vld [vmem:[#allocation13 + $0x138] sm:$0xff]
    %v7323 = vld [vmem:[#allocation13 + $0x140] sm:$0xff]
    %v7324 = vld [vmem:[#allocation13 + $0x148] sm:$0xff]
    %v7325 = vld [vmem:[#allocation13 + $0x150] sm:$0xff]
    %v7326 = vld [vmem:[#allocation13 + $0x158] sm:$0xff]
    %v7327 = vld [vmem:[#allocation13 + $0x160] sm:$0xff]
    %v7328 = vld [vmem:[#allocation13 + $0x168] sm:$0xff]
    %v7329 = vld [vmem:[#allocation13 + $0x170] sm:$0xff]
    %v7330 = vld [vmem:[#allocation13 + $0x178] sm:$0xff]
    %v7331 = vld [vmem:[#allocation13 + $0x180] sm:$0xff]
    %v7332 = vld [vmem:[#allocation13 + $0x188] sm:$0xff]
    %v7333 = vld [vmem:[#allocation13 + $0x190] sm:$0xff]
    %v7334 = vld [vmem:[#allocation13 + $0x198] sm:$0xff]
    %v7335 = vld [vmem:[#allocation13 + $0x1a0] sm:$0xff]
    %v7336 = vld [vmem:[#allocation13 + $0x1a8] sm:$0xff]
    %v7337 = vld [vmem:[#allocation13 + $0x1b0] sm:$0xff]
    %v7338 = vld [vmem:[#allocation13 + $0x1b8] sm:$0xff]
    %v7339 = vld [vmem:[#allocation13 + $0x1c0] sm:$0xff]
    %v7340 = vld [vmem:[#allocation13 + $0x1c8] sm:$0xff]
    %v7341 = vld [vmem:[#allocation13 + $0x1d0] sm:$0xff]
    %v7342 = vld [vmem:[#allocation13 + $0x1d8] sm:$0xff]
    %v7343 = vld [vmem:[#allocation13 + $0x1e0] sm:$0xff]
    %v7344 = vld [vmem:[#allocation13 + $0x1e8] sm:$0xff]
    %v7345 = vld [vmem:[#allocation13 + $0x1f0] sm:$0xff]
    %v7346 = vld [vmem:[#allocation13 + $0x1f8] sm:$0xff]
    %v7347 = vld [vmem:[#allocation13 + $0x200] sm:$0xff]
    %v7348 = vld [vmem:[#allocation13 + $0x208] sm:$0xff]
    %v7349 = vld [vmem:[#allocation13 + $0x210] sm:$0xff]
    %v7350 = vld [vmem:[#allocation13 + $0x218] sm:$0xff]
    %v7351 = vld [vmem:[#allocation13 + $0x220] sm:$0xff]
    %v7352 = vld [vmem:[#allocation13 + $0x228] sm:$0xff]
    %v7353 = vld [vmem:[#allocation13 + $0x230] sm:$0xff]
    %v7354 = vld [vmem:[#allocation13 + $0x238] sm:$0xff]
    %v7355 = vld [vmem:[#allocation13 + $0x240] sm:$0xff]
    %v7356 = vld [vmem:[#allocation13 + $0x248] sm:$0xff]
    %v7357 = vld [vmem:[#allocation13 + $0x250] sm:$0xff]
    %v7358 = vld [vmem:[#allocation13 + $0x258] sm:$0xff]
    %v7359 = vld [vmem:[#allocation13 + $0x260] sm:$0xff]
    %v7360 = vld [vmem:[#allocation13 + $0x268] sm:$0xff]
    %v7361 = vld [vmem:[#allocation13 + $0x270] sm:$0xff]
    %v7362 = vld [vmem:[#allocation13 + $0x278] sm:$0xff]
    %v7363 = vld [vmem:[#allocation13 + $0x280] sm:$0xff]
    %v7364 = vld [vmem:[#allocation13 + $0x288] sm:$0xff]
    %v7365 = vld [vmem:[#allocation13 + $0x290] sm:$0xff]
    %v7366 = vld [vmem:[#allocation13 + $0x298] sm:$0xff]
    %v7367 = vld [vmem:[#allocation13 + $0x2a0] sm:$0xff]
    %v7368 = vld [vmem:[#allocation13 + $0x2a8] sm:$0xff]
    %v7369 = vld [vmem:[#allocation13 + $0x2b0] sm:$0xff]
    %v7370 = vld [vmem:[#allocation13 + $0x2b8] sm:$0xff]
    %v7371 = vld [vmem:[#allocation13 + $0x2c0] sm:$0xff]
    %v7372 = vld [vmem:[#allocation13 + $0x2c8] sm:$0xff]
    %v7373 = vld [vmem:[#allocation13 + $0x2d0] sm:$0xff]
    %v7374 = vld [vmem:[#allocation13 + $0x2d8] sm:$0xff]
    %v7375 = vld [vmem:[#allocation13 + $0x2e0] sm:$0xff]
    %v7376 = vld [vmem:[#allocation13 + $0x2e8] sm:$0xff]
    %v7377 = vld [vmem:[#allocation13 + $0x2f0] sm:$0xff]
    %v7378 = vld [vmem:[#allocation13 + $0x2f8] sm:$0xff]
    %v7379 = vld [vmem:[#allocation13 + $0x300] sm:$0xff]
    %v7380 = vld [vmem:[#allocation13 + $0x308] sm:$0xff]
    %v7381 = vld [vmem:[#allocation13 + $0x310] sm:$0xff]
    %v7382 = vld [vmem:[#allocation13 + $0x318] sm:$0xff]
    %v7383 = vld [vmem:[#allocation13 + $0x320] sm:$0xff]
    %v7384 = vld [vmem:[#allocation13 + $0x328] sm:$0xff]
    %v7385 = vld [vmem:[#allocation13 + $0x330] sm:$0xff]
    %v7386 = vld [vmem:[#allocation13 + $0x338] sm:$0xff]
    %v7387 = vld [vmem:[#allocation13 + $0x340] sm:$0xff]
    %v7388 = vld [vmem:[#allocation13 + $0x348] sm:$0xff]
    %v7389 = vld [vmem:[#allocation13 + $0x350] sm:$0xff]
    %v7390 = vld [vmem:[#allocation13 + $0x358] sm:$0xff]
    %v7391 = vld [vmem:[#allocation13 + $0x360] sm:$0xff]
    %v7392 = vld [vmem:[#allocation13 + $0x368] sm:$0xff]
    %v7393 = vld [vmem:[#allocation13 + $0x370] sm:$0xff]
    %v7394 = vld [vmem:[#allocation13 + $0x378] sm:$0xff]
    %v7395 = vld [vmem:[#allocation13 + $0x380] sm:$0xff]
    %v7396 = vld [vmem:[#allocation13 + $0x388] sm:$0xff]
    %v7397 = vld [vmem:[#allocation13 + $0x390] sm:$0xff]
    %v7398 = vld [vmem:[#allocation13 + $0x398] sm:$0xff]
    %v7399 = vld [vmem:[#allocation13 + $0x3a0] sm:$0xff]
    %v7400 = vld [vmem:[#allocation13 + $0x3a8] sm:$0xff]
    %v7401 = vld [vmem:[#allocation13 + $0x3b0] sm:$0xff]
    %v7402 = vld [vmem:[#allocation13 + $0x3b8] sm:$0xff]
    %v7403 = vld [vmem:[#allocation13 + $0x3c0] sm:$0xff]
    %v7404 = vld [vmem:[#allocation13 + $0x3c8] sm:$0xff]
    %v7405 = vld [vmem:[#allocation13 + $0x3d0] sm:$0xff]
    %v7406 = vld [vmem:[#allocation13 + $0x3d8] sm:$0xff]
    %v7407 = vld [vmem:[#allocation13 + $0x3e0] sm:$0xff]
    %v7408 = vld [vmem:[#allocation13 + $0x3e8] sm:$0xff]
    %v7409 = vld [vmem:[#allocation13 + $0x3f0] sm:$0xff]
    %v7410 = vld [vmem:[#allocation13 + $0x3f8] sm:$0xff]
    %v7539 = vunpack.c.l.b16 %v7283
    %v7540 = vunpack.c.h.b16 %v7283
    %v7541 = vunpack.c.l.b16 %v7284
    %v7542 = vunpack.c.h.b16 %v7284
    %v7543 = vunpack.c.l.b16 %v7285
    %v7544 = vunpack.c.h.b16 %v7285
    %v7545 = vunpack.c.l.b16 %v7286
    %v7546 = vunpack.c.h.b16 %v7286
    %v7547 = vunpack.c.l.b16 %v7287
    %v7548 = vunpack.c.h.b16 %v7287
    %v7549 = vunpack.c.l.b16 %v7288
    %v7550 = vunpack.c.h.b16 %v7288
    %v7551 = vunpack.c.l.b16 %v7289
    %v7552 = vunpack.c.h.b16 %v7289
    %v7553 = vunpack.c.l.b16 %v7290
    %v7554 = vunpack.c.h.b16 %v7290
    %v7555 = vunpack.c.l.b16 %v7291
    %v7556 = vunpack.c.h.b16 %v7291
    %v7557 = vunpack.c.l.b16 %v7292
    %v7558 = vunpack.c.h.b16 %v7292
    %v7559 = vunpack.c.l.b16 %v7293
    %v7560 = vunpack.c.h.b16 %v7293
    %v7561 = vunpack.c.l.b16 %v7294
    %v7562 = vunpack.c.h.b16 %v7294
    %v7563 = vunpack.c.l.b16 %v7295
    %v7564 = vunpack.c.h.b16 %v7295
    %v7565 = vunpack.c.l.b16 %v7296
    %v7566 = vunpack.c.h.b16 %v7296
    %v7567 = vunpack.c.l.b16 %v7297
    %v7568 = vunpack.c.h.b16 %v7297
    %v7569 = vunpack.c.l.b16 %v7298
    %v7570 = vunpack.c.h.b16 %v7298
    %v7571 = vunpack.c.l.b16 %v7299
    %v7572 = vunpack.c.h.b16 %v7299
    %v7573 = vunpack.c.l.b16 %v7300
    %v7574 = vunpack.c.h.b16 %v7300
    %v7575 = vunpack.c.l.b16 %v7301
    %v7576 = vunpack.c.h.b16 %v7301
    %v7577 = vunpack.c.l.b16 %v7302
    %v7578 = vunpack.c.h.b16 %v7302
    %v7579 = vunpack.c.l.b16 %v7303
    %v7580 = vunpack.c.h.b16 %v7303
    %v7581 = vunpack.c.l.b16 %v7304
    %v7582 = vunpack.c.h.b16 %v7304
    %v7583 = vunpack.c.l.b16 %v7305
    %v7584 = vunpack.c.h.b16 %v7305
    %v7585 = vunpack.c.l.b16 %v7306
    %v7586 = vunpack.c.h.b16 %v7306
    %v7587 = vunpack.c.l.b16 %v7307
    %v7588 = vunpack.c.h.b16 %v7307
    %v7589 = vunpack.c.l.b16 %v7308
    %v7590 = vunpack.c.h.b16 %v7308
    %v7591 = vunpack.c.l.b16 %v7309
    %v7592 = vunpack.c.h.b16 %v7309
    %v7593 = vunpack.c.l.b16 %v7310
    %v7594 = vunpack.c.h.b16 %v7310
    %v7595 = vunpack.c.l.b16 %v7311
    %v7596 = vunpack.c.h.b16 %v7311
    %v7597 = vunpack.c.l.b16 %v7312
    %v7598 = vunpack.c.h.b16 %v7312
    %v7599 = vunpack.c.l.b16 %v7313
    %v7600 = vunpack.c.h.b16 %v7313
    %v7601 = vunpack.c.l.b16 %v7314
    %v7602 = vunpack.c.h.b16 %v7314
    %v7603 = vunpack.c.l.b16 %v7315
    %v7604 = vunpack.c.h.b16 %v7315
    %v7605 = vunpack.c.l.b16 %v7316
    %v7606 = vunpack.c.h.b16 %v7316
    %v7607 = vunpack.c.l.b16 %v7317
    %v7608 = vunpack.c.h.b16 %v7317
    %v7609 = vunpack.c.l.b16 %v7318
    %v7610 = vunpack.c.h.b16 %v7318
    %v7611 = vunpack.c.l.b16 %v7319
    %v7612 = vunpack.c.h.b16 %v7319
    %v7613 = vunpack.c.l.b16 %v7320
    %v7614 = vunpack.c.h.b16 %v7320
    %v7615 = vunpack.c.l.b16 %v7321
    %v7616 = vunpack.c.h.b16 %v7321
    %v7617 = vunpack.c.l.b16 %v7322
    %v7618 = vunpack.c.h.b16 %v7322
    %v7619 = vunpack.c.l.b16 %v7323
    %v7620 = vunpack.c.h.b16 %v7323
    %v7621 = vunpack.c.l.b16 %v7324
    %v7622 = vunpack.c.h.b16 %v7324
    %v7623 = vunpack.c.l.b16 %v7325
    %v7624 = vunpack.c.h.b16 %v7325
    %v7625 = vunpack.c.l.b16 %v7326
    %v7626 = vunpack.c.h.b16 %v7326
    %v7627 = vunpack.c.l.b16 %v7327
    %v7628 = vunpack.c.h.b16 %v7327
    %v7629 = vunpack.c.l.b16 %v7328
    %v7630 = vunpack.c.h.b16 %v7328
    %v7631 = vunpack.c.l.b16 %v7329
    %v7632 = vunpack.c.h.b16 %v7329
    %v7633 = vunpack.c.l.b16 %v7330
    %v7634 = vunpack.c.h.b16 %v7330
    %v7635 = vunpack.c.l.b16 %v7331
    %v7636 = vunpack.c.h.b16 %v7331
    %v7637 = vunpack.c.l.b16 %v7332
    %v7638 = vunpack.c.h.b16 %v7332
    %v7639 = vunpack.c.l.b16 %v7333
    %v7640 = vunpack.c.h.b16 %v7333
    %v7641 = vunpack.c.l.b16 %v7334
    %v7642 = vunpack.c.h.b16 %v7334
    %v7643 = vunpack.c.l.b16 %v7335
    %v7644 = vunpack.c.h.b16 %v7335
    %v7645 = vunpack.c.l.b16 %v7336
    %v7646 = vunpack.c.h.b16 %v7336
    %v7647 = vunpack.c.l.b16 %v7337
    %v7648 = vunpack.c.h.b16 %v7337
    %v7649 = vunpack.c.l.b16 %v7338
    %v7650 = vunpack.c.h.b16 %v7338
    %v7651 = vunpack.c.l.b16 %v7339
    %v7652 = vunpack.c.h.b16 %v7339
    %v7653 = vunpack.c.l.b16 %v7340
    %v7654 = vunpack.c.h.b16 %v7340
    %v7655 = vunpack.c.l.b16 %v7341
    %v7656 = vunpack.c.h.b16 %v7341
    %v7657 = vunpack.c.l.b16 %v7342
    %v7658 = vunpack.c.h.b16 %v7342
    %v7659 = vunpack.c.l.b16 %v7343
    %v7660 = vunpack.c.h.b16 %v7343
    %v7661 = vunpack.c.l.b16 %v7344
    %v7662 = vunpack.c.h.b16 %v7344
    %v7663 = vunpack.c.l.b16 %v7345
    %v7664 = vunpack.c.h.b16 %v7345
    %v7665 = vunpack.c.l.b16 %v7346
    %v7666 = vunpack.c.h.b16 %v7346
    %v7667 = vunpack.c.l.b16 %v7347
    %v7668 = vunpack.c.h.b16 %v7347
    %v7669 = vunpack.c.l.b16 %v7348
    %v7670 = vunpack.c.h.b16 %v7348
    %v7671 = vunpack.c.l.b16 %v7349
    %v7672 = vunpack.c.h.b16 %v7349
    %v7673 = vunpack.c.l.b16 %v7350
    %v7674 = vunpack.c.h.b16 %v7350
    %v7675 = vunpack.c.l.b16 %v7351
    %v7676 = vunpack.c.h.b16 %v7351
    %v7677 = vunpack.c.l.b16 %v7352
    %v7678 = vunpack.c.h.b16 %v7352
    %v7679 = vunpack.c.l.b16 %v7353
    %v7680 = vunpack.c.h.b16 %v7353
    %v7681 = vunpack.c.l.b16 %v7354
    %v7682 = vunpack.c.h.b16 %v7354
    %v7683 = vunpack.c.l.b16 %v7355
    %v7684 = vunpack.c.h.b16 %v7355
    %v7685 = vunpack.c.l.b16 %v7356
    %v7686 = vunpack.c.h.b16 %v7356
    %v7687 = vunpack.c.l.b16 %v7357
    %v7688 = vunpack.c.h.b16 %v7357
    %v7689 = vunpack.c.l.b16 %v7358
    %v7690 = vunpack.c.h.b16 %v7358
    %v7691 = vunpack.c.l.b16 %v7359
    %v7692 = vunpack.c.h.b16 %v7359
    %v7693 = vunpack.c.l.b16 %v7360
    %v7694 = vunpack.c.h.b16 %v7360
    %v7695 = vunpack.c.l.b16 %v7361
    %v7696 = vunpack.c.h.b16 %v7361
    %v7697 = vunpack.c.l.b16 %v7362
    %v7698 = vunpack.c.h.b16 %v7362
    %v7699 = vunpack.c.l.b16 %v7363
    %v7700 = vunpack.c.h.b16 %v7363
    %v7701 = vunpack.c.l.b16 %v7364
    %v7702 = vunpack.c.h.b16 %v7364
    %v7703 = vunpack.c.l.b16 %v7365
    %v7704 = vunpack.c.h.b16 %v7365
    %v7705 = vunpack.c.l.b16 %v7366
    %v7706 = vunpack.c.h.b16 %v7366
    %v7707 = vunpack.c.l.b16 %v7367
    %v7708 = vunpack.c.h.b16 %v7367
    %v7709 = vunpack.c.l.b16 %v7368
    %v7710 = vunpack.c.h.b16 %v7368
    %v7711 = vunpack.c.l.b16 %v7369
    %v7712 = vunpack.c.h.b16 %v7369
    %v7713 = vunpack.c.l.b16 %v7370
    %v7714 = vunpack.c.h.b16 %v7370
    %v7715 = vunpack.c.l.b16 %v7371
    %v7716 = vunpack.c.h.b16 %v7371
    %v7717 = vunpack.c.l.b16 %v7372
    %v7718 = vunpack.c.h.b16 %v7372
    %v7719 = vunpack.c.l.b16 %v7373
    %v7720 = vunpack.c.h.b16 %v7373
    %v7721 = vunpack.c.l.b16 %v7374
    %v7722 = vunpack.c.h.b16 %v7374
    %v7723 = vunpack.c.l.b16 %v7375
    %v7724 = vunpack.c.h.b16 %v7375
    %v7725 = vunpack.c.l.b16 %v7376
    %v7726 = vunpack.c.h.b16 %v7376
    %v7727 = vunpack.c.l.b16 %v7377
    %v7728 = vunpack.c.h.b16 %v7377
    %v7729 = vunpack.c.l.b16 %v7378
    %v7730 = vunpack.c.h.b16 %v7378
    %v7731 = vunpack.c.l.b16 %v7379
    %v7732 = vunpack.c.h.b16 %v7379
    %v7733 = vunpack.c.l.b16 %v7380
    %v7734 = vunpack.c.h.b16 %v7380
    %v7735 = vunpack.c.l.b16 %v7381
    %v7736 = vunpack.c.h.b16 %v7381
    %v7737 = vunpack.c.l.b16 %v7382
    %v7738 = vunpack.c.h.b16 %v7382
    %v7739 = vunpack.c.l.b16 %v7383
    %v7740 = vunpack.c.h.b16 %v7383
    %v7741 = vunpack.c.l.b16 %v7384
    %v7742 = vunpack.c.h.b16 %v7384
    %v7743 = vunpack.c.l.b16 %v7385
    %v7744 = vunpack.c.h.b16 %v7385
    %v7745 = vunpack.c.l.b16 %v7386
    %v7746 = vunpack.c.h.b16 %v7386
    %v7747 = vunpack.c.l.b16 %v7387
    %v7748 = vunpack.c.h.b16 %v7387
    %v7749 = vunpack.c.l.b16 %v7388
    %v7750 = vunpack.c.h.b16 %v7388
    %v7751 = vunpack.c.l.b16 %v7389
    %v7752 = vunpack.c.h.b16 %v7389
    %v7753 = vunpack.c.l.b16 %v7390
    %v7754 = vunpack.c.h.b16 %v7390
    %v7755 = vunpack.c.l.b16 %v7391
    %v7756 = vunpack.c.h.b16 %v7391
    %v7757 = vunpack.c.l.b16 %v7392
    %v7758 = vunpack.c.h.b16 %v7392
    %v7759 = vunpack.c.l.b16 %v7393
    %v7760 = vunpack.c.h.b16 %v7393
    %v7761 = vunpack.c.l.b16 %v7394
    %v7762 = vunpack.c.h.b16 %v7394
    %v7763 = vunpack.c.l.b16 %v7395
    %v7764 = vunpack.c.h.b16 %v7395
    %v7765 = vunpack.c.l.b16 %v7396
    %v7766 = vunpack.c.h.b16 %v7396
    %v7767 = vunpack.c.l.b16 %v7397
    %v7768 = vunpack.c.h.b16 %v7397
    %v7769 = vunpack.c.l.b16 %v7398
    %v7770 = vunpack.c.h.b16 %v7398
    %v7771 = vunpack.c.l.b16 %v7399
    %v7772 = vunpack.c.h.b16 %v7399
    %v7773 = vunpack.c.l.b16 %v7400
    %v7774 = vunpack.c.h.b16 %v7400
    %v7775 = vunpack.c.l.b16 %v7401
    %v7776 = vunpack.c.h.b16 %v7401
    %v7777 = vunpack.c.l.b16 %v7402
    %v7778 = vunpack.c.h.b16 %v7402
    %v7779 = vunpack.c.l.b16 %v7403
    %v7780 = vunpack.c.h.b16 %v7403
    %v7781 = vunpack.c.l.b16 %v7404
    %v7782 = vunpack.c.h.b16 %v7404
    %v7783 = vunpack.c.l.b16 %v7405
    %v7784 = vunpack.c.h.b16 %v7405
    %v7785 = vunpack.c.l.b16 %v7406
    %v7786 = vunpack.c.h.b16 %v7406
    %v7787 = vunpack.c.l.b16 %v7407
    %v7788 = vunpack.c.h.b16 %v7407
    %v7789 = vunpack.c.l.b16 %v7408
    %v7790 = vunpack.c.h.b16 %v7408
    %v7791 = vunpack.c.l.b16 %v7409
    %v7792 = vunpack.c.h.b16 %v7409
    %v7793 = vunpack.c.l.b16 %v7410
    %v7794 = vunpack.c.h.b16 %v7410
    %v7795 = vpack.c.b16 %v7543, %v7539
    %v7796 = vpack.c.b16 %v7544, %v7540
    %v7797 = vpack.c.b16 %v7545, %v7541
    %v7798 = vpack.c.b16 %v7546, %v7542
    %v7799 = vpack.c.b16 %v7551, %v7547
    %v7800 = vpack.c.b16 %v7552, %v7548
    %v7801 = vpack.c.b16 %v7553, %v7549
    %v7802 = vpack.c.b16 %v7554, %v7550
    %v7803 = vpack.c.b16 %v7559, %v7555
    %v7804 = vpack.c.b16 %v7560, %v7556
    %v7805 = vpack.c.b16 %v7561, %v7557
    %v7806 = vpack.c.b16 %v7562, %v7558
    %v7807 = vpack.c.b16 %v7567, %v7563
    %v7808 = vpack.c.b16 %v7568, %v7564
    %v7809 = vpack.c.b16 %v7569, %v7565
    %v7810 = vpack.c.b16 %v7570, %v7566
    %v7811 = vpack.c.b16 %v7575, %v7571
    %v7812 = vpack.c.b16 %v7576, %v7572
    %v7813 = vpack.c.b16 %v7577, %v7573
    %v7814 = vpack.c.b16 %v7578, %v7574
    %v7815 = vpack.c.b16 %v7583, %v7579
    %v7816 = vpack.c.b16 %v7584, %v7580
    %v7817 = vpack.c.b16 %v7585, %v7581
    %v7818 = vpack.c.b16 %v7586, %v7582
    %v7819 = vpack.c.b16 %v7591, %v7587
    %v7820 = vpack.c.b16 %v7592, %v7588
    %v7821 = vpack.c.b16 %v7593, %v7589
    %v7822 = vpack.c.b16 %v7594, %v7590
    %v7823 = vpack.c.b16 %v7599, %v7595
    %v7824 = vpack.c.b16 %v7600, %v7596
    %v7825 = vpack.c.b16 %v7601, %v7597
    %v7826 = vpack.c.b16 %v7602, %v7598
    %v7827 = vpack.c.b16 %v7607, %v7603
    %v7828 = vpack.c.b16 %v7608, %v7604
    %v7829 = vpack.c.b16 %v7609, %v7605
    %v7830 = vpack.c.b16 %v7610, %v7606
    %v7831 = vpack.c.b16 %v7615, %v7611
    %v7832 = vpack.c.b16 %v7616, %v7612
    %v7833 = vpack.c.b16 %v7617, %v7613
    %v7834 = vpack.c.b16 %v7618, %v7614
    %v7835 = vpack.c.b16 %v7623, %v7619
    %v7836 = vpack.c.b16 %v7624, %v7620
    %v7837 = vpack.c.b16 %v7625, %v7621
    %v7838 = vpack.c.b16 %v7626, %v7622
    %v7839 = vpack.c.b16 %v7631, %v7627
    %v7840 = vpack.c.b16 %v7632, %v7628
    %v7841 = vpack.c.b16 %v7633, %v7629
    %v7842 = vpack.c.b16 %v7634, %v7630
    %v7843 = vpack.c.b16 %v7639, %v7635
    %v7844 = vpack.c.b16 %v7640, %v7636
    %v7845 = vpack.c.b16 %v7641, %v7637
    %v7846 = vpack.c.b16 %v7642, %v7638
    %v7847 = vpack.c.b16 %v7647, %v7643
    %v7848 = vpack.c.b16 %v7648, %v7644
    %v7849 = vpack.c.b16 %v7649, %v7645
    %v7850 = vpack.c.b16 %v7650, %v7646
    %v7851 = vpack.c.b16 %v7655, %v7651
    %v7852 = vpack.c.b16 %v7656, %v7652
    %v7853 = vpack.c.b16 %v7657, %v7653
    %v7854 = vpack.c.b16 %v7658, %v7654
    %v7855 = vpack.c.b16 %v7663, %v7659
    %v7856 = vpack.c.b16 %v7664, %v7660
    %v7857 = vpack.c.b16 %v7665, %v7661
    %v7858 = vpack.c.b16 %v7666, %v7662
    %v7859 = vpack.c.b16 %v7671, %v7667
    %v7860 = vpack.c.b16 %v7672, %v7668
    %v7861 = vpack.c.b16 %v7673, %v7669
    %v7862 = vpack.c.b16 %v7674, %v7670
    %v7863 = vpack.c.b16 %v7679, %v7675
    %v7864 = vpack.c.b16 %v7680, %v7676
    %v7865 = vpack.c.b16 %v7681, %v7677
    %v7866 = vpack.c.b16 %v7682, %v7678
    %v7867 = vpack.c.b16 %v7687, %v7683
    %v7868 = vpack.c.b16 %v7688, %v7684
    %v7869 = vpack.c.b16 %v7689, %v7685
    %v7870 = vpack.c.b16 %v7690, %v7686
    %v7871 = vpack.c.b16 %v7695, %v7691
    %v7872 = vpack.c.b16 %v7696, %v7692
    %v7873 = vpack.c.b16 %v7697, %v7693
    %v7874 = vpack.c.b16 %v7698, %v7694
    %v7875 = vpack.c.b16 %v7703, %v7699
    %v7876 = vpack.c.b16 %v7704, %v7700
    %v7877 = vpack.c.b16 %v7705, %v7701
    %v7878 = vpack.c.b16 %v7706, %v7702
    %v7879 = vpack.c.b16 %v7711, %v7707
    %v7880 = vpack.c.b16 %v7712, %v7708
    %v7881 = vpack.c.b16 %v7713, %v7709
    %v7882 = vpack.c.b16 %v7714, %v7710
    %v7883 = vpack.c.b16 %v7719, %v7715
    %v7884 = vpack.c.b16 %v7720, %v7716
    %v7885 = vpack.c.b16 %v7721, %v7717
    %v7886 = vpack.c.b16 %v7722, %v7718
    %v7887 = vpack.c.b16 %v7727, %v7723
    %v7888 = vpack.c.b16 %v7728, %v7724
    %v7889 = vpack.c.b16 %v7729, %v7725
    %v7890 = vpack.c.b16 %v7730, %v7726
    %v7891 = vpack.c.b16 %v7735, %v7731
    %v7892 = vpack.c.b16 %v7736, %v7732
    %v7893 = vpack.c.b16 %v7737, %v7733
    %v7894 = vpack.c.b16 %v7738, %v7734
    %v7895 = vpack.c.b16 %v7743, %v7739
    %v7896 = vpack.c.b16 %v7744, %v7740
    %v7897 = vpack.c.b16 %v7745, %v7741
    %v7898 = vpack.c.b16 %v7746, %v7742
    %v7899 = vpack.c.b16 %v7751, %v7747
    %v7900 = vpack.c.b16 %v7752, %v7748
    %v7901 = vpack.c.b16 %v7753, %v7749
    %v7902 = vpack.c.b16 %v7754, %v7750
    %v7903 = vpack.c.b16 %v7759, %v7755
    %v7904 = vpack.c.b16 %v7760, %v7756
    %v7905 = vpack.c.b16 %v7761, %v7757
    %v7906 = vpack.c.b16 %v7762, %v7758
    %v7907 = vpack.c.b16 %v7767, %v7763
    %v7908 = vpack.c.b16 %v7768, %v7764
    %v7909 = vpack.c.b16 %v7769, %v7765
    %v7910 = vpack.c.b16 %v7770, %v7766
    %v7911 = vpack.c.b16 %v7775, %v7771
    %v7912 = vpack.c.b16 %v7776, %v7772
    %v7913 = vpack.c.b16 %v7777, %v7773
    %v7914 = vpack.c.b16 %v7778, %v7774
    %v7915 = vpack.c.b16 %v7783, %v7779
    %v7916 = vpack.c.b16 %v7784, %v7780
    %v7917 = vpack.c.b16 %v7785, %v7781
    %v7918 = vpack.c.b16 %v7786, %v7782
    %v7919 = vpack.c.b16 %v7791, %v7787
    %v7920 = vpack.c.b16 %v7792, %v7788
    %v7921 = vpack.c.b16 %v7793, %v7789
    %v7922 = vpack.c.b16 %v7794, %v7790
    %8051 = vmatprep.subr.bf16.mxu0 %v7824
    %8052 = vmatpush1.bf16.msra.mxu0 %v7823
    %8053 = vmatprep.subr.bf16.mxu0 %v7820
    %8054 = vmatpush1.bf16.msra.mxu0 %v7819
    %8055 = vmatprep.subr.bf16.mxu0 %v7816
    %8056 = vmatpush1.bf16.msra.mxu0 %v7815
    %8057 = vmatprep.subr.bf16.mxu0 %v7812
    %8058 = vmatpush1.bf16.msra.mxu0 %v7811
    %8059 = vmatprep.subr.bf16.mxu0 %v7808
    %8060 = vmatpush1.bf16.msra.mxu0 %v7807
    %8061 = vmatprep.subr.bf16.mxu0 %v7804
    %8062 = vmatpush1.bf16.msra.mxu0 %v7803
    %8063 = vmatprep.subr.bf16.mxu0 %v7800
    %8064 = vmatpush1.bf16.msra.mxu0 %v7799
    %8065 = vmatprep.subr.bf16.mxu0 %v7796
    %8066 = vmatpush1.bf16.msra.mxu0 %v7795
    %8067 = vmatprep.subr.bf16.mxu0 %v7856
    %8068 = vmatpush2.bf16.msra.mxu0 %v7855
    %8069 = vmatprep.subr.bf16.mxu0 %v7852
    %8070 = vmatpush2.bf16.msra.mxu0 %v7851
    %8071 = vmatprep.subr.bf16.mxu0 %v7848
    %8072 = vmatpush2.bf16.msra.mxu0 %v7847
    %8073 = vmatprep.subr.bf16.mxu0 %v7844
    %8074 = vmatpush2.bf16.msra.mxu0 %v7843
    %8075 = vmatprep.subr.bf16.mxu0 %v7840
    %8076 = vmatpush2.bf16.msra.mxu0 %v7839
    %8077 = vmatprep.subr.bf16.mxu0 %v7836
    %8078 = vmatpush2.bf16.msra.mxu0 %v7835
    %8079 = vmatprep.subr.bf16.mxu0 %v7832
    %8080 = vmatpush2.bf16.msra.mxu0 %v7831
    %8081 = vmatprep.subr.bf16.mxu0 %v7828
    %8082 = vmatpush2.bf16.msra.mxu0 %v7827
    %8083 = vmatprep.mubr.bf16.mxu0 %v7276
    %8084 = vmatmul.mubr.bf16.gmra.mxu0 %v7275
    %v8085 = vpop.f32.mrf.mxu0
    %v8086 = vadd.f32 0.0, %v8085
    %v8087 = vpop.f32.mrf.mxu0
    %v8088 = vadd.f32 0.0, %v8087
    %v8089 = vpop.f32.mrf.mxu0
    %v8090 = vadd.f32 0.0, %v8089
    %v8091 = vpop.f32.mrf.mxu0
    %v8092 = vadd.f32 0.0, %v8091
    %8093 = vmatprep.mubr.bf16.mxu0 %v7280
    %8094 = vmatmul.mubr.bf16.gmra.mxu0 %v7279
    %v8095 = vpop.f32.mrf.mxu0
    %v8096 = vadd.f32 0.0, %v8095
    %v8097 = vpop.f32.mrf.mxu0
    %v8098 = vadd.f32 0.0, %v8097
    %v8099 = vpop.f32.mrf.mxu0
    %v8100 = vpop.f32.mrf.mxu0
    %8101 = vdwg.mxu0
    %8102 = vmatprep.subr.bf16.mxu0 %v7888
    %8103 = vmatpush1.bf16.msra.mxu0 %v7887
    %8104 = vmatprep.subr.bf16.mxu0 %v7884
    %8105 = vmatpush1.bf16.msra.mxu0 %v7883
    %8106 = vmatprep.subr.bf16.mxu0 %v7880
    %8107 = vmatpush1.bf16.msra.mxu0 %v7879
    %8108 = vmatprep.subr.bf16.mxu0 %v7876
    %8109 = vmatpush1.bf16.msra.mxu0 %v7875
    %8110 = vmatprep.subr.bf16.mxu0 %v7872
    %8111 = vmatpush1.bf16.msra.mxu0 %v7871
    %8112 = vmatprep.subr.bf16.mxu0 %v7868
    %8113 = vmatpush1.bf16.msra.mxu0 %v7867
    %8114 = vmatprep.subr.bf16.mxu0 %v7864
    %8115 = vmatpush1.bf16.msra.mxu0 %v7863
    %8116 = vmatprep.subr.bf16.mxu0 %v7860
    %8117 = vmatpush1.bf16.msra.mxu0 %v7859
    %8118 = vmatprep.subr.bf16.mxu0 %v7920
    %8119 = vmatpush2.bf16.msra.mxu0 %v7919
    %8120 = vmatprep.subr.bf16.mxu0 %v7916
    %8121 = vmatpush2.bf16.msra.mxu0 %v7915
    %8122 = vmatprep.subr.bf16.mxu0 %v7912
    %8123 = vmatpush2.bf16.msra.mxu0 %v7911
    %8124 = vmatprep.subr.bf16.mxu0 %v7908
    %8125 = vmatpush2.bf16.msra.mxu0 %v7907
    %8126 = vmatprep.subr.bf16.mxu0 %v7904
    %8127 = vmatpush2.bf16.msra.mxu0 %v7903
    %8128 = vmatprep.subr.bf16.mxu0 %v7900
    %8129 = vmatpush2.bf16.msra.mxu0 %v7899
    %8130 = vmatprep.subr.bf16.mxu0 %v7896
    %8131 = vmatpush2.bf16.msra.mxu0 %v7895
    %8132 = vmatprep.subr.bf16.mxu0 %v7892
    %8133 = vmatpush2.bf16.msra.mxu0 %v7891
    %8134 = vmatprep.mubr.bf16.mxu0 %v7278
    %8135 = vmatmul.mubr.bf16.gmra.mxu0 %v7277
    %v8136 = vpop.f32.mrf.mxu0
    %v8137 = vadd.f32 %v8086, %v8136
    %v8138 = vpop.f32.mrf.mxu0
    %v8139 = vadd.f32 %v8088, %v8138
    %v8140 = vpop.f32.mrf.mxu0
    %v8141 = vadd.f32 %v8090, %v8140
    %v8142 = vpop.f32.mrf.mxu0
    %v8143 = vadd.f32 %v8092, %v8142
    %8144 = vmatprep.mubr.bf16.mxu0 %v7282
    %8145 = vmatmul.mubr.bf16.gmra.mxu0 %v7281
    %v8146 = vpop.f32.mrf.mxu0
    %v8147 = vadd.f32 %v8096, %v8146
    %v8148 = vpop.f32.mrf.mxu0
    %v8149 = vadd.f32 %v8098, %v8148
    %v8150 = vpop.f32.mrf.mxu0
    %v8151 = vpop.f32.mrf.mxu0
    %8152 = vdwg.mxu0
    %8153 = vmatprep.subr.bf16.mxu0 %v7826
    %8154 = vmatpush1.bf16.msra.mxu0 %v7825
    %8155 = vmatprep.subr.bf16.mxu0 %v7822
    %8156 = vmatpush1.bf16.msra.mxu0 %v7821
    %8157 = vmatprep.subr.bf16.mxu0 %v7818
    %8158 = vmatpush1.bf16.msra.mxu0 %v7817
    %8159 = vmatprep.subr.bf16.mxu0 %v7814
    %8160 = vmatpush1.bf16.msra.mxu0 %v7813
    %8161 = vmatprep.subr.bf16.mxu0 %v7810
    %8162 = vmatpush1.bf16.msra.mxu0 %v7809
    %8163 = vmatprep.subr.bf16.mxu0 %v7806
    %8164 = vmatpush1.bf16.msra.mxu0 %v7805
    %8165 = vmatprep.subr.bf16.mxu0 %v7802
    %8166 = vmatpush1.bf16.msra.mxu0 %v7801
    %8167 = vmatprep.subr.bf16.mxu0 %v7798
    %8168 = vmatpush1.bf16.msra.mxu0 %v7797
    %8169 = vmatprep.subr.bf16.mxu0 %v7858
    %8170 = vmatpush2.bf16.msra.mxu0 %v7857
    %8171 = vmatprep.subr.bf16.mxu0 %v7854
    %8172 = vmatpush2.bf16.msra.mxu0 %v7853
    %8173 = vmatprep.subr.bf16.mxu0 %v7850
    %8174 = vmatpush2.bf16.msra.mxu0 %v7849
    %8175 = vmatprep.subr.bf16.mxu0 %v7846
    %8176 = vmatpush2.bf16.msra.mxu0 %v7845
    %8177 = vmatprep.subr.bf16.mxu0 %v7842
    %8178 = vmatpush2.bf16.msra.mxu0 %v7841
    %8179 = vmatprep.subr.bf16.mxu0 %v7838
    %8180 = vmatpush2.bf16.msra.mxu0 %v7837
    %8181 = vmatprep.subr.bf16.mxu0 %v7834
    %8182 = vmatpush2.bf16.msra.mxu0 %v7833
    %8183 = vmatprep.subr.bf16.mxu0 %v7830
    %8184 = vmatpush2.bf16.msra.mxu0 %v7829
    %8185 = vmatprep.mubr.bf16.mxu0 %v7276
    %8186 = vmatmul.mubr.bf16.gmra.mxu0 %v7275
    %v8187 = vpop.f32.mrf.mxu0
    %v8188 = vadd.f32 0.0, %v8187
    %v8189 = vpop.f32.mrf.mxu0
    %v8190 = vadd.f32 0.0, %v8189
    %v8191 = vpop.f32.mrf.mxu0
    %v8192 = vadd.f32 0.0, %v8191
    %v8193 = vpop.f32.mrf.mxu0
    %v8194 = vadd.f32 0.0, %v8193
    %8195 = vmatprep.mubr.bf16.mxu0 %v7280
    %8196 = vmatmul.mubr.bf16.gmra.mxu0 %v7279
    %v8197 = vpop.f32.mrf.mxu0
    %v8198 = vadd.f32 0.0, %v8197
    %v8199 = vpop.f32.mrf.mxu0
    %v8200 = vadd.f32 0.0, %v8199
    %v8201 = vpop.f32.mrf.mxu0
    %v8202 = vpop.f32.mrf.mxu0
    %8203 = vdwg.mxu0
    %8204 = vmatprep.subr.bf16.mxu0 %v7890
    %8205 = vmatpush1.bf16.msra.mxu0 %v7889
    %8206 = vmatprep.subr.bf16.mxu0 %v7886
    %8207 = vmatpush1.bf16.msra.mxu0 %v7885
    %8208 = vmatprep.subr.bf16.mxu0 %v7882
    %8209 = vmatpush1.bf16.msra.mxu0 %v7881
    %8210 = vmatprep.subr.bf16.mxu0 %v7878
    %8211 = vmatpush1.bf16.msra.mxu0 %v7877
    %8212 = vmatprep.subr.bf16.mxu0 %v7874
    %8213 = vmatpush1.bf16.msra.mxu0 %v7873
    %8214 = vmatprep.subr.bf16.mxu0 %v7870
    %8215 = vmatpush1.bf16.msra.mxu0 %v7869
    %8216 = vmatprep.subr.bf16.mxu0 %v7866
    %8217 = vmatpush1.bf16.msra.mxu0 %v7865
    %8218 = vmatprep.subr.bf16.mxu0 %v7862
    %8219 = vmatpush1.bf16.msra.mxu0 %v7861
    %8220 = vmatprep.subr.bf16.mxu0 %v7922
    %8221 = vmatpush2.bf16.msra.mxu0 %v7921
    %8222 = vmatprep.subr.bf16.mxu0 %v7918
    %8223 = vmatpush2.bf16.msra.mxu0 %v7917
    %8224 = vmatprep.subr.bf16.mxu0 %v7914
    %8225 = vmatpush2.bf16.msra.mxu0 %v7913
    %8226 = vmatprep.subr.bf16.mxu0 %v7910
    %8227 = vmatpush2.bf16.msra.mxu0 %v7909
    %8228 = vmatprep.subr.bf16.mxu0 %v7906
    %8229 = vmatpush2.bf16.msra.mxu0 %v7905
    %8230 = vmatprep.subr.bf16.mxu0 %v7902
    %8231 = vmatpush2.bf16.msra.mxu0 %v7901
    %8232 = vmatprep.subr.bf16.mxu0 %v7898
    %8233 = vmatpush2.bf16.msra.mxu0 %v7897
    %8234 = vmatprep.subr.bf16.mxu0 %v7894
    %8235 = vmatpush2.bf16.msra.mxu0 %v7893
    %8236 = vmatprep.mubr.bf16.mxu0 %v7278
    %8237 = vmatmul.mubr.bf16.gmra.mxu0 %v7277
    %v8238 = vpop.f32.mrf.mxu0
    %v8239 = vadd.f32 %v8188, %v8238
    %v8240 = vpop.f32.mrf.mxu0
    %v8241 = vadd.f32 %v8190, %v8240
    %v8242 = vpop.f32.mrf.mxu0
    %v8243 = vadd.f32 %v8192, %v8242
    %v8244 = vpop.f32.mrf.mxu0
    %v8245 = vadd.f32 %v8194, %v8244
    %8246 = vmatprep.mubr.bf16.mxu0 %v7282
    %8247 = vmatmul.mubr.bf16.gmra.mxu0 %v7281
    %v8248 = vpop.f32.mrf.mxu0
    %v8249 = vadd.f32 %v8198, %v8248
    %v8250 = vpop.f32.mrf.mxu0
    %v8251 = vadd.f32 %v8200, %v8250
    %v8252 = vpop.f32.mrf.mxu0
    %v8253 = vpop.f32.mrf.mxu0
    %8254 = vdwg.mxu0
    %v8255 = vadd.f32 %v8137, %v8141
    %v8256 = vadd.f32 %v8255, %v8147
    %v8257 = vrot.slane %v8256, 4
    %v8258 = vadd.f32 %v8256, %v8257
    %v8259 = vrot.slane %v8258, 2
    %v8260 = vadd.f32 %v8258, %v8259
    %v8261 = vrot.slane %v8260, 1
    %v8262 = vadd.f32 %v8260, %v8261
    %v8263 = vadd.f32 %v8139, %v8143
    %v8264 = vadd.f32 %v8263, %v8149
    %v8265 = vrot.slane %v8264, 4
    %v8266 = vadd.f32 %v8264, %v8265
    %v8267 = vrot.slane %v8266, 2
    %v8268 = vadd.f32 %v8266, %v8267
    %v8269 = vrot.slane %v8268, 1
    %v8270 = vadd.f32 %v8268, %v8269
    %v8271 = vadd.f32 %v8239, %v8243
    %v8272 = vadd.f32 %v8271, %v8249
    %v8273 = vrot.slane %v8272, 4
    %v8274 = vadd.f32 %v8272, %v8273
    %v8275 = vrot.slane %v8274, 2
    %v8276 = vadd.f32 %v8274, %v8275
    %v8277 = vrot.slane %v8276, 1
    %v8278 = vadd.f32 %v8276, %v8277
    %v8279 = vadd.f32 %v8241, %v8245
    %v8280 = vadd.f32 %v8279, %v8251
    %v8281 = vrot.slane %v8280, 4
    %v8282 = vadd.f32 %v8280, %v8281
    %v8283 = vrot.slane %v8282, 2
    %v8284 = vadd.f32 %v8282, %v8283
    %v8285 = vrot.slane %v8284, 1
    %v8286 = vadd.f32 %v8284, %v8285
    %v8287 = vmul.f32 %v8262, %v7043
    %v8288 = vmul.f32 %v8270, %v7043
    %v8289 = vmul.f32 %v8278, %v7043
    %v8290 = vmul.f32 %v8286, %v7043
    %v8291 = vmul.f32 %v8137, %v8137
    %v8292 = vmul.f32 %v8139, %v8139
    %v8293 = vmul.f32 %v8239, %v8239
    %v8294 = vmul.f32 %v8241, %v8241
    %v8295 = vmul.f32 %v8141, %v8141
    %v8296 = vmul.f32 %v8143, %v8143
    %v8297 = vmul.f32 %v8243, %v8243
    %v8298 = vmul.f32 %v8245, %v8245
    %v8299 = vmul.f32 %v8147, %v8147
    %v8300 = vmul.f32 %v8149, %v8149
    %v8301 = vmul.f32 %v8249, %v8249
    %v8302 = vmul.f32 %v8251, %v8251
    %v8303 = vadd.f32 %v8291, %v8295
    %v8304 = vadd.f32 %v8303, %v8299
    %v8305 = vrot.slane %v8304, 4
    %v8306 = vadd.f32 %v8304, %v8305
    %v8307 = vrot.slane %v8306, 2
    %v8308 = vadd.f32 %v8306, %v8307
    %v8309 = vrot.slane %v8308, 1
    %v8310 = vadd.f32 %v8308, %v8309
    %v8311 = vadd.f32 %v8292, %v8296
    %v8312 = vadd.f32 %v8311, %v8300
    %v8313 = vrot.slane %v8312, 4
    %v8314 = vadd.f32 %v8312, %v8313
    %v8315 = vrot.slane %v8314, 2
    %v8316 = vadd.f32 %v8314, %v8315
    %v8317 = vrot.slane %v8316, 1
    %v8318 = vadd.f32 %v8316, %v8317
    %v8319 = vadd.f32 %v8293, %v8297
    %v8320 = vadd.f32 %v8319, %v8301
    %v8321 = vrot.slane %v8320, 4
    %v8322 = vadd.f32 %v8320, %v8321
    %v8323 = vrot.slane %v8322, 2
    %v8324 = vadd.f32 %v8322, %v8323
    %v8325 = vrot.slane %v8324, 1
    %v8326 = vadd.f32 %v8324, %v8325
    %v8327 = vadd.f32 %v8294, %v8298
    %v8328 = vadd.f32 %v8327, %v8302
    %v8329 = vrot.slane %v8328, 4
    %v8330 = vadd.f32 %v8328, %v8329
    %v8331 = vrot.slane %v8330, 2
    %v8332 = vadd.f32 %v8330, %v8331
    %v8333 = vrot.slane %v8332, 1
    %v8334 = vadd.f32 %v8332, %v8333
    %v8335 = vmul.f32 %v8310, %v7043
    %v8336 = vmul.f32 %v8318, %v7043
    %v8337 = vmul.f32 %v8326, %v7043
    %v8338 = vmul.f32 %v8334, %v7043
    %v8339 = vmul.f32 %v8287, %v8287
    %v8340 = vmul.f32 %v8288, %v8288
    %v8341 = vmul.f32 %v8289, %v8289
    %v8342 = vmul.f32 %v8290, %v8290
    %v8343 = vsub.f32 %v8335, %v8339
    %v8344 = vsub.f32 %v8336, %v8340
    %v8345 = vsub.f32 %v8337, %v8341
    %v8346 = vsub.f32 %v8338, %v8342
    %v8347 = vmax.f32 %v8343, 0.0
    %v8348 = vmax.f32 %v8344, 0.0
    %v8349 = vmax.f32 %v8345, 0.0
    %v8350 = vmax.f32 %v8346, 0.0
    %v8351 = vadd.f32 %v8347, 1e-05
    %v8352 = vadd.f32 %v8348, 1e-05
    %v8353 = vadd.f32 %v8349, 1e-05
    %v8354 = vadd.f32 %v8350, 1e-05
    %v8355 = vrsqrt.pop %v8351
    %v8356 = vrsqrt.pop %v8352
    %v8357 = vrsqrt.pop %v8353
    %v8358 = vrsqrt.pop %v8354
    %v8359 = vld [vmem:[%s21] sm:$0xf]
    %v8361 = vlaneseq
    %v8362 = vshrl.u32 %v8361, 7
    %v8363 = vsub.s32 0, %v8362
    %v8364 = vrot.slane %v8359, %v8363
    %v8365 = vlaneseq
    %v8366 = vshrl.u32 %v8365, 7
    %v8367 = vsub.s32 1, %v8366
    %v8368 = vrot.slane %v8359, %v8367
    %v8369 = vlaneseq
    %v8370 = vshrl.u32 %v8369, 7
    %v8371 = vsub.s32 2, %v8370
    %v8372 = vrot.slane %v8359, %v8371
    %v8373 = vlaneseq
    %v8374 = vshrl.u32 %v8373, 7
    %v8375 = vsub.s32 3, %v8374
    %v8376 = vrot.slane %v8359, %v8375
    %v8381 = vmul.f32 %v8355, %v8364
    %v8382 = vmul.f32 %v8356, %v8368
    %v8383 = vmul.f32 %v8357, %v8372
    %v8384 = vmul.f32 %v8358, %v8376
    %v8385 = vld [vmem:[%s22] sm:$0xf]
    %v8386 = vmul.f32 %v8287, %v8381
    %v8387 = vmul.f32 %v8288, %v8382
    %v8388 = vmul.f32 %v8289, %v8383
    %v8389 = vmul.f32 %v8290, %v8384
    %v8394 = vcombine.low %v8386, %v8387
    %v8395 = vcombine.low %v8388, %v8389
    %v8397 = vunpack.c.l.s4 1966171168
    %v8398 = vunpack.c.0.s8 %v8397
    %v8399 = vlaneseq
    %v8400 = vshrl.u32 %v8399, 7
    %v8401 = vsub.s32 %v8398, %v8400
    %v8402 = vrot.slane %v8394, %v8401
    %v8404 = vunpack.c.l.s4 1966171168
    %v8405 = vunpack.c.0.s8 %v8404
    %v8406 = vlaneseq
    %v8407 = vshrl.u32 %v8406, 7
    %v8408 = vsub.s32 %v8405, %v8407
    %v8409 = vrot.slane %v8395, %v8408
    %v8410 = vcombine.low %v8402, %v8409
    %v8412 = vunpack.c.l.s4 1966171168
    %v8413 = vunpack.c.0.s8 %v8412
    %v8414 = vlaneseq
    %v8415 = vshrl.u32 %v8414, 7
    %v8416 = vsub.s32 %v8413, %v8415
    %v8417 = vrot.slane %v8410, %v8416
    %v8419 = vsub.f32 %v8385, %v8417
    %v8420 = vlaneseq
    %v8421 = vshrl.u32 %v8420, 7
    %v8422 = vsub.s32 0, %v8421
    %v8423 = vrot.slane %v8381, %v8422
    %v8424 = vlaneseq
    %v8425 = vshrl.u32 %v8424, 7
    %v8426 = vsub.s32 0, %v8425
    %v8427 = vrot.slane %v8382, %v8426
    %v8428 = vlaneseq
    %v8429 = vshrl.u32 %v8428, 7
    %v8430 = vsub.s32 0, %v8429
    %v8431 = vrot.slane %v8383, %v8430
    %v8432 = vlaneseq
    %v8433 = vshrl.u32 %v8432, 7
    %v8434 = vsub.s32 0, %v8433
    %v8435 = vrot.slane %v8384, %v8434
    %v8436 = vmul.f32 %v8137, %v8423
    %v8437 = vmul.f32 %v8139, %v8427
    %v8438 = vmul.f32 %v8239, %v8431
    %v8439 = vmul.f32 %v8241, %v8435
    %v8440 = vmul.f32 %v8141, %v8423
    %v8441 = vmul.f32 %v8143, %v8427
    %v8442 = vmul.f32 %v8243, %v8431
    %v8443 = vmul.f32 %v8245, %v8435
    %v8444 = vmul.f32 %v8147, %v8423
    %v8445 = vmul.f32 %v8149, %v8427
    %v8446 = vmul.f32 %v8249, %v8431
    %v8447 = vmul.f32 %v8251, %v8435
    %v8449 = vlaneseq
    %v8450 = vshrl.u32 %v8449, 7
    %v8451 = vsub.s32 0, %v8450
    %v8452 = vrot.slane %v8419, %v8451
    %v8453 = vlaneseq
    %v8454 = vshrl.u32 %v8453, 7
    %v8455 = vsub.s32 1, %v8454
    %v8456 = vrot.slane %v8419, %v8455
    %v8457 = vlaneseq
    %v8458 = vshrl.u32 %v8457, 7
    %v8459 = vsub.s32 2, %v8458
    %v8460 = vrot.slane %v8419, %v8459
    %v8461 = vlaneseq
    %v8462 = vshrl.u32 %v8461, 7
    %v8463 = vsub.s32 3, %v8462
    %v8464 = vrot.slane %v8419, %v8463
    %v8469 = vadd.f32 %v8436, %v8452
    %v8470 = vadd.f32 %v8437, %v8456
    %v8471 = vadd.f32 %v8438, %v8460
    %v8472 = vadd.f32 %v8439, %v8464
    %v8473 = vadd.f32 %v8440, %v8452
    %v8474 = vadd.f32 %v8441, %v8456
    %v8475 = vadd.f32 %v8442, %v8460
    %v8476 = vadd.f32 %v8443, %v8464
    %v8477 = vadd.f32 %v8444, %v8452
    %v8478 = vadd.f32 %v8445, %v8456
    %v8479 = vadd.f32 %v8446, %v8460
    %v8480 = vadd.f32 %v8447, %v8464
    %v8481 = vunpack.c.l.bf16 %v6029
    %v8482 = vunpack.c.l.bf16 %v6030
    %v8483 = vunpack.c.l.bf16 %v6031
    %v8484 = vunpack.c.l.bf16 %v6032
    %v8485 = vunpack.c.h.bf16 %v6029
    %v8486 = vunpack.c.h.bf16 %v6030
    %v8487 = vunpack.c.h.bf16 %v6031
    %v8488 = vunpack.c.h.bf16 %v6032
    %v8489 = vunpack.c.l.bf16 %v6033
    %v8490 = vunpack.c.l.bf16 %v6034
    %v8491 = vunpack.c.l.bf16 %v6035
    %v8492 = vunpack.c.l.bf16 %v6036
    %v8493 = vadd.f32 %v8469, %v8481
    %v8494 = vadd.f32 %v8470, %v8482
    %v8495 = vadd.f32 %v8471, %v8483
    %v8496 = vadd.f32 %v8472, %v8484
    %v8497 = vadd.f32 %v8473, %v8485
    %v8498 = vadd.f32 %v8474, %v8486
    %v8499 = vadd.f32 %v8475, %v8487
    %v8500 = vadd.f32 %v8476, %v8488
    %v8501 = vadd.f32 %v8477, %v8489
    %v8502 = vadd.f32 %v8478, %v8490
    %v8503 = vadd.f32 %v8479, %v8491
    %v8504 = vadd.f32 %v8480, %v8492
    %vm8505 = vcmp.ge.f32.partialorder %v8493, 0.0
    %vm8506 = vcmp.ge.f32.partialorder %v8494, 0.0
    %vm8507 = vcmp.ge.f32.partialorder %v8495, 0.0
    %vm8508 = vcmp.ge.f32.partialorder %v8496, 0.0
    %vm8509 = vcmp.ge.f32.partialorder %v8497, 0.0
    %vm8510 = vcmp.ge.f32.partialorder %v8498, 0.0
    %vm8511 = vcmp.ge.f32.partialorder %v8499, 0.0
    %vm8512 = vcmp.ge.f32.partialorder %v8500, 0.0
    %vm8513 = vcmp.ge.f32.partialorder %v8501, 0.0
    %vm8514 = vcmp.ge.f32.partialorder %v8502, 0.0
    %vm8515 = vcmp.ge.f32.partialorder %v8503, 0.0
    %vm8516 = vcmp.ge.f32.partialorder %v8504, 0.0
    %v8517 = vstv %s6038
    %v8518 = vmul.f32 %v8517, %v8493
    %v8519 = vmul.f32 %v8517, %v8494
    %v8520 = vmul.f32 %v8517, %v8495
    %v8521 = vmul.f32 %v8517, %v8496
    %v8522 = vmul.f32 %v8517, %v8497
    %v8523 = vmul.f32 %v8517, %v8498
    %v8524 = vmul.f32 %v8517, %v8499
    %v8525 = vmul.f32 %v8517, %v8500
    %v8526 = vmul.f32 %v8517, %v8501
    %v8527 = vmul.f32 %v8517, %v8502
    %v8528 = vmul.f32 %v8517, %v8503
    %v8529 = vmul.f32 %v8517, %v8504
    %v8530 = vsel %vm8505, %v8493, %v8518
    %v8531 = vsel %vm8506, %v8494, %v8519
    %v8532 = vsel %vm8507, %v8495, %v8520
    %v8533 = vsel %vm8508, %v8496, %v8521
    %v8534 = vsel %vm8509, %v8497, %v8522
    %v8535 = vsel %vm8510, %v8498, %v8523
    %v8536 = vsel %vm8511, %v8499, %v8524
    %v8537 = vsel %vm8512, %v8500, %v8525
    %v8538 = vsel %vm8513, %v8501, %v8526
    %v8539 = vsel %vm8514, %v8502, %v8527
    %v8540 = vsel %vm8515, %v8503, %v8528
    %v8541 = vsel %vm8516, %v8504, %v8529
    %v8542 = vmax.f32 %v8530, %v8534
    %v8543 = vmax.f32 %v8531, %v8535
    %v8544 = vmax.f32 %v8532, %v8536
    %v8545 = vmax.f32 %v8533, %v8537
    %v8546 = vmax.f32 %v8542, %v8538
    %v8547 = vmax.f32 %v8543, %v8539
    %v8548 = vmax.f32 %v8544, %v8540
    %v8549 = vmax.f32 %v8545, %v8541
    %v8550 = vpack.c.bf16 %v8546, %v8546
    %v8551 = vpack.c.bf16 %v8547, %v8547
    %v8552 = vpack.c.bf16 %v8548, %v8548
    %v8553 = vpack.c.bf16 %v8549, %v8549
    %v8554 = vld [vmem:[#allocation15] sm:$0xff]
    %v8555 = vld [vmem:[#allocation15 + $0x8] sm:$0xff]
    %v8556 = vld [vmem:[#allocation15 + $0x10] sm:$0xff]
    %v8557 = vld [vmem:[#allocation15 + $0x18] sm:$0xff]
    %v8558 = vld [vmem:[#allocation15 + $0x20] sm:$0xff]
    %v8559 = vld [vmem:[#allocation15 + $0x28] sm:$0xff]
    %v8560 = vld [vmem:[#allocation15 + $0x30] sm:$0xff]
    %v8561 = vld [vmem:[#allocation15 + $0x38] sm:$0xff]
    %v8562 = vld [vmem:[#allocation15 + $0x40] sm:$0xff]
    %v8563 = vld [vmem:[#allocation15 + $0x48] sm:$0xff]
    %v8564 = vld [vmem:[#allocation15 + $0x50] sm:$0xff]
    %v8565 = vld [vmem:[#allocation15 + $0x58] sm:$0xff]
    %v8566 = vld [vmem:[#allocation15 + $0x60] sm:$0xff]
    %v8567 = vld [vmem:[#allocation15 + $0x68] sm:$0xff]
    %v8568 = vld [vmem:[#allocation15 + $0x70] sm:$0xff]
    %v8569 = vld [vmem:[#allocation15 + $0x78] sm:$0xff]
    %v8570 = vld [vmem:[#allocation15 + $0x80] sm:$0xff]
    %v8571 = vld [vmem:[#allocation15 + $0x88] sm:$0xff]
    %v8572 = vld [vmem:[#allocation15 + $0x90] sm:$0xff]
    %v8573 = vld [vmem:[#allocation15 + $0x98] sm:$0xff]
    %v8574 = vld [vmem:[#allocation15 + $0xa0] sm:$0xff]
    %v8575 = vld [vmem:[#allocation15 + $0xa8] sm:$0xff]
    %v8576 = vld [vmem:[#allocation15 + $0xb0] sm:$0xff]
    %v8577 = vld [vmem:[#allocation15 + $0xb8] sm:$0xff]
    %v8578 = vld [vmem:[#allocation15 + $0xc0] sm:$0xff]
    %v8579 = vld [vmem:[#allocation15 + $0xc8] sm:$0xff]
    %v8580 = vld [vmem:[#allocation15 + $0xd0] sm:$0xff]
    %v8581 = vld [vmem:[#allocation15 + $0xd8] sm:$0xff]
    %v8582 = vld [vmem:[#allocation15 + $0xe0] sm:$0xff]
    %v8583 = vld [vmem:[#allocation15 + $0xe8] sm:$0xff]
    %v8584 = vld [vmem:[#allocation15 + $0xf0] sm:$0xff]
    %v8585 = vld [vmem:[#allocation15 + $0xf8] sm:$0xff]
    %v8586 = vld [vmem:[#allocation15 + $0x100] sm:$0xff]
    %v8587 = vld [vmem:[#allocation15 + $0x108] sm:$0xff]
    %v8588 = vld [vmem:[#allocation15 + $0x110] sm:$0xff]
    %v8589 = vld [vmem:[#allocation15 + $0x118] sm:$0xff]
    %v8590 = vld [vmem:[#allocation15 + $0x120] sm:$0xff]
    %v8591 = vld [vmem:[#allocation15 + $0x128] sm:$0xff]
    %v8592 = vld [vmem:[#allocation15 + $0x130] sm:$0xff]
    %v8593 = vld [vmem:[#allocation15 + $0x138] sm:$0xff]
    %v8594 = vld [vmem:[#allocation15 + $0x140] sm:$0xff]
    %v8595 = vld [vmem:[#allocation15 + $0x148] sm:$0xff]
    %v8596 = vld [vmem:[#allocation15 + $0x150] sm:$0xff]
    %v8597 = vld [vmem:[#allocation15 + $0x158] sm:$0xff]
    %v8598 = vld [vmem:[#allocation15 + $0x160] sm:$0xff]
    %v8599 = vld [vmem:[#allocation15 + $0x168] sm:$0xff]
    %v8600 = vld [vmem:[#allocation15 + $0x170] sm:$0xff]
    %v8601 = vld [vmem:[#allocation15 + $0x178] sm:$0xff]
    %v8602 = vld [vmem:[#allocation15 + $0x180] sm:$0xff]
    %v8603 = vld [vmem:[#allocation15 + $0x188] sm:$0xff]
    %v8604 = vld [vmem:[#allocation15 + $0x190] sm:$0xff]
    %v8605 = vld [vmem:[#allocation15 + $0x198] sm:$0xff]
    %v8606 = vld [vmem:[#allocation15 + $0x1a0] sm:$0xff]
    %v8607 = vld [vmem:[#allocation15 + $0x1a8] sm:$0xff]
    %v8608 = vld [vmem:[#allocation15 + $0x1b0] sm:$0xff]
    %v8609 = vld [vmem:[#allocation15 + $0x1b8] sm:$0xff]
    %v8610 = vld [vmem:[#allocation15 + $0x1c0] sm:$0xff]
    %v8611 = vld [vmem:[#allocation15 + $0x1c8] sm:$0xff]
    %v8612 = vld [vmem:[#allocation15 + $0x1d0] sm:$0xff]
    %v8613 = vld [vmem:[#allocation15 + $0x1d8] sm:$0xff]
    %v8614 = vld [vmem:[#allocation15 + $0x1e0] sm:$0xff]
    %v8615 = vld [vmem:[#allocation15 + $0x1e8] sm:$0xff]
    %v8616 = vld [vmem:[#allocation15 + $0x1f0] sm:$0xff]
    %v8617 = vld [vmem:[#allocation15 + $0x1f8] sm:$0xff]
    %v8618 = vld [vmem:[%s24] sm:$0x3]
    %v8620 = vlaneseq
    %v8621 = vshrl.u32 %v8620, 7
    %v8622 = vsub.s32 0, %v8621
    %v8623 = vrot.slane %v8618, %v8622
    %v8624 = vlaneseq
    %v8625 = vshrl.u32 %v8624, 7
    %v8626 = vsub.s32 1, %v8625
    %v8627 = vrot.slane %v8618, %v8626
    %v8694 = vunpack.c.l.b16 %v8554
    %v8695 = vunpack.c.h.b16 %v8554
    %v8696 = vunpack.c.l.b16 %v8555
    %v8697 = vunpack.c.h.b16 %v8555
    %v8698 = vunpack.c.l.b16 %v8556
    %v8699 = vunpack.c.h.b16 %v8556
    %v8700 = vunpack.c.l.b16 %v8557
    %v8701 = vunpack.c.h.b16 %v8557
    %v8702 = vunpack.c.l.b16 %v8558
    %v8703 = vunpack.c.h.b16 %v8558
    %v8704 = vunpack.c.l.b16 %v8559
    %v8705 = vunpack.c.h.b16 %v8559
    %v8706 = vunpack.c.l.b16 %v8560
    %v8707 = vunpack.c.h.b16 %v8560
    %v8708 = vunpack.c.l.b16 %v8561
    %v8709 = vunpack.c.h.b16 %v8561
    %v8710 = vunpack.c.l.b16 %v8562
    %v8711 = vunpack.c.h.b16 %v8562
    %v8712 = vunpack.c.l.b16 %v8563
    %v8713 = vunpack.c.h.b16 %v8563
    %v8714 = vunpack.c.l.b16 %v8564
    %v8715 = vunpack.c.h.b16 %v8564
    %v8716 = vunpack.c.l.b16 %v8565
    %v8717 = vunpack.c.h.b16 %v8565
    %v8718 = vunpack.c.l.b16 %v8566
    %v8719 = vunpack.c.h.b16 %v8566
    %v8720 = vunpack.c.l.b16 %v8567
    %v8721 = vunpack.c.h.b16 %v8567
    %v8722 = vunpack.c.l.b16 %v8568
    %v8723 = vunpack.c.h.b16 %v8568
    %v8724 = vunpack.c.l.b16 %v8569
    %v8725 = vunpack.c.h.b16 %v8569
    %v8726 = vunpack.c.l.b16 %v8570
    %v8727 = vunpack.c.h.b16 %v8570
    %v8728 = vunpack.c.l.b16 %v8571
    %v8729 = vunpack.c.h.b16 %v8571
    %v8730 = vunpack.c.l.b16 %v8572
    %v8731 = vunpack.c.h.b16 %v8572
    %v8732 = vunpack.c.l.b16 %v8573
    %v8733 = vunpack.c.h.b16 %v8573
    %v8734 = vunpack.c.l.b16 %v8574
    %v8735 = vunpack.c.h.b16 %v8574
    %v8736 = vunpack.c.l.b16 %v8575
    %v8737 = vunpack.c.h.b16 %v8575
    %v8738 = vunpack.c.l.b16 %v8576
    %v8739 = vunpack.c.h.b16 %v8576
    %v8740 = vunpack.c.l.b16 %v8577
    %v8741 = vunpack.c.h.b16 %v8577
    %v8742 = vunpack.c.l.b16 %v8578
    %v8743 = vunpack.c.h.b16 %v8578
    %v8744 = vunpack.c.l.b16 %v8579
    %v8745 = vunpack.c.h.b16 %v8579
    %v8746 = vunpack.c.l.b16 %v8580
    %v8747 = vunpack.c.h.b16 %v8580
    %v8748 = vunpack.c.l.b16 %v8581
    %v8749 = vunpack.c.h.b16 %v8581
    %v8750 = vunpack.c.l.b16 %v8582
    %v8751 = vunpack.c.h.b16 %v8582
    %v8752 = vunpack.c.l.b16 %v8583
    %v8753 = vunpack.c.h.b16 %v8583
    %v8754 = vunpack.c.l.b16 %v8584
    %v8755 = vunpack.c.h.b16 %v8584
    %v8756 = vunpack.c.l.b16 %v8585
    %v8757 = vunpack.c.h.b16 %v8585
    %v8758 = vunpack.c.l.b16 %v8586
    %v8759 = vunpack.c.h.b16 %v8586
    %v8760 = vunpack.c.l.b16 %v8587
    %v8761 = vunpack.c.h.b16 %v8587
    %v8762 = vunpack.c.l.b16 %v8588
    %v8763 = vunpack.c.h.b16 %v8588
    %v8764 = vunpack.c.l.b16 %v8589
    %v8765 = vunpack.c.h.b16 %v8589
    %v8766 = vunpack.c.l.b16 %v8590
    %v8767 = vunpack.c.h.b16 %v8590
    %v8768 = vunpack.c.l.b16 %v8591
    %v8769 = vunpack.c.h.b16 %v8591
    %v8770 = vunpack.c.l.b16 %v8592
    %v8771 = vunpack.c.h.b16 %v8592
    %v8772 = vunpack.c.l.b16 %v8593
    %v8773 = vunpack.c.h.b16 %v8593
    %v8774 = vunpack.c.l.b16 %v8594
    %v8775 = vunpack.c.h.b16 %v8594
    %v8776 = vunpack.c.l.b16 %v8595
    %v8777 = vunpack.c.h.b16 %v8595
    %v8778 = vunpack.c.l.b16 %v8596
    %v8779 = vunpack.c.h.b16 %v8596
    %v8780 = vunpack.c.l.b16 %v8597
    %v8781 = vunpack.c.h.b16 %v8597
    %v8782 = vunpack.c.l.b16 %v8598
    %v8783 = vunpack.c.h.b16 %v8598
    %v8784 = vunpack.c.l.b16 %v8599
    %v8785 = vunpack.c.h.b16 %v8599
    %v8786 = vunpack.c.l.b16 %v8600
    %v8787 = vunpack.c.h.b16 %v8600
    %v8788 = vunpack.c.l.b16 %v8601
    %v8789 = vunpack.c.h.b16 %v8601
    %v8790 = vunpack.c.l.b16 %v8602
    %v8791 = vunpack.c.h.b16 %v8602
    %v8792 = vunpack.c.l.b16 %v8603
    %v8793 = vunpack.c.h.b16 %v8603
    %v8794 = vunpack.c.l.b16 %v8604
    %v8795 = vunpack.c.h.b16 %v8604
    %v8796 = vunpack.c.l.b16 %v8605
    %v8797 = vunpack.c.h.b16 %v8605
    %v8798 = vunpack.c.l.b16 %v8606
    %v8799 = vunpack.c.h.b16 %v8606
    %v8800 = vunpack.c.l.b16 %v8607
    %v8801 = vunpack.c.h.b16 %v8607
    %v8802 = vunpack.c.l.b16 %v8608
    %v8803 = vunpack.c.h.b16 %v8608
    %v8804 = vunpack.c.l.b16 %v8609
    %v8805 = vunpack.c.h.b16 %v8609
    %v8806 = vunpack.c.l.b16 %v8610
    %v8807 = vunpack.c.h.b16 %v8610
    %v8808 = vunpack.c.l.b16 %v8611
    %v8809 = vunpack.c.h.b16 %v8611
    %v8810 = vunpack.c.l.b16 %v8612
    %v8811 = vunpack.c.h.b16 %v8612
    %v8812 = vunpack.c.l.b16 %v8613
    %v8813 = vunpack.c.h.b16 %v8613
    %v8814 = vunpack.c.l.b16 %v8614
    %v8815 = vunpack.c.h.b16 %v8614
    %v8816 = vunpack.c.l.b16 %v8615
    %v8817 = vunpack.c.h.b16 %v8615
    %v8818 = vunpack.c.l.b16 %v8616
    %v8819 = vunpack.c.h.b16 %v8616
    %v8820 = vunpack.c.l.b16 %v8617
    %v8821 = vunpack.c.h.b16 %v8617
    %v8822 = vpack.c.b16 %v8696, %v8694
    %v8823 = vpack.c.b16 %v8697, %v8695
    %v8824 = vpack.c.b16 %v8700, %v8698
    %v8825 = vpack.c.b16 %v8701, %v8699
    %v8826 = vpack.c.b16 %v8704, %v8702
    %v8827 = vpack.c.b16 %v8705, %v8703
    %v8828 = vpack.c.b16 %v8708, %v8706
    %v8829 = vpack.c.b16 %v8709, %v8707
    %v8830 = vpack.c.b16 %v8712, %v8710
    %v8831 = vpack.c.b16 %v8713, %v8711
    %v8832 = vpack.c.b16 %v8716, %v8714
    %v8833 = vpack.c.b16 %v8717, %v8715
    %v8834 = vpack.c.b16 %v8720, %v8718
    %v8835 = vpack.c.b16 %v8721, %v8719
    %v8836 = vpack.c.b16 %v8724, %v8722
    %v8837 = vpack.c.b16 %v8725, %v8723
    %v8838 = vpack.c.b16 %v8728, %v8726
    %v8839 = vpack.c.b16 %v8729, %v8727
    %v8840 = vpack.c.b16 %v8732, %v8730
    %v8841 = vpack.c.b16 %v8733, %v8731
    %v8842 = vpack.c.b16 %v8736, %v8734
    %v8843 = vpack.c.b16 %v8737, %v8735
    %v8844 = vpack.c.b16 %v8740, %v8738
    %v8845 = vpack.c.b16 %v8741, %v8739
    %v8846 = vpack.c.b16 %v8744, %v8742
    %v8847 = vpack.c.b16 %v8745, %v8743
    %v8848 = vpack.c.b16 %v8748, %v8746
    %v8849 = vpack.c.b16 %v8749, %v8747
    %v8850 = vpack.c.b16 %v8752, %v8750
    %v8851 = vpack.c.b16 %v8753, %v8751
    %v8852 = vpack.c.b16 %v8756, %v8754
    %v8853 = vpack.c.b16 %v8757, %v8755
    %v8854 = vpack.c.b16 %v8760, %v8758
    %v8855 = vpack.c.b16 %v8761, %v8759
    %v8856 = vpack.c.b16 %v8764, %v8762
    %v8857 = vpack.c.b16 %v8765, %v8763
    %v8858 = vpack.c.b16 %v8768, %v8766
    %v8859 = vpack.c.b16 %v8769, %v8767
    %v8860 = vpack.c.b16 %v8772, %v8770
    %v8861 = vpack.c.b16 %v8773, %v8771
    %v8862 = vpack.c.b16 %v8776, %v8774
    %v8863 = vpack.c.b16 %v8777, %v8775
    %v8864 = vpack.c.b16 %v8780, %v8778
    %v8865 = vpack.c.b16 %v8781, %v8779
    %v8866 = vpack.c.b16 %v8784, %v8782
    %v8867 = vpack.c.b16 %v8785, %v8783
    %v8868 = vpack.c.b16 %v8788, %v8786
    %v8869 = vpack.c.b16 %v8789, %v8787
    %v8870 = vpack.c.b16 %v8792, %v8790
    %v8871 = vpack.c.b16 %v8793, %v8791
    %v8872 = vpack.c.b16 %v8796, %v8794
    %v8873 = vpack.c.b16 %v8797, %v8795
    %v8874 = vpack.c.b16 %v8800, %v8798
    %v8875 = vpack.c.b16 %v8801, %v8799
    %v8876 = vpack.c.b16 %v8804, %v8802
    %v8877 = vpack.c.b16 %v8805, %v8803
    %v8878 = vpack.c.b16 %v8808, %v8806
    %v8879 = vpack.c.b16 %v8809, %v8807
    %v8880 = vpack.c.b16 %v8812, %v8810
    %v8881 = vpack.c.b16 %v8813, %v8811
    %v8882 = vpack.c.b16 %v8816, %v8814
    %v8883 = vpack.c.b16 %v8817, %v8815
    %v8884 = vpack.c.b16 %v8820, %v8818
    %v8885 = vpack.c.b16 %v8821, %v8819
    %8950 = vmatprep.subr.bf16.mxu0 %v8837
    %8951 = vmatpush1.bf16.msra.mxu0 %v8836
    %8952 = vmatprep.subr.bf16.mxu0 %v8835
    %8953 = vmatpush1.bf16.msra.mxu0 %v8834
    %8954 = vmatprep.subr.bf16.mxu0 %v8833
    %8955 = vmatpush1.bf16.msra.mxu0 %v8832
    %8956 = vmatprep.subr.bf16.mxu0 %v8831
    %8957 = vmatpush1.bf16.msra.mxu0 %v8830
    %8958 = vmatprep.subr.bf16.mxu0 %v8829
    %8959 = vmatpush1.bf16.msra.mxu0 %v8828
    %8960 = vmatprep.subr.bf16.mxu0 %v8827
    %8961 = vmatpush1.bf16.msra.mxu0 %v8826
    %8962 = vmatprep.subr.bf16.mxu0 %v8825
    %8963 = vmatpush1.bf16.msra.mxu0 %v8824
    %8964 = vmatprep.subr.bf16.mxu0 %v8823
    %8965 = vmatpush1.bf16.msra.mxu0 %v8822
    %8966 = vmatprep.subr.bf16.mxu0 %v8853
    %8967 = vmatpush2.bf16.msra.mxu0 %v8852
    %8968 = vmatprep.subr.bf16.mxu0 %v8851
    %8969 = vmatpush2.bf16.msra.mxu0 %v8850
    %8970 = vmatprep.subr.bf16.mxu0 %v8849
    %8971 = vmatpush2.bf16.msra.mxu0 %v8848
    %8972 = vmatprep.subr.bf16.mxu0 %v8847
    %8973 = vmatpush2.bf16.msra.mxu0 %v8846
    %8974 = vmatprep.subr.bf16.mxu0 %v8845
    %8975 = vmatpush2.bf16.msra.mxu0 %v8844
    %8976 = vmatprep.subr.bf16.mxu0 %v8843
    %8977 = vmatpush2.bf16.msra.mxu0 %v8842
    %8978 = vmatprep.subr.bf16.mxu0 %v8841
    %8979 = vmatpush2.bf16.msra.mxu0 %v8840
    %8980 = vmatprep.subr.bf16.mxu0 %v8839
    %8981 = vmatpush2.bf16.msra.mxu0 %v8838
    %8982 = vmatprep.mubr.bf16.mxu0 %v8551
    %8983 = vmatmul.mubr.bf16.gmra.mxu0 %v8550
    %v8984 = vpop.f32.mrf.mxu0
    %v8985 = vadd.f32 %v8623, %v8984
    %v8986 = vpop.f32.mrf.mxu0
    %v8987 = vadd.f32 %v8627, %v8986
    %v8988 = vpop.f32.mrf.mxu0
    %v8989 = vpop.f32.mrf.mxu0
    %8990 = vdwg.mxu0
    %8991 = vmatprep.subr.bf16.mxu0 %v8869
    %8992 = vmatpush1.bf16.msra.mxu0 %v8868
    %8993 = vmatprep.subr.bf16.mxu0 %v8867
    %8994 = vmatpush1.bf16.msra.mxu0 %v8866
    %8995 = vmatprep.subr.bf16.mxu0 %v8865
    %8996 = vmatpush1.bf16.msra.mxu0 %v8864
    %8997 = vmatprep.subr.bf16.mxu0 %v8863
    %8998 = vmatpush1.bf16.msra.mxu0 %v8862
    %8999 = vmatprep.subr.bf16.mxu0 %v8861
    %9000 = vmatpush1.bf16.msra.mxu0 %v8860
    %9001 = vmatprep.subr.bf16.mxu0 %v8859
    %9002 = vmatpush1.bf16.msra.mxu0 %v8858
    %9003 = vmatprep.subr.bf16.mxu0 %v8857
    %9004 = vmatpush1.bf16.msra.mxu0 %v8856
    %9005 = vmatprep.subr.bf16.mxu0 %v8855
    %9006 = vmatpush1.bf16.msra.mxu0 %v8854
    %9007 = vmatprep.subr.bf16.mxu0 %v8885
    %9008 = vmatpush2.bf16.msra.mxu0 %v8884
    %9009 = vmatprep.subr.bf16.mxu0 %v8883
    %9010 = vmatpush2.bf16.msra.mxu0 %v8882
    %9011 = vmatprep.subr.bf16.mxu0 %v8881
    %9012 = vmatpush2.bf16.msra.mxu0 %v8880
    %9013 = vmatprep.subr.bf16.mxu0 %v8879
    %9014 = vmatpush2.bf16.msra.mxu0 %v8878
    %9015 = vmatprep.subr.bf16.mxu0 %v8877
    %9016 = vmatpush2.bf16.msra.mxu0 %v8876
    %9017 = vmatprep.subr.bf16.mxu0 %v8875
    %9018 = vmatpush2.bf16.msra.mxu0 %v8874
    %9019 = vmatprep.subr.bf16.mxu0 %v8873
    %9020 = vmatpush2.bf16.msra.mxu0 %v8872
    %9021 = vmatprep.subr.bf16.mxu0 %v8871
    %9022 = vmatpush2.bf16.msra.mxu0 %v8870
    %9023 = vmatprep.mubr.bf16.mxu0 %v8553
    %9024 = vmatmul.mubr.bf16.gmra.mxu0 %v8552
    %v9025 = vpop.f32.mrf.mxu0
    %v9026 = vadd.f32 %v8985, %v9025
    %v9027 = vpop.f32.mrf.mxu0
    %v9028 = vadd.f32 %v8987, %v9027
    %v9029 = vpop.f32.mrf.mxu0
    %v9030 = vpop.f32.mrf.mxu0
    %9031 = vdwg.mxu0
    %v9034 = vcombine.low %v9026, %v9028
    %v9035 = vcombine.high %v9026, %v9028
    %v9038 = vcombine.high %v9034, %v9034
    %v9039 = vcombine.high %v9035, %v9035
    %vm9042 = vcmask 1043456
    %v9043 = vsel %vm9042, %v9034, 0.0
    %v9044 = vrot.slane %v9043, 4
    %v9045 = vadd.f32 %v9043, %v9044
    %v9046 = vrot.slane %v9045, 2
    %v9047 = vadd.f32 %v9045, %v9046
    %v9048 = vrot.slane %v9047, 1
    %v9049 = vadd.f32 %v9047, %v9048
    %v9050 = vsel %vm9042, %v9038, 0.0
    %v9051 = vrot.slane %v9050, 4
    %v9052 = vadd.f32 %v9050, %v9051
    %v9053 = vrot.slane %v9052, 2
    %v9054 = vadd.f32 %v9052, %v9053
    %v9055 = vrot.slane %v9054, 1
    %v9056 = vadd.f32 %v9054, %v9055
    %v9057 = vsel %vm9042, %v9035, 0.0
    %v9058 = vrot.slane %v9057, 4
    %v9059 = vadd.f32 %v9057, %v9058
    %v9060 = vrot.slane %v9059, 2
    %v9061 = vadd.f32 %v9059, %v9060
    %v9062 = vrot.slane %v9061, 1
    %v9063 = vadd.f32 %v9061, %v9062
    %v9064 = vsel %vm9042, %v9039, 0.0
    %v9065 = vrot.slane %v9064, 4
    %v9066 = vadd.f32 %v9064, %v9065
    %v9067 = vrot.slane %v9066, 2
    %v9068 = vadd.f32 %v9066, %v9067
    %v9069 = vrot.slane %v9068, 1
    %v9070 = vadd.f32 %v9068, %v9069
    %v9075 = vcombine.low %v9049, %v9056
    %v9077 = vunpack.c.l.s4 1983009808
    %v9078 = vunpack.c.0.s8 %v9077
    %v9079 = vlaneseq
    %v9080 = vshrl.u32 %v9079, 7
    %v9081 = vsub.s32 %v9078, %v9080
    %v9082 = vrot.slane %v9075, %v9081
    %v9083 = vcombine.low %v9063, %v9070
    %v9085 = vunpack.c.l.s4 1983009808
    %v9086 = vunpack.c.0.s8 %v9085
    %v9087 = vlaneseq
    %v9088 = vshrl.u32 %v9087, 7
    %v9089 = vsub.s32 %v9086, %v9088
    %v9090 = vrot.slane %v9083, %v9089
    %vm9091 = vcmask 1044484
    %v9092 = vsel %vm9091, %v9082, %v9082
    %vm9093 = vcmask 1046534
    %v9094 = vsel %vm9093, %v9082, %v9092
    %v9095 = vrot.slane %v9090, 7
    %vm9096 = vcmask 1041409
    %v9097 = vsel %vm9096, %v9095, %v9094
    %vm9098 = vcmask 1043459
    %v9099 = vsel %vm9098, %v9095, %v9097
    %vm9100 = vcmask 1045509
    %v9101 = vsel %vm9100, %v9095, %v9099
    %vm9102 = vcmask 1047559
    %v9103 = vsel %vm9102, %v9095, %v9101
    %9105 = vst [vmem:[#allocation16] sm:$0xf] %v9103
    // Predicated region
    $region134: #{tpu_custom_call.1} parent=1 // pred_check
      _
    $region135: #{tpu_custom_call.1} parent=1 // pred_check_branch
      %9107 = sbr.rel (0) target = $region137
    $region136: #{tpu_custom_call.1} parent=1 // pred_region
      %s9109 = ssub.s32 64, 64
      %9110 = vsyncadd [#allocation4], %s9109
      %s9112 = sshll.u32 [#allocation16], 4
      %s9113 = int_to_ptr.vmem [resolvable:$true] %s9112
      %9115 = dma.vmem_to_hbm [thread:$0]  %s9113, 64, %s25, [#allocation4]
    $region137: #{tpu_custom_call.1} parent=1 // pred_fallthru
      _
    // Predicated region
    $region138: #{tpu_custom_call.1} parent=1 // pred_check
      _
    $region139: #{tpu_custom_call.1} parent=1 // pred_check_branch
      %9117 = sbr.rel (0) target = $region141
    $region140: #{tpu_custom_call.1} parent=1 // pred_region
      %9118 = dma.done [#allocation4], 64
    $region141: #{tpu_custom_call.1} parent=1 // pred_fallthru
      _
    %9119 = vsyncpa [#allocation3], 1
    %9120 = vsyncpa [#allocation8], 1
    %9121 = vsyncpa [#allocation11], 1
    %9122 = vsyncpa [#allocation14], 1
    %9123 = vsyncpa [#allocation4], 1
    %9124 = vsyncpa [#allocation5], 1

</llo_original>
